<compile_context>
chip_gen: v5e
topology: v5e:2x2
jax: 0.10.0
libtpu: 0.0.40
codegen_flags: <defaults>
</compile_context>

<pallas_src>
import functools

import jax
import jax.numpy as jnp
from jax.experimental import pallas as pl
from jax.experimental.pallas import tpu as pltpu


# ---------------------------------------------------------------------------
# Implicit-GEMM conv kernel (shared by 3x3 convs and the transposed convs)
# ---------------------------------------------------------------------------
def _conv_kernel(*refs, groups, n_src, m_out, cout, relu, has_redir, has_head):
    """out[:, g] = epi_g( sum_taps  src[si][off : off + m_out] @ w[wi] )

    epi_g(a) = [head .] relu( a * bn_scale + bn_bias  [+ redir_x[g] @ redir_w] )

    `groups` is a static tuple with one entry per output column group (1 for a plain
    conv, 4 sub-pixel phases for a stride-2 transposed conv); each entry is a tuple of
    (src_index, flat_row_offset, weight_index) taps.  All slices are static and
    contiguous; the reduction over taps happens fully in VMEM/registers.
    """
    srcs = refs[:n_src]
    pos = n_src
    w_ref, s_ref, b_ref = refs[pos], refs[pos + 1], refs[pos + 2]
    pos += 3
    rx_ref = rw_ref = hw_ref = hb_ref = None
    if has_redir:
        rx_ref, rw_ref = refs[pos], refs[pos + 1]
        pos += 2
    if has_head:
        hw_ref, hb_ref = refs[pos], refs[pos + 1]
        pos += 2
    o_ref = refs[pos]

    bn_s = s_ref[...]                      # (1, Cout) f32
    bn_b = b_ref[...]                      # (1, Cout) f32
    cg = 1 if has_head else cout
    for g, taps in enumerate(groups):
        acc = None
        for (si, off, wi) in taps:
            d = jnp.dot(srcs[si][off:off + m_out, :], w_ref[wi],
                        preferred_element_type=jnp.float32)
            acc = d if acc is None else acc + d
        y = acc * bn_s + bn_b
        if has_redir:
            # fused 1x1 redir residual (rides MXU slack of a memory-bound kernel)
            y = y + jnp.dot(rx_ref[g], rw_ref[...],
                            preferred_element_type=jnp.float32)
        if relu:
            y = jnp.maximum(y, 0.0)
        if has_head:
            # fused final `res` 1x1 conv (+bias), scale already folded in.
            y = jnp.sum(y * hw_ref[...], axis=-1, keepdims=True) + hb_ref[...]
        o_ref[:, g * cg:(g + 1) * cg] = y.astype(o_ref.dtype)


def _implicit_conv(srcs, w9, bn_s, bn_b, *, groups, m_out, relu,
                   redir=None, head=None, out_dtype=jnp.bfloat16):
    """Launch the implicit-GEMM conv kernel.  Grid = (batch,) marked 'parallel';
    every block is full-extent along its non-batch dims (weights/BN/redir weights are
    fetched once and stay VMEM-resident across the whole grid)."""
    B = srcs[0].shape[0]
    n_src = len(srcs)
    nw, cin, cout = w9.shape
    has_redir = redir is not None
    has_head = head is not None
    n_groups = len(groups)
    cg = 1 if has_head else cout
    nc = n_groups * cg

    inputs = list(srcs) + [w9,
                           bn_s.astype(jnp.float32).reshape(1, cout),
                           bn_b.astype(jnp.float32).reshape(1, cout)]
    in_specs = [pl.BlockSpec((None,) + tuple(s.shape[1:]), lambda b: (b, 0, 0))
                for s in srcs]
    in_specs += [
        pl.BlockSpec((nw, cin, cout), lambda b: (0, 0, 0)),
        pl.BlockSpec((1, cout), lambda b: (0, 0)),
        pl.BlockSpec((1, cout), lambda b: (0, 0)),
    ]
    if has_redir:
        rx, rw = redir
        inputs += [rx, rw]
        in_specs += [
            pl.BlockSpec((None,) + tuple(rx.shape[1:]), lambda b: (b, 0, 0, 0)),
            pl.BlockSpec(tuple(rw.shape), lambda b: (0, 0)),
        ]
    if has_head:
        hw, hb = head
        inputs += [hw.astype(jnp.float32).reshape(1, cout),
                   jnp.asarray(hb, jnp.float32).reshape(1, 1)]
        in_specs += [
            pl.BlockSpec((1, cout), lambda b: (0, 0)),
            pl.BlockSpec((1, 1), lambda b: (0, 0)),
        ]

    flops = 2 * B * m_out * cin * cout * sum(len(g) for g in groups)
    if has_redir:
        flops += 2 * B * m_out * int(redir[0].shape[-1]) * cout * n_groups
    bytes_acc = sum(int(x.size) * x.dtype.itemsize for x in inputs)
    bytes_acc += B * m_out * nc * jnp.dtype(out_dtype).itemsize

    kernel = functools.partial(
        _conv_kernel, groups=groups, n_src=n_src, m_out=m_out, cout=cout,
        relu=relu, has_redir=has_redir, has_head=has_head)

    return pl.pallas_call(
        kernel,
        out_shape=jax.ShapeDtypeStruct((B, m_out, nc), out_dtype),
        grid_spec=pltpu.PrefetchScalarGridSpec(
            num_scalar_prefetch=0,
            grid=(B,),
            in_specs=in_specs,
            out_specs=pl.BlockSpec((None, m_out, nc), lambda b: (b, 0, 0)),
        ),
        compiler_params=pltpu.CompilerParams(
            dimension_semantics=("parallel",)),
        cost_estimate=pl.CostEstimate(flops=int(flops), transcendentals=0,
                                      bytes_accessed=int(bytes_acc)),
    )(*inputs)


# ---------------------------------------------------------------------------
# Layer wrappers (padding / flattening glue in XLA — fused into a single producer
# fusion per operand, ~1x input traffic — all MACs in the Pallas kernel)
# ---------------------------------------------------------------------------
def _pad_rows(flat, need):
    if flat.shape[1] >= need:
        return flat
    return jnp.pad(flat, ((0, 0), (0, need - flat.shape[1]), (0, 0)))


def conv3x3_bn_relu(x, w9, bn_s, bn_b, *, stride):
    """3x3 conv (padding=1, stride 1 or 2) + folded BN + ReLU, NHWC bf16 in/out."""
    B, H, W, cin = x.shape
    xpad = jnp.pad(x, ((0, 0), (1, 1), (1, 1), (0, 0)))
    if stride == 1:
        ho, wo, wf = H, W, W + 2
        srcs = [xpad.reshape(B, (H + 2) * wf, cin)]
        taps = tuple((0, ki * wf + kj, ki * 3 + kj)
                     for ki in range(3) for kj in range(3))
    else:  # stride 2: 4-way phase split -> every tap is a contiguous slice
        ho, wo = H // 2, W // 2
        wf = wo + 1
        srcs = [xpad[:, a::2, b::2, :].reshape(B, -1, cin)
                for a in (0, 1) for b in (0, 1)]
        taps = tuple(((ki % 2) * 2 + (kj % 2),
                      (ki // 2) * wf + (kj // 2),
                      ki * 3 + kj)
                     for ki in range(3) for kj in range(3))
    m_out = ho * wf
    need = m_out + max(t[1] for t in taps)
    srcs = [_pad_rows(s, need) for s in srcs]
    y = _implicit_conv(srcs, w9, bn_s, bn_b, groups=(taps,), m_out=m_out, relu=True)
    return y.reshape(B, ho, wf, -1)[:, :, :wo, :]


# Sub-pixel taps of ConvTranspose2d(k=3, stride=2, padding=1, output_padding=1):
#   even output index 2m   <- input m   (kernel index 1)
#   odd  output index 2m+1 <- input m   (kernel index 2) + input m+1 (kernel index 0)
_T_TAPS = {0: ((1, 0),), 1: ((2, 0), (0, 1))}


def _phase_split_flat(r, h, w):
    """(B, 2h, 2w, C) -> (B, 4, h*(w+1), C) phase arrays matching the flat
    (width w+1, one garbage column) layout of the transposed-conv output phases."""
    B, _, _, C = r.shape
    parts = []
    for a in (0, 1):
        for b in (0, 1):
            p = r[:, a::2, b::2, :]
            p = jnp.pad(p, ((0, 0), (0, 0), (0, 1), (0, 0)))
            parts.append(p.reshape(B, h * (w + 1), C))
    return jnp.stack(parts, axis=1)


def _phase_interleave(y, h, w):
    """(B, h*(w+1), 4*Cg) phase-major kernel output -> (B, 2h, 2w, Cg)."""
    B = y.shape[0]
    cg = y.shape[-1] // 4
    y = y.reshape(B, h, w + 1, 2, 2, cg)[:, :, :w]
    y = jnp.transpose(y, (0, 1, 3, 2, 4, 5))
    return y.reshape(B, 2 * h, 2 * w, cg)


def conv_transpose3x3_s2(x, w9, bn_s, bn_b, *, redir_x, redir_w, relu=True,
                         head=None, out_dtype=jnp.bfloat16):
    """ConvTranspose2d(3, s=2, p=1, op=1) + folded BN, with a fused 1x1 `redir`
    residual add, ReLU and (optionally) the final 1x1 `res` head — one kernel
    producing the 4 sub-pixel phases as column groups of a wide output block."""
    B, h, w, cin = x.shape
    wf = w + 1
    m_out = h * wf
    xpad = jnp.pad(x, ((0, 0), (0, 1), (0, 1), (0, 0)))     # taps at m+1 / n+1 -> zero
    src = _pad_rows(xpad.reshape(B, (h + 1) * wf, cin), m_out + wf + 1)

    groups = tuple(
        tuple((0, di * wf + dj, ki * 3 + kj)
              for (ki, di) in _T_TAPS[ph] for (kj, dj) in _T_TAPS[pw])
        for ph in (0, 1) for pw in (0, 1))

    rx = _phase_split_flat(redir_x, h, w)                   # (B, 4, m_out, Cr)
    y = _implicit_conv([src], w9, bn_s, bn_b, groups=groups, m_out=m_out,
                       relu=relu, redir=(rx, redir_w), head=head,
                       out_dtype=out_dtype)
    return _phase_interleave(y, h, w)


# ---------------------------------------------------------------------------
# Small glue ops (pool, warp)
# ---------------------------------------------------------------------------
def avg_pool(x, k):
    B, H, W, C = x.shape
    return x.reshape(B, H // k, k, W // k, k, C).mean(axis=(2, 4))


def disp_warp(right, disp):
    """Bilinear horizontal warp: sample `right` at x - disp, border padding."""
    B, H, W, C = right.shape
    xg = jnp.arange(W, dtype=jnp.float32)[None, None, :, None]
    xs = jnp.clip(xg - disp, 0.0, W - 1.0)
    x0 = jnp.floor(xs)
    frac = xs - x0
    x0i = x0.astype(jnp.int32)
    x1i = jnp.clip(x0i + 1, 0, W - 1)

    def gather_w(img, idx):
        idx = jnp.broadcast_to(idx, (B, H, W, C))
        return jnp.take_along_axis(img, idx, axis=2)

    v0 = gather_w(right, x0i)
    v1 = gather_w(right, x1i)
    warped = v0 * (1.0 - frac) + v1 * frac
    return warped, jnp.ones_like(warped)


# ---------------------------------------------------------------------------
# Parameters (conv weights stored GEMM-ready: (9, Cin, Cout) bf16; BN folded eval)
# ---------------------------------------------------------------------------
def fold_bn(gamma, beta, mean, var, eps=1e-5):
    s = gamma / jnp.sqrt(var + eps)
    return s, beta - mean * s


def init_params(key, input_layer, out_planes):
    cin0 = input_layer + 10
    c2, c4 = out_planes * 2, out_planes * 4

    def conv_w(k, cin, cout):
        w = jax.random.normal(k, (3, 3, cin, cout), jnp.float32) * (9 * cin) ** -0.5
        return w.reshape(9, cin, cout).astype(jnp.bfloat16)

    def conv1x1_w(k, cin, cout):
        w = jax.random.normal(k, (cin, cout), jnp.float32) * cin ** -0.5
        return w.astype(jnp.bfloat16)

    def bn(k, c):
        k1, k2, k3, k4 = jax.random.split(k, 4)
        gamma = jax.random.uniform(k1, (c,), jnp.float32, 0.5, 1.5)
        beta = jax.random.normal(k2, (c,), jnp.float32) * 0.1
        mean = jax.random.normal(k3, (c,), jnp.float32) * 0.1
        var = jax.random.uniform(k4, (c,), jnp.float32, 0.5, 1.5)
        return fold_bn(gamma, beta, mean, var)

    ks = jax.random.split(key, 16)
    p = {}
    p['conv1_w'] = conv_w(ks[0], cin0, c2)
    p['bn1_s'], p['bn1_b'] = bn(ks[1], c2)
    p['conv2_w'] = conv_w(ks[2], c2, c2)
    p['bn2_s'], p['bn2_b'] = bn(ks[3], c2)
    p['conv3_w'] = conv_w(ks[4], c2, c4)
    p['bn3_s'], p['bn3_b'] = bn(ks[5], c4)
    p['conv4_w'] = conv_w(ks[6], c4, c4)
    p['bn4_s'], p['bn4_b'] = bn(ks[7], c4)
    p['conv5_w'] = conv_w(ks[8], c4, c2)          # ConvTranspose weight (9, Cin, Cout)
    p['bn5_s'], p['bn5_b'] = bn(ks[9], c2)
    p['conv6_w'] = conv_w(ks[10], c2, out_planes)  # ConvTranspose weight (9, Cin, Cout)
    p['bn6_s'], p['bn6_b'] = bn(ks[11], out_planes)
    p['redir1_w'] = conv1x1_w(ks[12], cin0, out_planes)
    p['redir2_w'] = conv1x1_w(ks[13], c2, c2)
    p['res_w'] = (jax.random.normal(ks[14], (out_planes,), jnp.float32)
                  * out_planes ** -0.5)            # 1x1 res conv weight (head vector)
    p['res_b'] = jax.random.normal(ks[15], (1,), jnp.float32) * 0.1  # res conv bias
    return p


# ---------------------------------------------------------------------------
# Forward (matches res_submodule.forward semantics)
# ---------------------------------------------------------------------------
def res_submodule_forward(params, left, right, disp, feature, *, pool):
    to_nhwc = lambda t: jnp.transpose(t, (0, 2, 3, 1))
    left, right, disp, feature = map(to_nhwc, (left, right, disp, feature))

    scale = left.shape[1] / disp.shape[1]                  # static python float
    left = avg_pool(left, pool)
    right = avg_pool(right, pool)
    disp_ = disp / scale
    left_rec, _mask = disp_warp(right, disp_)
    error_map = left_rec - left

    cat = jnp.concatenate((left, right, disp_, error_map, feature),
                          axis=-1).astype(jnp.bfloat16)

    c1 = conv3x3_bn_relu(cat, params['conv1_w'], params['bn1_s'], params['bn1_b'],
                         stride=2)
    c2 = conv3x3_bn_relu(c1, params['conv2_w'], params['bn2_s'], params['bn2_b'],
                         stride=1)
    c3 = conv3x3_bn_relu(c2, params['conv3_w'], params['bn3_s'], params['bn3_b'],
                         stride=2)
    c4 = conv3x3_bn_relu(c3, params['conv4_w'], params['bn4_s'], params['bn4_b'],
                         stride=1)

    # conv5 = ReLU(BN(ConvT(c4)) + redir2(c2)) — redir2, the add and the ReLU are
    # fused in the single merged-phase kernel (128-lane-dense output).
    c5 = conv_transpose3x3_s2(c4, params['conv5_w'], params['bn5_s'], params['bn5_b'],
                              redir_x=c2, redir_w=params['redir2_w'], relu=True)

    # conv6 = ReLU(BN(ConvT(c5)) + redir1(cat)); res = (conv6 @ res_w + res_b) * scale.
    # redir1, the add, the ReLU and the res head are fused into the conv6 kernel, so
    # conv6 itself is never written to HBM.
    res = conv_transpose3x3_s2(c5, params['conv6_w'], params['bn6_s'], params['bn6_b'],
                               redir_x=cat, redir_w=params['redir1_w'], relu=True,
                               head=(params['res_w'] * scale,
                                     params['res_b'] * scale),
                               out_dtype=jnp.float32)
    return jnp.transpose(res, (0, 3, 1, 2))                # back to NCHW


# ---------------------------------------------------------------------------
if __name__ == "__main__":
    key = jax.random.PRNGKey(0)
    scale_init = 1            # module __init__ arg -> pool factor 2**scale_init
    input_layer = 6
    out_planes = 16
    B, H, W = 2, 16, 16
    Hd, Wd = H // (2 ** scale_init), W // (2 ** scale_init)

    k0, k1, k2, k3, k4 = jax.random.split(key, 5)
    left = jax.random.normal(k0, (B, 3, H, W), jnp.float32)
    right = jax.random.normal(k1, (B, 3, H, W), jnp.float32)
    disp = jax.random.uniform(k2, (B, 1, Hd, Wd), jnp.float32, 0.0, 4.0)
    feature = jax.random.normal(k3, (B, input_layer, Hd, Wd), jnp.float32)
    params = init_params(k4, input_layer, out_planes)

    fwd = jax.jit(functools.partial(res_submodule_forward, pool=2 ** scale_init))
    out = jax.block_until_ready(fwd(params, left, right, disp, feature))
    assert out.shape == (B, 1, Hd, Wd), out.shape
    assert bool(jnp.all(jnp.isfinite(out)))
    print("KERNEL_OK")
</pallas_src>

<mosaic_0001>
module attributes {stable_mosaic.version = 11 : i64} {
  func.func @_conv_kernel(%arg0: i32, %arg1: memref<1x26x16xbf16, #tpu.memory_space<vmem>>, %arg2: memref<1x26x16xbf16, #tpu.memory_space<vmem>>, %arg3: memref<1x26x16xbf16, #tpu.memory_space<vmem>>, %arg4: memref<1x26x16xbf16, #tpu.memory_space<vmem>>, %arg5: memref<9x16x32xbf16, #tpu.memory_space<vmem>>, %arg6: memref<1x32xf32, #tpu.memory_space<vmem>>, %arg7: memref<1x32xf32, #tpu.memory_space<vmem>>, %arg8: memref<1x20x32xbf16, #tpu.memory_space<vmem>>) attributes {dimension_semantics = [#tpu.dimension_semantics<parallel>], iteration_bounds = array<i64: 2>, scalar_prefetch = 0 : i64, scratch_operands = 0 : i64, tpu.core_type = #tpu.core_type<tc>, window_params = [{transform_indices = @transform_0, window_bounds = array<i64: 1, 26, 16>}, {transform_indices = @transform_1, window_bounds = array<i64: 1, 26, 16>}, {transform_indices = @transform_2, window_bounds = array<i64: 1, 26, 16>}, {transform_indices = @transform_3, window_bounds = array<i64: 1, 26, 16>}, {pipeline_mode = #tpu.pipeline_mode<synchronous>, transform_indices = @transform_4, window_bounds = array<i64: 9, 16, 32>}, {pipeline_mode = #tpu.pipeline_mode<synchronous>, transform_indices = @transform_5, window_bounds = array<i64: 1, 32>}, {pipeline_mode = #tpu.pipeline_mode<synchronous>, transform_indices = @transform_6, window_bounds = array<i64: 1, 32>}, {transform_indices = @transform_7, window_bounds = array<i64: 1, 20, 32>}]} {
    %c0 = arith.constant 0 : index
    %c0_0 = arith.constant 0 : index
    %0 = vector.load %arg6[%c0, %c0_0] : memref<1x32xf32, #tpu.memory_space<vmem>>, vector<1x32xf32>
    %c0_1 = arith.constant 0 : index
    %c0_2 = arith.constant 0 : index
    %1 = vector.load %arg7[%c0_1, %c0_2] : memref<1x32xf32, #tpu.memory_space<vmem>>, vector<1x32xf32>
    %c0_3 = arith.constant 0 : index
    %c0_4 = arith.constant 0 : index
    %c0_5 = arith.constant 0 : index
    %2 = vector.load %arg1[%c0_3, %c0_4, %c0_5] : memref<1x26x16xbf16, #tpu.memory_space<vmem>>, vector<1x20x16xbf16>
    %3 = vector.shape_cast %2 : vector<1x20x16xbf16> to vector<20x16xbf16>
    %c0_6 = arith.constant 0 : index
    %c0_7 = arith.constant 0 : index
    %c0_8 = arith.constant 0 : index
    %4 = vector.load %arg5[%c0_6, %c0_7, %c0_8] : memref<9x16x32xbf16, #tpu.memory_space<vmem>>, vector<1x16x32xbf16>
    %5 = vector.shape_cast %4 : vector<1x16x32xbf16> to vector<16x32xbf16>
    %cst = arith.constant dense<0.000000e+00> : vector<20x32xf32>
    %6 = tpu.matmul %3, %5, %cst {dimension_numbers = #tpu.dot_dimension_numbers<[1], [0], [0], [1], [0, 0, 1, 1], [], []>} : vector<20x16xbf16>, vector<16x32xbf16>, vector<20x32xf32> -> vector<20x32xf32>
    %c0_9 = arith.constant 0 : index
    %c0_10 = arith.constant 0 : index
    %c0_11 = arith.constant 0 : index
    %7 = vector.load %arg2[%c0_9, %c0_10, %c0_11] : memref<1x26x16xbf16, #tpu.memory_space<vmem>>, vector<1x20x16xbf16>
    %8 = vector.shape_cast %7 : vector<1x20x16xbf16> to vector<20x16xbf16>
    %c1 = arith.constant 1 : index
    %c0_12 = arith.constant 0 : index
    %c0_13 = arith.constant 0 : index
    %9 = vector.load %arg5[%c1, %c0_12, %c0_13] : memref<9x16x32xbf16, #tpu.memory_space<vmem>>, vector<1x16x32xbf16>
    %10 = vector.shape_cast %9 : vector<1x16x32xbf16> to vector<16x32xbf16>
    %cst_14 = arith.constant dense<0.000000e+00> : vector<20x32xf32>
    %11 = tpu.matmul %8, %10, %cst_14 {dimension_numbers = #tpu.dot_dimension_numbers<[1], [0], [0], [1], [0, 0, 1, 1], [], []>} : vector<20x16xbf16>, vector<16x32xbf16>, vector<20x32xf32> -> vector<20x32xf32>
    %12 = arith.addf %6, %11 : vector<20x32xf32>
    %c0_15 = arith.constant 0 : index
    %c1_16 = arith.constant 1 : index
    %c0_17 = arith.constant 0 : index
    %13 = vector.load %arg1[%c0_15, %c1_16, %c0_17] : memref<1x26x16xbf16, #tpu.memory_space<vmem>>, vector<1x20x16xbf16>
    %14 = vector.shape_cast %13 : vector<1x20x16xbf16> to vector<20x16xbf16>
    %c2 = arith.constant 2 : index
    %c0_18 = arith.constant 0 : index
    %c0_19 = arith.constant 0 : index
    %15 = vector.load %arg5[%c2, %c0_18, %c0_19] : memref<9x16x32xbf16, #tpu.memory_space<vmem>>, vector<1x16x32xbf16>
    %16 = vector.shape_cast %15 : vector<1x16x32xbf16> to vector<16x32xbf16>
    %cst_20 = arith.constant dense<0.000000e+00> : vector<20x32xf32>
    %17 = tpu.matmul %14, %16, %cst_20 {dimension_numbers = #tpu.dot_dimension_numbers<[1], [0], [0], [1], [0, 0, 1, 1], [], []>} : vector<20x16xbf16>, vector<16x32xbf16>, vector<20x32xf32> -> vector<20x32xf32>
    %18 = arith.addf %12, %17 : vector<20x32xf32>
    %c0_21 = arith.constant 0 : index
    %c0_22 = arith.constant 0 : index
    %c0_23 = arith.constant 0 : index
    %19 = vector.load %arg3[%c0_21, %c0_22, %c0_23] : memref<1x26x16xbf16, #tpu.memory_space<vmem>>, vector<1x20x16xbf16>
    %20 = vector.shape_cast %19 : vector<1x20x16xbf16> to vector<20x16xbf16>
    %c3 = arith.constant 3 : index
    %c0_24 = arith.constant 0 : index
    %c0_25 = arith.constant 0 : index
    %21 = vector.load %arg5[%c3, %c0_24, %c0_25] : memref<9x16x32xbf16, #tpu.memory_space<vmem>>, vector<1x16x32xbf16>
    %22 = vector.shape_cast %21 : vector<1x16x32xbf16> to vector<16x32xbf16>
    %cst_26 = arith.constant dense<0.000000e+00> : vector<20x32xf32>
    %23 = tpu.matmul %20, %22, %cst_26 {dimension_numbers = #tpu.dot_dimension_numbers<[1], [0], [0], [1], [0, 0, 1, 1], [], []>} : vector<20x16xbf16>, vector<16x32xbf16>, vector<20x32xf32> -> vector<20x32xf32>
    %24 = arith.addf %18, %23 : vector<20x32xf32>
    %c0_27 = arith.constant 0 : index
    %c0_28 = arith.constant 0 : index
    %c0_29 = arith.constant 0 : index
    %25 = vector.load %arg4[%c0_27, %c0_28, %c0_29] : memref<1x26x16xbf16, #tpu.memory_space<vmem>>, vector<1x20x16xbf16>
    %26 = vector.shape_cast %25 : vector<1x20x16xbf16> to vector<20x16xbf16>
    %c4 = arith.constant 4 : index
    %c0_30 = arith.constant 0 : index
    %c0_31 = arith.constant 0 : index
    %27 = vector.load %arg5[%c4, %c0_30, %c0_31] : memref<9x16x32xbf16, #tpu.memory_space<vmem>>, vector<1x16x32xbf16>
    %28 = vector.shape_cast %27 : vector<1x16x32xbf16> to vector<16x32xbf16>
    %cst_32 = arith.constant dense<0.000000e+00> : vector<20x32xf32>
    %29 = tpu.matmul %26, %28, %cst_32 {dimension_numbers = #tpu.dot_dimension_numbers<[1], [0], [0], [1], [0, 0, 1, 1], [], []>} : vector<20x16xbf16>, vector<16x32xbf16>, vector<20x32xf32> -> vector<20x32xf32>
    %30 = arith.addf %24, %29 : vector<20x32xf32>
    %c0_33 = arith.constant 0 : index
    %c1_34 = arith.constant 1 : index
    %c0_35 = arith.constant 0 : index
    %31 = vector.load %arg3[%c0_33, %c1_34, %c0_35] : memref<1x26x16xbf16, #tpu.memory_space<vmem>>, vector<1x20x16xbf16>
    %32 = vector.shape_cast %31 : vector<1x20x16xbf16> to vector<20x16xbf16>
    %c5 = arith.constant 5 : index
    %c0_36 = arith.constant 0 : index
    %c0_37 = arith.constant 0 : index
    %33 = vector.load %arg5[%c5, %c0_36, %c0_37] : memref<9x16x32xbf16, #tpu.memory_space<vmem>>, vector<1x16x32xbf16>
    %34 = vector.shape_cast %33 : vector<1x16x32xbf16> to vector<16x32xbf16>
    %cst_38 = arith.constant dense<0.000000e+00> : vector<20x32xf32>
    %35 = tpu.matmul %32, %34, %cst_38 {dimension_numbers = #tpu.dot_dimension_numbers<[1], [0], [0], [1], [0, 0, 1, 1], [], []>} : vector<20x16xbf16>, vector<16x32xbf16>, vector<20x32xf32> -> vector<20x32xf32>
    %36 = arith.addf %30, %35 : vector<20x32xf32>
    %c0_39 = arith.constant 0 : index
    %c5_40 = arith.constant 5 : index
    %c0_41 = arith.constant 0 : index
    %37 = vector.load %arg1[%c0_39, %c5_40, %c0_41] : memref<1x26x16xbf16, #tpu.memory_space<vmem>>, vector<1x20x16xbf16>
    %38 = vector.shape_cast %37 : vector<1x20x16xbf16> to vector<20x16xbf16>
    %c6 = arith.constant 6 : index
    %c0_42 = arith.constant 0 : index
    %c0_43 = arith.constant 0 : index
    %39 = vector.load %arg5[%c6, %c0_42, %c0_43] : memref<9x16x32xbf16, #tpu.memory_space<vmem>>, vector<1x16x32xbf16>
    %40 = vector.shape_cast %39 : vector<1x16x32xbf16> to vector<16x32xbf16>
    %cst_44 = arith.constant dense<0.000000e+00> : vector<20x32xf32>
    %41 = tpu.matmul %38, %40, %cst_44 {dimension_numbers = #tpu.dot_dimension_numbers<[1], [0], [0], [1], [0, 0, 1, 1], [], []>} : vector<20x16xbf16>, vector<16x32xbf16>, vector<20x32xf32> -> vector<20x32xf32>
    %42 = arith.addf %36, %41 : vector<20x32xf32>
    %c0_45 = arith.constant 0 : index
    %c5_46 = arith.constant 5 : index
    %c0_47 = arith.constant 0 : index
    %43 = vector.load %arg2[%c0_45, %c5_46, %c0_47] : memref<1x26x16xbf16, #tpu.memory_space<vmem>>, vector<1x20x16xbf16>
    %44 = vector.shape_cast %43 : vector<1x20x16xbf16> to vector<20x16xbf16>
    %c7 = arith.constant 7 : index
    %c0_48 = arith.constant 0 : index
    %c0_49 = arith.constant 0 : index
    %45 = vector.load %arg5[%c7, %c0_48, %c0_49] : memref<9x16x32xbf16, #tpu.memory_space<vmem>>, vector<1x16x32xbf16>
    %46 = vector.shape_cast %45 : vector<1x16x32xbf16> to vector<16x32xbf16>
    %cst_50 = arith.constant dense<0.000000e+00> : vector<20x32xf32>
    %47 = tpu.matmul %44, %46, %cst_50 {dimension_numbers = #tpu.dot_dimension_numbers<[1], [0], [0], [1], [0, 0, 1, 1], [], []>} : vector<20x16xbf16>, vector<16x32xbf16>, vector<20x32xf32> -> vector<20x32xf32>
    %48 = arith.addf %42, %47 : vector<20x32xf32>
    %c0_51 = arith.constant 0 : index
    %c6_52 = arith.constant 6 : index
    %c0_53 = arith.constant 0 : index
    %49 = vector.load %arg1[%c0_51, %c6_52, %c0_53] : memref<1x26x16xbf16, #tpu.memory_space<vmem>>, vector<1x20x16xbf16>
    %50 = vector.shape_cast %49 : vector<1x20x16xbf16> to vector<20x16xbf16>
    %c8 = arith.constant 8 : index
    %c0_54 = arith.constant 0 : index
    %c0_55 = arith.constant 0 : index
    %51 = vector.load %arg5[%c8, %c0_54, %c0_55] : memref<9x16x32xbf16, #tpu.memory_space<vmem>>, vector<1x16x32xbf16>
    %52 = vector.shape_cast %51 : vector<1x16x32xbf16> to vector<16x32xbf16>
    %cst_56 = arith.constant dense<0.000000e+00> : vector<20x32xf32>
    %53 = tpu.matmul %50, %52, %cst_56 {dimension_numbers = #tpu.dot_dimension_numbers<[1], [0], [0], [1], [0, 0, 1, 1], [], []>} : vector<20x16xbf16>, vector<16x32xbf16>, vector<20x32xf32> -> vector<20x32xf32>
    %54 = arith.addf %48, %53 : vector<20x32xf32>
    %55 = vector.broadcast %0 : vector<1x32xf32> to vector<20x32xf32>
    %56 = arith.mulf %54, %55 : vector<20x32xf32>
    %57 = vector.broadcast %1 : vector<1x32xf32> to vector<20x32xf32>
    %58 = arith.addf %56, %57 : vector<20x32xf32>
    %cst_57 = arith.constant 0.000000e+00 : f32
    %59 = vector.broadcast %cst_57 : f32 to vector<20x32xf32>
    %60 = arith.maximumf %58, %59 : vector<20x32xf32>
    %61 = arith.truncf %60 : vector<20x32xf32> to vector<20x32xbf16>
    %c0_58 = arith.constant 0 : index
    %c0_59 = arith.constant 0 : index
    %c0_60 = arith.constant 0 : index
    %62 = vector.load %arg8[%c0_58, %c0_59, %c0_60] : memref<1x20x32xbf16, #tpu.memory_space<vmem>>, vector<1x20x32xbf16>
    %63 = vector.shape_cast %62 : vector<1x20x32xbf16> to vector<20x32xbf16>
    %64 = vector.shape_cast %61 : vector<20x32xbf16> to vector<1x20x32xbf16>
    tpu.vector_store %arg8[%c0_58, %c0_59, %c0_60], %64 {strides = array<i32>} : memref<1x20x32xbf16, #tpu.memory_space<vmem>>, vector<1x20x32xbf16>,
    return
  }
  func.func @transform_0(%arg0: i32) -> (i32, i32, i32) {
    %c0_i32 = arith.constant 0 : i32
    %c0_i32_0 = arith.constant 0 : i32
    %c0_i32_1 = arith.constant 0 : i32
    return %arg0, %c0_i32, %c0_i32_0 : i32, i32, i32
  }
  func.func @transform_1(%arg0: i32) -> (i32, i32, i32) {
    %c0_i32 = arith.constant 0 : i32
    %c0_i32_0 = arith.constant 0 : i32
    %c0_i32_1 = arith.constant 0 : i32
    return %arg0, %c0_i32, %c0_i32_0 : i32, i32, i32
  }
  func.func @transform_2(%arg0: i32) -> (i32, i32, i32) {
    %c0_i32 = arith.constant 0 : i32
    %c0_i32_0 = arith.constant 0 : i32
    %c0_i32_1 = arith.constant 0 : i32
    return %arg0, %c0_i32, %c0_i32_0 : i32, i32, i32
  }
  func.func @transform_3(%arg0: i32) -> (i32, i32, i32) {
    %c0_i32 = arith.constant 0 : i32
    %c0_i32_0 = arith.constant 0 : i32
    %c0_i32_1 = arith.constant 0 : i32
    return %arg0, %c0_i32, %c0_i32_0 : i32, i32, i32
  }
  func.func @transform_4(%arg0: i32) -> (i32, i32, i32) {
    %c0_i32 = arith.constant 0 : i32
    %c0_i32_0 = arith.constant 0 : i32
    %c0_i32_1 = arith.constant 0 : i32
    %c0_i32_2 = arith.constant 0 : i32
    return %c0_i32, %c0_i32_0, %c0_i32_1 : i32, i32, i32
  }
  func.func @transform_5(%arg0: i32) -> (i32, i32) {
    %c0_i32 = arith.constant 0 : i32
    %c0_i32_0 = arith.constant 0 : i32
    %c0_i32_1 = arith.constant 0 : i32
    return %c0_i32, %c0_i32_0 : i32, i32
  }
  func.func @transform_6(%arg0: i32) -> (i32, i32) {
    %c0_i32 = arith.constant 0 : i32
    %c0_i32_0 = arith.constant 0 : i32
    %c0_i32_1 = arith.constant 0 : i32
    return %c0_i32, %c0_i32_0 : i32, i32
  }
  func.func @transform_7(%arg0: i32) -> (i32, i32, i32) {
    %c0_i32 = arith.constant 0 : i32
    %c0_i32_0 = arith.constant 0 : i32
    %c0_i32_1 = arith.constant 0 : i32
    return %arg0, %c0_i32, %c0_i32_0 : i32, i32, i32
  }
}

module attributes {stable_mosaic.version = 11 : i64} {
  func.func @_conv_kernel(%arg0: i32, %arg1: memref<1x38x32xbf16, #tpu.memory_space<vmem>>, %arg2: memref<9x32x32xbf16, #tpu.memory_space<vmem>>, %arg3: memref<1x32xf32, #tpu.memory_space<vmem>>, %arg4: memref<1x32xf32, #tpu.memory_space<vmem>>, %arg5: memref<1x24x32xbf16, #tpu.memory_space<vmem>>) attributes {dimension_semantics = [#tpu.dimension_semantics<parallel>], iteration_bounds = array<i64: 2>, scalar_prefetch = 0 : i64, scratch_operands = 0 : i64, tpu.core_type = #tpu.core_type<tc>, window_params = [{transform_indices = @transform_0, window_bounds = array<i64: 1, 38, 32>}, {pipeline_mode = #tpu.pipeline_mode<synchronous>, transform_indices = @transform_1, window_bounds = array<i64: 9, 32, 32>}, {pipeline_mode = #tpu.pipeline_mode<synchronous>, transform_indices = @transform_2, window_bounds = array<i64: 1, 32>}, {pipeline_mode = #tpu.pipeline_mode<synchronous>, transform_indices = @transform_3, window_bounds = array<i64: 1, 32>}, {transform_indices = @transform_4, window_bounds = array<i64: 1, 24, 32>}]} {
    %c0 = arith.constant 0 : index
    %c0_0 = arith.constant 0 : index
    %0 = vector.load %arg3[%c0, %c0_0] : memref<1x32xf32, #tpu.memory_space<vmem>>, vector<1x32xf32>
    %c0_1 = arith.constant 0 : index
    %c0_2 = arith.constant 0 : index
    %1 = vector.load %arg4[%c0_1, %c0_2] : memref<1x32xf32, #tpu.memory_space<vmem>>, vector<1x32xf32>
    %c0_3 = arith.constant 0 : index
    %c0_4 = arith.constant 0 : index
    %c0_5 = arith.constant 0 : index
    %2 = vector.load %arg1[%c0_3, %c0_4, %c0_5] : memref<1x38x32xbf16, #tpu.memory_space<vmem>>, vector<1x24x32xbf16>
    %3 = vector.shape_cast %2 : vector<1x24x32xbf16> to vector<24x32xbf16>
    %c0_6 = arith.constant 0 : index
    %c0_7 = arith.constant 0 : index
    %c0_8 = arith.constant 0 : index
    %4 = vector.load %arg2[%c0_6, %c0_7, %c0_8] : memref<9x32x32xbf16, #tpu.memory_space<vmem>>, vector<1x32x32xbf16>
    %5 = vector.shape_cast %4 : vector<1x32x32xbf16> to vector<32x32xbf16>
    %cst = arith.constant dense<0.000000e+00> : vector<24x32xf32>
    %6 = tpu.matmul %3, %5, %cst {dimension_numbers = #tpu.dot_dimension_numbers<[1], [0], [0], [1], [0, 0, 1, 1], [], []>} : vector<24x32xbf16>, vector<32x32xbf16>, vector<24x32xf32> -> vector<24x32xf32>
    %c0_9 = arith.constant 0 : index
    %c1 = arith.constant 1 : index
    %c0_10 = arith.constant 0 : index
    %7 = vector.load %arg1[%c0_9, %c1, %c0_10] : memref<1x38x32xbf16, #tpu.memory_space<vmem>>, vector<1x24x32xbf16>
    %8 = vector.shape_cast %7 : vector<1x24x32xbf16> to vector<24x32xbf16>
    %c1_11 = arith.constant 1 : index
    %c0_12 = arith.constant 0 : index
    %c0_13 = arith.constant 0 : index
    %9 = vector.load %arg2[%c1_11, %c0_12, %c0_13] : memref<9x32x32xbf16, #tpu.memory_space<vmem>>, vector<1x32x32xbf16>
    %10 = vector.shape_cast %9 : vector<1x32x32xbf16> to vector<32x32xbf16>
    %cst_14 = arith.constant dense<0.000000e+00> : vector<24x32xf32>
    %11 = tpu.matmul %8, %10, %cst_14 {dimension_numbers = #tpu.dot_dimension_numbers<[1], [0], [0], [1], [0, 0, 1, 1], [], []>} : vector<24x32xbf16>, vector<32x32xbf16>, vector<24x32xf32> -> vector<24x32xf32>
    %12 = arith.addf %6, %11 : vector<24x32xf32>
    %c0_15 = arith.constant 0 : index
    %c2 = arith.constant 2 : index
    %c0_16 = arith.constant 0 : index
    %13 = vector.load %arg1[%c0_15, %c2, %c0_16] : memref<1x38x32xbf16, #tpu.memory_space<vmem>>, vector<1x24x32xbf16>
    %14 = vector.shape_cast %13 : vector<1x24x32xbf16> to vector<24x32xbf16>
    %c2_17 = arith.constant 2 : index
    %c0_18 = arith.constant 0 : index
    %c0_19 = arith.constant 0 : index
    %15 = vector.load %arg2[%c2_17, %c0_18, %c0_19] : memref<9x32x32xbf16, #tpu.memory_space<vmem>>, vector<1x32x32xbf16>
    %16 = vector.shape_cast %15 : vector<1x32x32xbf16> to vector<32x32xbf16>
    %cst_20 = arith.constant dense<0.000000e+00> : vector<24x32xf32>
    %17 = tpu.matmul %14, %16, %cst_20 {dimension_numbers = #tpu.dot_dimension_numbers<[1], [0], [0], [1], [0, 0, 1, 1], [], []>} : vector<24x32xbf16>, vector<32x32xbf16>, vector<24x32xf32> -> vector<24x32xf32>
    %18 = arith.addf %12, %17 : vector<24x32xf32>
    %c0_21 = arith.constant 0 : index
    %c6 = arith.constant 6 : index
    %c0_22 = arith.constant 0 : index
    %19 = vector.load %arg1[%c0_21, %c6, %c0_22] : memref<1x38x32xbf16, #tpu.memory_space<vmem>>, vector<1x24x32xbf16>
    %20 = vector.shape_cast %19 : vector<1x24x32xbf16> to vector<24x32xbf16>
    %c3 = arith.constant 3 : index
    %c0_23 = arith.constant 0 : index
    %c0_24 = arith.constant 0 : index
    %21 = vector.load %arg2[%c3, %c0_23, %c0_24] : memref<9x32x32xbf16, #tpu.memory_space<vmem>>, vector<1x32x32xbf16>
    %22 = vector.shape_cast %21 : vector<1x32x32xbf16> to vector<32x32xbf16>
    %cst_25 = arith.constant dense<0.000000e+00> : vector<24x32xf32>
    %23 = tpu.matmul %20, %22, %cst_25 {dimension_numbers = #tpu.dot_dimension_numbers<[1], [0], [0], [1], [0, 0, 1, 1], [], []>} : vector<24x32xbf16>, vector<32x32xbf16>, vector<24x32xf32> -> vector<24x32xf32>
    %24 = arith.addf %18, %23 : vector<24x32xf32>
    %c0_26 = arith.constant 0 : index
    %c7 = arith.constant 7 : index
    %c0_27 = arith.constant 0 : index
    %25 = vector.load %arg1[%c0_26, %c7, %c0_27] : memref<1x38x32xbf16, #tpu.memory_space<vmem>>, vector<1x24x32xbf16>
    %26 = vector.shape_cast %25 : vector<1x24x32xbf16> to vector<24x32xbf16>
    %c4 = arith.constant 4 : index
    %c0_28 = arith.constant 0 : index
    %c0_29 = arith.constant 0 : index
    %27 = vector.load %arg2[%c4, %c0_28, %c0_29] : memref<9x32x32xbf16, #tpu.memory_space<vmem>>, vector<1x32x32xbf16>
    %28 = vector.shape_cast %27 : vector<1x32x32xbf16> to vector<32x32xbf16>
    %cst_30 = arith.constant dense<0.000000e+00> : vector<24x32xf32>
    %29 = tpu.matmul %26, %28, %cst_30 {dimension_numbers = #tpu.dot_dimension_numbers<[1], [0], [0], [1], [0, 0, 1, 1], [], []>} : vector<24x32xbf16>, vector<32x32xbf16>, vector<24x32xf32> -> vector<24x32xf32>
    %30 = arith.addf %24, %29 : vector<24x32xf32>
    %c0_31 = arith.constant 0 : index
    %c8 = arith.constant 8 : index
    %c0_32 = arith.constant 0 : index
    %31 = vector.load %arg1[%c0_31, %c8, %c0_32] : memref<1x38x32xbf16, #tpu.memory_space<vmem>>, vector<1x24x32xbf16>
    %32 = vector.shape_cast %31 : vector<1x24x32xbf16> to vector<24x32xbf16>
    %c5 = arith.constant 5 : index
    %c0_33 = arith.constant 0 : index
    %c0_34 = arith.constant 0 : index
    %33 = vector.load %arg2[%c5, %c0_33, %c0_34] : memref<9x32x32xbf16, #tpu.memory_space<vmem>>, vector<1x32x32xbf16>
    %34 = vector.shape_cast %33 : vector<1x32x32xbf16> to vector<32x32xbf16>
    %cst_35 = arith.constant dense<0.000000e+00> : vector<24x32xf32>
    %35 = tpu.matmul %32, %34, %cst_35 {dimension_numbers = #tpu.dot_dimension_numbers<[1], [0], [0], [1], [0, 0, 1, 1], [], []>} : vector<24x32xbf16>, vector<32x32xbf16>, vector<24x32xf32> -> vector<24x32xf32>
    %36 = arith.addf %30, %35 : vector<24x32xf32>
    %c0_36 = arith.constant 0 : index
    %c12 = arith.constant 12 : index
    %c0_37 = arith.constant 0 : index
    %37 = vector.load %arg1[%c0_36, %c12, %c0_37] : memref<1x38x32xbf16, #tpu.memory_space<vmem>>, vector<1x24x32xbf16>
    %38 = vector.shape_cast %37 : vector<1x24x32xbf16> to vector<24x32xbf16>
    %c6_38 = arith.constant 6 : index
    %c0_39 = arith.constant 0 : index
    %c0_40 = arith.constant 0 : index
    %39 = vector.load %arg2[%c6_38, %c0_39, %c0_40] : memref<9x32x32xbf16, #tpu.memory_space<vmem>>, vector<1x32x32xbf16>
    %40 = vector.shape_cast %39 : vector<1x32x32xbf16> to vector<32x32xbf16>
    %cst_41 = arith.constant dense<0.000000e+00> : vector<24x32xf32>
    %41 = tpu.matmul %38, %40, %cst_41 {dimension_numbers = #tpu.dot_dimension_numbers<[1], [0], [0], [1], [0, 0, 1, 1], [], []>} : vector<24x32xbf16>, vector<32x32xbf16>, vector<24x32xf32> -> vector<24x32xf32>
    %42 = arith.addf %36, %41 : vector<24x32xf32>
    %c0_42 = arith.constant 0 : index
    %c13 = arith.constant 13 : index
    %c0_43 = arith.constant 0 : index
    %43 = vector.load %arg1[%c0_42, %c13, %c0_43] : memref<1x38x32xbf16, #tpu.memory_space<vmem>>, vector<1x24x32xbf16>
    %44 = vector.shape_cast %43 : vector<1x24x32xbf16> to vector<24x32xbf16>
    %c7_44 = arith.constant 7 : index
    %c0_45 = arith.constant 0 : index
    %c0_46 = arith.constant 0 : index
    %45 = vector.load %arg2[%c7_44, %c0_45, %c0_46] : memref<9x32x32xbf16, #tpu.memory_space<vmem>>, vector<1x32x32xbf16>
    %46 = vector.shape_cast %45 : vector<1x32x32xbf16> to vector<32x32xbf16>
    %cst_47 = arith.constant dense<0.000000e+00> : vector<24x32xf32>
    %47 = tpu.matmul %44, %46, %cst_47 {dimension_numbers = #tpu.dot_dimension_numbers<[1], [0], [0], [1], [0, 0, 1, 1], [], []>} : vector<24x32xbf16>, vector<32x32xbf16>, vector<24x32xf32> -> vector<24x32xf32>
    %48 = arith.addf %42, %47 : vector<24x32xf32>
    %c0_48 = arith.constant 0 : index
    %c14 = arith.constant 14 : index
    %c0_49 = arith.constant 0 : index
    %49 = vector.load %arg1[%c0_48, %c14, %c0_49] : memref<1x38x32xbf16, #tpu.memory_space<vmem>>, vector<1x24x32xbf16>
    %50 = vector.shape_cast %49 : vector<1x24x32xbf16> to vector<24x32xbf16>
    %c8_50 = arith.constant 8 : index
    %c0_51 = arith.constant 0 : index
    %c0_52 = arith.constant 0 : index
    %51 = vector.load %arg2[%c8_50, %c0_51, %c0_52] : memref<9x32x32xbf16, #tpu.memory_space<vmem>>, vector<1x32x32xbf16>
    %52 = vector.shape_cast %51 : vector<1x32x32xbf16> to vector<32x32xbf16>
    %cst_53 = arith.constant dense<0.000000e+00> : vector<24x32xf32>
    %53 = tpu.matmul %50, %52, %cst_53 {dimension_numbers = #tpu.dot_dimension_numbers<[1], [0], [0], [1], [0, 0, 1, 1], [], []>} : vector<24x32xbf16>, vector<32x32xbf16>, vector<24x32xf32> -> vector<24x32xf32>
    %54 = arith.addf %48, %53 : vector<24x32xf32>
    %55 = vector.broadcast %0 : vector<1x32xf32> to vector<24x32xf32>
    %56 = arith.mulf %54, %55 : vector<24x32xf32>
    %57 = vector.broadcast %1 : vector<1x32xf32> to vector<24x32xf32>
    %58 = arith.addf %56, %57 : vector<24x32xf32>
    %cst_54 = arith.constant 0.000000e+00 : f32
    %59 = vector.broadcast %cst_54 : f32 to vector<24x32xf32>
    %60 = arith.maximumf %58, %59 : vector<24x32xf32>
    %61 = arith.truncf %60 : vector<24x32xf32> to vector<24x32xbf16>
    %c0_55 = arith.constant 0 : index
    %c0_56 = arith.constant 0 : index
    %c0_57 = arith.constant 0 : index
    %62 = vector.load %arg5[%c0_55, %c0_56, %c0_57] : memref<1x24x32xbf16, #tpu.memory_space<vmem>>, vector<1x24x32xbf16>
    %63 = vector.shape_cast %62 : vector<1x24x32xbf16> to vector<24x32xbf16>
    %64 = vector.shape_cast %61 : vector<24x32xbf16> to vector<1x24x32xbf16>
    tpu.vector_store %arg5[%c0_55, %c0_56, %c0_57], %64 {strides = array<i32>} : memref<1x24x32xbf16, #tpu.memory_space<vmem>>, vector<1x24x32xbf16>,
    return
  }
  func.func @transform_0(%arg0: i32) -> (i32, i32, i32) {
    %c0_i32 = arith.constant 0 : i32
    %c0_i32_0 = arith.constant 0 : i32
    %c0_i32_1 = arith.constant 0 : i32
    return %arg0, %c0_i32, %c0_i32_0 : i32, i32, i32
  }
  func.func @transform_1(%arg0: i32) -> (i32, i32, i32) {
    %c0_i32 = arith.constant 0 : i32
    %c0_i32_0 = arith.constant 0 : i32
    %c0_i32_1 = arith.constant 0 : i32
    %c0_i32_2 = arith.constant 0 : i32
    return %c0_i32, %c0_i32_0, %c0_i32_1 : i32, i32, i32
  }
  func.func @transform_2(%arg0: i32) -> (i32, i32) {
    %c0_i32 = arith.constant 0 : i32
    %c0_i32_0 = arith.constant 0 : i32
    %c0_i32_1 = arith.constant 0 : i32
    return %c0_i32, %c0_i32_0 : i32, i32
  }
  func.func @transform_3(%arg0: i32) -> (i32, i32) {
    %c0_i32 = arith.constant 0 : i32
    %c0_i32_0 = arith.constant 0 : i32
    %c0_i32_1 = arith.constant 0 : i32
    return %c0_i32, %c0_i32_0 : i32, i32
  }
  func.func @transform_4(%arg0: i32) -> (i32, i32, i32) {
    %c0_i32 = arith.constant 0 : i32
    %c0_i32_0 = arith.constant 0 : i32
    %c0_i32_1 = arith.constant 0 : i32
    return %arg0, %c0_i32, %c0_i32_0 : i32, i32, i32
  }
}

module attributes {stable_mosaic.version = 11 : i64} {
  func.func @_conv_kernel(%arg0: i32, %arg1: memref<1x10x32xbf16, #tpu.memory_space<vmem>>, %arg2: memref<1x10x32xbf16, #tpu.memory_space<vmem>>, %arg3: memref<1x10x32xbf16, #tpu.memory_space<vmem>>, %arg4: memref<1x10x32xbf16, #tpu.memory_space<vmem>>, %arg5: memref<9x32x64xbf16, #tpu.memory_space<vmem>>, %arg6: memref<1x64xf32, #tpu.memory_space<vmem>>, %arg7: memref<1x64xf32, #tpu.memory_space<vmem>>, %arg8: memref<1x6x64xbf16, #tpu.memory_space<vmem>>) attributes {dimension_semantics = [#tpu.dimension_semantics<parallel>], iteration_bounds = array<i64: 2>, scalar_prefetch = 0 : i64, scratch_operands = 0 : i64, tpu.core_type = #tpu.core_type<tc>, window_params = [{transform_indices = @transform_0, window_bounds = array<i64: 1, 10, 32>}, {transform_indices = @transform_1, window_bounds = array<i64: 1, 10, 32>}, {transform_indices = @transform_2, window_bounds = array<i64: 1, 10, 32>}, {transform_indices = @transform_3, window_bounds = array<i64: 1, 10, 32>}, {pipeline_mode = #tpu.pipeline_mode<synchronous>, transform_indices = @transform_4, window_bounds = array<i64: 9, 32, 64>}, {pipeline_mode = #tpu.pipeline_mode<synchronous>, transform_indices = @transform_5, window_bounds = array<i64: 1, 64>}, {pipeline_mode = #tpu.pipeline_mode<synchronous>, transform_indices = @transform_6, window_bounds = array<i64: 1, 64>}, {transform_indices = @transform_7, window_bounds = array<i64: 1, 6, 64>}]} {
    %c0 = arith.constant 0 : index
    %c0_0 = arith.constant 0 : index
    %0 = vector.load %arg6[%c0, %c0_0] : memref<1x64xf32, #tpu.memory_space<vmem>>, vector<1x64xf32>
    %c0_1 = arith.constant 0 : index
    %c0_2 = arith.constant 0 : index
    %1 = vector.load %arg7[%c0_1, %c0_2] : memref<1x64xf32, #tpu.memory_space<vmem>>, vector<1x64xf32>
    %c0_3 = arith.constant 0 : index
    %c0_4 = arith.constant 0 : index
    %c0_5 = arith.constant 0 : index
    %2 = vector.load %arg1[%c0_3, %c0_4, %c0_5] : memref<1x10x32xbf16, #tpu.memory_space<vmem>>, vector<1x6x32xbf16>
    %3 = vector.shape_cast %2 : vector<1x6x32xbf16> to vector<6x32xbf16>
    %c0_6 = arith.constant 0 : index
    %c0_7 = arith.constant 0 : index
    %c0_8 = arith.constant 0 : index
    %4 = vector.load %arg5[%c0_6, %c0_7, %c0_8] : memref<9x32x64xbf16, #tpu.memory_space<vmem>>, vector<1x32x64xbf16>
    %5 = vector.shape_cast %4 : vector<1x32x64xbf16> to vector<32x64xbf16>
    %cst = arith.constant dense<0.000000e+00> : vector<6x64xf32>
    %6 = tpu.matmul %3, %5, %cst {dimension_numbers = #tpu.dot_dimension_numbers<[1], [0], [0], [1], [0, 0, 1, 1], [], []>} : vector<6x32xbf16>, vector<32x64xbf16>, vector<6x64xf32> -> vector<6x64xf32>
    %c0_9 = arith.constant 0 : index
    %c0_10 = arith.constant 0 : index
    %c0_11 = arith.constant 0 : index
    %7 = vector.load %arg2[%c0_9, %c0_10, %c0_11] : memref<1x10x32xbf16, #tpu.memory_space<vmem>>, vector<1x6x32xbf16>
    %8 = vector.shape_cast %7 : vector<1x6x32xbf16> to vector<6x32xbf16>
    %c1 = arith.constant 1 : index
    %c0_12 = arith.constant 0 : index
    %c0_13 = arith.constant 0 : index
    %9 = vector.load %arg5[%c1, %c0_12, %c0_13] : memref<9x32x64xbf16, #tpu.memory_space<vmem>>, vector<1x32x64xbf16>
    %10 = vector.shape_cast %9 : vector<1x32x64xbf16> to vector<32x64xbf16>
    %cst_14 = arith.constant dense<0.000000e+00> : vector<6x64xf32>
    %11 = tpu.matmul %8, %10, %cst_14 {dimension_numbers = #tpu.dot_dimension_numbers<[1], [0], [0], [1], [0, 0, 1, 1], [], []>} : vector<6x32xbf16>, vector<32x64xbf16>, vector<6x64xf32> -> vector<6x64xf32>
    %12 = arith.addf %6, %11 : vector<6x64xf32>
    %c0_15 = arith.constant 0 : index
    %c1_16 = arith.constant 1 : index
    %c0_17 = arith.constant 0 : index
    %13 = vector.load %arg1[%c0_15, %c1_16, %c0_17] : memref<1x10x32xbf16, #tpu.memory_space<vmem>>, vector<1x6x32xbf16>
    %14 = vector.shape_cast %13 : vector<1x6x32xbf16> to vector<6x32xbf16>
    %c2 = arith.constant 2 : index
    %c0_18 = arith.constant 0 : index
    %c0_19 = arith.constant 0 : index
    %15 = vector.load %arg5[%c2, %c0_18, %c0_19] : memref<9x32x64xbf16, #tpu.memory_space<vmem>>, vector<1x32x64xbf16>
    %16 = vector.shape_cast %15 : vector<1x32x64xbf16> to vector<32x64xbf16>
    %cst_20 = arith.constant dense<0.000000e+00> : vector<6x64xf32>
    %17 = tpu.matmul %14, %16, %cst_20 {dimension_numbers = #tpu.dot_dimension_numbers<[1], [0], [0], [1], [0, 0, 1, 1], [], []>} : vector<6x32xbf16>, vector<32x64xbf16>, vector<6x64xf32> -> vector<6x64xf32>
    %18 = arith.addf %12, %17 : vector<6x64xf32>
    %c0_21 = arith.constant 0 : index
    %c0_22 = arith.constant 0 : index
    %c0_23 = arith.constant 0 : index
    %19 = vector.load %arg3[%c0_21, %c0_22, %c0_23] : memref<1x10x32xbf16, #tpu.memory_space<vmem>>, vector<1x6x32xbf16>
    %20 = vector.shape_cast %19 : vector<1x6x32xbf16> to vector<6x32xbf16>
    %c3 = arith.constant 3 : index
    %c0_24 = arith.constant 0 : index
    %c0_25 = arith.constant 0 : index
    %21 = vector.load %arg5[%c3, %c0_24, %c0_25] : memref<9x32x64xbf16, #tpu.memory_space<vmem>>, vector<1x32x64xbf16>
    %22 = vector.shape_cast %21 : vector<1x32x64xbf16> to vector<32x64xbf16>
    %cst_26 = arith.constant dense<0.000000e+00> : vector<6x64xf32>
    %23 = tpu.matmul %20, %22, %cst_26 {dimension_numbers = #tpu.dot_dimension_numbers<[1], [0], [0], [1], [0, 0, 1, 1], [], []>} : vector<6x32xbf16>, vector<32x64xbf16>, vector<6x64xf32> -> vector<6x64xf32>
    %24 = arith.addf %18, %23 : vector<6x64xf32>
    %c0_27 = arith.constant 0 : index
    %c0_28 = arith.constant 0 : index
    %c0_29 = arith.constant 0 : index
    %25 = vector.load %arg4[%c0_27, %c0_28, %c0_29] : memref<1x10x32xbf16, #tpu.memory_space<vmem>>, vector<1x6x32xbf16>
    %26 = vector.shape_cast %25 : vector<1x6x32xbf16> to vector<6x32xbf16>
    %c4 = arith.constant 4 : index
    %c0_30 = arith.constant 0 : index
    %c0_31 = arith.constant 0 : index
    %27 = vector.load %arg5[%c4, %c0_30, %c0_31] : memref<9x32x64xbf16, #tpu.memory_space<vmem>>, vector<1x32x64xbf16>
    %28 = vector.shape_cast %27 : vector<1x32x64xbf16> to vector<32x64xbf16>
    %cst_32 = arith.constant dense<0.000000e+00> : vector<6x64xf32>
    %29 = tpu.matmul %26, %28, %cst_32 {dimension_numbers = #tpu.dot_dimension_numbers<[1], [0], [0], [1], [0, 0, 1, 1], [], []>} : vector<6x32xbf16>, vector<32x64xbf16>, vector<6x64xf32> -> vector<6x64xf32>
    %30 = arith.addf %24, %29 : vector<6x64xf32>
    %c0_33 = arith.constant 0 : index
    %c1_34 = arith.constant 1 : index
    %c0_35 = arith.constant 0 : index
    %31 = vector.load %arg3[%c0_33, %c1_34, %c0_35] : memref<1x10x32xbf16, #tpu.memory_space<vmem>>, vector<1x6x32xbf16>
    %32 = vector.shape_cast %31 : vector<1x6x32xbf16> to vector<6x32xbf16>
    %c5 = arith.constant 5 : index
    %c0_36 = arith.constant 0 : index
    %c0_37 = arith.constant 0 : index
    %33 = vector.load %arg5[%c5, %c0_36, %c0_37] : memref<9x32x64xbf16, #tpu.memory_space<vmem>>, vector<1x32x64xbf16>
    %34 = vector.shape_cast %33 : vector<1x32x64xbf16> to vector<32x64xbf16>
    %cst_38 = arith.constant dense<0.000000e+00> : vector<6x64xf32>
    %35 = tpu.matmul %32, %34, %cst_38 {dimension_numbers = #tpu.dot_dimension_numbers<[1], [0], [0], [1], [0, 0, 1, 1], [], []>} : vector<6x32xbf16>, vector<32x64xbf16>, vector<6x64xf32> -> vector<6x64xf32>
    %36 = arith.addf %30, %35 : vector<6x64xf32>
    %c0_39 = arith.constant 0 : index
    %c3_40 = arith.constant 3 : index
    %c0_41 = arith.constant 0 : index
    %37 = vector.load %arg1[%c0_39, %c3_40, %c0_41] : memref<1x10x32xbf16, #tpu.memory_space<vmem>>, vector<1x6x32xbf16>
    %38 = vector.shape_cast %37 : vector<1x6x32xbf16> to vector<6x32xbf16>
    %c6 = arith.constant 6 : index
    %c0_42 = arith.constant 0 : index
    %c0_43 = arith.constant 0 : index
    %39 = vector.load %arg5[%c6, %c0_42, %c0_43] : memref<9x32x64xbf16, #tpu.memory_space<vmem>>, vector<1x32x64xbf16>
    %40 = vector.shape_cast %39 : vector<1x32x64xbf16> to vector<32x64xbf16>
    %cst_44 = arith.constant dense<0.000000e+00> : vector<6x64xf32>
    %41 = tpu.matmul %38, %40, %cst_44 {dimension_numbers = #tpu.dot_dimension_numbers<[1], [0], [0], [1], [0, 0, 1, 1], [], []>} : vector<6x32xbf16>, vector<32x64xbf16>, vector<6x64xf32> -> vector<6x64xf32>
    %42 = arith.addf %36, %41 : vector<6x64xf32>
    %c0_45 = arith.constant 0 : index
    %c3_46 = arith.constant 3 : index
    %c0_47 = arith.constant 0 : index
    %43 = vector.load %arg2[%c0_45, %c3_46, %c0_47] : memref<1x10x32xbf16, #tpu.memory_space<vmem>>, vector<1x6x32xbf16>
    %44 = vector.shape_cast %43 : vector<1x6x32xbf16> to vector<6x32xbf16>
    %c7 = arith.constant 7 : index
    %c0_48 = arith.constant 0 : index
    %c0_49 = arith.constant 0 : index
    %45 = vector.load %arg5[%c7, %c0_48, %c0_49] : memref<9x32x64xbf16, #tpu.memory_space<vmem>>, vector<1x32x64xbf16>
    %46 = vector.shape_cast %45 : vector<1x32x64xbf16> to vector<32x64xbf16>
    %cst_50 = arith.constant dense<0.000000e+00> : vector<6x64xf32>
    %47 = tpu.matmul %44, %46, %cst_50 {dimension_numbers = #tpu.dot_dimension_numbers<[1], [0], [0], [1], [0, 0, 1, 1], [], []>} : vector<6x32xbf16>, vector<32x64xbf16>, vector<6x64xf32> -> vector<6x64xf32>
    %48 = arith.addf %42, %47 : vector<6x64xf32>
    %c0_51 = arith.constant 0 : index
    %c4_52 = arith.constant 4 : index
    %c0_53 = arith.constant 0 : index
    %49 = vector.load %arg1[%c0_51, %c4_52, %c0_53] : memref<1x10x32xbf16, #tpu.memory_space<vmem>>, vector<1x6x32xbf16>
    %50 = vector.shape_cast %49 : vector<1x6x32xbf16> to vector<6x32xbf16>
    %c8 = arith.constant 8 : index
    %c0_54 = arith.constant 0 : index
    %c0_55 = arith.constant 0 : index
    %51 = vector.load %arg5[%c8, %c0_54, %c0_55] : memref<9x32x64xbf16, #tpu.memory_space<vmem>>, vector<1x32x64xbf16>
    %52 = vector.shape_cast %51 : vector<1x32x64xbf16> to vector<32x64xbf16>
    %cst_56 = arith.constant dense<0.000000e+00> : vector<6x64xf32>
    %53 = tpu.matmul %50, %52, %cst_56 {dimension_numbers = #tpu.dot_dimension_numbers<[1], [0], [0], [1], [0, 0, 1, 1], [], []>} : vector<6x32xbf16>, vector<32x64xbf16>, vector<6x64xf32> -> vector<6x64xf32>
    %54 = arith.addf %48, %53 : vector<6x64xf32>
    %55 = vector.broadcast %0 : vector<1x64xf32> to vector<6x64xf32>
    %56 = arith.mulf %54, %55 : vector<6x64xf32>
    %57 = vector.broadcast %1 : vector<1x64xf32> to vector<6x64xf32>
    %58 = arith.addf %56, %57 : vector<6x64xf32>
    %cst_57 = arith.constant 0.000000e+00 : f32
    %59 = vector.broadcast %cst_57 : f32 to vector<6x64xf32>
    %60 = arith.maximumf %58, %59 : vector<6x64xf32>
    %61 = arith.truncf %60 : vector<6x64xf32> to vector<6x64xbf16>
    %c0_58 = arith.constant 0 : index
    %c0_59 = arith.constant 0 : index
    %c0_60 = arith.constant 0 : index
    %62 = vector.load %arg8[%c0_58, %c0_59, %c0_60] : memref<1x6x64xbf16, #tpu.memory_space<vmem>>, vector<1x6x64xbf16>
    %63 = vector.shape_cast %62 : vector<1x6x64xbf16> to vector<6x64xbf16>
    %64 = vector.shape_cast %61 : vector<6x64xbf16> to vector<1x6x64xbf16>
    tpu.vector_store %arg8[%c0_58, %c0_59, %c0_60], %64 {strides = array<i32>} : memref<1x6x64xbf16, #tpu.memory_space<vmem>>, vector<1x6x64xbf16>,
    return
  }
  func.func @transform_0(%arg0: i32) -> (i32, i32, i32) {
    %c0_i32 = arith.constant 0 : i32
    %c0_i32_0 = arith.constant 0 : i32
    %c0_i32_1 = arith.constant 0 : i32
    return %arg0, %c0_i32, %c0_i32_0 : i32, i32, i32
  }
  func.func @transform_1(%arg0: i32) -> (i32, i32, i32) {
    %c0_i32 = arith.constant 0 : i32
    %c0_i32_0 = arith.constant 0 : i32
    %c0_i32_1 = arith.constant 0 : i32
    return %arg0, %c0_i32, %c0_i32_0 : i32, i32, i32
  }
  func.func @transform_2(%arg0: i32) -> (i32, i32, i32) {
    %c0_i32 = arith.constant 0 : i32
    %c0_i32_0 = arith.constant 0 : i32
    %c0_i32_1 = arith.constant 0 : i32
    return %arg0, %c0_i32, %c0_i32_0 : i32, i32, i32
  }
  func.func @transform_3(%arg0: i32) -> (i32, i32, i32) {
    %c0_i32 = arith.constant 0 : i32
    %c0_i32_0 = arith.constant 0 : i32
    %c0_i32_1 = arith.constant 0 : i32
    return %arg0, %c0_i32, %c0_i32_0 : i32, i32, i32
  }
  func.func @transform_4(%arg0: i32) -> (i32, i32, i32) {
    %c0_i32 = arith.constant 0 : i32
    %c0_i32_0 = arith.constant 0 : i32
    %c0_i32_1 = arith.constant 0 : i32
    %c0_i32_2 = arith.constant 0 : i32
    return %c0_i32, %c0_i32_0, %c0_i32_1 : i32, i32, i32
  }
  func.func @transform_5(%arg0: i32) -> (i32, i32) {
    %c0_i32 = arith.constant 0 : i32
    %c0_i32_0 = arith.constant 0 : i32
    %c0_i32_1 = arith.constant 0 : i32
    return %c0_i32, %c0_i32_0 : i32, i32
  }
  func.func @transform_6(%arg0: i32) -> (i32, i32) {
    %c0_i32 = arith.constant 0 : i32
    %c0_i32_0 = arith.constant 0 : i32
    %c0_i32_1 = arith.constant 0 : i32
    return %c0_i32, %c0_i32_0 : i32, i32
  }
  func.func @transform_7(%arg0: i32) -> (i32, i32, i32) {
    %c0_i32 = arith.constant 0 : i32
    %c0_i32_0 = arith.constant 0 : i32
    %c0_i32_1 = arith.constant 0 : i32
    return %arg0, %c0_i32, %c0_i32_0 : i32, i32, i32
  }
}

module attributes {stable_mosaic.version = 11 : i64} {
  func.func @_conv_kernel(%arg0: i32, %arg1: memref<1x18x64xbf16, #tpu.memory_space<vmem>>, %arg2: memref<9x64x64xbf16, #tpu.memory_space<vmem>>, %arg3: memref<1x64xf32, #tpu.memory_space<vmem>>, %arg4: memref<1x64xf32, #tpu.memory_space<vmem>>, %arg5: memref<1x8x64xbf16, #tpu.memory_space<vmem>>) attributes {dimension_semantics = [#tpu.dimension_semantics<parallel>], iteration_bounds = array<i64: 2>, scalar_prefetch = 0 : i64, scratch_operands = 0 : i64, tpu.core_type = #tpu.core_type<tc>, window_params = [{transform_indices = @transform_0, window_bounds = array<i64: 1, 18, 64>}, {pipeline_mode = #tpu.pipeline_mode<synchronous>, transform_indices = @transform_1, window_bounds = array<i64: 9, 64, 64>}, {pipeline_mode = #tpu.pipeline_mode<synchronous>, transform_indices = @transform_2, window_bounds = array<i64: 1, 64>}, {pipeline_mode = #tpu.pipeline_mode<synchronous>, transform_indices = @transform_3, window_bounds = array<i64: 1, 64>}, {transform_indices = @transform_4, window_bounds = array<i64: 1, 8, 64>}]} {
    %c0 = arith.constant 0 : index
    %c0_0 = arith.constant 0 : index
    %0 = vector.load %arg3[%c0, %c0_0] : memref<1x64xf32, #tpu.memory_space<vmem>>, vector<1x64xf32>
    %c0_1 = arith.constant 0 : index
    %c0_2 = arith.constant 0 : index
    %1 = vector.load %arg4[%c0_1, %c0_2] : memref<1x64xf32, #tpu.memory_space<vmem>>, vector<1x64xf32>
    %c0_3 = arith.constant 0 : index
    %c0_4 = arith.constant 0 : index
    %c0_5 = arith.constant 0 : index
    %2 = vector.load %arg1[%c0_3, %c0_4, %c0_5] : memref<1x18x64xbf16, #tpu.memory_space<vmem>>, vector<1x8x64xbf16>
    %3 = vector.shape_cast %2 : vector<1x8x64xbf16> to vector<8x64xbf16>
    %c0_6 = arith.constant 0 : index
    %c0_7 = arith.constant 0 : index
    %c0_8 = arith.constant 0 : index
    %4 = vector.load %arg2[%c0_6, %c0_7, %c0_8] : memref<9x64x64xbf16, #tpu.memory_space<vmem>>, vector<1x64x64xbf16>
    %5 = vector.shape_cast %4 : vector<1x64x64xbf16> to vector<64x64xbf16>
    %cst = arith.constant dense<0.000000e+00> : vector<8x64xf32>
    %6 = tpu.matmul %3, %5, %cst {dimension_numbers = #tpu.dot_dimension_numbers<[1], [0], [0], [1], [0, 0, 1, 1], [], []>} : vector<8x64xbf16>, vector<64x64xbf16>, vector<8x64xf32> -> vector<8x64xf32>
    %c0_9 = arith.constant 0 : index
    %c1 = arith.constant 1 : index
    %c0_10 = arith.constant 0 : index
    %7 = vector.load %arg1[%c0_9, %c1, %c0_10] : memref<1x18x64xbf16, #tpu.memory_space<vmem>>, vector<1x8x64xbf16>
    %8 = vector.shape_cast %7 : vector<1x8x64xbf16> to vector<8x64xbf16>
    %c1_11 = arith.constant 1 : index
    %c0_12 = arith.constant 0 : index
    %c0_13 = arith.constant 0 : index
    %9 = vector.load %arg2[%c1_11, %c0_12, %c0_13] : memref<9x64x64xbf16, #tpu.memory_space<vmem>>, vector<1x64x64xbf16>
    %10 = vector.shape_cast %9 : vector<1x64x64xbf16> to vector<64x64xbf16>
    %cst_14 = arith.constant dense<0.000000e+00> : vector<8x64xf32>
    %11 = tpu.matmul %8, %10, %cst_14 {dimension_numbers = #tpu.dot_dimension_numbers<[1], [0], [0], [1], [0, 0, 1, 1], [], []>} : vector<8x64xbf16>, vector<64x64xbf16>, vector<8x64xf32> -> vector<8x64xf32>
    %12 = arith.addf %6, %11 : vector<8x64xf32>
    %c0_15 = arith.constant 0 : index
    %c2 = arith.constant 2 : index
    %c0_16 = arith.constant 0 : index
    %13 = vector.load %arg1[%c0_15, %c2, %c0_16] : memref<1x18x64xbf16, #tpu.memory_space<vmem>>, vector<1x8x64xbf16>
    %14 = vector.shape_cast %13 : vector<1x8x64xbf16> to vector<8x64xbf16>
    %c2_17 = arith.constant 2 : index
    %c0_18 = arith.constant 0 : index
    %c0_19 = arith.constant 0 : index
    %15 = vector.load %arg2[%c2_17, %c0_18, %c0_19] : memref<9x64x64xbf16, #tpu.memory_space<vmem>>, vector<1x64x64xbf16>
    %16 = vector.shape_cast %15 : vector<1x64x64xbf16> to vector<64x64xbf16>
    %cst_20 = arith.constant dense<0.000000e+00> : vector<8x64xf32>
    %17 = tpu.matmul %14, %16, %cst_20 {dimension_numbers = #tpu.dot_dimension_numbers<[1], [0], [0], [1], [0, 0, 1, 1], [], []>} : vector<8x64xbf16>, vector<64x64xbf16>, vector<8x64xf32> -> vector<8x64xf32>
    %18 = arith.addf %12, %17 : vector<8x64xf32>
    %c0_21 = arith.constant 0 : index
    %c4 = arith.constant 4 : index
    %c0_22 = arith.constant 0 : index
    %19 = vector.load %arg1[%c0_21, %c4, %c0_22] : memref<1x18x64xbf16, #tpu.memory_space<vmem>>, vector<1x8x64xbf16>
    %20 = vector.shape_cast %19 : vector<1x8x64xbf16> to vector<8x64xbf16>
    %c3 = arith.constant 3 : index
    %c0_23 = arith.constant 0 : index
    %c0_24 = arith.constant 0 : index
    %21 = vector.load %arg2[%c3, %c0_23, %c0_24] : memref<9x64x64xbf16, #tpu.memory_space<vmem>>, vector<1x64x64xbf16>
    %22 = vector.shape_cast %21 : vector<1x64x64xbf16> to vector<64x64xbf16>
    %cst_25 = arith.constant dense<0.000000e+00> : vector<8x64xf32>
    %23 = tpu.matmul %20, %22, %cst_25 {dimension_numbers = #tpu.dot_dimension_numbers<[1], [0], [0], [1], [0, 0, 1, 1], [], []>} : vector<8x64xbf16>, vector<64x64xbf16>, vector<8x64xf32> -> vector<8x64xf32>
    %24 = arith.addf %18, %23 : vector<8x64xf32>
    %c0_26 = arith.constant 0 : index
    %c5 = arith.constant 5 : index
    %c0_27 = arith.constant 0 : index
    %25 = vector.load %arg1[%c0_26, %c5, %c0_27] : memref<1x18x64xbf16, #tpu.memory_space<vmem>>, vector<1x8x64xbf16>
    %26 = vector.shape_cast %25 : vector<1x8x64xbf16> to vector<8x64xbf16>
    %c4_28 = arith.constant 4 : index
    %c0_29 = arith.constant 0 : index
    %c0_30 = arith.constant 0 : index
    %27 = vector.load %arg2[%c4_28, %c0_29, %c0_30] : memref<9x64x64xbf16, #tpu.memory_space<vmem>>, vector<1x64x64xbf16>
    %28 = vector.shape_cast %27 : vector<1x64x64xbf16> to vector<64x64xbf16>
    %cst_31 = arith.constant dense<0.000000e+00> : vector<8x64xf32>
    %29 = tpu.matmul %26, %28, %cst_31 {dimension_numbers = #tpu.dot_dimension_numbers<[1], [0], [0], [1], [0, 0, 1, 1], [], []>} : vector<8x64xbf16>, vector<64x64xbf16>, vector<8x64xf32> -> vector<8x64xf32>
    %30 = arith.addf %24, %29 : vector<8x64xf32>
    %c0_32 = arith.constant 0 : index
    %c6 = arith.constant 6 : index
    %c0_33 = arith.constant 0 : index
    %31 = vector.load %arg1[%c0_32, %c6, %c0_33] : memref<1x18x64xbf16, #tpu.memory_space<vmem>>, vector<1x8x64xbf16>
    %32 = vector.shape_cast %31 : vector<1x8x64xbf16> to vector<8x64xbf16>
    %c5_34 = arith.constant 5 : index
    %c0_35 = arith.constant 0 : index
    %c0_36 = arith.constant 0 : index
    %33 = vector.load %arg2[%c5_34, %c0_35, %c0_36] : memref<9x64x64xbf16, #tpu.memory_space<vmem>>, vector<1x64x64xbf16>
    %34 = vector.shape_cast %33 : vector<1x64x64xbf16> to vector<64x64xbf16>
    %cst_37 = arith.constant dense<0.000000e+00> : vector<8x64xf32>
    %35 = tpu.matmul %32, %34, %cst_37 {dimension_numbers = #tpu.dot_dimension_numbers<[1], [0], [0], [1], [0, 0, 1, 1], [], []>} : vector<8x64xbf16>, vector<64x64xbf16>, vector<8x64xf32> -> vector<8x64xf32>
    %36 = arith.addf %30, %35 : vector<8x64xf32>
    %c0_38 = arith.constant 0 : index
    %c8 = arith.constant 8 : index
    %c0_39 = arith.constant 0 : index
    %37 = vector.load %arg1[%c0_38, %c8, %c0_39] : memref<1x18x64xbf16, #tpu.memory_space<vmem>>, vector<1x8x64xbf16>
    %38 = vector.shape_cast %37 : vector<1x8x64xbf16> to vector<8x64xbf16>
    %c6_40 = arith.constant 6 : index
    %c0_41 = arith.constant 0 : index
    %c0_42 = arith.constant 0 : index
    %39 = vector.load %arg2[%c6_40, %c0_41, %c0_42] : memref<9x64x64xbf16, #tpu.memory_space<vmem>>, vector<1x64x64xbf16>
    %40 = vector.shape_cast %39 : vector<1x64x64xbf16> to vector<64x64xbf16>
    %cst_43 = arith.constant dense<0.000000e+00> : vector<8x64xf32>
    %41 = tpu.matmul %38, %40, %cst_43 {dimension_numbers = #tpu.dot_dimension_numbers<[1], [0], [0], [1], [0, 0, 1, 1], [], []>} : vector<8x64xbf16>, vector<64x64xbf16>, vector<8x64xf32> -> vector<8x64xf32>
    %42 = arith.addf %36, %41 : vector<8x64xf32>
    %c0_44 = arith.constant 0 : index
    %c9 = arith.constant 9 : index
    %c0_45 = arith.constant 0 : index
    %43 = vector.load %arg1[%c0_44, %c9, %c0_45] : memref<1x18x64xbf16, #tpu.memory_space<vmem>>, vector<1x8x64xbf16>
    %44 = vector.shape_cast %43 : vector<1x8x64xbf16> to vector<8x64xbf16>
    %c7 = arith.constant 7 : index
    %c0_46 = arith.constant 0 : index
    %c0_47 = arith.constant 0 : index
    %45 = vector.load %arg2[%c7, %c0_46, %c0_47] : memref<9x64x64xbf16, #tpu.memory_space<vmem>>, vector<1x64x64xbf16>
    %46 = vector.shape_cast %45 : vector<1x64x64xbf16> to vector<64x64xbf16>
    %cst_48 = arith.constant dense<0.000000e+00> : vector<8x64xf32>
    %47 = tpu.matmul %44, %46, %cst_48 {dimension_numbers = #tpu.dot_dimension_numbers<[1], [0], [0], [1], [0, 0, 1, 1], [], []>} : vector<8x64xbf16>, vector<64x64xbf16>, vector<8x64xf32> -> vector<8x64xf32>
    %48 = arith.addf %42, %47 : vector<8x64xf32>
    %c0_49 = arith.constant 0 : index
    %c10 = arith.constant 10 : index
    %c0_50 = arith.constant 0 : index
    %49 = vector.load %arg1[%c0_49, %c10, %c0_50] : memref<1x18x64xbf16, #tpu.memory_space<vmem>>, vector<1x8x64xbf16>
    %50 = vector.shape_cast %49 : vector<1x8x64xbf16> to vector<8x64xbf16>
    %c8_51 = arith.constant 8 : index
    %c0_52 = arith.constant 0 : index
    %c0_53 = arith.constant 0 : index
    %51 = vector.load %arg2[%c8_51, %c0_52, %c0_53] : memref<9x64x64xbf16, #tpu.memory_space<vmem>>, vector<1x64x64xbf16>
    %52 = vector.shape_cast %51 : vector<1x64x64xbf16> to vector<64x64xbf16>
    %cst_54 = arith.constant dense<0.000000e+00> : vector<8x64xf32>
    %53 = tpu.matmul %50, %52, %cst_54 {dimension_numbers = #tpu.dot_dimension_numbers<[1], [0], [0], [1], [0, 0, 1, 1], [], []>} : vector<8x64xbf16>, vector<64x64xbf16>, vector<8x64xf32> -> vector<8x64xf32>
    %54 = arith.addf %48, %53 : vector<8x64xf32>
    %55 = vector.broadcast %0 : vector<1x64xf32> to vector<8x64xf32>
    %56 = arith.mulf %54, %55 : vector<8x64xf32>
    %57 = vector.broadcast %1 : vector<1x64xf32> to vector<8x64xf32>
    %58 = arith.addf %56, %57 : vector<8x64xf32>
    %cst_55 = arith.constant 0.000000e+00 : f32
    %59 = vector.broadcast %cst_55 : f32 to vector<8x64xf32>
    %60 = arith.maximumf %58, %59 : vector<8x64xf32>
    %61 = arith.truncf %60 : vector<8x64xf32> to vector<8x64xbf16>
    %c0_56 = arith.constant 0 : index
    %c0_57 = arith.constant 0 : index
    %c0_58 = arith.constant 0 : index
    %62 = vector.load %arg5[%c0_56, %c0_57, %c0_58] : memref<1x8x64xbf16, #tpu.memory_space<vmem>>, vector<1x8x64xbf16>
    %63 = vector.shape_cast %62 : vector<1x8x64xbf16> to vector<8x64xbf16>
    %64 = vector.shape_cast %61 : vector<8x64xbf16> to vector<1x8x64xbf16>
    tpu.vector_store %arg5[%c0_56, %c0_57, %c0_58], %64 {strides = array<i32>} : memref<1x8x64xbf16, #tpu.memory_space<vmem>>, vector<1x8x64xbf16>,
    return
  }
  func.func @transform_0(%arg0: i32) -> (i32, i32, i32) {
    %c0_i32 = arith.constant 0 : i32
    %c0_i32_0 = arith.constant 0 : i32
    %c0_i32_1 = arith.constant 0 : i32
    return %arg0, %c0_i32, %c0_i32_0 : i32, i32, i32
  }
  func.func @transform_1(%arg0: i32) -> (i32, i32, i32) {
    %c0_i32 = arith.constant 0 : i32
    %c0_i32_0 = arith.constant 0 : i32
    %c0_i32_1 = arith.constant 0 : i32
    %c0_i32_2 = arith.constant 0 : i32
    return %c0_i32, %c0_i32_0, %c0_i32_1 : i32, i32, i32
  }
  func.func @transform_2(%arg0: i32) -> (i32, i32) {
    %c0_i32 = arith.constant 0 : i32
    %c0_i32_0 = arith.constant 0 : i32
    %c0_i32_1 = arith.constant 0 : i32
    return %c0_i32, %c0_i32_0 : i32, i32
  }
  func.func @transform_3(%arg0: i32) -> (i32, i32) {
    %c0_i32 = arith.constant 0 : i32
    %c0_i32_0 = arith.constant 0 : i32
    %c0_i32_1 = arith.constant 0 : i32
    return %c0_i32, %c0_i32_0 : i32, i32
  }
  func.func @transform_4(%arg0: i32) -> (i32, i32, i32) {
    %c0_i32 = arith.constant 0 : i32
    %c0_i32_0 = arith.constant 0 : i32
    %c0_i32_1 = arith.constant 0 : i32
    return %arg0, %c0_i32, %c0_i32_0 : i32, i32, i32
  }
}

module attributes {stable_mosaic.version = 11 : i64} {
  func.func @_conv_kernel(%arg0: i32, %arg1: memref<1x10x64xbf16, #tpu.memory_space<vmem>>, %arg2: memref<9x64x32xbf16, #tpu.memory_space<vmem>>, %arg3: memref<1x32xf32, #tpu.memory_space<vmem>>, %arg4: memref<1x32xf32, #tpu.memory_space<vmem>>, %arg5: memref<1x4x6x32xbf16, #tpu.memory_space<vmem>>, %arg6: memref<32x32xbf16, #tpu.memory_space<vmem>>, %arg7: memref<1x6x128xbf16, #tpu.memory_space<vmem>>) attributes {dimension_semantics = [#tpu.dimension_semantics<parallel>], iteration_bounds = array<i64: 2>, scalar_prefetch = 0 : i64, scratch_operands = 0 : i64, tpu.core_type = #tpu.core_type<tc>, window_params = [{transform_indices = @transform_0, window_bounds = array<i64: 1, 10, 64>}, {pipeline_mode = #tpu.pipeline_mode<synchronous>, transform_indices = @transform_1, window_bounds = array<i64: 9, 64, 32>}, {pipeline_mode = #tpu.pipeline_mode<synchronous>, transform_indices = @transform_2, window_bounds = array<i64: 1, 32>}, {pipeline_mode = #tpu.pipeline_mode<synchronous>, transform_indices = @transform_3, window_bounds = array<i64: 1, 32>}, {transform_indices = @transform_4, window_bounds = array<i64: 1, 4, 6, 32>}, {pipeline_mode = #tpu.pipeline_mode<synchronous>, transform_indices = @transform_5, window_bounds = array<i64: 32, 32>}, {transform_indices = @transform_6, window_bounds = array<i64: 1, 6, 128>}]} {
    %c0 = arith.constant 0 : index
    %c0_0 = arith.constant 0 : index
    %0 = vector.load %arg3[%c0, %c0_0] : memref<1x32xf32, #tpu.memory_space<vmem>>, vector<1x32xf32>
    %c0_1 = arith.constant 0 : index
    %c0_2 = arith.constant 0 : index
    %1 = vector.load %arg4[%c0_1, %c0_2] : memref<1x32xf32, #tpu.memory_space<vmem>>, vector<1x32xf32>
    %c0_3 = arith.constant 0 : index
    %c0_4 = arith.constant 0 : index
    %c0_5 = arith.constant 0 : index
    %2 = vector.load %arg1[%c0_3, %c0_4, %c0_5] : memref<1x10x64xbf16, #tpu.memory_space<vmem>>, vector<1x6x64xbf16>
    %3 = vector.shape_cast %2 : vector<1x6x64xbf16> to vector<6x64xbf16>
    %c4 = arith.constant 4 : index
    %c0_6 = arith.constant 0 : index
    %c0_7 = arith.constant 0 : index
    %4 = vector.load %arg2[%c4, %c0_6, %c0_7] : memref<9x64x32xbf16, #tpu.memory_space<vmem>>, vector<1x64x32xbf16>
    %5 = vector.shape_cast %4 : vector<1x64x32xbf16> to vector<64x32xbf16>
    %cst = arith.constant dense<0.000000e+00> : vector<6x32xf32>
    %6 = tpu.matmul %3, %5, %cst {dimension_numbers = #tpu.dot_dimension_numbers<[1], [0], [0], [1], [0, 0, 1, 1], [], []>} : vector<6x64xbf16>, vector<64x32xbf16>, vector<6x32xf32> -> vector<6x32xf32>
    %7 = vector.broadcast %0 : vector<1x32xf32> to vector<6x32xf32>
    %8 = arith.mulf %6, %7 : vector<6x32xf32>
    %9 = vector.broadcast %1 : vector<1x32xf32> to vector<6x32xf32>
    %10 = arith.addf %8, %9 : vector<6x32xf32>
    %c0_8 = arith.constant 0 : index
    %c0_9 = arith.constant 0 : index
    %c0_10 = arith.constant 0 : index
    %c0_11 = arith.constant 0 : index
    %11 = vector.load %arg5[%c0_8, %c0_9, %c0_10, %c0_11] : memref<1x4x6x32xbf16, #tpu.memory_space<vmem>>, vector<1x1x6x32xbf16>
    %12 = vector.shape_cast %11 : vector<1x1x6x32xbf16> to vector<6x32xbf16>
    %c0_12 = arith.constant 0 : index
    %c0_13 = arith.constant 0 : index
    %13 = vector.load %arg6[%c0_12, %c0_13] : memref<32x32xbf16, #tpu.memory_space<vmem>>, vector<32x32xbf16>
    %cst_14 = arith.constant dense<0.000000e+00> : vector<6x32xf32>
    %14 = tpu.matmul %12, %13, %cst_14 {dimension_numbers = #tpu.dot_dimension_numbers<[1], [0], [0], [1], [0, 0, 1, 1], [], []>} : vector<6x32xbf16>, vector<32x32xbf16>, vector<6x32xf32> -> vector<6x32xf32>
    %15 = arith.addf %10, %14 : vector<6x32xf32>
    %cst_15 = arith.constant 0.000000e+00 : f32
    %16 = vector.broadcast %cst_15 : f32 to vector<6x32xf32>
    %17 = arith.maximumf %15, %16 : vector<6x32xf32>
    %18 = arith.truncf %17 : vector<6x32xf32> to vector<6x32xbf16>
    %c0_16 = arith.constant 0 : index
    %c0_17 = arith.constant 0 : index
    %c0_18 = arith.constant 0 : index
    %19 = vector.load %arg7[%c0_16, %c0_17, %c0_18] : memref<1x6x128xbf16, #tpu.memory_space<vmem>>, vector<1x6x32xbf16>
    %20 = vector.shape_cast %19 : vector<1x6x32xbf16> to vector<6x32xbf16>
    %21 = vector.shape_cast %18 : vector<6x32xbf16> to vector<1x6x32xbf16>
    tpu.vector_store %arg7[%c0_16, %c0_17, %c0_18], %21 {strides = array<i32>} : memref<1x6x128xbf16, #tpu.memory_space<vmem>>, vector<1x6x32xbf16>,
    %c0_19 = arith.constant 0 : index
    %c0_20 = arith.constant 0 : index
    %c0_21 = arith.constant 0 : index
    %22 = vector.load %arg1[%c0_19, %c0_20, %c0_21] : memref<1x10x64xbf16, #tpu.memory_space<vmem>>, vector<1x6x64xbf16>
    %23 = vector.shape_cast %22 : vector<1x6x64xbf16> to vector<6x64xbf16>
    %c5 = arith.constant 5 : index
    %c0_22 = arith.constant 0 : index
    %c0_23 = arith.constant 0 : index
    %24 = vector.load %arg2[%c5, %c0_22, %c0_23] : memref<9x64x32xbf16, #tpu.memory_space<vmem>>, vector<1x64x32xbf16>
    %25 = vector.shape_cast %24 : vector<1x64x32xbf16> to vector<64x32xbf16>
    %cst_24 = arith.constant dense<0.000000e+00> : vector<6x32xf32>
    %26 = tpu.matmul %23, %25, %cst_24 {dimension_numbers = #tpu.dot_dimension_numbers<[1], [0], [0], [1], [0, 0, 1, 1], [], []>} : vector<6x64xbf16>, vector<64x32xbf16>, vector<6x32xf32> -> vector<6x32xf32>
    %c0_25 = arith.constant 0 : index
    %c1 = arith.constant 1 : index
    %c0_26 = arith.constant 0 : index
    %27 = vector.load %arg1[%c0_25, %c1, %c0_26] : memref<1x10x64xbf16, #tpu.memory_space<vmem>>, vector<1x6x64xbf16>
    %28 = vector.shape_cast %27 : vector<1x6x64xbf16> to vector<6x64xbf16>
    %c3 = arith.constant 3 : index
    %c0_27 = arith.constant 0 : index
    %c0_28 = arith.constant 0 : index
    %29 = vector.load %arg2[%c3, %c0_27, %c0_28] : memref<9x64x32xbf16, #tpu.memory_space<vmem>>, vector<1x64x32xbf16>
    %30 = vector.shape_cast %29 : vector<1x64x32xbf16> to vector<64x32xbf16>
    %cst_29 = arith.constant dense<0.000000e+00> : vector<6x32xf32>
    %31 = tpu.matmul %28, %30, %cst_29 {dimension_numbers = #tpu.dot_dimension_numbers<[1], [0], [0], [1], [0, 0, 1, 1], [], []>} : vector<6x64xbf16>, vector<64x32xbf16>, vector<6x32xf32> -> vector<6x32xf32>
    %32 = arith.addf %26, %31 : vector<6x32xf32>
    %33 = vector.broadcast %0 : vector<1x32xf32> to vector<6x32xf32>
    %34 = arith.mulf %32, %33 : vector<6x32xf32>
    %35 = vector.broadcast %1 : vector<1x32xf32> to vector<6x32xf32>
    %36 = arith.addf %34, %35 : vector<6x32xf32>
    %c0_30 = arith.constant 0 : index
    %c1_31 = arith.constant 1 : index
    %c0_32 = arith.constant 0 : index
    %c0_33 = arith.constant 0 : index
    %37 = vector.load %arg5[%c0_30, %c1_31, %c0_32, %c0_33] : memref<1x4x6x32xbf16, #tpu.memory_space<vmem>>, vector<1x1x6x32xbf16>
    %38 = vector.shape_cast %37 : vector<1x1x6x32xbf16> to vector<6x32xbf16>
    %c0_34 = arith.constant 0 : index
    %c0_35 = arith.constant 0 : index
    %39 = vector.load %arg6[%c0_34, %c0_35] : memref<32x32xbf16, #tpu.memory_space<vmem>>, vector<32x32xbf16>
    %cst_36 = arith.constant dense<0.000000e+00> : vector<6x32xf32>
    %40 = tpu.matmul %38, %39, %cst_36 {dimension_numbers = #tpu.dot_dimension_numbers<[1], [0], [0], [1], [0, 0, 1, 1], [], []>} : vector<6x32xbf16>, vector<32x32xbf16>, vector<6x32xf32> -> vector<6x32xf32>
    %41 = arith.addf %36, %40 : vector<6x32xf32>
    %cst_37 = arith.constant 0.000000e+00 : f32
    %42 = vector.broadcast %cst_37 : f32 to vector<6x32xf32>
    %43 = arith.maximumf %41, %42 : vector<6x32xf32>
    %44 = arith.truncf %43 : vector<6x32xf32> to vector<6x32xbf16>
    %c0_38 = arith.constant 0 : index
    %c0_39 = arith.constant 0 : index
    %c32 = arith.constant 32 : index
    %45 = vector.load %arg7[%c0_38, %c0_39, %c32] : memref<1x6x128xbf16, #tpu.memory_space<vmem>>, vector<1x6x32xbf16>
    %46 = vector.shape_cast %45 : vector<1x6x32xbf16> to vector<6x32xbf16>
    %47 = vector.shape_cast %44 : vector<6x32xbf16> to vector<1x6x32xbf16>
    tpu.vector_store %arg7[%c0_38, %c0_39, %c32], %47 {strides = array<i32>} : memref<1x6x128xbf16, #tpu.memory_space<vmem>>, vector<1x6x32xbf16>,
    %c0_40 = arith.constant 0 : index
    %c0_41 = arith.constant 0 : index
    %c0_42 = arith.constant 0 : index
    %48 = vector.load %arg1[%c0_40, %c0_41, %c0_42] : memref<1x10x64xbf16, #tpu.memory_space<vmem>>, vector<1x6x64xbf16>
    %49 = vector.shape_cast %48 : vector<1x6x64xbf16> to vector<6x64xbf16>
    %c7 = arith.constant 7 : index
    %c0_43 = arith.constant 0 : index
    %c0_44 = arith.constant 0 : index
    %50 = vector.load %arg2[%c7, %c0_43, %c0_44] : memref<9x64x32xbf16, #tpu.memory_space<vmem>>, vector<1x64x32xbf16>
    %51 = vector.shape_cast %50 : vector<1x64x32xbf16> to vector<64x32xbf16>
    %cst_45 = arith.constant dense<0.000000e+00> : vector<6x32xf32>
    %52 = tpu.matmul %49, %51, %cst_45 {dimension_numbers = #tpu.dot_dimension_numbers<[1], [0], [0], [1], [0, 0, 1, 1], [], []>} : vector<6x64xbf16>, vector<64x32xbf16>, vector<6x32xf32> -> vector<6x32xf32>
    %c0_46 = arith.constant 0 : index
    %c3_47 = arith.constant 3 : index
    %c0_48 = arith.constant 0 : index
    %53 = vector.load %arg1[%c0_46, %c3_47, %c0_48] : memref<1x10x64xbf16, #tpu.memory_space<vmem>>, vector<1x6x64xbf16>
    %54 = vector.shape_cast %53 : vector<1x6x64xbf16> to vector<6x64xbf16>
    %c1_49 = arith.constant 1 : index
    %c0_50 = arith.constant 0 : index
    %c0_51 = arith.constant 0 : index
    %55 = vector.load %arg2[%c1_49, %c0_50, %c0_51] : memref<9x64x32xbf16, #tpu.memory_space<vmem>>, vector<1x64x32xbf16>
    %56 = vector.shape_cast %55 : vector<1x64x32xbf16> to vector<64x32xbf16>
    %cst_52 = arith.constant dense<0.000000e+00> : vector<6x32xf32>
    %57 = tpu.matmul %54, %56, %cst_52 {dimension_numbers = #tpu.dot_dimension_numbers<[1], [0], [0], [1], [0, 0, 1, 1], [], []>} : vector<6x64xbf16>, vector<64x32xbf16>, vector<6x32xf32> -> vector<6x32xf32>
    %58 = arith.addf %52, %57 : vector<6x32xf32>
    %59 = vector.broadcast %0 : vector<1x32xf32> to vector<6x32xf32>
    %60 = arith.mulf %58, %59 : vector<6x32xf32>
    %61 = vector.broadcast %1 : vector<1x32xf32> to vector<6x32xf32>
    %62 = arith.addf %60, %61 : vector<6x32xf32>
    %c0_53 = arith.constant 0 : index
    %c2 = arith.constant 2 : index
    %c0_54 = arith.constant 0 : index
    %c0_55 = arith.constant 0 : index
    %63 = vector.load %arg5[%c0_53, %c2, %c0_54, %c0_55] : memref<1x4x6x32xbf16, #tpu.memory_space<vmem>>, vector<1x1x6x32xbf16>
    %64 = vector.shape_cast %63 : vector<1x1x6x32xbf16> to vector<6x32xbf16>
    %c0_56 = arith.constant 0 : index
    %c0_57 = arith.constant 0 : index
    %65 = vector.load %arg6[%c0_56, %c0_57] : memref<32x32xbf16, #tpu.memory_space<vmem>>, vector<32x32xbf16>
    %cst_58 = arith.constant dense<0.000000e+00> : vector<6x32xf32>
    %66 = tpu.matmul %64, %65, %cst_58 {dimension_numbers = #tpu.dot_dimension_numbers<[1], [0], [0], [1], [0, 0, 1, 1], [], []>} : vector<6x32xbf16>, vector<32x32xbf16>, vector<6x32xf32> -> vector<6x32xf32>
    %67 = arith.addf %62, %66 : vector<6x32xf32>
    %cst_59 = arith.constant 0.000000e+00 : f32
    %68 = vector.broadcast %cst_59 : f32 to vector<6x32xf32>
    %69 = arith.maximumf %67, %68 : vector<6x32xf32>
    %70 = arith.truncf %69 : vector<6x32xf32> to vector<6x32xbf16>
    %c0_60 = arith.constant 0 : index
    %c0_61 = arith.constant 0 : index
    %c64 = arith.constant 64 : index
    %71 = vector.load %arg7[%c0_60, %c0_61, %c64] : memref<1x6x128xbf16, #tpu.memory_space<vmem>>, vector<1x6x32xbf16>
    %72 = vector.shape_cast %71 : vector<1x6x32xbf16> to vector<6x32xbf16>
    %73 = vector.shape_cast %70 : vector<6x32xbf16> to vector<1x6x32xbf16>
    tpu.vector_store %arg7[%c0_60, %c0_61, %c64], %73 {strides = array<i32>} : memref<1x6x128xbf16, #tpu.memory_space<vmem>>, vector<1x6x32xbf16>,
    %c0_62 = arith.constant 0 : index
    %c0_63 = arith.constant 0 : index
    %c0_64 = arith.constant 0 : index
    %74 = vector.load %arg1[%c0_62, %c0_63, %c0_64] : memref<1x10x64xbf16, #tpu.memory_space<vmem>>, vector<1x6x64xbf16>
    %75 = vector.shape_cast %74 : vector<1x6x64xbf16> to vector<6x64xbf16>
    %c8 = arith.constant 8 : index
    %c0_65 = arith.constant 0 : index
    %c0_66 = arith.constant 0 : index
    %76 = vector.load %arg2[%c8, %c0_65, %c0_66] : memref<9x64x32xbf16, #tpu.memory_space<vmem>>, vector<1x64x32xbf16>
    %77 = vector.shape_cast %76 : vector<1x64x32xbf16> to vector<64x32xbf16>
    %cst_67 = arith.constant dense<0.000000e+00> : vector<6x32xf32>
    %78 = tpu.matmul %75, %77, %cst_67 {dimension_numbers = #tpu.dot_dimension_numbers<[1], [0], [0], [1], [0, 0, 1, 1], [], []>} : vector<6x64xbf16>, vector<64x32xbf16>, vector<6x32xf32> -> vector<6x32xf32>
    %c0_68 = arith.constant 0 : index
    %c1_69 = arith.constant 1 : index
    %c0_70 = arith.constant 0 : index
    %79 = vector.load %arg1[%c0_68, %c1_69, %c0_70] : memref<1x10x64xbf16, #tpu.memory_space<vmem>>, vector<1x6x64xbf16>
    %80 = vector.shape_cast %79 : vector<1x6x64xbf16> to vector<6x64xbf16>
    %c6 = arith.constant 6 : index
    %c0_71 = arith.constant 0 : index
    %c0_72 = arith.constant 0 : index
    %81 = vector.load %arg2[%c6, %c0_71, %c0_72] : memref<9x64x32xbf16, #tpu.memory_space<vmem>>, vector<1x64x32xbf16>
    %82 = vector.shape_cast %81 : vector<1x64x32xbf16> to vector<64x32xbf16>
    %cst_73 = arith.constant dense<0.000000e+00> : vector<6x32xf32>
    %83 = tpu.matmul %80, %82, %cst_73 {dimension_numbers = #tpu.dot_dimension_numbers<[1], [0], [0], [1], [0, 0, 1, 1], [], []>} : vector<6x64xbf16>, vector<64x32xbf16>, vector<6x32xf32> -> vector<6x32xf32>
    %84 = arith.addf %78, %83 : vector<6x32xf32>
    %c0_74 = arith.constant 0 : index
    %c3_75 = arith.constant 3 : index
    %c0_76 = arith.constant 0 : index
    %85 = vector.load %arg1[%c0_74, %c3_75, %c0_76] : memref<1x10x64xbf16, #tpu.memory_space<vmem>>, vector<1x6x64xbf16>
    %86 = vector.shape_cast %85 : vector<1x6x64xbf16> to vector<6x64xbf16>
    %c2_77 = arith.constant 2 : index
    %c0_78 = arith.constant 0 : index
    %c0_79 = arith.constant 0 : index
    %87 = vector.load %arg2[%c2_77, %c0_78, %c0_79] : memref<9x64x32xbf16, #tpu.memory_space<vmem>>, vector<1x64x32xbf16>
    %88 = vector.shape_cast %87 : vector<1x64x32xbf16> to vector<64x32xbf16>
    %cst_80 = arith.constant dense<0.000000e+00> : vector<6x32xf32>
    %89 = tpu.matmul %86, %88, %cst_80 {dimension_numbers = #tpu.dot_dimension_numbers<[1], [0], [0], [1], [0, 0, 1, 1], [], []>} : vector<6x64xbf16>, vector<64x32xbf16>, vector<6x32xf32> -> vector<6x32xf32>
    %90 = arith.addf %84, %89 : vector<6x32xf32>
    %c0_81 = arith.constant 0 : index
    %c4_82 = arith.constant 4 : index
    %c0_83 = arith.constant 0 : index
    %91 = vector.load %arg1[%c0_81, %c4_82, %c0_83] : memref<1x10x64xbf16, #tpu.memory_space<vmem>>, vector<1x6x64xbf16>
    %92 = vector.shape_cast %91 : vector<1x6x64xbf16> to vector<6x64xbf16>
    %c0_84 = arith.constant 0 : index
    %c0_85 = arith.constant 0 : index
    %c0_86 = arith.constant 0 : index
    %93 = vector.load %arg2[%c0_84, %c0_85, %c0_86] : memref<9x64x32xbf16, #tpu.memory_space<vmem>>, vector<1x64x32xbf16>
    %94 = vector.shape_cast %93 : vector<1x64x32xbf16> to vector<64x32xbf16>
    %cst_87 = arith.constant dense<0.000000e+00> : vector<6x32xf32>
    %95 = tpu.matmul %92, %94, %cst_87 {dimension_numbers = #tpu.dot_dimension_numbers<[1], [0], [0], [1], [0, 0, 1, 1], [], []>} : vector<6x64xbf16>, vector<64x32xbf16>, vector<6x32xf32> -> vector<6x32xf32>
    %96 = arith.addf %90, %95 : vector<6x32xf32>
    %97 = vector.broadcast %0 : vector<1x32xf32> to vector<6x32xf32>
    %98 = arith.mulf %96, %97 : vector<6x32xf32>
    %99 = vector.broadcast %1 : vector<1x32xf32> to vector<6x32xf32>
    %100 = arith.addf %98, %99 : vector<6x32xf32>
    %c0_88 = arith.constant 0 : index
    %c3_89 = arith.constant 3 : index
    %c0_90 = arith.constant 0 : index
    %c0_91 = arith.constant 0 : index
    %101 = vector.load %arg5[%c0_88, %c3_89, %c0_90, %c0_91] : memref<1x4x6x32xbf16, #tpu.memory_space<vmem>>, vector<1x1x6x32xbf16>
    %102 = vector.shape_cast %101 : vector<1x1x6x32xbf16> to vector<6x32xbf16>
    %c0_92 = arith.constant 0 : index
    %c0_93 = arith.constant 0 : index
    %103 = vector.load %arg6[%c0_92, %c0_93] : memref<32x32xbf16, #tpu.memory_space<vmem>>, vector<32x32xbf16>
    %cst_94 = arith.constant dense<0.000000e+00> : vector<6x32xf32>
    %104 = tpu.matmul %102, %103, %cst_94 {dimension_numbers = #tpu.dot_dimension_numbers<[1], [0], [0], [1], [0, 0, 1, 1], [], []>} : vector<6x32xbf16>, vector<32x32xbf16>, vector<6x32xf32> -> vector<6x32xf32>
    %105 = arith.addf %100, %104 : vector<6x32xf32>
    %cst_95 = arith.constant 0.000000e+00 : f32
    %106 = vector.broadcast %cst_95 : f32 to vector<6x32xf32>
    %107 = arith.maximumf %105, %106 : vector<6x32xf32>
    %108 = arith.truncf %107 : vector<6x32xf32> to vector<6x32xbf16>
    %c0_96 = arith.constant 0 : index
    %c0_97 = arith.constant 0 : index
    %c96 = arith.constant 96 : index
    %109 = vector.load %arg7[%c0_96, %c0_97, %c96] : memref<1x6x128xbf16, #tpu.memory_space<vmem>>, vector<1x6x32xbf16>
    %110 = vector.shape_cast %109 : vector<1x6x32xbf16> to vector<6x32xbf16>
    %111 = vector.shape_cast %108 : vector<6x32xbf16> to vector<1x6x32xbf16>
    tpu.vector_store %arg7[%c0_96, %c0_97, %c96], %111 {strides = array<i32>} : memref<1x6x128xbf16, #tpu.memory_space<vmem>>, vector<1x6x32xbf16>,
    return
  }
  func.func @transform_0(%arg0: i32) -> (i32, i32, i32) {
    %c0_i32 = arith.constant 0 : i32
    %c0_i32_0 = arith.constant 0 : i32
    %c0_i32_1 = arith.constant 0 : i32
    return %arg0, %c0_i32, %c0_i32_0 : i32, i32, i32
  }
  func.func @transform_1(%arg0: i32) -> (i32, i32, i32) {
    %c0_i32 = arith.constant 0 : i32
    %c0_i32_0 = arith.constant 0 : i32
    %c0_i32_1 = arith.constant 0 : i32
    %c0_i32_2 = arith.constant 0 : i32
    return %c0_i32, %c0_i32_0, %c0_i32_1 : i32, i32, i32
  }
  func.func @transform_2(%arg0: i32) -> (i32, i32) {
    %c0_i32 = arith.constant 0 : i32
    %c0_i32_0 = arith.constant 0 : i32
    %c0_i32_1 = arith.constant 0 : i32
    return %c0_i32, %c0_i32_0 : i32, i32
  }
  func.func @transform_3(%arg0: i32) -> (i32, i32) {
    %c0_i32 = arith.constant 0 : i32
    %c0_i32_0 = arith.constant 0 : i32
    %c0_i32_1 = arith.constant 0 : i32
    return %c0_i32, %c0_i32_0 : i32, i32
  }
  func.func @transform_4(%arg0: i32) -> (i32, i32, i32, i32) {
    %c0_i32 = arith.constant 0 : i32
    %c0_i32_0 = arith.constant 0 : i32
    %c0_i32_1 = arith.constant 0 : i32
    %c0_i32_2 = arith.constant 0 : i32
    return %arg0, %c0_i32, %c0_i32_0, %c0_i32_1 : i32, i32, i32, i32
  }
  func.func @transform_5(%arg0: i32) -> (i32, i32) {
    %c0_i32 = arith.constant 0 : i32
    %c0_i32_0 = arith.constant 0 : i32
    %c0_i32_1 = arith.constant 0 : i32
    return %c0_i32, %c0_i32_0 : i32, i32
  }
  func.func @transform_6(%arg0: i32) -> (i32, i32, i32) {
    %c0_i32 = arith.constant 0 : i32
    %c0_i32_0 = arith.constant 0 : i32
    %c0_i32_1 = arith.constant 0 : i32
    return %arg0, %c0_i32, %c0_i32_0 : i32, i32, i32
  }
}

module attributes {stable_mosaic.version = 11 : i64} {
  func.func @_conv_kernel(%arg0: i32, %arg1: memref<1x26x32xbf16, #tpu.memory_space<vmem>>, %arg2: memref<9x32x16xbf16, #tpu.memory_space<vmem>>, %arg3: memref<1x16xf32, #tpu.memory_space<vmem>>, %arg4: memref<1x16xf32, #tpu.memory_space<vmem>>, %arg5: memref<1x4x20x16xbf16, #tpu.memory_space<vmem>>, %arg6: memref<16x16xbf16, #tpu.memory_space<vmem>>, %arg7: memref<1x16xf32, #tpu.memory_space<vmem>>, %arg8: memref<1x1xf32, #tpu.memory_space<vmem>>, %arg9: memref<1x20x4xf32, #tpu.memory_space<vmem>>) attributes {dimension_semantics = [#tpu.dimension_semantics<parallel>], iteration_bounds = array<i64: 2>, scalar_prefetch = 0 : i64, scratch_operands = 0 : i64, tpu.core_type = #tpu.core_type<tc>, window_params = [{transform_indices = @transform_0, window_bounds = array<i64: 1, 26, 32>}, {pipeline_mode = #tpu.pipeline_mode<synchronous>, transform_indices = @transform_1, window_bounds = array<i64: 9, 32, 16>}, {pipeline_mode = #tpu.pipeline_mode<synchronous>, transform_indices = @transform_2, window_bounds = array<i64: 1, 16>}, {pipeline_mode = #tpu.pipeline_mode<synchronous>, transform_indices = @transform_3, window_bounds = array<i64: 1, 16>}, {transform_indices = @transform_4, window_bounds = array<i64: 1, 4, 20, 16>}, {pipeline_mode = #tpu.pipeline_mode<synchronous>, transform_indices = @transform_5, window_bounds = array<i64: 16, 16>}, {pipeline_mode = #tpu.pipeline_mode<synchronous>, transform_indices = @transform_6, window_bounds = array<i64: 1, 16>}, {pipeline_mode = #tpu.pipeline_mode<synchronous>, transform_indices = @transform_7, window_bounds = array<i64: 1, 1>}, {transform_indices = @transform_8, window_bounds = array<i64: 1, 20, 4>}]} {
    %c0 = arith.constant 0 : index
    %c0_0 = arith.constant 0 : index
    %0 = vector.load %arg3[%c0, %c0_0] : memref<1x16xf32, #tpu.memory_space<vmem>>, vector<1x16xf32>
    %c0_1 = arith.constant 0 : index
    %c0_2 = arith.constant 0 : index
    %1 = vector.load %arg4[%c0_1, %c0_2] : memref<1x16xf32, #tpu.memory_space<vmem>>, vector<1x16xf32>
    %c0_3 = arith.constant 0 : index
    %c0_4 = arith.constant 0 : index
    %c0_5 = arith.constant 0 : index
    %2 = vector.load %arg1[%c0_3, %c0_4, %c0_5] : memref<1x26x32xbf16, #tpu.memory_space<vmem>>, vector<1x20x32xbf16>
    %3 = vector.shape_cast %2 : vector<1x20x32xbf16> to vector<20x32xbf16>
    %c4 = arith.constant 4 : index
    %c0_6 = arith.constant 0 : index
    %c0_7 = arith.constant 0 : index
    %4 = vector.load %arg2[%c4, %c0_6, %c0_7] : memref<9x32x16xbf16, #tpu.memory_space<vmem>>, vector<1x32x16xbf16>
    %5 = vector.shape_cast %4 : vector<1x32x16xbf16> to vector<32x16xbf16>
    %cst = arith.constant dense<0.000000e+00> : vector<20x16xf32>
    %6 = tpu.matmul %3, %5, %cst {dimension_numbers = #tpu.dot_dimension_numbers<[1], [0], [0], [1], [0, 0, 1, 1], [], []>} : vector<20x32xbf16>, vector<32x16xbf16>, vector<20x16xf32> -> vector<20x16xf32>
    %7 = vector.broadcast %0 : vector<1x16xf32> to vector<20x16xf32>
    %8 = arith.mulf %6, %7 : vector<20x16xf32>
    %9 = vector.broadcast %1 : vector<1x16xf32> to vector<20x16xf32>
    %10 = arith.addf %8, %9 : vector<20x16xf32>
    %c0_8 = arith.constant 0 : index
    %c0_9 = arith.constant 0 : index
    %c0_10 = arith.constant 0 : index
    %c0_11 = arith.constant 0 : index
    %11 = vector.load %arg5[%c0_8, %c0_9, %c0_10, %c0_11] : memref<1x4x20x16xbf16, #tpu.memory_space<vmem>>, vector<1x1x20x16xbf16>
    %12 = vector.shape_cast %11 : vector<1x1x20x16xbf16> to vector<20x16xbf16>
    %c0_12 = arith.constant 0 : index
    %c0_13 = arith.constant 0 : index
    %13 = vector.load %arg6[%c0_12, %c0_13] : memref<16x16xbf16, #tpu.memory_space<vmem>>, vector<16x16xbf16>
    %cst_14 = arith.constant dense<0.000000e+00> : vector<20x16xf32>
    %14 = tpu.matmul %12, %13, %cst_14 {dimension_numbers = #tpu.dot_dimension_numbers<[1], [0], [0], [1], [0, 0, 1, 1], [], []>} : vector<20x16xbf16>, vector<16x16xbf16>, vector<20x16xf32> -> vector<20x16xf32>
    %15 = arith.addf %10, %14 : vector<20x16xf32>
    %cst_15 = arith.constant 0.000000e+00 : f32
    %16 = vector.broadcast %cst_15 : f32 to vector<20x16xf32>
    %17 = arith.maximumf %15, %16 : vector<20x16xf32>
    %c0_16 = arith.constant 0 : index
    %c0_17 = arith.constant 0 : index
    %18 = vector.load %arg7[%c0_16, %c0_17] : memref<1x16xf32, #tpu.memory_space<vmem>>, vector<1x16xf32>
    %19 = vector.broadcast %18 : vector<1x16xf32> to vector<20x16xf32>
    %20 = arith.mulf %17, %19 : vector<20x16xf32>
    %cst_18 = arith.constant dense<0.000000e+00> : vector<20xf32>
    %21 = vector.multi_reduction <add>, %20, %cst_18 [1] : vector<20x16xf32> to vector<20xf32>
    %22 = vector.shape_cast %21 : vector<20xf32> to vector<20x1xf32>
    %c0_19 = arith.constant 0 : index
    %c0_20 = arith.constant 0 : index
    %23 = vector.load %arg8[%c0_19, %c0_20] : memref<1x1xf32, #tpu.memory_space<vmem>>, vector<1x1xf32>
    %24 = vector.broadcast %23 : vector<1x1xf32> to vector<20x1xf32>
    %25 = arith.addf %22, %24 : vector<20x1xf32>
    %c0_21 = arith.constant 0 : index
    %c0_22 = arith.constant 0 : index
    %c0_23 = arith.constant 0 : index
    %26 = vector.load %arg9[%c0_21, %c0_22, %c0_23] : memref<1x20x4xf32, #tpu.memory_space<vmem>>, vector<1x20x1xf32>
    %27 = vector.shape_cast %26 : vector<1x20x1xf32> to vector<20x1xf32>
    %28 = vector.shape_cast %25 : vector<20x1xf32> to vector<1x20x1xf32>
    tpu.vector_store %arg9[%c0_21, %c0_22, %c0_23], %28 {strides = array<i32>} : memref<1x20x4xf32, #tpu.memory_space<vmem>>, vector<1x20x1xf32>,
    %c0_24 = arith.constant 0 : index
    %c0_25 = arith.constant 0 : index
    %c0_26 = arith.constant 0 : index
    %29 = vector.load %arg1[%c0_24, %c0_25, %c0_26] : memref<1x26x32xbf16, #tpu.memory_space<vmem>>, vector<1x20x32xbf16>
    %30 = vector.shape_cast %29 : vector<1x20x32xbf16> to vector<20x32xbf16>
    %c5 = arith.constant 5 : index
    %c0_27 = arith.constant 0 : index
    %c0_28 = arith.constant 0 : index
    %31 = vector.load %arg2[%c5, %c0_27, %c0_28] : memref<9x32x16xbf16, #tpu.memory_space<vmem>>, vector<1x32x16xbf16>
    %32 = vector.shape_cast %31 : vector<1x32x16xbf16> to vector<32x16xbf16>
    %cst_29 = arith.constant dense<0.000000e+00> : vector<20x16xf32>
    %33 = tpu.matmul %30, %32, %cst_29 {dimension_numbers = #tpu.dot_dimension_numbers<[1], [0], [0], [1], [0, 0, 1, 1], [], []>} : vector<20x32xbf16>, vector<32x16xbf16>, vector<20x16xf32> -> vector<20x16xf32>
    %c0_30 = arith.constant 0 : index
    %c1 = arith.constant 1 : index
    %c0_31 = arith.constant 0 : index
    %34 = vector.load %arg1[%c0_30, %c1, %c0_31] : memref<1x26x32xbf16, #tpu.memory_space<vmem>>, vector<1x20x32xbf16>
    %35 = vector.shape_cast %34 : vector<1x20x32xbf16> to vector<20x32xbf16>
    %c3 = arith.constant 3 : index
    %c0_32 = arith.constant 0 : index
    %c0_33 = arith.constant 0 : index
    %36 = vector.load %arg2[%c3, %c0_32, %c0_33] : memref<9x32x16xbf16, #tpu.memory_space<vmem>>, vector<1x32x16xbf16>
    %37 = vector.shape_cast %36 : vector<1x32x16xbf16> to vector<32x16xbf16>
    %cst_34 = arith.constant dense<0.000000e+00> : vector<20x16xf32>
    %38 = tpu.matmul %35, %37, %cst_34 {dimension_numbers = #tpu.dot_dimension_numbers<[1], [0], [0], [1], [0, 0, 1, 1], [], []>} : vector<20x32xbf16>, vector<32x16xbf16>, vector<20x16xf32> -> vector<20x16xf32>
    %39 = arith.addf %33, %38 : vector<20x16xf32>
    %40 = vector.broadcast %0 : vector<1x16xf32> to vector<20x16xf32>
    %41 = arith.mulf %39, %40 : vector<20x16xf32>
    %42 = vector.broadcast %1 : vector<1x16xf32> to vector<20x16xf32>
    %43 = arith.addf %41, %42 : vector<20x16xf32>
    %c0_35 = arith.constant 0 : index
    %c1_36 = arith.constant 1 : index
    %c0_37 = arith.constant 0 : index
    %c0_38 = arith.constant 0 : index
    %44 = vector.load %arg5[%c0_35, %c1_36, %c0_37, %c0_38] : memref<1x4x20x16xbf16, #tpu.memory_space<vmem>>, vector<1x1x20x16xbf16>
    %45 = vector.shape_cast %44 : vector<1x1x20x16xbf16> to vector<20x16xbf16>
    %c0_39 = arith.constant 0 : index
    %c0_40 = arith.constant 0 : index
    %46 = vector.load %arg6[%c0_39, %c0_40] : memref<16x16xbf16, #tpu.memory_space<vmem>>, vector<16x16xbf16>
    %cst_41 = arith.constant dense<0.000000e+00> : vector<20x16xf32>
    %47 = tpu.matmul %45, %46, %cst_41 {dimension_numbers = #tpu.dot_dimension_numbers<[1], [0], [0], [1], [0, 0, 1, 1], [], []>} : vector<20x16xbf16>, vector<16x16xbf16>, vector<20x16xf32> -> vector<20x16xf32>
    %48 = arith.addf %43, %47 : vector<20x16xf32>
    %cst_42 = arith.constant 0.000000e+00 : f32
    %49 = vector.broadcast %cst_42 : f32 to vector<20x16xf32>
    %50 = arith.maximumf %48, %49 : vector<20x16xf32>
    %c0_43 = arith.constant 0 : index
    %c0_44 = arith.constant 0 : index
    %51 = vector.load %arg7[%c0_43, %c0_44] : memref<1x16xf32, #tpu.memory_space<vmem>>, vector<1x16xf32>
    %52 = vector.broadcast %51 : vector<1x16xf32> to vector<20x16xf32>
    %53 = arith.mulf %50, %52 : vector<20x16xf32>
    %cst_45 = arith.constant dense<0.000000e+00> : vector<20xf32>
    %54 = vector.multi_reduction <add>, %53, %cst_45 [1] : vector<20x16xf32> to vector<20xf32>
    %55 = vector.shape_cast %54 : vector<20xf32> to vector<20x1xf32>
    %c0_46 = arith.constant 0 : index
    %c0_47 = arith.constant 0 : index
    %56 = vector.load %arg8[%c0_46, %c0_47] : memref<1x1xf32, #tpu.memory_space<vmem>>, vector<1x1xf32>
    %57 = vector.broadcast %56 : vector<1x1xf32> to vector<20x1xf32>
    %58 = arith.addf %55, %57 : vector<20x1xf32>
    %c0_48 = arith.constant 0 : index
    %c0_49 = arith.constant 0 : index
    %c1_50 = arith.constant 1 : index
    %59 = vector.load %arg9[%c0_48, %c0_49, %c1_50] : memref<1x20x4xf32, #tpu.memory_space<vmem>>, vector<1x20x1xf32>
    %60 = vector.shape_cast %59 : vector<1x20x1xf32> to vector<20x1xf32>
    %61 = vector.shape_cast %58 : vector<20x1xf32> to vector<1x20x1xf32>
    tpu.vector_store %arg9[%c0_48, %c0_49, %c1_50], %61 {strides = array<i32>} : memref<1x20x4xf32, #tpu.memory_space<vmem>>, vector<1x20x1xf32>,
    %c0_51 = arith.constant 0 : index
    %c0_52 = arith.constant 0 : index
    %c0_53 = arith.constant 0 : index
    %62 = vector.load %arg1[%c0_51, %c0_52, %c0_53] : memref<1x26x32xbf16, #tpu.memory_space<vmem>>, vector<1x20x32xbf16>
    %63 = vector.shape_cast %62 : vector<1x20x32xbf16> to vector<20x32xbf16>
    %c7 = arith.constant 7 : index
    %c0_54 = arith.constant 0 : index
    %c0_55 = arith.constant 0 : index
    %64 = vector.load %arg2[%c7, %c0_54, %c0_55] : memref<9x32x16xbf16, #tpu.memory_space<vmem>>, vector<1x32x16xbf16>
    %65 = vector.shape_cast %64 : vector<1x32x16xbf16> to vector<32x16xbf16>
    %cst_56 = arith.constant dense<0.000000e+00> : vector<20x16xf32>
    %66 = tpu.matmul %63, %65, %cst_56 {dimension_numbers = #tpu.dot_dimension_numbers<[1], [0], [0], [1], [0, 0, 1, 1], [], []>} : vector<20x32xbf16>, vector<32x16xbf16>, vector<20x16xf32> -> vector<20x16xf32>
    %c0_57 = arith.constant 0 : index
    %c5_58 = arith.constant 5 : index
    %c0_59 = arith.constant 0 : index
    %67 = vector.load %arg1[%c0_57, %c5_58, %c0_59] : memref<1x26x32xbf16, #tpu.memory_space<vmem>>, vector<1x20x32xbf16>
    %68 = vector.shape_cast %67 : vector<1x20x32xbf16> to vector<20x32xbf16>
    %c1_60 = arith.constant 1 : index
    %c0_61 = arith.constant 0 : index
    %c0_62 = arith.constant 0 : index
    %69 = vector.load %arg2[%c1_60, %c0_61, %c0_62] : memref<9x32x16xbf16, #tpu.memory_space<vmem>>, vector<1x32x16xbf16>
    %70 = vector.shape_cast %69 : vector<1x32x16xbf16> to vector<32x16xbf16>
    %cst_63 = arith.constant dense<0.000000e+00> : vector<20x16xf32>
    %71 = tpu.matmul %68, %70, %cst_63 {dimension_numbers = #tpu.dot_dimension_numbers<[1], [0], [0], [1], [0, 0, 1, 1], [], []>} : vector<20x32xbf16>, vector<32x16xbf16>, vector<20x16xf32> -> vector<20x16xf32>
    %72 = arith.addf %66, %71 : vector<20x16xf32>
    %73 = vector.broadcast %0 : vector<1x16xf32> to vector<20x16xf32>
    %74 = arith.mulf %72, %73 : vector<20x16xf32>
    %75 = vector.broadcast %1 : vector<1x16xf32> to vector<20x16xf32>
    %76 = arith.addf %74, %75 : vector<20x16xf32>
    %c0_64 = arith.constant 0 : index
    %c2 = arith.constant 2 : index
    %c0_65 = arith.constant 0 : index
    %c0_66 = arith.constant 0 : index
    %77 = vector.load %arg5[%c0_64, %c2, %c0_65, %c0_66] : memref<1x4x20x16xbf16, #tpu.memory_space<vmem>>, vector<1x1x20x16xbf16>
    %78 = vector.shape_cast %77 : vector<1x1x20x16xbf16> to vector<20x16xbf16>
    %c0_67 = arith.constant 0 : index
    %c0_68 = arith.constant 0 : index
    %79 = vector.load %arg6[%c0_67, %c0_68] : memref<16x16xbf16, #tpu.memory_space<vmem>>, vector<16x16xbf16>
    %cst_69 = arith.constant dense<0.000000e+00> : vector<20x16xf32>
    %80 = tpu.matmul %78, %79, %cst_69 {dimension_numbers = #tpu.dot_dimension_numbers<[1], [0], [0], [1], [0, 0, 1, 1], [], []>} : vector<20x16xbf16>, vector<16x16xbf16>, vector<20x16xf32> -> vector<20x16xf32>
    %81 = arith.addf %76, %80 : vector<20x16xf32>
    %cst_70 = arith.constant 0.000000e+00 : f32
    %82 = vector.broadcast %cst_70 : f32 to vector<20x16xf32>
    %83 = arith.maximumf %81, %82 : vector<20x16xf32>
    %c0_71 = arith.constant 0 : index
    %c0_72 = arith.constant 0 : index
    %84 = vector.load %arg7[%c0_71, %c0_72] : memref<1x16xf32, #tpu.memory_space<vmem>>, vector<1x16xf32>
    %85 = vector.broadcast %84 : vector<1x16xf32> to vector<20x16xf32>
    %86 = arith.mulf %83, %85 : vector<20x16xf32>
    %cst_73 = arith.constant dense<0.000000e+00> : vector<20xf32>
    %87 = vector.multi_reduction <add>, %86, %cst_73 [1] : vector<20x16xf32> to vector<20xf32>
    %88 = vector.shape_cast %87 : vector<20xf32> to vector<20x1xf32>
    %c0_74 = arith.constant 0 : index
    %c0_75 = arith.constant 0 : index
    %89 = vector.load %arg8[%c0_74, %c0_75] : memref<1x1xf32, #tpu.memory_space<vmem>>, vector<1x1xf32>
    %90 = vector.broadcast %89 : vector<1x1xf32> to vector<20x1xf32>
    %91 = arith.addf %88, %90 : vector<20x1xf32>
    %c0_76 = arith.constant 0 : index
    %c0_77 = arith.constant 0 : index
    %c2_78 = arith.constant 2 : index
    %92 = vector.load %arg9[%c0_76, %c0_77, %c2_78] : memref<1x20x4xf32, #tpu.memory_space<vmem>>, vector<1x20x1xf32>
    %93 = vector.shape_cast %92 : vector<1x20x1xf32> to vector<20x1xf32>
    %94 = vector.shape_cast %91 : vector<20x1xf32> to vector<1x20x1xf32>
    tpu.vector_store %arg9[%c0_76, %c0_77, %c2_78], %94 {strides = array<i32>} : memref<1x20x4xf32, #tpu.memory_space<vmem>>, vector<1x20x1xf32>,
    %c0_79 = arith.constant 0 : index
    %c0_80 = arith.constant 0 : index
    %c0_81 = arith.constant 0 : index
    %95 = vector.load %arg1[%c0_79, %c0_80, %c0_81] : memref<1x26x32xbf16, #tpu.memory_space<vmem>>, vector<1x20x32xbf16>
    %96 = vector.shape_cast %95 : vector<1x20x32xbf16> to vector<20x32xbf16>
    %c8 = arith.constant 8 : index
    %c0_82 = arith.constant 0 : index
    %c0_83 = arith.constant 0 : index
    %97 = vector.load %arg2[%c8, %c0_82, %c0_83] : memref<9x32x16xbf16, #tpu.memory_space<vmem>>, vector<1x32x16xbf16>
    %98 = vector.shape_cast %97 : vector<1x32x16xbf16> to vector<32x16xbf16>
    %cst_84 = arith.constant dense<0.000000e+00> : vector<20x16xf32>
    %99 = tpu.matmul %96, %98, %cst_84 {dimension_numbers = #tpu.dot_dimension_numbers<[1], [0], [0], [1], [0, 0, 1, 1], [], []>} : vector<20x32xbf16>, vector<32x16xbf16>, vector<20x16xf32> -> vector<20x16xf32>
    %c0_85 = arith.constant 0 : index
    %c1_86 = arith.constant 1 : index
    %c0_87 = arith.constant 0 : index
    %100 = vector.load %arg1[%c0_85, %c1_86, %c0_87] : memref<1x26x32xbf16, #tpu.memory_space<vmem>>, vector<1x20x32xbf16>
    %101 = vector.shape_cast %100 : vector<1x20x32xbf16> to vector<20x32xbf16>
    %c6 = arith.constant 6 : index
    %c0_88 = arith.constant 0 : index
    %c0_89 = arith.constant 0 : index
    %102 = vector.load %arg2[%c6, %c0_88, %c0_89] : memref<9x32x16xbf16, #tpu.memory_space<vmem>>, vector<1x32x16xbf16>
    %103 = vector.shape_cast %102 : vector<1x32x16xbf16> to vector<32x16xbf16>
    %cst_90 = arith.constant dense<0.000000e+00> : vector<20x16xf32>
    %104 = tpu.matmul %101, %103, %cst_90 {dimension_numbers = #tpu.dot_dimension_numbers<[1], [0], [0], [1], [0, 0, 1, 1], [], []>} : vector<20x32xbf16>, vector<32x16xbf16>, vector<20x16xf32> -> vector<20x16xf32>
    %105 = arith.addf %99, %104 : vector<20x16xf32>
    %c0_91 = arith.constant 0 : index
    %c5_92 = arith.constant 5 : index
    %c0_93 = arith.constant 0 : index
    %106 = vector.load %arg1[%c0_91, %c5_92, %c0_93] : memref<1x26x32xbf16, #tpu.memory_space<vmem>>, vector<1x20x32xbf16>
    %107 = vector.shape_cast %106 : vector<1x20x32xbf16> to vector<20x32xbf16>
    %c2_94 = arith.constant 2 : index
    %c0_95 = arith.constant 0 : index
    %c0_96 = arith.constant 0 : index
    %108 = vector.load %arg2[%c2_94, %c0_95, %c0_96] : memref<9x32x16xbf16, #tpu.memory_space<vmem>>, vector<1x32x16xbf16>
    %109 = vector.shape_cast %108 : vector<1x32x16xbf16> to vector<32x16xbf16>
    %cst_97 = arith.constant dense<0.000000e+00> : vector<20x16xf32>
    %110 = tpu.matmul %107, %109, %cst_97 {dimension_numbers = #tpu.dot_dimension_numbers<[1], [0], [0], [1], [0, 0, 1, 1], [], []>} : vector<20x32xbf16>, vector<32x16xbf16>, vector<20x16xf32> -> vector<20x16xf32>
    %111 = arith.addf %105, %110 : vector<20x16xf32>
    %c0_98 = arith.constant 0 : index
    %c6_99 = arith.constant 6 : index
    %c0_100 = arith.constant 0 : index
    %112 = vector.load %arg1[%c0_98, %c6_99, %c0_100] : memref<1x26x32xbf16, #tpu.memory_space<vmem>>, vector<1x20x32xbf16>
    %113 = vector.shape_cast %112 : vector<1x20x32xbf16> to vector<20x32xbf16>
    %c0_101 = arith.constant 0 : index
    %c0_102 = arith.constant 0 : index
    %c0_103 = arith.constant 0 : index
    %114 = vector.load %arg2[%c0_101, %c0_102, %c0_103] : memref<9x32x16xbf16, #tpu.memory_space<vmem>>, vector<1x32x16xbf16>
    %115 = vector.shape_cast %114 : vector<1x32x16xbf16> to vector<32x16xbf16>
    %cst_104 = arith.constant dense<0.000000e+00> : vector<20x16xf32>
    %116 = tpu.matmul %113, %115, %cst_104 {dimension_numbers = #tpu.dot_dimension_numbers<[1], [0], [0], [1], [0, 0, 1, 1], [], []>} : vector<20x32xbf16>, vector<32x16xbf16>, vector<20x16xf32> -> vector<20x16xf32>
    %117 = arith.addf %111, %116 : vector<20x16xf32>
    %118 = vector.broadcast %0 : vector<1x16xf32> to vector<20x16xf32>
    %119 = arith.mulf %117, %118 : vector<20x16xf32>
    %120 = vector.broadcast %1 : vector<1x16xf32> to vector<20x16xf32>
    %121 = arith.addf %119, %120 : vector<20x16xf32>
    %c0_105 = arith.constant 0 : index
    %c3_106 = arith.constant 3 : index
    %c0_107 = arith.constant 0 : index
    %c0_108 = arith.constant 0 : index
    %122 = vector.load %arg5[%c0_105, %c3_106, %c0_107, %c0_108] : memref<1x4x20x16xbf16, #tpu.memory_space<vmem>>, vector<1x1x20x16xbf16>
    %123 = vector.shape_cast %122 : vector<1x1x20x16xbf16> to vector<20x16xbf16>
    %c0_109 = arith.constant 0 : index
    %c0_110 = arith.constant 0 : index
    %124 = vector.load %arg6[%c0_109, %c0_110] : memref<16x16xbf16, #tpu.memory_space<vmem>>, vector<16x16xbf16>
    %cst_111 = arith.constant dense<0.000000e+00> : vector<20x16xf32>
    %125 = tpu.matmul %123, %124, %cst_111 {dimension_numbers = #tpu.dot_dimension_numbers<[1], [0], [0], [1], [0, 0, 1, 1], [], []>} : vector<20x16xbf16>, vector<16x16xbf16>, vector<20x16xf32> -> vector<20x16xf32>
    %126 = arith.addf %121, %125 : vector<20x16xf32>
    %cst_112 = arith.constant 0.000000e+00 : f32
    %127 = vector.broadcast %cst_112 : f32 to vector<20x16xf32>
    %128 = arith.maximumf %126, %127 : vector<20x16xf32>
    %c0_113 = arith.constant 0 : index
    %c0_114 = arith.constant 0 : index
    %129 = vector.load %arg7[%c0_113, %c0_114] : memref<1x16xf32, #tpu.memory_space<vmem>>, vector<1x16xf32>
    %130 = vector.broadcast %129 : vector<1x16xf32> to vector<20x16xf32>
    %131 = arith.mulf %128, %130 : vector<20x16xf32>
    %cst_115 = arith.constant dense<0.000000e+00> : vector<20xf32>
    %132 = vector.multi_reduction <add>, %131, %cst_115 [1] : vector<20x16xf32> to vector<20xf32>
    %133 = vector.shape_cast %132 : vector<20xf32> to vector<20x1xf32>
    %c0_116 = arith.constant 0 : index
    %c0_117 = arith.constant 0 : index
    %134 = vector.load %arg8[%c0_116, %c0_117] : memref<1x1xf32, #tpu.memory_space<vmem>>, vector<1x1xf32>
    %135 = vector.broadcast %134 : vector<1x1xf32> to vector<20x1xf32>
    %136 = arith.addf %133, %135 : vector<20x1xf32>
    %c0_118 = arith.constant 0 : index
    %c0_119 = arith.constant 0 : index
    %c3_120 = arith.constant 3 : index
    %137 = vector.load %arg9[%c0_118, %c0_119, %c3_120] : memref<1x20x4xf32, #tpu.memory_space<vmem>>, vector<1x20x1xf32>
    %138 = vector.shape_cast %137 : vector<1x20x1xf32> to vector<20x1xf32>
    %139 = vector.shape_cast %136 : vector<20x1xf32> to vector<1x20x1xf32>
    tpu.vector_store %arg9[%c0_118, %c0_119, %c3_120], %139 {strides = array<i32>} : memref<1x20x4xf32, #tpu.memory_space<vmem>>, vector<1x20x1xf32>,
    return
  }
  func.func @transform_0(%arg0: i32) -> (i32, i32, i32) {
    %c0_i32 = arith.constant 0 : i32
    %c0_i32_0 = arith.constant 0 : i32
    %c0_i32_1 = arith.constant 0 : i32
    return %arg0, %c0_i32, %c0_i32_0 : i32, i32, i32
  }
  func.func @transform_1(%arg0: i32) -> (i32, i32, i32) {
    %c0_i32 = arith.constant 0 : i32
    %c0_i32_0 = arith.constant 0 : i32
    %c0_i32_1 = arith.constant 0 : i32
    %c0_i32_2 = arith.constant 0 : i32
    return %c0_i32, %c0_i32_0, %c0_i32_1 : i32, i32, i32
  }
  func.func @transform_2(%arg0: i32) -> (i32, i32) {
    %c0_i32 = arith.constant 0 : i32
    %c0_i32_0 = arith.constant 0 : i32
    %c0_i32_1 = arith.constant 0 : i32
    return %c0_i32, %c0_i32_0 : i32, i32
  }
  func.func @transform_3(%arg0: i32) -> (i32, i32) {
    %c0_i32 = arith.constant 0 : i32
    %c0_i32_0 = arith.constant 0 : i32
    %c0_i32_1 = arith.constant 0 : i32
    return %c0_i32, %c0_i32_0 : i32, i32
  }
  func.func @transform_4(%arg0: i32) -> (i32, i32, i32, i32) {
    %c0_i32 = arith.constant 0 : i32
    %c0_i32_0 = arith.constant 0 : i32
    %c0_i32_1 = arith.constant 0 : i32
    %c0_i32_2 = arith.constant 0 : i32
    return %arg0, %c0_i32, %c0_i32_0, %c0_i32_1 : i32, i32, i32, i32
  }
  func.func @transform_5(%arg0: i32) -> (i32, i32) {
    %c0_i32 = arith.constant 0 : i32
    %c0_i32_0 = arith.constant 0 : i32
    %c0_i32_1 = arith.constant 0 : i32
    return %c0_i32, %c0_i32_0 : i32, i32
  }
  func.func @transform_6(%arg0: i32) -> (i32, i32) {
    %c0_i32 = arith.constant 0 : i32
    %c0_i32_0 = arith.constant 0 : i32
    %c0_i32_1 = arith.constant 0 : i32
    return %c0_i32, %c0_i32_0 : i32, i32
  }
  func.func @transform_7(%arg0: i32) -> (i32, i32) {
    %c0_i32 = arith.constant 0 : i32
    %c0_i32_0 = arith.constant 0 : i32
    %c0_i32_1 = arith.constant 0 : i32
    return %c0_i32, %c0_i32_0 : i32, i32
  }
  func.func @transform_8(%arg0: i32) -> (i32, i32, i32) {
    %c0_i32 = arith.constant 0 : i32
    %c0_i32_0 = arith.constant 0 : i32
    %c0_i32_1 = arith.constant 0 : i32
    return %arg0, %c0_i32, %c0_i32_0 : i32, i32, i32
  }
}

</mosaic_0001>

<llo_original>
// kernel: res_submodule_forward.6
$region0: #{res_submodule_forward.6}
  #allocation0 [shape = 'u32[]', space=smem, size = 0x4, offset = 0x4, fixed_abs, tag = 'smem constant byte address 0x4 - core index']
  #allocation1 [shape = 'u32[72,128]{1,0:T(1,128)}', space=vmem, size = 0x9000, scoped, tag = 'internal scratch']
  %s0 = inlined_call_operand.vmem [shape: bf16[2,26,16], index: 0, kind: input, shape index: {}]
  %s1 = inlined_call_operand.vmem [shape: bf16[2,26,16], index: 1, kind: input, shape index: {}]
  %s2 = inlined_call_operand.vmem [shape: bf16[2,26,16], index: 2, kind: input, shape index: {}]
  %s3 = inlined_call_operand.vmem [shape: bf16[2,26,16], index: 3, kind: input, shape index: {}]
  %s4 = inlined_call_operand.vmem [shape: bf16[9,16,32], index: 4, kind: input, shape index: {}]
  %s5 = inlined_call_operand.vmem [shape: f32[1,32], index: 5, kind: input, shape index: {}]
  %s6 = inlined_call_operand.vmem [shape: f32[1,32], index: 6, kind: input, shape index: {}]
  %s7 = inlined_call_operand.vmem [shape: bf16[2,20,32], index: 7, kind: output, shape index: {}]
  %s8 = sld [smem:[#allocation0]]
  $region61: #{res_submodule_forward.6} parent=0
    _
  %s10 = ssub.s32 1, %s8
  %s11 = scalar_select 0, %s10, %s8
  loop: start=0, step=1, limit=4
  $region2: #{res_submodule_forward.6} parent=0 // loop_pre_header
    _
  $region3: #{res_submodule_forward.6} parent=0 // loop_header
    %s13 = sphi 0, %s17
    %p14 = scmp.ge.s32.totalorder %s13, 4
    %s23 = sphi 0, %s25
    %s26 = sphi 0, %s23
    %s27 = sphi 0, %s26
    %s43 = sphi 0, %s27
    %s49 = sphi 0, %s51
    %s52 = sphi 0, %s49
    %s53 = sphi 0, %s52
    %s69 = sphi 0, %s53
    %s75 = sphi 0, %s77
    %s78 = sphi 0, %s75
    %s79 = sphi 0, %s78
    %s95 = sphi 0, %s79
    %s101 = sphi 0, %s103
    %s104 = sphi 0, %s101
    %s105 = sphi 0, %s104
    %s121 = sphi 0, %s105
    %s125 = sphi 0, %s125
    %s127 = sphi 0, %s125
    %s128 = sphi 0, %s127
    %s142 = sphi 0, %s128
    %s146 = sphi 0, %s146
    %s148 = sphi 0, %s146
    %s149 = sphi 0, %s148
    %s163 = sphi 0, %s149
    %s167 = sphi 0, %s167
    %s169 = sphi 0, %s167
    %s170 = sphi 0, %s169
    %s184 = sphi 0, %s170
    %s190 = sphi 0, %s192
    %s193 = sphi 0, %s190
    %s194 = sphi 0, %s193
    %s210 = sphi 0, %s194
  $region4: #{res_submodule_forward.6} parent=0 // loop_header_branch
    %16 = sbr.rel (%p14) target = $region8
  $region5: #{res_submodule_forward.6} parent=0 // loop_body
    %s18 = ssub.s32 %s13, 1
    %s19 = ssub.s32 %s13, 2
    %s20 = sadd.s32 %s13, 1
    %s21 = ssub.s32 %s13, %s20
    %p22 = scmp.eq.s32.totalorder %s21, 0
    %s24 = sadd.s32 %s23, 1
    %s25 = scalar_select %p22, %s23, %s24
    %p28 = pneg %p22
    %p29 = scmp.eq.s32.totalorder %s13, 1
    %p30 = por %p28, %p29
    %p31 = scmp.ne.s32.totalorder %s23, %s26
    %p32 = scmp.eq.s32.totalorder %s13, 0
    %p33 = por %p31, %p32
    %p34 = scmp.ne.s32.totalorder %s23, %s26
    %p35 = scmp.eq.s32.totalorder %s18, 1
    %p36 = por %p34, %p35
    %p37 = scmp.ne.s32.totalorder %s26, %s27
    %p38 = scmp.eq.s32.totalorder %s18, 0
    %p39 = por %p37, %p38
    %p40 = scmp.ne.s32.totalorder %s26, %s27
    %p41 = scmp.eq.s32.totalorder %s19, 1
    %p42 = por %p40, %p41
    %p44 = scmp.ne.s32.totalorder %s27, %s43
    %p45 = scmp.eq.s32.totalorder %s19, 0
    %p46 = por %p44, %p45
    %s47 = ssub.s32 %s13, %s20
    %p48 = scmp.eq.s32.totalorder %s47, 0
    %s50 = sadd.s32 %s49, 1
    %s51 = scalar_select %p48, %s49, %s50
    %p54 = pneg %p48
    %p55 = scmp.eq.s32.totalorder %s13, 1
    %p56 = por %p54, %p55
    %p57 = scmp.ne.s32.totalorder %s49, %s52
    %p58 = scmp.eq.s32.totalorder %s13, 0
    %p59 = por %p57, %p58
    %p60 = scmp.ne.s32.totalorder %s49, %s52
    %p61 = scmp.eq.s32.totalorder %s18, 1
    %p62 = por %p60, %p61
    %p63 = scmp.ne.s32.totalorder %s52, %s53
    %p64 = scmp.eq.s32.totalorder %s18, 0
    %p65 = por %p63, %p64
    %p66 = scmp.ne.s32.totalorder %s52, %s53
    %p67 = scmp.eq.s32.totalorder %s19, 1
    %p68 = por %p66, %p67
    %p70 = scmp.ne.s32.totalorder %s53, %s69
    %p71 = scmp.eq.s32.totalorder %s19, 0
    %p72 = por %p70, %p71
    %s73 = ssub.s32 %s13, %s20
    %p74 = scmp.eq.s32.totalorder %s73, 0
    %s76 = sadd.s32 %s75, 1
    %s77 = scalar_select %p74, %s75, %s76
    %p80 = pneg %p74
    %p81 = scmp.eq.s32.totalorder %s13, 1
    %p82 = por %p80, %p81
    %p83 = scmp.ne.s32.totalorder %s75, %s78
    %p84 = scmp.eq.s32.totalorder %s13, 0
    %p85 = por %p83, %p84
    %p86 = scmp.ne.s32.totalorder %s75, %s78
    %p87 = scmp.eq.s32.totalorder %s18, 1
    %p88 = por %p86, %p87
    %p89 = scmp.ne.s32.totalorder %s78, %s79
    %p90 = scmp.eq.s32.totalorder %s18, 0
    %p91 = por %p89, %p90
    %p92 = scmp.ne.s32.totalorder %s78, %s79
    %p93 = scmp.eq.s32.totalorder %s19, 1
    %p94 = por %p92, %p93
    %p96 = scmp.ne.s32.totalorder %s79, %s95
    %p97 = scmp.eq.s32.totalorder %s19, 0
    %p98 = por %p96, %p97
    %s99 = ssub.s32 %s13, %s20
    %p100 = scmp.eq.s32.totalorder %s99, 0
    %s102 = sadd.s32 %s101, 1
    %s103 = scalar_select %p100, %s101, %s102
    %p106 = pneg %p100
    %p107 = scmp.eq.s32.totalorder %s13, 1
    %p108 = por %p106, %p107
    %p109 = scmp.ne.s32.totalorder %s101, %s104
    %p110 = scmp.eq.s32.totalorder %s13, 0
    %p111 = por %p109, %p110
    %p112 = scmp.ne.s32.totalorder %s101, %s104
    %p113 = scmp.eq.s32.totalorder %s18, 1
    %p114 = por %p112, %p113
    %p115 = scmp.ne.s32.totalorder %s104, %s105
    %p116 = scmp.eq.s32.totalorder %s18, 0
    %p117 = por %p115, %p116
    %p118 = scmp.ne.s32.totalorder %s104, %s105
    %p119 = scmp.eq.s32.totalorder %s19, 1
    %p120 = por %p118, %p119
    %p122 = scmp.ne.s32.totalorder %s105, %s121
    %p123 = scmp.eq.s32.totalorder %s19, 0
    %p124 = por %p122, %p123
    %s126 = sadd.s32 %s125, 1
    %p129 = scmp.eq.s32.totalorder %s13, 1
    %p130 = scmp.ne.s32.totalorder %s125, %s127
    %p131 = scmp.eq.s32.totalorder %s13, 0
    %p132 = por %p130, %p131
    %p133 = scmp.ne.s32.totalorder %s125, %s127
    %p134 = scmp.eq.s32.totalorder %s18, 1
    %p135 = por %p133, %p134
    %p136 = scmp.ne.s32.totalorder %s127, %s128
    %p137 = scmp.eq.s32.totalorder %s18, 0
    %p138 = por %p136, %p137
    %p139 = scmp.ne.s32.totalorder %s127, %s128
    %p140 = scmp.eq.s32.totalorder %s19, 1
    %p141 = por %p139, %p140
    %p143 = scmp.ne.s32.totalorder %s128, %s142
    %p144 = scmp.eq.s32.totalorder %s19, 0
    %p145 = por %p143, %p144
    %s147 = sadd.s32 %s146, 1
    %p150 = scmp.eq.s32.totalorder %s13, 1
    %p151 = scmp.ne.s32.totalorder %s146, %s148
    %p152 = scmp.eq.s32.totalorder %s13, 0
    %p153 = por %p151, %p152
    %p154 = scmp.ne.s32.totalorder %s146, %s148
    %p155 = scmp.eq.s32.totalorder %s18, 1
    %p156 = por %p154, %p155
    %p157 = scmp.ne.s32.totalorder %s148, %s149
    %p158 = scmp.eq.s32.totalorder %s18, 0
    %p159 = por %p157, %p158
    %p160 = scmp.ne.s32.totalorder %s148, %s149
    %p161 = scmp.eq.s32.totalorder %s19, 1
    %p162 = por %p160, %p161
    %p164 = scmp.ne.s32.totalorder %s149, %s163
    %p165 = scmp.eq.s32.totalorder %s19, 0
    %p166 = por %p164, %p165
    %s168 = sadd.s32 %s167, 1
    %p171 = scmp.eq.s32.totalorder %s13, 1
    %p172 = scmp.ne.s32.totalorder %s167, %s169
    %p173 = scmp.eq.s32.totalorder %s13, 0
    %p174 = por %p172, %p173
    %p175 = scmp.ne.s32.totalorder %s167, %s169
    %p176 = scmp.eq.s32.totalorder %s18, 1
    %p177 = por %p175, %p176
    %p178 = scmp.ne.s32.totalorder %s169, %s170
    %p179 = scmp.eq.s32.totalorder %s18, 0
    %p180 = por %p178, %p179
    %p181 = scmp.ne.s32.totalorder %s169, %s170
    %p182 = scmp.eq.s32.totalorder %s19, 1
    %p183 = por %p181, %p182
    %p185 = scmp.ne.s32.totalorder %s170, %s184
    %p186 = scmp.eq.s32.totalorder %s19, 0
    %p187 = por %p185, %p186
    %s188 = ssub.s32 %s13, %s20
    %p189 = scmp.eq.s32.totalorder %s188, 0
    %s191 = sadd.s32 %s190, 1
    %s192 = scalar_select %p189, %s190, %s191
    %p195 = pneg %p189
    %p196 = scmp.eq.s32.totalorder %s13, 1
    %p197 = por %p195, %p196
    %p198 = scmp.ne.s32.totalorder %s190, %s193
    %p199 = scmp.eq.s32.totalorder %s13, 0
    %p200 = por %p198, %p199
    %p201 = scmp.ne.s32.totalorder %s190, %s193
    %p202 = scmp.eq.s32.totalorder %s18, 1
    %p203 = por %p201, %p202
    %p204 = scmp.ne.s32.totalorder %s193, %s194
    %p205 = scmp.eq.s32.totalorder %s18, 0
    %p206 = por %p204, %p205
    %p207 = scmp.ne.s32.totalorder %s193, %s194
    %p208 = scmp.eq.s32.totalorder %s19, 1
    %p209 = por %p207, %p208
    %p211 = scmp.ne.s32.totalorder %s194, %s210
    %p212 = scmp.eq.s32.totalorder %s19, 0
    %p213 = por %p211, %p212
    %p214 = scmp.le.s32.totalorder 1, %s13
    %p215 = scmp.lt.s32.totalorder %s13, 3
    %p216 = pnand %p214, %p215
    %p217 = pneg %p216
    // Predicated region
    $region9: #{res_submodule_forward.6} parent=5 // pred_check
      _
    $region10: #{res_submodule_forward.6} parent=5 // pred_check_branch
      %219 = sbr.rel (%p216) target = $region12
    $region11: #{res_submodule_forward.6} parent=5 // pred_region
      %s220 = ssub.s32 %s13, 1
      // Predicated region
      $region13: #{res_submodule_forward.6} parent=11 // pred_check
        %p221 = pneg %p138
      $region14: #{res_submodule_forward.6} parent=11 // pred_check_branch
        %223 = sbr.rel (%p221) target = $region16
      $region15: #{res_submodule_forward.6} parent=11 // pred_region
        _
      $region16: #{res_submodule_forward.6} parent=11 // pred_fallthru
        _
      // Predicated region
      $region17: #{res_submodule_forward.6} parent=11 // pred_check
        %p224 = pneg %p159
      $region18: #{res_submodule_forward.6} parent=11 // pred_check_branch
        %226 = sbr.rel (%p224) target = $region20
      $region19: #{res_submodule_forward.6} parent=11 // pred_region
        _
      $region20: #{res_submodule_forward.6} parent=11 // pred_fallthru
        _
      // Predicated region
      $region21: #{res_submodule_forward.6} parent=11 // pred_check
        %p227 = pneg %p180
      $region22: #{res_submodule_forward.6} parent=11 // pred_check_branch
        %229 = sbr.rel (%p227) target = $region24
      $region23: #{res_submodule_forward.6} parent=11 // pred_region
        _
      $region24: #{res_submodule_forward.6} parent=11 // pred_fallthru
        _
    $region12: #{res_submodule_forward.6} parent=5 // pred_fallthru
      _
    %p230 = scmp.lt.s32.totalorder %s13, 2
    // Predicated region
    $region25: #{res_submodule_forward.6} parent=5 // pred_check
      %p231 = pneg %p230
    $region26: #{res_submodule_forward.6} parent=5 // pred_check_branch
      %233 = sbr.rel (%p231) target = $region28
    $region27: #{res_submodule_forward.6} parent=5 // pred_region
      // Predicated region
      $region29: #{res_submodule_forward.6} parent=27 // pred_check
        %p234 = pneg %p33
      $region30: #{res_submodule_forward.6} parent=27 // pred_check_branch
        %236 = sbr.rel (%p234) target = $region32
      $region31: #{res_submodule_forward.6} parent=27 // pred_region
        %p237 = scmp.lt.s32.totalorder %s13, 1
        %s238 = scalar_select %p237, %s13, 1
        %s239 = smul.addr %s238, 4
        %s240 = smul.addr %s239, 4
        %s241 = scalar_lea.vmem %s0, %s240
      $region32: #{res_submodule_forward.6} parent=27 // pred_fallthru
        _
      // Predicated region
      $region33: #{res_submodule_forward.6} parent=27 // pred_check
        %p242 = pneg %p59
      $region34: #{res_submodule_forward.6} parent=27 // pred_check_branch
        %244 = sbr.rel (%p242) target = $region36
      $region35: #{res_submodule_forward.6} parent=27 // pred_region
        %p245 = scmp.lt.s32.totalorder %s13, 1
        %s246 = scalar_select %p245, %s13, 1
        %s247 = smul.addr %s246, 4
        %s248 = smul.addr %s247, 4
        %s249 = scalar_lea.vmem %s1, %s248
      $region36: #{res_submodule_forward.6} parent=27 // pred_fallthru
        _
      // Predicated region
      $region37: #{res_submodule_forward.6} parent=27 // pred_check
        %p250 = pneg %p85
      $region38: #{res_submodule_forward.6} parent=27 // pred_check_branch
        %252 = sbr.rel (%p250) target = $region40
      $region39: #{res_submodule_forward.6} parent=27 // pred_region
        %p253 = scmp.lt.s32.totalorder %s13, 1
        %s254 = scalar_select %p253, %s13, 1
        %s255 = smul.addr %s254, 4
        %s256 = smul.addr %s255, 4
        %s257 = scalar_lea.vmem %s2, %s256
      $region40: #{res_submodule_forward.6} parent=27 // pred_fallthru
        _
      // Predicated region
      $region41: #{res_submodule_forward.6} parent=27 // pred_check
        %p258 = pneg %p111
      $region42: #{res_submodule_forward.6} parent=27 // pred_check_branch
        %260 = sbr.rel (%p258) target = $region44
      $region43: #{res_submodule_forward.6} parent=27 // pred_region
        %p261 = scmp.lt.s32.totalorder %s13, 1
        %s262 = scalar_select %p261, %s13, 1
        %s263 = smul.addr %s262, 4
        %s264 = smul.addr %s263, 4
        %s265 = scalar_lea.vmem %s3, %s264
      $region44: #{res_submodule_forward.6} parent=27 // pred_fallthru
        _
    $region28: #{res_submodule_forward.6} parent=5 // pred_fallthru
      _
    %p266 = scmp.le.s32.totalorder 1, %s13
    %p267 = scmp.lt.s32.totalorder %s13, 3
    %p268 = pnand %p266, %p267
    %p269 = pneg %p268
    // Predicated region
    $region45: #{res_submodule_forward.6} parent=5 // pred_check
      _
    $region46: #{res_submodule_forward.6} parent=5 // pred_check_branch
      %271 = sbr.rel (%p268) target = $region48
    $region47: #{res_submodule_forward.6} parent=5 // pred_region
      %s272 = ssub.s32 %s13, 1
      %p273 = scmp.lt.s32.totalorder %s18, 1
      %s274 = scalar_select %p273, %s18, 1
      %s275 = smul.addr %s274, 4
      %s276 = smul.addr %s275, 4
      %s277 = scalar_lea.vmem %s0, %s276
      %p278 = pneg %p39
      %p279 = pneg %p36
      %p280 = scmp.lt.s32.totalorder %s18, 1
      %s281 = scalar_select %p280, %s18, 1
      %s282 = smul.addr %s281, 4
      %s283 = smul.addr %s282, 4
      %s284 = scalar_lea.vmem %s1, %s283
      %p285 = pneg %p65
      %p286 = pneg %p62
      %p287 = scmp.lt.s32.totalorder %s18, 1
      %s288 = scalar_select %p287, %s18, 1
      %s289 = smul.addr %s288, 4
      %s290 = smul.addr %s289, 4
      %s291 = scalar_lea.vmem %s2, %s290
      %p292 = pneg %p91
      %p293 = pneg %p88
      %p294 = scmp.lt.s32.totalorder %s18, 1
      %s295 = scalar_select %p294, %s18, 1
      %s296 = smul.addr %s295, 4
      %s297 = smul.addr %s296, 4
      %s298 = scalar_lea.vmem %s3, %s297
      %p299 = pneg %p117
      %p300 = pneg %p114
      %p301 = pneg %p138
      %p302 = pneg %p135
      %p303 = pneg %p159
      %p304 = pneg %p156
      %p305 = pneg %p180
      %p306 = pneg %p177
      %p307 = pneg %p206
      %p308 = pneg %p203
      %p309 = scmp.lt.s32.totalorder %s18, 1
      %s310 = scalar_select %p309, %s18, 1
      %s311 = smul.addr %s310, 3
      %s312 = smul.addr %s311, 4
      %s313 = scalar_lea.vmem %s7, %s312
      %p314 = scmp.lt.s32.totalorder %s18, 1
      %s315 = scalar_select %p314, %s18, 1
      %s316 = smul.addr %s315, 4
      %s317 = smul.addr %s316, 4
      %s318 = scalar_lea.vmem %s0, %s317
      %p319 = scmp.lt.s32.totalorder %s18, 1
      %s320 = scalar_select %p319, %s18, 1
      %s321 = smul.addr %s320, 4
      %s322 = smul.addr %s321, 4
      %s323 = scalar_lea.vmem %s1, %s322
      %p324 = scmp.lt.s32.totalorder %s18, 1
      %s325 = scalar_select %p324, %s18, 1
      %s326 = smul.addr %s325, 4
      %s327 = smul.addr %s326, 4
      %s328 = scalar_lea.vmem %s2, %s327
      %p329 = scmp.lt.s32.totalorder %s18, 1
      %s330 = scalar_select %p329, %s18, 1
      %s331 = smul.addr %s330, 4
      %s332 = smul.addr %s331, 4
      %s333 = scalar_lea.vmem %s3, %s332
      %p334 = scmp.lt.s32.totalorder %s18, 1
      %s335 = scalar_select %p334, %s18, 1
      %s336 = smul.addr %s335, 3
      %s337 = smul.addr %s336, 4
      %s338 = scalar_lea.vmem %s7, %s337
      %v340 = vld [vmem:[%s5] sm:$0x1]
      %v341 = vld [vmem:[%s6] sm:$0x1]
      %v342 = vld [vmem:[%s318] sm:$0xf]
      %v343 = vld [vmem:[%s318 + $0x4] sm:$0xf]
      %v344 = vld [vmem:[%s318 + $0x8] sm:$0x3]
      %v345 = vld [vmem:[%s4] sm:$0xf]
      %v346 = vld [vmem:[%s4 + $0x4] sm:$0xf]
      %v347 = vld [vmem:[%s323] sm:$0xf]
      %v348 = vld [vmem:[%s323 + $0x4] sm:$0xf]
      %v349 = vld [vmem:[%s323 + $0x8] sm:$0x3]
      %s350 = scalar_lea.vmem %s4, 8
      %v351 = vld [vmem:[%s350] sm:$0xf]
      %v352 = vld [vmem:[%s350 + $0x4] sm:$0xf]
      %v356 = vunpack.c.l.b16 %v347
      %v357 = vunpack.c.l.b16 %v348
      %v358 = vunpack.c.l.b16 %v349
      %v359 = vpack.c.b16 %v357, %v356
      %v360 = vpack.c.b16 %v358, %v358
      %v363 = vunpack.c.l.b16 %v351
      %v364 = vunpack.c.l.b16 %v352
      %v365 = vpack.c.b16 %v364, %v363
      %vm367 = vcmask 130048
      %v369 = vsel %vm367, %v359, 0
      %v372 = vsel %vm367, %v360, 0
      %374 = vmatpush.bf16.msra.mxu0 0
      %375 = vmatpush.bf16.msra.mxu0 0
      %376 = vmatpush.bf16.msra.mxu0 0
      %377 = vmatpush.bf16.msra.mxu0 0
      %378 = vmatpush.bf16.msra.mxu0 0
      %379 = vmatpush.bf16.msra.mxu0 0
      %380 = vmatpush.bf16.msra.mxu0 0
      %381 = vmatpush.bf16.msra.mxu0 %v365
      %382 = vmatmul.bf16.gmra.mxu0 %v369
      %v383 = vpop.f32.mrf.mxu0
      %v384 = vadd.f32 0.0, %v383
      %v385 = vpop.f32.mrf.mxu0
      %v386 = vadd.f32 0.0, %v385
      %387 = vmatmul.bf16.gmra.mxu0 %v372
      %v388 = vpop.f32.mrf.mxu0
      %v389 = vadd.f32 0.0, %v388
      %v390 = vpop.f32.mrf.mxu0
      %391 = vdwg.mxu0
      %v395 = vunpack.c.l.b16 %v342
      %v396 = vunpack.c.l.b16 %v343
      %v397 = vunpack.c.l.b16 %v344
      %v398 = vpack.c.b16 %v396, %v395
      %v399 = vpack.c.b16 %v397, %v397
      %v402 = vunpack.c.l.b16 %v345
      %v403 = vunpack.c.l.b16 %v346
      %v404 = vpack.c.b16 %v403, %v402
      %v407 = vsel %vm367, %v398, 0
      %v410 = vsel %vm367, %v399, 0
      %412 = vmatpush.bf16.msra.mxu0 0
      %413 = vmatpush.bf16.msra.mxu0 0
      %414 = vmatpush.bf16.msra.mxu0 0
      %415 = vmatpush.bf16.msra.mxu0 0
      %416 = vmatpush.bf16.msra.mxu0 0
      %417 = vmatpush.bf16.msra.mxu0 0
      %418 = vmatpush.bf16.msra.mxu0 0
      %419 = vmatpush.bf16.msra.mxu0 %v404
      %420 = vmatmul.bf16.gmra.mxu0 %v407
      %v421 = vpop.f32.mrf.mxu0
      %v422 = vadd.f32 %v384, %v421
      %v423 = vpop.f32.mrf.mxu0
      %v424 = vadd.f32 %v386, %v423
      %425 = vmatmul.bf16.gmra.mxu0 %v410
      %v426 = vpop.f32.mrf.mxu0
      %v427 = vadd.f32 %v389, %v426
      %v428 = vpop.f32.mrf.mxu0
      %429 = vdwg.mxu0
      %v430 = vld [vmem:[%s318 + $0x8] sm:$0x7]
      %s431 = scalar_lea.vmem %s4, 16
      %v432 = vld [vmem:[%s431] sm:$0xf]
      %v433 = vld [vmem:[%s431 + $0x4] sm:$0xf]
      %v435 = vunpack.c.l.b16 %v430
      %v436 = vpack.c.b16 %v435, %v435
      %vm437 = vsmask.f32 7424
      %v438 = vshrl.u32 %v398, 16
      %v440 = vshll.u32 %v398, 16
      %v442 = vrot.slane %v440, 1
      %v443 = vor.u32 %v438, %v442
      %v445 = vshll.u32 %v436, 16
      %v447 = vrot.slane %v445, 1
      %v448 = vsel %vm437, %v443, %v447
      %v449 = vshrl.u32 %v436, 16
      %v451 = vor.u32 %v449, %v447
      %v454 = vunpack.c.l.b16 %v432
      %v455 = vunpack.c.l.b16 %v433
      %v456 = vpack.c.b16 %v455, %v454
      %v459 = vsel %vm367, %v448, 0
      %v462 = vsel %vm367, %v451, 0
      %464 = vmatpush.bf16.msra.mxu0 0
      %465 = vmatpush.bf16.msra.mxu0 0
      %466 = vmatpush.bf16.msra.mxu0 0
      %467 = vmatpush.bf16.msra.mxu0 0
      %468 = vmatpush.bf16.msra.mxu0 0
      %469 = vmatpush.bf16.msra.mxu0 0
      %470 = vmatpush.bf16.msra.mxu0 0
      %471 = vmatpush.bf16.msra.mxu0 %v456
      %472 = vmatmul.bf16.gmra.mxu0 %v459
      %v473 = vpop.f32.mrf.mxu0
      %v474 = vadd.f32 0.0, %v473
      %v475 = vpop.f32.mrf.mxu0
      %v476 = vadd.f32 0.0, %v475
      %477 = vmatmul.bf16.gmra.mxu0 %v462
      %v478 = vpop.f32.mrf.mxu0
      %v479 = vadd.f32 0.0, %v478
      %v480 = vpop.f32.mrf.mxu0
      %481 = vdwg.mxu0
      %v482 = vadd.f32 %v422, %v474
      %v483 = vadd.f32 %v424, %v476
      %v484 = vadd.f32 %v427, %v479
      %v485 = vld [vmem:[%s328] sm:$0xf]
      %v486 = vld [vmem:[%s328 + $0x4] sm:$0xf]
      %v487 = vld [vmem:[%s328 + $0x8] sm:$0x3]
      %s488 = scalar_lea.vmem %s4, 24
      %v489 = vld [vmem:[%s488] sm:$0xf]
      %v490 = vld [vmem:[%s488 + $0x4] sm:$0xf]
      %v494 = vunpack.c.l.b16 %v485
      %v495 = vunpack.c.l.b16 %v486
      %v496 = vunpack.c.l.b16 %v487
      %v497 = vpack.c.b16 %v495, %v494
      %v498 = vpack.c.b16 %v496, %v496
      %v501 = vunpack.c.l.b16 %v489
      %v502 = vunpack.c.l.b16 %v490
      %v503 = vpack.c.b16 %v502, %v501
      %v506 = vsel %vm367, %v497, 0
      %v509 = vsel %vm367, %v498, 0
      %511 = vmatpush.bf16.msra.mxu0 0
      %512 = vmatpush.bf16.msra.mxu0 0
      %513 = vmatpush.bf16.msra.mxu0 0
      %514 = vmatpush.bf16.msra.mxu0 0
      %515 = vmatpush.bf16.msra.mxu0 0
      %516 = vmatpush.bf16.msra.mxu0 0
      %517 = vmatpush.bf16.msra.mxu0 0
      %518 = vmatpush.bf16.msra.mxu0 %v503
      %519 = vmatmul.bf16.gmra.mxu0 %v506
      %v520 = vpop.f32.mrf.mxu0
      %v521 = vadd.f32 0.0, %v520
      %v522 = vpop.f32.mrf.mxu0
      %v523 = vadd.f32 0.0, %v522
      %524 = vmatmul.bf16.gmra.mxu0 %v509
      %v525 = vpop.f32.mrf.mxu0
      %v526 = vadd.f32 0.0, %v525
      %v527 = vpop.f32.mrf.mxu0
      %528 = vdwg.mxu0
      %v529 = vadd.f32 %v482, %v521
      %v530 = vadd.f32 %v483, %v523
      %v531 = vadd.f32 %v484, %v526
      %v532 = vld [vmem:[%s333] sm:$0xf]
      %v533 = vld [vmem:[%s333 + $0x4] sm:$0xf]
      %v534 = vld [vmem:[%s333 + $0x8] sm:$0x3]
      %s535 = scalar_lea.vmem %s4, 32
      %v536 = vld [vmem:[%s535] sm:$0xf]
      %v537 = vld [vmem:[%s535 + $0x4] sm:$0xf]
      %v541 = vunpack.c.l.b16 %v532
      %v542 = vunpack.c.l.b16 %v533
      %v543 = vunpack.c.l.b16 %v534
      %v544 = vpack.c.b16 %v542, %v541
      %v545 = vpack.c.b16 %v543, %v543
      %v548 = vunpack.c.l.b16 %v536
      %v549 = vunpack.c.l.b16 %v537
      %v550 = vpack.c.b16 %v549, %v548
      %v553 = vsel %vm367, %v544, 0
      %v556 = vsel %vm367, %v545, 0
      %558 = vmatpush.bf16.msra.mxu0 0
      %559 = vmatpush.bf16.msra.mxu0 0
      %560 = vmatpush.bf16.msra.mxu0 0
      %561 = vmatpush.bf16.msra.mxu0 0
      %562 = vmatpush.bf16.msra.mxu0 0
      %563 = vmatpush.bf16.msra.mxu0 0
      %564 = vmatpush.bf16.msra.mxu0 0
      %565 = vmatpush.bf16.msra.mxu0 %v550
      %566 = vmatmul.bf16.gmra.mxu0 %v553
      %v567 = vpop.f32.mrf.mxu0
      %v568 = vadd.f32 0.0, %v567
      %v569 = vpop.f32.mrf.mxu0
      %v570 = vadd.f32 0.0, %v569
      %571 = vmatmul.bf16.gmra.mxu0 %v556
      %v572 = vpop.f32.mrf.mxu0
      %v573 = vadd.f32 0.0, %v572
      %v574 = vpop.f32.mrf.mxu0
      %575 = vdwg.mxu0
      %v576 = vadd.f32 %v529, %v568
      %v577 = vadd.f32 %v530, %v570
      %v578 = vadd.f32 %v531, %v573
      %v579 = vld [vmem:[%s328 + $0x8] sm:$0x7]
      %s580 = scalar_lea.vmem %s4, 40
      %v581 = vld [vmem:[%s580] sm:$0xf]
      %v582 = vld [vmem:[%s580 + $0x4] sm:$0xf]
      %v584 = vunpack.c.l.b16 %v579
      %v585 = vpack.c.b16 %v584, %v584
      %v586 = vshrl.u32 %v497, 16
      %v588 = vshll.u32 %v497, 16
      %v590 = vrot.slane %v588, 1
      %v591 = vor.u32 %v586, %v590
      %v593 = vshll.u32 %v585, 16
      %v595 = vrot.slane %v593, 1
      %v596 = vsel %vm437, %v591, %v595
      %v597 = vshrl.u32 %v585, 16
      %v599 = vor.u32 %v597, %v595
      %v602 = vunpack.c.l.b16 %v581
      %v603 = vunpack.c.l.b16 %v582
      %v604 = vpack.c.b16 %v603, %v602
      %v607 = vsel %vm367, %v596, 0
      %v610 = vsel %vm367, %v599, 0
      %612 = vmatpush.bf16.msra.mxu0 0
      %613 = vmatpush.bf16.msra.mxu0 0
      %614 = vmatpush.bf16.msra.mxu0 0
      %615 = vmatpush.bf16.msra.mxu0 0
      %616 = vmatpush.bf16.msra.mxu0 0
      %617 = vmatpush.bf16.msra.mxu0 0
      %618 = vmatpush.bf16.msra.mxu0 0
      %619 = vmatpush.bf16.msra.mxu0 %v604
      %620 = vmatmul.bf16.gmra.mxu0 %v607
      %v621 = vpop.f32.mrf.mxu0
      %v622 = vadd.f32 0.0, %v621
      %v623 = vpop.f32.mrf.mxu0
      %v624 = vadd.f32 0.0, %v623
      %625 = vmatmul.bf16.gmra.mxu0 %v610
      %v626 = vpop.f32.mrf.mxu0
      %v627 = vadd.f32 0.0, %v626
      %v628 = vpop.f32.mrf.mxu0
      %629 = vdwg.mxu0
      %v630 = vadd.f32 %v576, %v622
      %v631 = vadd.f32 %v577, %v624
      %v632 = vadd.f32 %v578, %v627
      %v633 = vld [vmem:[%s318] sm:$0xc]
      %v634 = vld [vmem:[%s318 + $0x4] sm:$0xf]
      %v635 = vld [vmem:[%s318 + $0x8] sm:$0xf]
      %v636 = vld [vmem:[%s318 + $0xc] sm:$0x1]
      %s637 = scalar_lea.vmem %s4, 48
      %v638 = vld [vmem:[%s637] sm:$0xf]
      %v639 = vld [vmem:[%s637 + $0x4] sm:$0xf]
      %v644 = vunpack.c.l.b16 %v633
      %v645 = vunpack.c.l.b16 %v634
      %v646 = vunpack.c.l.b16 %v635
      %v647 = vunpack.c.l.b16 %v636
      %v648 = vpack.c.b16 %v645, %v644
      %v649 = vpack.c.b16 %v647, %v646
      %vm650 = vsmask.f32 5376
      %v652 = vshrl.u32 %v648, 16
      %v654 = vrot.slane %v652, 2
      %v655 = vshll.u32 %v648, 16
      %v657 = vrot.slane %v655, 3
      %v658 = vor.u32 %v654, %v657
      %v660 = vshrl.u32 %v649, 16
      %v662 = vrot.slane %v660, 2
      %v663 = vshll.u32 %v649, 16
      %v665 = vrot.slane %v663, 3
      %v666 = vor.u32 %v662, %v665
      %v667 = vsel %vm650, %v658, %v666
      %v670 = vunpack.c.l.b16 %v638
      %v671 = vunpack.c.l.b16 %v639
      %v672 = vpack.c.b16 %v671, %v670
      %v675 = vsel %vm367, %v667, 0
      %v678 = vsel %vm367, %v666, 0
      %680 = vmatpush.bf16.msra.mxu0 0
      %681 = vmatpush.bf16.msra.mxu0 0
      %682 = vmatpush.bf16.msra.mxu0 0
      %683 = vmatpush.bf16.msra.mxu0 0
      %684 = vmatpush.bf16.msra.mxu0 0
      %685 = vmatpush.bf16.msra.mxu0 0
      %686 = vmatpush.bf16.msra.mxu0 0
      %687 = vmatpush.bf16.msra.mxu0 %v672
      %688 = vmatmul.bf16.gmra.mxu0 %v675
      %v689 = vpop.f32.mrf.mxu0
      %v690 = vadd.f32 0.0, %v689
      %v691 = vpop.f32.mrf.mxu0
      %v692 = vadd.f32 0.0, %v691
      %693 = vmatmul.bf16.gmra.mxu0 %v678
      %v694 = vpop.f32.mrf.mxu0
      %v695 = vadd.f32 0.0, %v694
      %v696 = vpop.f32.mrf.mxu0
      %697 = vdwg.mxu0
      %v698 = vadd.f32 %v630, %v690
      %v699 = vadd.f32 %v631, %v692
      %v700 = vadd.f32 %v632, %v695
      %v701 = vld [vmem:[%s323] sm:$0xc]
      %v702 = vld [vmem:[%s323 + $0x4] sm:$0xf]
      %v703 = vld [vmem:[%s323 + $0x8] sm:$0xf]
      %v704 = vld [vmem:[%s323 + $0xc] sm:$0x1]
      %s705 = scalar_lea.vmem %s4, 56
      %v706 = vld [vmem:[%s705] sm:$0xf]
      %v707 = vld [vmem:[%s705 + $0x4] sm:$0xf]
      %v712 = vunpack.c.l.b16 %v701
      %v713 = vunpack.c.l.b16 %v702
      %v714 = vunpack.c.l.b16 %v703
      %v715 = vunpack.c.l.b16 %v704
      %v716 = vpack.c.b16 %v713, %v712
      %v717 = vpack.c.b16 %v715, %v714
      %v719 = vshrl.u32 %v716, 16
      %v721 = vrot.slane %v719, 2
      %v722 = vshll.u32 %v716, 16
      %v724 = vrot.slane %v722, 3
      %v725 = vor.u32 %v721, %v724
      %v727 = vshrl.u32 %v717, 16
      %v729 = vrot.slane %v727, 2
      %v730 = vshll.u32 %v717, 16
      %v732 = vrot.slane %v730, 3
      %v733 = vor.u32 %v729, %v732
      %v734 = vsel %vm650, %v725, %v733
      %v737 = vunpack.c.l.b16 %v706
      %v738 = vunpack.c.l.b16 %v707
      %v739 = vpack.c.b16 %v738, %v737
      %v742 = vsel %vm367, %v734, 0
      %v745 = vsel %vm367, %v733, 0
      %747 = vmatpush.bf16.msra.mxu0 0
      %748 = vmatpush.bf16.msra.mxu0 0
      %749 = vmatpush.bf16.msra.mxu0 0
      %750 = vmatpush.bf16.msra.mxu0 0
      %751 = vmatpush.bf16.msra.mxu0 0
      %752 = vmatpush.bf16.msra.mxu0 0
      %753 = vmatpush.bf16.msra.mxu0 0
      %754 = vmatpush.bf16.msra.mxu0 %v739
      %755 = vmatmul.bf16.gmra.mxu0 %v742
      %v756 = vpop.f32.mrf.mxu0
      %v757 = vadd.f32 0.0, %v756
      %v758 = vpop.f32.mrf.mxu0
      %v759 = vadd.f32 0.0, %v758
      %760 = vmatmul.bf16.gmra.mxu0 %v745
      %v761 = vpop.f32.mrf.mxu0
      %v762 = vadd.f32 0.0, %v761
      %v763 = vpop.f32.mrf.mxu0
      %764 = vdwg.mxu0
      %v765 = vadd.f32 %v698, %v757
      %v766 = vadd.f32 %v699, %v759
      %v767 = vadd.f32 %v700, %v762
      %v768 = vld [vmem:[%s318] sm:$0x8]
      %s769 = scalar_lea.vmem %s4, 64
      %v770 = vld [vmem:[%s769] sm:$0xf]
      %v771 = vld [vmem:[%s769 + $0x4] sm:$0xf]
      %v773 = vunpack.c.l.b16 %v768
      %v774 = vpack.c.b16 %v645, %v773
      %vm775 = vcmask 1044480
      %v776 = vrot.slane %v774, 3
      %v777 = vrot.slane %v649, 3
      %v778 = vsel %vm775, %v776, %v777
      %v781 = vunpack.c.l.b16 %v770
      %v782 = vunpack.c.l.b16 %v771
      %v783 = vpack.c.b16 %v782, %v781
      %v786 = vsel %vm367, %v778, 0
      %v789 = vsel %vm367, %v777, 0
      %791 = vmatpush.bf16.msra.mxu0 0
      %792 = vmatpush.bf16.msra.mxu0 0
      %793 = vmatpush.bf16.msra.mxu0 0
      %794 = vmatpush.bf16.msra.mxu0 0
      %795 = vmatpush.bf16.msra.mxu0 0
      %796 = vmatpush.bf16.msra.mxu0 0
      %797 = vmatpush.bf16.msra.mxu0 0
      %798 = vmatpush.bf16.msra.mxu0 %v783
      %799 = vmatmul.bf16.gmra.mxu0 %v786
      %v800 = vpop.f32.mrf.mxu0
      %v801 = vadd.f32 0.0, %v800
      %v802 = vpop.f32.mrf.mxu0
      %v803 = vadd.f32 0.0, %v802
      %804 = vmatmul.bf16.gmra.mxu0 %v789
      %v805 = vpop.f32.mrf.mxu0
      %v806 = vadd.f32 0.0, %v805
      %v807 = vpop.f32.mrf.mxu0
      %808 = vdwg.mxu0
      %v809 = vadd.f32 %v765, %v801
      %v810 = vadd.f32 %v766, %v803
      %v811 = vadd.f32 %v767, %v806
      %v813 = vperm.slane %v340, 0
      %v815 = vmul.f32 %v809, %v813
      %v816 = vmul.f32 %v810, %v813
      %v817 = vmul.f32 %v811, %v813
      %v819 = vperm.slane %v341, 0
      %v821 = vadd.f32 %v815, %v819
      %v822 = vadd.f32 %v816, %v819
      %v823 = vadd.f32 %v817, %v819
      %v824 = vmax.f32 %v821, 0.0
      %v825 = vmax.f32 %v822, 0.0
      %v826 = vmax.f32 %v823, 0.0
      %v827 = vpack.c.bf16 %v824, %v824
      %v828 = vpack.c.bf16 %v825, %v825
      %v829 = vpack.c.bf16 %v826, %v826
      %vm830 = vcmask 257024
      %831 = vst.msk [vmem:[%s338] sm:$0xf] %vm830, %v827
      %832 = vst.msk [vmem:[%s338 + $0x4] sm:$0xf] %vm830, %v828
      %vm833 = vcmask 254976
      %834 = vst.msk [vmem:[%s338 + $0x8] sm:$0x3] %vm833, %v829
      %p835 = scmp.lt.s32.totalorder %s18, 1
      %s836 = scalar_select %p835, %s18, 1
      %s837 = smul.addr %s836, 3
      %s838 = smul.addr %s837, 4
      %s839 = scalar_lea.vmem %s7, %s838
      // Predicated region
      $region49: #{res_submodule_forward.6} parent=47 // pred_check
        %p840 = pneg %p203
      $region50: #{res_submodule_forward.6} parent=47 // pred_check_branch
        %842 = sbr.rel (%p840) target = $region52
      $region51: #{res_submodule_forward.6} parent=47 // pred_region
        _
      $region52: #{res_submodule_forward.6} parent=47 // pred_fallthru
        _
    $region48: #{res_submodule_forward.6} parent=5 // pred_fallthru
      _
    %p843 = scmp.le.s32.totalorder 2, %s13
    // Predicated region
    $region53: #{res_submodule_forward.6} parent=5 // pred_check
      %p844 = pneg %p843
    $region54: #{res_submodule_forward.6} parent=5 // pred_check_branch
      %846 = sbr.rel (%p844) target = $region56
    $region55: #{res_submodule_forward.6} parent=5 // pred_region
      %s847 = ssub.s32 %s13, 2
      // Predicated region
      $region57: #{res_submodule_forward.6} parent=55 // pred_check
        %p848 = pneg %p209
      $region58: #{res_submodule_forward.6} parent=55 // pred_check_branch
        %850 = sbr.rel (%p848) target = $region60
      $region59: #{res_submodule_forward.6} parent=55 // pred_region
        %p851 = scmp.lt.s32.totalorder %s19, 1
        %s852 = scalar_select %p851, %s19, 1
        %s853 = smul.addr %s852, 3
        %s854 = smul.addr %s853, 4
        %s855 = scalar_lea.vmem %s7, %s854
      $region60: #{res_submodule_forward.6} parent=55 // pred_fallthru
        _
    $region56: #{res_submodule_forward.6} parent=5 // pred_fallthru
      _
  $region6: #{res_submodule_forward.6} parent=0 // loop_footer
    %s17 = sadd.s32 1, %s13
  $region7: #{res_submodule_forward.6} parent=0 // loop_footer_branch
    %12 = sbr.rel target = $region3
  $region8: #{res_submodule_forward.6} parent=0 // loop_exit
    _

// kernel: res_submodule_forward.7
$region0: #{res_submodule_forward.7}
  #allocation0 [shape = 'u32[]', space=smem, size = 0x4, offset = 0x4, fixed_abs, tag = 'smem constant byte address 0x4 - core index']
  #allocation1 [shape = 'u32[72,128]{1,0:T(1,128)}', space=vmem, size = 0x9000, scoped, tag = 'internal scratch']
  %s0 = inlined_call_operand.vmem [shape: bf16[2,38,32], index: 0, kind: input, shape index: {}]
  %s1 = inlined_call_operand.vmem [shape: bf16[9,32,32], index: 1, kind: input, shape index: {}]
  %s2 = inlined_call_operand.vmem [shape: f32[1,32], index: 2, kind: input, shape index: {}]
  %s3 = inlined_call_operand.vmem [shape: f32[1,32], index: 3, kind: input, shape index: {}]
  %s4 = inlined_call_operand.vmem [shape: bf16[2,24,32], index: 4, kind: output, shape index: {}]
  %s5 = sld [smem:[#allocation0]]
  $region49: #{res_submodule_forward.7} parent=0
    _
  %s7 = ssub.s32 1, %s5
  %s8 = scalar_select 0, %s7, %s5
  loop: start=0, step=1, limit=4
  $region2: #{res_submodule_forward.7} parent=0 // loop_pre_header
    _
  $region3: #{res_submodule_forward.7} parent=0 // loop_header
    %s10 = sphi 0, %s14
    %p11 = scmp.ge.s32.totalorder %s10, 4
    %s20 = sphi 0, %s22
    %s23 = sphi 0, %s20
    %s24 = sphi 0, %s23
    %s40 = sphi 0, %s24
    %s44 = sphi 0, %s44
    %s46 = sphi 0, %s44
    %s47 = sphi 0, %s46
    %s61 = sphi 0, %s47
    %s65 = sphi 0, %s65
    %s67 = sphi 0, %s65
    %s68 = sphi 0, %s67
    %s82 = sphi 0, %s68
    %s86 = sphi 0, %s86
    %s88 = sphi 0, %s86
    %s89 = sphi 0, %s88
    %s103 = sphi 0, %s89
    %s109 = sphi 0, %s111
    %s112 = sphi 0, %s109
    %s113 = sphi 0, %s112
    %s129 = sphi 0, %s113
  $region4: #{res_submodule_forward.7} parent=0 // loop_header_branch
    %13 = sbr.rel (%p11) target = $region8
  $region5: #{res_submodule_forward.7} parent=0 // loop_body
    %s15 = ssub.s32 %s10, 1
    %s16 = ssub.s32 %s10, 2
    %s17 = sadd.s32 %s10, 1
    %s18 = ssub.s32 %s10, %s17
    %p19 = scmp.eq.s32.totalorder %s18, 0
    %s21 = sadd.s32 %s20, 1
    %s22 = scalar_select %p19, %s20, %s21
    %p25 = pneg %p19
    %p26 = scmp.eq.s32.totalorder %s10, 1
    %p27 = por %p25, %p26
    %p28 = scmp.ne.s32.totalorder %s20, %s23
    %p29 = scmp.eq.s32.totalorder %s10, 0
    %p30 = por %p28, %p29
    %p31 = scmp.ne.s32.totalorder %s20, %s23
    %p32 = scmp.eq.s32.totalorder %s15, 1
    %p33 = por %p31, %p32
    %p34 = scmp.ne.s32.totalorder %s23, %s24
    %p35 = scmp.eq.s32.totalorder %s15, 0
    %p36 = por %p34, %p35
    %p37 = scmp.ne.s32.totalorder %s23, %s24
    %p38 = scmp.eq.s32.totalorder %s16, 1
    %p39 = por %p37, %p38
    %p41 = scmp.ne.s32.totalorder %s24, %s40
    %p42 = scmp.eq.s32.totalorder %s16, 0
    %p43 = por %p41, %p42
    %s45 = sadd.s32 %s44, 1
    %p48 = scmp.eq.s32.totalorder %s10, 1
    %p49 = scmp.ne.s32.totalorder %s44, %s46
    %p50 = scmp.eq.s32.totalorder %s10, 0
    %p51 = por %p49, %p50
    %p52 = scmp.ne.s32.totalorder %s44, %s46
    %p53 = scmp.eq.s32.totalorder %s15, 1
    %p54 = por %p52, %p53
    %p55 = scmp.ne.s32.totalorder %s46, %s47
    %p56 = scmp.eq.s32.totalorder %s15, 0
    %p57 = por %p55, %p56
    %p58 = scmp.ne.s32.totalorder %s46, %s47
    %p59 = scmp.eq.s32.totalorder %s16, 1
    %p60 = por %p58, %p59
    %p62 = scmp.ne.s32.totalorder %s47, %s61
    %p63 = scmp.eq.s32.totalorder %s16, 0
    %p64 = por %p62, %p63
    %s66 = sadd.s32 %s65, 1
    %p69 = scmp.eq.s32.totalorder %s10, 1
    %p70 = scmp.ne.s32.totalorder %s65, %s67
    %p71 = scmp.eq.s32.totalorder %s10, 0
    %p72 = por %p70, %p71
    %p73 = scmp.ne.s32.totalorder %s65, %s67
    %p74 = scmp.eq.s32.totalorder %s15, 1
    %p75 = por %p73, %p74
    %p76 = scmp.ne.s32.totalorder %s67, %s68
    %p77 = scmp.eq.s32.totalorder %s15, 0
    %p78 = por %p76, %p77
    %p79 = scmp.ne.s32.totalorder %s67, %s68
    %p80 = scmp.eq.s32.totalorder %s16, 1
    %p81 = por %p79, %p80
    %p83 = scmp.ne.s32.totalorder %s68, %s82
    %p84 = scmp.eq.s32.totalorder %s16, 0
    %p85 = por %p83, %p84
    %s87 = sadd.s32 %s86, 1
    %p90 = scmp.eq.s32.totalorder %s10, 1
    %p91 = scmp.ne.s32.totalorder %s86, %s88
    %p92 = scmp.eq.s32.totalorder %s10, 0
    %p93 = por %p91, %p92
    %p94 = scmp.ne.s32.totalorder %s86, %s88
    %p95 = scmp.eq.s32.totalorder %s15, 1
    %p96 = por %p94, %p95
    %p97 = scmp.ne.s32.totalorder %s88, %s89
    %p98 = scmp.eq.s32.totalorder %s15, 0
    %p99 = por %p97, %p98
    %p100 = scmp.ne.s32.totalorder %s88, %s89
    %p101 = scmp.eq.s32.totalorder %s16, 1
    %p102 = por %p100, %p101
    %p104 = scmp.ne.s32.totalorder %s89, %s103
    %p105 = scmp.eq.s32.totalorder %s16, 0
    %p106 = por %p104, %p105
    %s107 = ssub.s32 %s10, %s17
    %p108 = scmp.eq.s32.totalorder %s107, 0
    %s110 = sadd.s32 %s109, 1
    %s111 = scalar_select %p108, %s109, %s110
    %p114 = pneg %p108
    %p115 = scmp.eq.s32.totalorder %s10, 1
    %p116 = por %p114, %p115
    %p117 = scmp.ne.s32.totalorder %s109, %s112
    %p118 = scmp.eq.s32.totalorder %s10, 0
    %p119 = por %p117, %p118
    %p120 = scmp.ne.s32.totalorder %s109, %s112
    %p121 = scmp.eq.s32.totalorder %s15, 1
    %p122 = por %p120, %p121
    %p123 = scmp.ne.s32.totalorder %s112, %s113
    %p124 = scmp.eq.s32.totalorder %s15, 0
    %p125 = por %p123, %p124
    %p126 = scmp.ne.s32.totalorder %s112, %s113
    %p127 = scmp.eq.s32.totalorder %s16, 1
    %p128 = por %p126, %p127
    %p130 = scmp.ne.s32.totalorder %s113, %s129
    %p131 = scmp.eq.s32.totalorder %s16, 0
    %p132 = por %p130, %p131
    %p133 = scmp.le.s32.totalorder 1, %s10
    %p134 = scmp.lt.s32.totalorder %s10, 3
    %p135 = pnand %p133, %p134
    %p136 = pneg %p135
    // Predicated region
    $region9: #{res_submodule_forward.7} parent=5 // pred_check
      _
    $region10: #{res_submodule_forward.7} parent=5 // pred_check_branch
      %138 = sbr.rel (%p135) target = $region12
    $region11: #{res_submodule_forward.7} parent=5 // pred_region
      %s139 = ssub.s32 %s10, 1
      // Predicated region
      $region13: #{res_submodule_forward.7} parent=11 // pred_check
        %p140 = pneg %p57
      $region14: #{res_submodule_forward.7} parent=11 // pred_check_branch
        %142 = sbr.rel (%p140) target = $region16
      $region15: #{res_submodule_forward.7} parent=11 // pred_region
        _
      $region16: #{res_submodule_forward.7} parent=11 // pred_fallthru
        _
      // Predicated region
      $region17: #{res_submodule_forward.7} parent=11 // pred_check
        %p143 = pneg %p78
      $region18: #{res_submodule_forward.7} parent=11 // pred_check_branch
        %145 = sbr.rel (%p143) target = $region20
      $region19: #{res_submodule_forward.7} parent=11 // pred_region
        _
      $region20: #{res_submodule_forward.7} parent=11 // pred_fallthru
        _
      // Predicated region
      $region21: #{res_submodule_forward.7} parent=11 // pred_check
        %p146 = pneg %p99
      $region22: #{res_submodule_forward.7} parent=11 // pred_check_branch
        %148 = sbr.rel (%p146) target = $region24
      $region23: #{res_submodule_forward.7} parent=11 // pred_region
        _
      $region24: #{res_submodule_forward.7} parent=11 // pred_fallthru
        _
    $region12: #{res_submodule_forward.7} parent=5 // pred_fallthru
      _
    %p149 = scmp.lt.s32.totalorder %s10, 2
    // Predicated region
    $region25: #{res_submodule_forward.7} parent=5 // pred_check
      %p150 = pneg %p149
    $region26: #{res_submodule_forward.7} parent=5 // pred_check_branch
      %152 = sbr.rel (%p150) target = $region28
    $region27: #{res_submodule_forward.7} parent=5 // pred_region
      // Predicated region
      $region29: #{res_submodule_forward.7} parent=27 // pred_check
        %p153 = pneg %p30
      $region30: #{res_submodule_forward.7} parent=27 // pred_check_branch
        %155 = sbr.rel (%p153) target = $region32
      $region31: #{res_submodule_forward.7} parent=27 // pred_region
        %p156 = scmp.lt.s32.totalorder %s10, 1
        %s157 = scalar_select %p156, %s10, 1
        %s158 = smul.addr %s157, 5
        %s159 = smul.addr %s158, 4
        %s160 = scalar_lea.vmem %s0, %s159
      $region32: #{res_submodule_forward.7} parent=27 // pred_fallthru
        _
    $region28: #{res_submodule_forward.7} parent=5 // pred_fallthru
      _
    %p161 = scmp.le.s32.totalorder 1, %s10
    %p162 = scmp.lt.s32.totalorder %s10, 3
    %p163 = pnand %p161, %p162
    %p164 = pneg %p163
    // Predicated region
    $region33: #{res_submodule_forward.7} parent=5 // pred_check
      _
    $region34: #{res_submodule_forward.7} parent=5 // pred_check_branch
      %166 = sbr.rel (%p163) target = $region36
    $region35: #{res_submodule_forward.7} parent=5 // pred_region
      %s167 = ssub.s32 %s10, 1
      %p168 = scmp.lt.s32.totalorder %s15, 1
      %s169 = scalar_select %p168, %s15, 1
      %s170 = smul.addr %s169, 5
      %s171 = smul.addr %s170, 4
      %s172 = scalar_lea.vmem %s0, %s171
      %p173 = pneg %p36
      %p174 = pneg %p33
      %p175 = pneg %p57
      %p176 = pneg %p54
      %p177 = pneg %p78
      %p178 = pneg %p75
      %p179 = pneg %p99
      %p180 = pneg %p96
      %p181 = pneg %p125
      %p182 = pneg %p122
      %p183 = scmp.lt.s32.totalorder %s15, 1
      %s184 = scalar_select %p183, %s15, 1
      %s185 = smul.addr %s184, 3
      %s186 = smul.addr %s185, 4
      %s187 = scalar_lea.vmem %s4, %s186
      %p188 = scmp.lt.s32.totalorder %s15, 1
      %s189 = scalar_select %p188, %s15, 1
      %s190 = smul.addr %s189, 5
      %s191 = smul.addr %s190, 4
      %s192 = scalar_lea.vmem %s0, %s191
      %p193 = scmp.lt.s32.totalorder %s15, 1
      %s194 = scalar_select %p193, %s15, 1
      %s195 = smul.addr %s194, 3
      %s196 = smul.addr %s195, 4
      %s197 = scalar_lea.vmem %s4, %s196
      %v199 = vld [vmem:[%s2] sm:$0x1]
      %v200 = vld [vmem:[%s3] sm:$0x1]
      %v201 = vld [vmem:[%s192] sm:$0xf]
      %v202 = vld [vmem:[%s192 + $0x4] sm:$0xf]
      %v203 = vld [vmem:[%s192 + $0x8] sm:$0xf]
      %v204 = vld [vmem:[%s1] sm:$0xf]
      %v205 = vld [vmem:[%s1 + $0x4] sm:$0xf]
      %v206 = vld [vmem:[%s1 + $0x8] sm:$0xf]
      %v207 = vld [vmem:[%s1 + $0xc] sm:$0xf]
      %v208 = vld [vmem:[%s192 + $0xc] sm:$0x1]
      %s209 = scalar_lea.vmem %s1, 16
      %v210 = vld [vmem:[%s209] sm:$0xf]
      %v211 = vld [vmem:[%s209 + $0x4] sm:$0xf]
      %v212 = vld [vmem:[%s209 + $0x8] sm:$0xf]
      %v213 = vld [vmem:[%s209 + $0xc] sm:$0xf]
      %v218 = vunpack.c.l.b16 %v201
      %v219 = vunpack.c.l.b16 %v202
      %v220 = vunpack.c.l.b16 %v203
      %v221 = vunpack.c.l.b16 %v208
      %v222 = vpack.c.b16 %v219, %v218
      %v223 = vpack.c.b16 %v221, %v220
      %vm224 = vsmask.f32 7424
      %v226 = vshrl.u32 %v222, 16
      %v228 = vshll.u32 %v222, 16
      %v230 = vrot.slane %v228, 1
      %v231 = vor.u32 %v226, %v230
      %v233 = vshll.u32 %v223, 16
      %v235 = vrot.slane %v233, 1
      %v236 = vsel %vm224, %v231, %v235
      %v237 = vshrl.u32 %v223, 16
      %v239 = vor.u32 %v237, %v235
      %v244 = vunpack.c.l.b16 %v210
      %v245 = vunpack.c.l.b16 %v211
      %v246 = vunpack.c.l.b16 %v212
      %v247 = vunpack.c.l.b16 %v213
      %v248 = vpack.c.b16 %v245, %v244
      %v249 = vpack.c.b16 %v247, %v246
      %vm252 = vcmask 261120
      %v254 = vsel %vm252, %v236, 0
      %v257 = vsel %vm252, %v239, 0
      %259 = vmatpush.bf16.msra.mxu0 0
      %260 = vmatpush.bf16.msra.mxu0 0
      %261 = vmatpush.bf16.msra.mxu0 0
      %262 = vmatpush.bf16.msra.mxu0 0
      %263 = vmatpush.bf16.msra.mxu0 0
      %264 = vmatpush.bf16.msra.mxu0 0
      %265 = vmatpush.bf16.msra.mxu0 %v249
      %266 = vmatpush.bf16.msra.mxu0 %v248
      %267 = vmatmul.bf16.gmra.mxu0 %v254
      %v268 = vpop.f32.mrf.mxu0
      %v269 = vadd.f32 0.0, %v268
      %v270 = vpop.f32.mrf.mxu0
      %v271 = vadd.f32 0.0, %v270
      %272 = vmatmul.bf16.gmra.mxu0 %v257
      %v273 = vpop.f32.mrf.mxu0
      %v274 = vadd.f32 0.0, %v273
      %v275 = vpop.f32.mrf.mxu0
      %276 = vdwg.mxu0
      %v277 = vpack.c.b16 %v220, %v220
      %v282 = vunpack.c.l.b16 %v204
      %v283 = vunpack.c.l.b16 %v205
      %v284 = vunpack.c.l.b16 %v206
      %v285 = vunpack.c.l.b16 %v207
      %v286 = vpack.c.b16 %v283, %v282
      %v287 = vpack.c.b16 %v285, %v284
      %v290 = vsel %vm252, %v222, 0
      %v293 = vsel %vm252, %v277, 0
      %295 = vmatpush.bf16.msra.mxu0 0
      %296 = vmatpush.bf16.msra.mxu0 0
      %297 = vmatpush.bf16.msra.mxu0 0
      %298 = vmatpush.bf16.msra.mxu0 0
      %299 = vmatpush.bf16.msra.mxu0 0
      %300 = vmatpush.bf16.msra.mxu0 0
      %301 = vmatpush.bf16.msra.mxu0 %v287
      %302 = vmatpush.bf16.msra.mxu0 %v286
      %303 = vmatmul.bf16.gmra.mxu0 %v290
      %v304 = vpop.f32.mrf.mxu0
      %v305 = vadd.f32 %v269, %v304
      %v306 = vpop.f32.mrf.mxu0
      %v307 = vadd.f32 %v271, %v306
      %308 = vmatmul.bf16.gmra.mxu0 %v293
      %v309 = vpop.f32.mrf.mxu0
      %v310 = vadd.f32 %v274, %v309
      %v311 = vpop.f32.mrf.mxu0
      %312 = vdwg.mxu0
      %v313 = vld [vmem:[%s192] sm:$0xe]
      %s314 = scalar_lea.vmem %s1, 32
      %v315 = vld [vmem:[%s314] sm:$0xf]
      %v316 = vld [vmem:[%s314 + $0x4] sm:$0xf]
      %v317 = vld [vmem:[%s314 + $0x8] sm:$0xf]
      %v318 = vld [vmem:[%s314 + $0xc] sm:$0xf]
      %v320 = vunpack.c.l.b16 %v313
      %v321 = vpack.c.b16 %v219, %v320
      %vm322 = vcmask 1046528
      %v323 = vrot.slane %v321, 1
      %v324 = vrot.slane %v223, 1
      %v325 = vsel %vm322, %v323, %v324
      %v330 = vunpack.c.l.b16 %v315
      %v331 = vunpack.c.l.b16 %v316
      %v332 = vunpack.c.l.b16 %v317
      %v333 = vunpack.c.l.b16 %v318
      %v334 = vpack.c.b16 %v331, %v330
      %v335 = vpack.c.b16 %v333, %v332
      %v339 = vsel %vm252, %v325, 0
      %v342 = vsel %vm252, %v324, 0
      %344 = vmatpush.bf16.msra.mxu0 0
      %345 = vmatpush.bf16.msra.mxu0 0
      %346 = vmatpush.bf16.msra.mxu0 0
      %347 = vmatpush.bf16.msra.mxu0 0
      %348 = vmatpush.bf16.msra.mxu0 0
      %349 = vmatpush.bf16.msra.mxu0 0
      %350 = vmatpush.bf16.msra.mxu0 %v335
      %351 = vmatpush.bf16.msra.mxu0 %v334
      %352 = vmatmul.bf16.gmra.mxu0 %v339
      %v353 = vpop.f32.mrf.mxu0
      %v354 = vadd.f32 0.0, %v353
      %v355 = vpop.f32.mrf.mxu0
      %v356 = vadd.f32 0.0, %v355
      %357 = vmatmul.bf16.gmra.mxu0 %v342
      %v358 = vpop.f32.mrf.mxu0
      %v359 = vadd.f32 0.0, %v358
      %v360 = vpop.f32.mrf.mxu0
      %361 = vdwg.mxu0
      %v362 = vadd.f32 %v305, %v354
      %v363 = vadd.f32 %v307, %v356
      %v364 = vadd.f32 %v310, %v359
      %v365 = vld [vmem:[%s192] sm:$0x8]
      %v366 = vld [vmem:[%s192 + $0xc] sm:$0x7]
      %s367 = scalar_lea.vmem %s1, 48
      %v368 = vld [vmem:[%s367] sm:$0xf]
      %v369 = vld [vmem:[%s367 + $0x4] sm:$0xf]
      %v370 = vld [vmem:[%s367 + $0x8] sm:$0xf]
      %v371 = vld [vmem:[%s367 + $0xc] sm:$0xf]
      %v374 = vunpack.c.l.b16 %v365
      %v375 = vunpack.c.l.b16 %v366
      %v376 = vpack.c.b16 %v219, %v374
      %v377 = vpack.c.b16 %v375, %v220
      %vm378 = vcmask 1044480
      %v379 = vrot.slane %v376, 3
      %v380 = vrot.slane %v377, 3
      %v381 = vsel %vm378, %v379, %v380
      %v386 = vunpack.c.l.b16 %v368
      %v387 = vunpack.c.l.b16 %v369
      %v388 = vunpack.c.l.b16 %v370
      %v389 = vunpack.c.l.b16 %v371
      %v390 = vpack.c.b16 %v387, %v386
      %v391 = vpack.c.b16 %v389, %v388
      %v395 = vsel %vm252, %v381, 0
      %v398 = vsel %vm252, %v380, 0
      %400 = vmatpush.bf16.msra.mxu0 0
      %401 = vmatpush.bf16.msra.mxu0 0
      %402 = vmatpush.bf16.msra.mxu0 0
      %403 = vmatpush.bf16.msra.mxu0 0
      %404 = vmatpush.bf16.msra.mxu0 0
      %405 = vmatpush.bf16.msra.mxu0 0
      %406 = vmatpush.bf16.msra.mxu0 %v391
      %407 = vmatpush.bf16.msra.mxu0 %v390
      %408 = vmatmul.bf16.gmra.mxu0 %v395
      %v409 = vpop.f32.mrf.mxu0
      %v410 = vadd.f32 0.0, %v409
      %v411 = vpop.f32.mrf.mxu0
      %v412 = vadd.f32 0.0, %v411
      %413 = vmatmul.bf16.gmra.mxu0 %v398
      %v414 = vpop.f32.mrf.mxu0
      %v415 = vadd.f32 0.0, %v414
      %v416 = vpop.f32.mrf.mxu0
      %417 = vdwg.mxu0
      %v418 = vadd.f32 %v362, %v410
      %v419 = vadd.f32 %v363, %v412
      %v420 = vadd.f32 %v364, %v415
      %v421 = vld [vmem:[%s192 + $0xc] sm:$0xf]
      %s422 = scalar_lea.vmem %s1, 64
      %v423 = vld [vmem:[%s422] sm:$0xf]
      %v424 = vld [vmem:[%s422 + $0x4] sm:$0xf]
      %v425 = vld [vmem:[%s422 + $0x8] sm:$0xf]
      %v426 = vld [vmem:[%s422 + $0xc] sm:$0xf]
      %v428 = vunpack.c.l.b16 %v421
      %v429 = vpack.c.b16 %v428, %v220
      %vm430 = vsmask.f32 4352
      %v432 = vshrl.u32 %v376, 16
      %v434 = vrot.slane %v432, 3
      %v435 = vshll.u32 %v376, 16
      %v437 = vrot.slane %v435, 4
      %v438 = vor.u32 %v434, %v437
      %v440 = vshrl.u32 %v429, 16
      %v442 = vrot.slane %v440, 3
      %v443 = vshll.u32 %v429, 16
      %v445 = vrot.slane %v443, 4
      %v446 = vor.u32 %v442, %v445
      %v447 = vsel %vm430, %v438, %v446
      %v452 = vunpack.c.l.b16 %v423
      %v453 = vunpack.c.l.b16 %v424
      %v454 = vunpack.c.l.b16 %v425
      %v455 = vunpack.c.l.b16 %v426
      %v456 = vpack.c.b16 %v453, %v452
      %v457 = vpack.c.b16 %v455, %v454
      %v461 = vsel %vm252, %v447, 0
      %v464 = vsel %vm252, %v446, 0
      %466 = vmatpush.bf16.msra.mxu0 0
      %467 = vmatpush.bf16.msra.mxu0 0
      %468 = vmatpush.bf16.msra.mxu0 0
      %469 = vmatpush.bf16.msra.mxu0 0
      %470 = vmatpush.bf16.msra.mxu0 0
      %471 = vmatpush.bf16.msra.mxu0 0
      %472 = vmatpush.bf16.msra.mxu0 %v457
      %473 = vmatpush.bf16.msra.mxu0 %v456
      %474 = vmatmul.bf16.gmra.mxu0 %v461
      %v475 = vpop.f32.mrf.mxu0
      %v476 = vadd.f32 0.0, %v475
      %v477 = vpop.f32.mrf.mxu0
      %v478 = vadd.f32 0.0, %v477
      %479 = vmatmul.bf16.gmra.mxu0 %v464
      %v480 = vpop.f32.mrf.mxu0
      %v481 = vadd.f32 0.0, %v480
      %v482 = vpop.f32.mrf.mxu0
      %483 = vdwg.mxu0
      %v484 = vadd.f32 %v418, %v476
      %v485 = vadd.f32 %v419, %v478
      %v486 = vadd.f32 %v420, %v481
      %s487 = scalar_lea.vmem %s1, 80
      %v488 = vld [vmem:[%s487] sm:$0xf]
      %v489 = vld [vmem:[%s487 + $0x4] sm:$0xf]
      %v490 = vld [vmem:[%s487 + $0x8] sm:$0xf]
      %v491 = vld [vmem:[%s487 + $0xc] sm:$0xf]
      %v492 = vpack.c.b16 %v220, %v219
      %v493 = vpack.c.b16 %v428, %v428
      %v498 = vunpack.c.l.b16 %v488
      %v499 = vunpack.c.l.b16 %v489
      %v500 = vunpack.c.l.b16 %v490
      %v501 = vunpack.c.l.b16 %v491
      %v502 = vpack.c.b16 %v499, %v498
      %v503 = vpack.c.b16 %v501, %v500
      %v507 = vsel %vm252, %v492, 0
      %v510 = vsel %vm252, %v493, 0
      %512 = vmatpush.bf16.msra.mxu0 0
      %513 = vmatpush.bf16.msra.mxu0 0
      %514 = vmatpush.bf16.msra.mxu0 0
      %515 = vmatpush.bf16.msra.mxu0 0
      %516 = vmatpush.bf16.msra.mxu0 0
      %517 = vmatpush.bf16.msra.mxu0 0
      %518 = vmatpush.bf16.msra.mxu0 %v503
      %519 = vmatpush.bf16.msra.mxu0 %v502
      %520 = vmatmul.bf16.gmra.mxu0 %v507
      %v521 = vpop.f32.mrf.mxu0
      %v522 = vadd.f32 0.0, %v521
      %v523 = vpop.f32.mrf.mxu0
      %v524 = vadd.f32 0.0, %v523
      %525 = vmatmul.bf16.gmra.mxu0 %v510
      %v526 = vpop.f32.mrf.mxu0
      %v527 = vadd.f32 0.0, %v526
      %v528 = vpop.f32.mrf.mxu0
      %529 = vdwg.mxu0
      %v530 = vadd.f32 %v484, %v522
      %v531 = vadd.f32 %v485, %v524
      %v532 = vadd.f32 %v486, %v527
      %v533 = vld [vmem:[%s192 + $0x4] sm:$0xc]
      %v534 = vld [vmem:[%s192 + $0x8] sm:$0xf]
      %v535 = vld [vmem:[%s192 + $0xc] sm:$0xf]
      %v536 = vld [vmem:[%s192 + $0x10] sm:$0x3]
      %s537 = scalar_lea.vmem %s1, 96
      %v538 = vld [vmem:[%s537] sm:$0xf]
      %v539 = vld [vmem:[%s537 + $0x4] sm:$0xf]
      %v540 = vld [vmem:[%s537 + $0x8] sm:$0xf]
      %v541 = vld [vmem:[%s537 + $0xc] sm:$0xf]
      %v546 = vunpack.c.l.b16 %v533
      %v547 = vunpack.c.l.b16 %v534
      %v548 = vunpack.c.l.b16 %v535
      %v549 = vunpack.c.l.b16 %v536
      %v550 = vpack.c.b16 %v547, %v546
      %v551 = vpack.c.b16 %v549, %v548
      %vm552 = vcmask 1045504
      %v553 = vrot.slane %v550, 2
      %v554 = vrot.slane %v551, 2
      %v555 = vsel %vm552, %v553, %v554
      %v560 = vunpack.c.l.b16 %v538
      %v561 = vunpack.c.l.b16 %v539
      %v562 = vunpack.c.l.b16 %v540
      %v563 = vunpack.c.l.b16 %v541
      %v564 = vpack.c.b16 %v561, %v560
      %v565 = vpack.c.b16 %v563, %v562
      %v569 = vsel %vm252, %v555, 0
      %v572 = vsel %vm252, %v554, 0
      %574 = vmatpush.bf16.msra.mxu0 0
      %575 = vmatpush.bf16.msra.mxu0 0
      %576 = vmatpush.bf16.msra.mxu0 0
      %577 = vmatpush.bf16.msra.mxu0 0
      %578 = vmatpush.bf16.msra.mxu0 0
      %579 = vmatpush.bf16.msra.mxu0 0
      %580 = vmatpush.bf16.msra.mxu0 %v565
      %581 = vmatpush.bf16.msra.mxu0 %v564
      %582 = vmatmul.bf16.gmra.mxu0 %v569
      %v583 = vpop.f32.mrf.mxu0
      %v584 = vadd.f32 0.0, %v583
      %v585 = vpop.f32.mrf.mxu0
      %v586 = vadd.f32 0.0, %v585
      %587 = vmatmul.bf16.gmra.mxu0 %v572
      %v588 = vpop.f32.mrf.mxu0
      %v589 = vadd.f32 0.0, %v588
      %v590 = vpop.f32.mrf.mxu0
      %591 = vdwg.mxu0
      %v592 = vadd.f32 %v530, %v584
      %v593 = vadd.f32 %v531, %v586
      %v594 = vadd.f32 %v532, %v589
      %v595 = vld [vmem:[%s192 + $0x10] sm:$0x7]
      %s596 = scalar_lea.vmem %s1, 112
      %v597 = vld [vmem:[%s596] sm:$0xf]
      %v598 = vld [vmem:[%s596 + $0x4] sm:$0xf]
      %v599 = vld [vmem:[%s596 + $0x8] sm:$0xf]
      %v600 = vld [vmem:[%s596 + $0xc] sm:$0xf]
      %v602 = vunpack.c.l.b16 %v595
      %v603 = vpack.c.b16 %v602, %v548
      %vm604 = vsmask.f32 5376
      %v606 = vshrl.u32 %v550, 16
      %v608 = vrot.slane %v606, 2
      %v609 = vshll.u32 %v550, 16
      %v611 = vrot.slane %v609, 3
      %v612 = vor.u32 %v608, %v611
      %v614 = vshrl.u32 %v603, 16
      %v616 = vrot.slane %v614, 2
      %v617 = vshll.u32 %v603, 16
      %v619 = vrot.slane %v617, 3
      %v620 = vor.u32 %v616, %v619
      %v621 = vsel %vm604, %v612, %v620
      %v626 = vunpack.c.l.b16 %v597
      %v627 = vunpack.c.l.b16 %v598
      %v628 = vunpack.c.l.b16 %v599
      %v629 = vunpack.c.l.b16 %v600
      %v630 = vpack.c.b16 %v627, %v626
      %v631 = vpack.c.b16 %v629, %v628
      %v635 = vsel %vm252, %v621, 0
      %v638 = vsel %vm252, %v620, 0
      %640 = vmatpush.bf16.msra.mxu0 0
      %641 = vmatpush.bf16.msra.mxu0 0
      %642 = vmatpush.bf16.msra.mxu0 0
      %643 = vmatpush.bf16.msra.mxu0 0
      %644 = vmatpush.bf16.msra.mxu0 0
      %645 = vmatpush.bf16.msra.mxu0 0
      %646 = vmatpush.bf16.msra.mxu0 %v631
      %647 = vmatpush.bf16.msra.mxu0 %v630
      %648 = vmatmul.bf16.gmra.mxu0 %v635
      %v649 = vpop.f32.mrf.mxu0
      %v650 = vadd.f32 0.0, %v649
      %v651 = vpop.f32.mrf.mxu0
      %v652 = vadd.f32 0.0, %v651
      %653 = vmatmul.bf16.gmra.mxu0 %v638
      %v654 = vpop.f32.mrf.mxu0
      %v655 = vadd.f32 0.0, %v654
      %v656 = vpop.f32.mrf.mxu0
      %657 = vdwg.mxu0
      %v658 = vadd.f32 %v592, %v650
      %v659 = vadd.f32 %v593, %v652
      %v660 = vadd.f32 %v594, %v655
      %v661 = vld [vmem:[%s192 + $0x4] sm:$0x8]
      %s662 = scalar_lea.vmem %s1, 128
      %v663 = vld [vmem:[%s662] sm:$0xf]
      %v664 = vld [vmem:[%s662 + $0x4] sm:$0xf]
      %v665 = vld [vmem:[%s662 + $0x8] sm:$0xf]
      %v666 = vld [vmem:[%s662 + $0xc] sm:$0xf]
      %v668 = vunpack.c.l.b16 %v661
      %v669 = vpack.c.b16 %v547, %v668
      %v670 = vrot.slane %v669, 3
      %v671 = vrot.slane %v603, 3
      %v672 = vsel %vm378, %v670, %v671
      %v677 = vunpack.c.l.b16 %v663
      %v678 = vunpack.c.l.b16 %v664
      %v679 = vunpack.c.l.b16 %v665
      %v680 = vunpack.c.l.b16 %v666
      %v681 = vpack.c.b16 %v678, %v677
      %v682 = vpack.c.b16 %v680, %v679
      %v686 = vsel %vm252, %v672, 0
      %v689 = vsel %vm252, %v671, 0
      %691 = vmatpush.bf16.msra.mxu0 0
      %692 = vmatpush.bf16.msra.mxu0 0
      %693 = vmatpush.bf16.msra.mxu0 0
      %694 = vmatpush.bf16.msra.mxu0 0
      %695 = vmatpush.bf16.msra.mxu0 0
      %696 = vmatpush.bf16.msra.mxu0 0
      %697 = vmatpush.bf16.msra.mxu0 %v682
      %698 = vmatpush.bf16.msra.mxu0 %v681
      %699 = vmatmul.bf16.gmra.mxu0 %v686
      %v700 = vpop.f32.mrf.mxu0
      %v701 = vadd.f32 0.0, %v700
      %v702 = vpop.f32.mrf.mxu0
      %v703 = vadd.f32 0.0, %v702
      %704 = vmatmul.bf16.gmra.mxu0 %v689
      %v705 = vpop.f32.mrf.mxu0
      %v706 = vadd.f32 0.0, %v705
      %v707 = vpop.f32.mrf.mxu0
      %708 = vdwg.mxu0
      %v709 = vadd.f32 %v658, %v701
      %v710 = vadd.f32 %v659, %v703
      %v711 = vadd.f32 %v660, %v706
      %v713 = vperm.slane %v199, 0
      %v715 = vmul.f32 %v709, %v713
      %v716 = vmul.f32 %v710, %v713
      %v717 = vmul.f32 %v711, %v713
      %v719 = vperm.slane %v200, 0
      %v721 = vadd.f32 %v715, %v719
      %v722 = vadd.f32 %v716, %v719
      %v723 = vadd.f32 %v717, %v719
      %v724 = vmax.f32 %v721, 0.0
      %v725 = vmax.f32 %v722, 0.0
      %v726 = vmax.f32 %v723, 0.0
      %v727 = vpack.c.bf16 %v724, %v724
      %v728 = vpack.c.bf16 %v725, %v725
      %v729 = vpack.c.bf16 %v726, %v726
      %vm730 = vcmask 257024
      %731 = vst.msk [vmem:[%s197] sm:$0xf] %vm730, %v727
      %732 = vst.msk [vmem:[%s197 + $0x4] sm:$0xf] %vm730, %v728
      %733 = vst.msk [vmem:[%s197 + $0x8] sm:$0xf] %vm730, %v729
      %p734 = scmp.lt.s32.totalorder %s15, 1
      %s735 = scalar_select %p734, %s15, 1
      %s736 = smul.addr %s735, 3
      %s737 = smul.addr %s736, 4
      %s738 = scalar_lea.vmem %s4, %s737
      // Predicated region
      $region37: #{res_submodule_forward.7} parent=35 // pred_check
        %p739 = pneg %p122
      $region38: #{res_submodule_forward.7} parent=35 // pred_check_branch
        %741 = sbr.rel (%p739) target = $region40
      $region39: #{res_submodule_forward.7} parent=35 // pred_region
        _
      $region40: #{res_submodule_forward.7} parent=35 // pred_fallthru
        _
    $region36: #{res_submodule_forward.7} parent=5 // pred_fallthru
      _
    %p742 = scmp.le.s32.totalorder 2, %s10
    // Predicated region
    $region41: #{res_submodule_forward.7} parent=5 // pred_check
      %p743 = pneg %p742
    $region42: #{res_submodule_forward.7} parent=5 // pred_check_branch
      %745 = sbr.rel (%p743) target = $region44
    $region43: #{res_submodule_forward.7} parent=5 // pred_region
      %s746 = ssub.s32 %s10, 2
      // Predicated region
      $region45: #{res_submodule_forward.7} parent=43 // pred_check
        %p747 = pneg %p128
      $region46: #{res_submodule_forward.7} parent=43 // pred_check_branch
        %749 = sbr.rel (%p747) target = $region48
      $region47: #{res_submodule_forward.7} parent=43 // pred_region
        %p750 = scmp.lt.s32.totalorder %s16, 1
        %s751 = scalar_select %p750, %s16, 1
        %s752 = smul.addr %s751, 3
        %s753 = smul.addr %s752, 4
        %s754 = scalar_lea.vmem %s4, %s753
      $region48: #{res_submodule_forward.7} parent=43 // pred_fallthru
        _
    $region44: #{res_submodule_forward.7} parent=5 // pred_fallthru
      _
  $region6: #{res_submodule_forward.7} parent=0 // loop_footer
    %s14 = sadd.s32 1, %s10
  $region7: #{res_submodule_forward.7} parent=0 // loop_footer_branch
    %9 = sbr.rel target = $region3
  $region8: #{res_submodule_forward.7} parent=0 // loop_exit
    _

// kernel: res_submodule_forward.8
$region0: #{res_submodule_forward.8}
  #allocation0 [shape = 'u32[]', space=smem, size = 0x4, offset = 0x4, fixed_abs, tag = 'smem constant byte address 0x4 - core index']
  #allocation1 [shape = 'u32[72,128]{1,0:T(1,128)}', space=vmem, size = 0x9000, scoped, tag = 'internal scratch']
  %s0 = inlined_call_operand.vmem [shape: bf16[2,10,32], index: 0, kind: input, shape index: {}]
  %s1 = inlined_call_operand.vmem [shape: bf16[2,10,32], index: 1, kind: input, shape index: {}]
  %s2 = inlined_call_operand.vmem [shape: bf16[2,10,32], index: 2, kind: input, shape index: {}]
  %s3 = inlined_call_operand.vmem [shape: bf16[2,10,32], index: 3, kind: input, shape index: {}]
  %s4 = inlined_call_operand.vmem [shape: bf16[9,32,64], index: 4, kind: input, shape index: {}]
  %s5 = inlined_call_operand.vmem [shape: f32[1,64], index: 5, kind: input, shape index: {}]
  %s6 = inlined_call_operand.vmem [shape: f32[1,64], index: 6, kind: input, shape index: {}]
  %s7 = inlined_call_operand.vmem [shape: bf16[2,6,64], index: 7, kind: output, shape index: {}]
  %s8 = sld [smem:[#allocation0]]
  $region61: #{res_submodule_forward.8} parent=0
    _
  %s10 = ssub.s32 1, %s8
  %s11 = scalar_select 0, %s10, %s8
  loop: start=0, step=1, limit=4
  $region2: #{res_submodule_forward.8} parent=0 // loop_pre_header
    _
  $region3: #{res_submodule_forward.8} parent=0 // loop_header
    %s13 = sphi 0, %s17
    %p14 = scmp.ge.s32.totalorder %s13, 4
    %s23 = sphi 0, %s25
    %s26 = sphi 0, %s23
    %s27 = sphi 0, %s26
    %s43 = sphi 0, %s27
    %s49 = sphi 0, %s51
    %s52 = sphi 0, %s49
    %s53 = sphi 0, %s52
    %s69 = sphi 0, %s53
    %s75 = sphi 0, %s77
    %s78 = sphi 0, %s75
    %s79 = sphi 0, %s78
    %s95 = sphi 0, %s79
    %s101 = sphi 0, %s103
    %s104 = sphi 0, %s101
    %s105 = sphi 0, %s104
    %s121 = sphi 0, %s105
    %s125 = sphi 0, %s125
    %s127 = sphi 0, %s125
    %s128 = sphi 0, %s127
    %s142 = sphi 0, %s128
    %s146 = sphi 0, %s146
    %s148 = sphi 0, %s146
    %s149 = sphi 0, %s148
    %s163 = sphi 0, %s149
    %s167 = sphi 0, %s167
    %s169 = sphi 0, %s167
    %s170 = sphi 0, %s169
    %s184 = sphi 0, %s170
    %s190 = sphi 0, %s192
    %s193 = sphi 0, %s190
    %s194 = sphi 0, %s193
    %s210 = sphi 0, %s194
  $region4: #{res_submodule_forward.8} parent=0 // loop_header_branch
    %16 = sbr.rel (%p14) target = $region8
  $region5: #{res_submodule_forward.8} parent=0 // loop_body
    %s18 = ssub.s32 %s13, 1
    %s19 = ssub.s32 %s13, 2
    %s20 = sadd.s32 %s13, 1
    %s21 = ssub.s32 %s13, %s20
    %p22 = scmp.eq.s32.totalorder %s21, 0
    %s24 = sadd.s32 %s23, 1
    %s25 = scalar_select %p22, %s23, %s24
    %p28 = pneg %p22
    %p29 = scmp.eq.s32.totalorder %s13, 1
    %p30 = por %p28, %p29
    %p31 = scmp.ne.s32.totalorder %s23, %s26
    %p32 = scmp.eq.s32.totalorder %s13, 0
    %p33 = por %p31, %p32
    %p34 = scmp.ne.s32.totalorder %s23, %s26
    %p35 = scmp.eq.s32.totalorder %s18, 1
    %p36 = por %p34, %p35
    %p37 = scmp.ne.s32.totalorder %s26, %s27
    %p38 = scmp.eq.s32.totalorder %s18, 0
    %p39 = por %p37, %p38
    %p40 = scmp.ne.s32.totalorder %s26, %s27
    %p41 = scmp.eq.s32.totalorder %s19, 1
    %p42 = por %p40, %p41
    %p44 = scmp.ne.s32.totalorder %s27, %s43
    %p45 = scmp.eq.s32.totalorder %s19, 0
    %p46 = por %p44, %p45
    %s47 = ssub.s32 %s13, %s20
    %p48 = scmp.eq.s32.totalorder %s47, 0
    %s50 = sadd.s32 %s49, 1
    %s51 = scalar_select %p48, %s49, %s50
    %p54 = pneg %p48
    %p55 = scmp.eq.s32.totalorder %s13, 1
    %p56 = por %p54, %p55
    %p57 = scmp.ne.s32.totalorder %s49, %s52
    %p58 = scmp.eq.s32.totalorder %s13, 0
    %p59 = por %p57, %p58
    %p60 = scmp.ne.s32.totalorder %s49, %s52
    %p61 = scmp.eq.s32.totalorder %s18, 1
    %p62 = por %p60, %p61
    %p63 = scmp.ne.s32.totalorder %s52, %s53
    %p64 = scmp.eq.s32.totalorder %s18, 0
    %p65 = por %p63, %p64
    %p66 = scmp.ne.s32.totalorder %s52, %s53
    %p67 = scmp.eq.s32.totalorder %s19, 1
    %p68 = por %p66, %p67
    %p70 = scmp.ne.s32.totalorder %s53, %s69
    %p71 = scmp.eq.s32.totalorder %s19, 0
    %p72 = por %p70, %p71
    %s73 = ssub.s32 %s13, %s20
    %p74 = scmp.eq.s32.totalorder %s73, 0
    %s76 = sadd.s32 %s75, 1
    %s77 = scalar_select %p74, %s75, %s76
    %p80 = pneg %p74
    %p81 = scmp.eq.s32.totalorder %s13, 1
    %p82 = por %p80, %p81
    %p83 = scmp.ne.s32.totalorder %s75, %s78
    %p84 = scmp.eq.s32.totalorder %s13, 0
    %p85 = por %p83, %p84
    %p86 = scmp.ne.s32.totalorder %s75, %s78
    %p87 = scmp.eq.s32.totalorder %s18, 1
    %p88 = por %p86, %p87
    %p89 = scmp.ne.s32.totalorder %s78, %s79
    %p90 = scmp.eq.s32.totalorder %s18, 0
    %p91 = por %p89, %p90
    %p92 = scmp.ne.s32.totalorder %s78, %s79
    %p93 = scmp.eq.s32.totalorder %s19, 1
    %p94 = por %p92, %p93
    %p96 = scmp.ne.s32.totalorder %s79, %s95
    %p97 = scmp.eq.s32.totalorder %s19, 0
    %p98 = por %p96, %p97
    %s99 = ssub.s32 %s13, %s20
    %p100 = scmp.eq.s32.totalorder %s99, 0
    %s102 = sadd.s32 %s101, 1
    %s103 = scalar_select %p100, %s101, %s102
    %p106 = pneg %p100
    %p107 = scmp.eq.s32.totalorder %s13, 1
    %p108 = por %p106, %p107
    %p109 = scmp.ne.s32.totalorder %s101, %s104
    %p110 = scmp.eq.s32.totalorder %s13, 0
    %p111 = por %p109, %p110
    %p112 = scmp.ne.s32.totalorder %s101, %s104
    %p113 = scmp.eq.s32.totalorder %s18, 1
    %p114 = por %p112, %p113
    %p115 = scmp.ne.s32.totalorder %s104, %s105
    %p116 = scmp.eq.s32.totalorder %s18, 0
    %p117 = por %p115, %p116
    %p118 = scmp.ne.s32.totalorder %s104, %s105
    %p119 = scmp.eq.s32.totalorder %s19, 1
    %p120 = por %p118, %p119
    %p122 = scmp.ne.s32.totalorder %s105, %s121
    %p123 = scmp.eq.s32.totalorder %s19, 0
    %p124 = por %p122, %p123
    %s126 = sadd.s32 %s125, 1
    %p129 = scmp.eq.s32.totalorder %s13, 1
    %p130 = scmp.ne.s32.totalorder %s125, %s127
    %p131 = scmp.eq.s32.totalorder %s13, 0
    %p132 = por %p130, %p131
    %p133 = scmp.ne.s32.totalorder %s125, %s127
    %p134 = scmp.eq.s32.totalorder %s18, 1
    %p135 = por %p133, %p134
    %p136 = scmp.ne.s32.totalorder %s127, %s128
    %p137 = scmp.eq.s32.totalorder %s18, 0
    %p138 = por %p136, %p137
    %p139 = scmp.ne.s32.totalorder %s127, %s128
    %p140 = scmp.eq.s32.totalorder %s19, 1
    %p141 = por %p139, %p140
    %p143 = scmp.ne.s32.totalorder %s128, %s142
    %p144 = scmp.eq.s32.totalorder %s19, 0
    %p145 = por %p143, %p144
    %s147 = sadd.s32 %s146, 1
    %p150 = scmp.eq.s32.totalorder %s13, 1
    %p151 = scmp.ne.s32.totalorder %s146, %s148
    %p152 = scmp.eq.s32.totalorder %s13, 0
    %p153 = por %p151, %p152
    %p154 = scmp.ne.s32.totalorder %s146, %s148
    %p155 = scmp.eq.s32.totalorder %s18, 1
    %p156 = por %p154, %p155
    %p157 = scmp.ne.s32.totalorder %s148, %s149
    %p158 = scmp.eq.s32.totalorder %s18, 0
    %p159 = por %p157, %p158
    %p160 = scmp.ne.s32.totalorder %s148, %s149
    %p161 = scmp.eq.s32.totalorder %s19, 1
    %p162 = por %p160, %p161
    %p164 = scmp.ne.s32.totalorder %s149, %s163
    %p165 = scmp.eq.s32.totalorder %s19, 0
    %p166 = por %p164, %p165
    %s168 = sadd.s32 %s167, 1
    %p171 = scmp.eq.s32.totalorder %s13, 1
    %p172 = scmp.ne.s32.totalorder %s167, %s169
    %p173 = scmp.eq.s32.totalorder %s13, 0
    %p174 = por %p172, %p173
    %p175 = scmp.ne.s32.totalorder %s167, %s169
    %p176 = scmp.eq.s32.totalorder %s18, 1
    %p177 = por %p175, %p176
    %p178 = scmp.ne.s32.totalorder %s169, %s170
    %p179 = scmp.eq.s32.totalorder %s18, 0
    %p180 = por %p178, %p179
    %p181 = scmp.ne.s32.totalorder %s169, %s170
    %p182 = scmp.eq.s32.totalorder %s19, 1
    %p183 = por %p181, %p182
    %p185 = scmp.ne.s32.totalorder %s170, %s184
    %p186 = scmp.eq.s32.totalorder %s19, 0
    %p187 = por %p185, %p186
    %s188 = ssub.s32 %s13, %s20
    %p189 = scmp.eq.s32.totalorder %s188, 0
    %s191 = sadd.s32 %s190, 1
    %s192 = scalar_select %p189, %s190, %s191
    %p195 = pneg %p189
    %p196 = scmp.eq.s32.totalorder %s13, 1
    %p197 = por %p195, %p196
    %p198 = scmp.ne.s32.totalorder %s190, %s193
    %p199 = scmp.eq.s32.totalorder %s13, 0
    %p200 = por %p198, %p199
    %p201 = scmp.ne.s32.totalorder %s190, %s193
    %p202 = scmp.eq.s32.totalorder %s18, 1
    %p203 = por %p201, %p202
    %p204 = scmp.ne.s32.totalorder %s193, %s194
    %p205 = scmp.eq.s32.totalorder %s18, 0
    %p206 = por %p204, %p205
    %p207 = scmp.ne.s32.totalorder %s193, %s194
    %p208 = scmp.eq.s32.totalorder %s19, 1
    %p209 = por %p207, %p208
    %p211 = scmp.ne.s32.totalorder %s194, %s210
    %p212 = scmp.eq.s32.totalorder %s19, 0
    %p213 = por %p211, %p212
    %p214 = scmp.le.s32.totalorder 1, %s13
    %p215 = scmp.lt.s32.totalorder %s13, 3
    %p216 = pnand %p214, %p215
    %p217 = pneg %p216
    // Predicated region
    $region9: #{res_submodule_forward.8} parent=5 // pred_check
      _
    $region10: #{res_submodule_forward.8} parent=5 // pred_check_branch
      %219 = sbr.rel (%p216) target = $region12
    $region11: #{res_submodule_forward.8} parent=5 // pred_region
      %s220 = ssub.s32 %s13, 1
      // Predicated region
      $region13: #{res_submodule_forward.8} parent=11 // pred_check
        %p221 = pneg %p138
      $region14: #{res_submodule_forward.8} parent=11 // pred_check_branch
        %223 = sbr.rel (%p221) target = $region16
      $region15: #{res_submodule_forward.8} parent=11 // pred_region
        _
      $region16: #{res_submodule_forward.8} parent=11 // pred_fallthru
        _
      // Predicated region
      $region17: #{res_submodule_forward.8} parent=11 // pred_check
        %p224 = pneg %p159
      $region18: #{res_submodule_forward.8} parent=11 // pred_check_branch
        %226 = sbr.rel (%p224) target = $region20
      $region19: #{res_submodule_forward.8} parent=11 // pred_region
        _
      $region20: #{res_submodule_forward.8} parent=11 // pred_fallthru
        _
      // Predicated region
      $region21: #{res_submodule_forward.8} parent=11 // pred_check
        %p227 = pneg %p180
      $region22: #{res_submodule_forward.8} parent=11 // pred_check_branch
        %229 = sbr.rel (%p227) target = $region24
      $region23: #{res_submodule_forward.8} parent=11 // pred_region
        _
      $region24: #{res_submodule_forward.8} parent=11 // pred_fallthru
        _
    $region12: #{res_submodule_forward.8} parent=5 // pred_fallthru
      _
    %p230 = scmp.lt.s32.totalorder %s13, 2
    // Predicated region
    $region25: #{res_submodule_forward.8} parent=5 // pred_check
      %p231 = pneg %p230
    $region26: #{res_submodule_forward.8} parent=5 // pred_check_branch
      %233 = sbr.rel (%p231) target = $region28
    $region27: #{res_submodule_forward.8} parent=5 // pred_region
      // Predicated region
      $region29: #{res_submodule_forward.8} parent=27 // pred_check
        %p234 = pneg %p33
      $region30: #{res_submodule_forward.8} parent=27 // pred_check_branch
        %236 = sbr.rel (%p234) target = $region32
      $region31: #{res_submodule_forward.8} parent=27 // pred_region
        %p237 = scmp.lt.s32.totalorder %s13, 1
        %s238 = scalar_select %p237, %s13, 1
        %s239 = smul.addr %s238, 2
        %s240 = smul.addr %s239, 4
        %s241 = scalar_lea.vmem %s0, %s240
      $region32: #{res_submodule_forward.8} parent=27 // pred_fallthru
        _
      // Predicated region
      $region33: #{res_submodule_forward.8} parent=27 // pred_check
        %p242 = pneg %p59
      $region34: #{res_submodule_forward.8} parent=27 // pred_check_branch
        %244 = sbr.rel (%p242) target = $region36
      $region35: #{res_submodule_forward.8} parent=27 // pred_region
        %p245 = scmp.lt.s32.totalorder %s13, 1
        %s246 = scalar_select %p245, %s13, 1
        %s247 = smul.addr %s246, 2
        %s248 = smul.addr %s247, 4
        %s249 = scalar_lea.vmem %s1, %s248
      $region36: #{res_submodule_forward.8} parent=27 // pred_fallthru
        _
      // Predicated region
      $region37: #{res_submodule_forward.8} parent=27 // pred_check
        %p250 = pneg %p85
      $region38: #{res_submodule_forward.8} parent=27 // pred_check_branch
        %252 = sbr.rel (%p250) target = $region40
      $region39: #{res_submodule_forward.8} parent=27 // pred_region
        %p253 = scmp.lt.s32.totalorder %s13, 1
        %s254 = scalar_select %p253, %s13, 1
        %s255 = smul.addr %s254, 2
        %s256 = smul.addr %s255, 4
        %s257 = scalar_lea.vmem %s2, %s256
      $region40: #{res_submodule_forward.8} parent=27 // pred_fallthru
        _
      // Predicated region
      $region41: #{res_submodule_forward.8} parent=27 // pred_check
        %p258 = pneg %p111
      $region42: #{res_submodule_forward.8} parent=27 // pred_check_branch
        %260 = sbr.rel (%p258) target = $region44
      $region43: #{res_submodule_forward.8} parent=27 // pred_region
        %p261 = scmp.lt.s32.totalorder %s13, 1
        %s262 = scalar_select %p261, %s13, 1
        %s263 = smul.addr %s262, 2
        %s264 = smul.addr %s263, 4
        %s265 = scalar_lea.vmem %s3, %s264
      $region44: #{res_submodule_forward.8} parent=27 // pred_fallthru
        _
    $region28: #{res_submodule_forward.8} parent=5 // pred_fallthru
      _
    %p266 = scmp.le.s32.totalorder 1, %s13
    %p267 = scmp.lt.s32.totalorder %s13, 3
    %p268 = pnand %p266, %p267
    %p269 = pneg %p268
    // Predicated region
    $region45: #{res_submodule_forward.8} parent=5 // pred_check
      _
    $region46: #{res_submodule_forward.8} parent=5 // pred_check_branch
      %271 = sbr.rel (%p268) target = $region48
    $region47: #{res_submodule_forward.8} parent=5 // pred_region
      %s272 = ssub.s32 %s13, 1
      %p273 = scmp.lt.s32.totalorder %s18, 1
      %s274 = scalar_select %p273, %s18, 1
      %s275 = smul.addr %s274, 2
      %s276 = smul.addr %s275, 4
      %s277 = scalar_lea.vmem %s0, %s276
      %p278 = pneg %p39
      %p279 = pneg %p36
      %p280 = scmp.lt.s32.totalorder %s18, 1
      %s281 = scalar_select %p280, %s18, 1
      %s282 = smul.addr %s281, 2
      %s283 = smul.addr %s282, 4
      %s284 = scalar_lea.vmem %s1, %s283
      %p285 = pneg %p65
      %p286 = pneg %p62
      %p287 = scmp.lt.s32.totalorder %s18, 1
      %s288 = scalar_select %p287, %s18, 1
      %s289 = smul.addr %s288, 2
      %s290 = smul.addr %s289, 4
      %s291 = scalar_lea.vmem %s2, %s290
      %p292 = pneg %p91
      %p293 = pneg %p88
      %p294 = scmp.lt.s32.totalorder %s18, 1
      %s295 = scalar_select %p294, %s18, 1
      %s296 = smul.addr %s295, 2
      %s297 = smul.addr %s296, 4
      %s298 = scalar_lea.vmem %s3, %s297
      %p299 = pneg %p117
      %p300 = pneg %p114
      %p301 = pneg %p138
      %p302 = pneg %p135
      %p303 = pneg %p159
      %p304 = pneg %p156
      %p305 = pneg %p180
      %p306 = pneg %p177
      %p307 = pneg %p206
      %p308 = pneg %p203
      %p309 = scmp.lt.s32.totalorder %s18, 1
      %s310 = scalar_select %p309, %s18, 1
      %s311 = smul.addr %s310, 4
      %s312 = scalar_lea.vmem %s7, %s311
      %p313 = scmp.lt.s32.totalorder %s18, 1
      %s314 = scalar_select %p313, %s18, 1
      %s315 = smul.addr %s314, 2
      %s316 = smul.addr %s315, 4
      %s317 = scalar_lea.vmem %s0, %s316
      %p318 = scmp.lt.s32.totalorder %s18, 1
      %s319 = scalar_select %p318, %s18, 1
      %s320 = smul.addr %s319, 2
      %s321 = smul.addr %s320, 4
      %s322 = scalar_lea.vmem %s1, %s321
      %p323 = scmp.lt.s32.totalorder %s18, 1
      %s324 = scalar_select %p323, %s18, 1
      %s325 = smul.addr %s324, 2
      %s326 = smul.addr %s325, 4
      %s327 = scalar_lea.vmem %s2, %s326
      %p328 = scmp.lt.s32.totalorder %s18, 1
      %s329 = scalar_select %p328, %s18, 1
      %s330 = smul.addr %s329, 2
      %s331 = smul.addr %s330, 4
      %s332 = scalar_lea.vmem %s3, %s331
      %p333 = scmp.lt.s32.totalorder %s18, 1
      %s334 = scalar_select %p333, %s18, 1
      %s335 = smul.addr %s334, 4
      %s336 = scalar_lea.vmem %s7, %s335
      %v338 = vld [vmem:[%s5] sm:$0x1]
      %v339 = vld [vmem:[%s6] sm:$0x1]
      %v340 = vld [vmem:[%s317] sm:$0x7]
      %v341 = vld [vmem:[%s4] sm:$0xf]
      %v342 = vld [vmem:[%s4 + $0x4] sm:$0xf]
      %v343 = vld [vmem:[%s4 + $0x8] sm:$0xf]
      %v344 = vld [vmem:[%s4 + $0xc] sm:$0xf]
      %v345 = vld [vmem:[%s322] sm:$0x7]
      %s346 = scalar_lea.vmem %s4, 16
      %v347 = vld [vmem:[%s346] sm:$0xf]
      %v348 = vld [vmem:[%s346 + $0x4] sm:$0xf]
      %v349 = vld [vmem:[%s346 + $0x8] sm:$0xf]
      %v350 = vld [vmem:[%s346 + $0xc] sm:$0xf]
      %v355 = vunpack.c.l.b16 %v347
      %v356 = vunpack.c.l.b16 %v348
      %v357 = vunpack.c.l.b16 %v349
      %v358 = vunpack.c.l.b16 %v350
      %v359 = vpack.c.b16 %v356, %v355
      %v360 = vpack.c.b16 %v358, %v357
      %vm363 = vcmask 261120
      %v365 = vsel %vm363, %v345, 0
      %367 = vmatpush.bf16.msra.mxu0 0
      %368 = vmatpush.bf16.msra.mxu0 0
      %369 = vmatpush.bf16.msra.mxu0 0
      %370 = vmatpush.bf16.msra.mxu0 0
      %371 = vmatpush.bf16.msra.mxu0 0
      %372 = vmatpush.bf16.msra.mxu0 0
      %373 = vmatpush.bf16.msra.mxu0 %v360
      %374 = vmatpush.bf16.msra.mxu0 %v359
      %375 = vmatmul.bf16.gmra.mxu0 %v365
      %v376 = vpop.f32.mrf.mxu0
      %v377 = vadd.f32 0.0, %v376
      %v378 = vpop.f32.mrf.mxu0
      %379 = vdwg.mxu0
      %v384 = vunpack.c.l.b16 %v341
      %v385 = vunpack.c.l.b16 %v342
      %v386 = vunpack.c.l.b16 %v343
      %v387 = vunpack.c.l.b16 %v344
      %v388 = vpack.c.b16 %v385, %v384
      %v389 = vpack.c.b16 %v387, %v386
      %v393 = vsel %vm363, %v340, 0
      %395 = vmatpush.bf16.msra.mxu0 0
      %396 = vmatpush.bf16.msra.mxu0 0
      %397 = vmatpush.bf16.msra.mxu0 0
      %398 = vmatpush.bf16.msra.mxu0 0
      %399 = vmatpush.bf16.msra.mxu0 0
      %400 = vmatpush.bf16.msra.mxu0 0
      %401 = vmatpush.bf16.msra.mxu0 %v389
      %402 = vmatpush.bf16.msra.mxu0 %v388
      %403 = vmatmul.bf16.gmra.mxu0 %v393
      %v404 = vpop.f32.mrf.mxu0
      %v405 = vadd.f32 %v377, %v404
      %v406 = vpop.f32.mrf.mxu0
      %407 = vdwg.mxu0
      %v408 = vld [vmem:[%s317] sm:$0xf]
      %s409 = scalar_lea.vmem %s4, 32
      %v410 = vld [vmem:[%s409] sm:$0xf]
      %v411 = vld [vmem:[%s409 + $0x4] sm:$0xf]
      %v412 = vld [vmem:[%s409 + $0x8] sm:$0xf]
      %v413 = vld [vmem:[%s409 + $0xc] sm:$0xf]
      %v415 = vunpack.c.l.b16 %v408
      %v416 = vpack.c.b16 %v415, %v415
      %v418 = vshrl.u32 %v416, 16
      %v420 = vshll.u32 %v416, 16
      %v422 = vrot.slane %v420, 1
      %v423 = vor.u32 %v418, %v422
      %v428 = vunpack.c.l.b16 %v410
      %v429 = vunpack.c.l.b16 %v411
      %v430 = vunpack.c.l.b16 %v412
      %v431 = vunpack.c.l.b16 %v413
      %v432 = vpack.c.b16 %v429, %v428
      %v433 = vpack.c.b16 %v431, %v430
      %v437 = vsel %vm363, %v423, 0
      %439 = vmatpush.bf16.msra.mxu0 0
      %440 = vmatpush.bf16.msra.mxu0 0
      %441 = vmatpush.bf16.msra.mxu0 0
      %442 = vmatpush.bf16.msra.mxu0 0
      %443 = vmatpush.bf16.msra.mxu0 0
      %444 = vmatpush.bf16.msra.mxu0 0
      %445 = vmatpush.bf16.msra.mxu0 %v433
      %446 = vmatpush.bf16.msra.mxu0 %v432
      %447 = vmatmul.bf16.gmra.mxu0 %v437
      %v448 = vpop.f32.mrf.mxu0
      %v449 = vadd.f32 0.0, %v448
      %v450 = vpop.f32.mrf.mxu0
      %451 = vdwg.mxu0
      %v452 = vadd.f32 %v405, %v449
      %v453 = vld [vmem:[%s327] sm:$0x7]
      %s454 = scalar_lea.vmem %s4, 48
      %v455 = vld [vmem:[%s454] sm:$0xf]
      %v456 = vld [vmem:[%s454 + $0x4] sm:$0xf]
      %v457 = vld [vmem:[%s454 + $0x8] sm:$0xf]
      %v458 = vld [vmem:[%s454 + $0xc] sm:$0xf]
      %v463 = vunpack.c.l.b16 %v455
      %v464 = vunpack.c.l.b16 %v456
      %v465 = vunpack.c.l.b16 %v457
      %v466 = vunpack.c.l.b16 %v458
      %v467 = vpack.c.b16 %v464, %v463
      %v468 = vpack.c.b16 %v466, %v465
      %v472 = vsel %vm363, %v453, 0
      %474 = vmatpush.bf16.msra.mxu0 0
      %475 = vmatpush.bf16.msra.mxu0 0
      %476 = vmatpush.bf16.msra.mxu0 0
      %477 = vmatpush.bf16.msra.mxu0 0
      %478 = vmatpush.bf16.msra.mxu0 0
      %479 = vmatpush.bf16.msra.mxu0 0
      %480 = vmatpush.bf16.msra.mxu0 %v468
      %481 = vmatpush.bf16.msra.mxu0 %v467
      %482 = vmatmul.bf16.gmra.mxu0 %v472
      %v483 = vpop.f32.mrf.mxu0
      %v484 = vadd.f32 0.0, %v483
      %v485 = vpop.f32.mrf.mxu0
      %486 = vdwg.mxu0
      %v487 = vadd.f32 %v452, %v484
      %v488 = vld [vmem:[%s332] sm:$0x7]
      %s489 = scalar_lea.vmem %s4, 64
      %v490 = vld [vmem:[%s489] sm:$0xf]
      %v491 = vld [vmem:[%s489 + $0x4] sm:$0xf]
      %v492 = vld [vmem:[%s489 + $0x8] sm:$0xf]
      %v493 = vld [vmem:[%s489 + $0xc] sm:$0xf]
      %v498 = vunpack.c.l.b16 %v490
      %v499 = vunpack.c.l.b16 %v491
      %v500 = vunpack.c.l.b16 %v492
      %v501 = vunpack.c.l.b16 %v493
      %v502 = vpack.c.b16 %v499, %v498
      %v503 = vpack.c.b16 %v501, %v500
      %v507 = vsel %vm363, %v488, 0
      %509 = vmatpush.bf16.msra.mxu0 0
      %510 = vmatpush.bf16.msra.mxu0 0
      %511 = vmatpush.bf16.msra.mxu0 0
      %512 = vmatpush.bf16.msra.mxu0 0
      %513 = vmatpush.bf16.msra.mxu0 0
      %514 = vmatpush.bf16.msra.mxu0 0
      %515 = vmatpush.bf16.msra.mxu0 %v503
      %516 = vmatpush.bf16.msra.mxu0 %v502
      %517 = vmatmul.bf16.gmra.mxu0 %v507
      %v518 = vpop.f32.mrf.mxu0
      %v519 = vadd.f32 0.0, %v518
      %v520 = vpop.f32.mrf.mxu0
      %521 = vdwg.mxu0
      %v522 = vadd.f32 %v487, %v519
      %v523 = vld [vmem:[%s327] sm:$0xf]
      %s524 = scalar_lea.vmem %s4, 80
      %v525 = vld [vmem:[%s524] sm:$0xf]
      %v526 = vld [vmem:[%s524 + $0x4] sm:$0xf]
      %v527 = vld [vmem:[%s524 + $0x8] sm:$0xf]
      %v528 = vld [vmem:[%s524 + $0xc] sm:$0xf]
      %v530 = vunpack.c.l.b16 %v523
      %v531 = vpack.c.b16 %v530, %v530
      %v533 = vshrl.u32 %v531, 16
      %v535 = vshll.u32 %v531, 16
      %v537 = vrot.slane %v535, 1
      %v538 = vor.u32 %v533, %v537
      %v543 = vunpack.c.l.b16 %v525
      %v544 = vunpack.c.l.b16 %v526
      %v545 = vunpack.c.l.b16 %v527
      %v546 = vunpack.c.l.b16 %v528
      %v547 = vpack.c.b16 %v544, %v543
      %v548 = vpack.c.b16 %v546, %v545
      %v552 = vsel %vm363, %v538, 0
      %554 = vmatpush.bf16.msra.mxu0 0
      %555 = vmatpush.bf16.msra.mxu0 0
      %556 = vmatpush.bf16.msra.mxu0 0
      %557 = vmatpush.bf16.msra.mxu0 0
      %558 = vmatpush.bf16.msra.mxu0 0
      %559 = vmatpush.bf16.msra.mxu0 0
      %560 = vmatpush.bf16.msra.mxu0 %v548
      %561 = vmatpush.bf16.msra.mxu0 %v547
      %562 = vmatmul.bf16.gmra.mxu0 %v552
      %v563 = vpop.f32.mrf.mxu0
      %v564 = vadd.f32 0.0, %v563
      %v565 = vpop.f32.mrf.mxu0
      %566 = vdwg.mxu0
      %v567 = vadd.f32 %v522, %v564
      %v568 = vld [vmem:[%s317] sm:$0xe]
      %v569 = vld [vmem:[%s317 + $0x4] sm:$0x1]
      %s570 = scalar_lea.vmem %s4, 96
      %v571 = vld [vmem:[%s570] sm:$0xf]
      %v572 = vld [vmem:[%s570 + $0x4] sm:$0xf]
      %v573 = vld [vmem:[%s570 + $0x8] sm:$0xf]
      %v574 = vld [vmem:[%s570 + $0xc] sm:$0xf]
      %v577 = vunpack.c.l.b16 %v568
      %v578 = vunpack.c.l.b16 %v569
      %v579 = vpack.c.b16 %v578, %v577
      %v581 = vshrl.u32 %v579, 16
      %v583 = vrot.slane %v581, 1
      %v584 = vshll.u32 %v579, 16
      %v586 = vrot.slane %v584, 2
      %v587 = vor.u32 %v583, %v586
      %v592 = vunpack.c.l.b16 %v571
      %v593 = vunpack.c.l.b16 %v572
      %v594 = vunpack.c.l.b16 %v573
      %v595 = vunpack.c.l.b16 %v574
      %v596 = vpack.c.b16 %v593, %v592
      %v597 = vpack.c.b16 %v595, %v594
      %v601 = vsel %vm363, %v587, 0
      %603 = vmatpush.bf16.msra.mxu0 0
      %604 = vmatpush.bf16.msra.mxu0 0
      %605 = vmatpush.bf16.msra.mxu0 0
      %606 = vmatpush.bf16.msra.mxu0 0
      %607 = vmatpush.bf16.msra.mxu0 0
      %608 = vmatpush.bf16.msra.mxu0 0
      %609 = vmatpush.bf16.msra.mxu0 %v597
      %610 = vmatpush.bf16.msra.mxu0 %v596
      %611 = vmatmul.bf16.gmra.mxu0 %v601
      %v612 = vpop.f32.mrf.mxu0
      %v613 = vadd.f32 0.0, %v612
      %v614 = vpop.f32.mrf.mxu0
      %615 = vdwg.mxu0
      %v616 = vadd.f32 %v567, %v613
      %v617 = vld [vmem:[%s322] sm:$0xe]
      %v618 = vld [vmem:[%s322 + $0x4] sm:$0x1]
      %s619 = scalar_lea.vmem %s4, 112
      %v620 = vld [vmem:[%s619] sm:$0xf]
      %v621 = vld [vmem:[%s619 + $0x4] sm:$0xf]
      %v622 = vld [vmem:[%s619 + $0x8] sm:$0xf]
      %v623 = vld [vmem:[%s619 + $0xc] sm:$0xf]
      %v626 = vunpack.c.l.b16 %v617
      %v627 = vunpack.c.l.b16 %v618
      %v628 = vpack.c.b16 %v627, %v626
      %v630 = vshrl.u32 %v628, 16
      %v632 = vrot.slane %v630, 1
      %v633 = vshll.u32 %v628, 16
      %v635 = vrot.slane %v633, 2
      %v636 = vor.u32 %v632, %v635
      %v641 = vunpack.c.l.b16 %v620
      %v642 = vunpack.c.l.b16 %v621
      %v643 = vunpack.c.l.b16 %v622
      %v644 = vunpack.c.l.b16 %v623
      %v645 = vpack.c.b16 %v642, %v641
      %v646 = vpack.c.b16 %v644, %v643
      %v650 = vsel %vm363, %v636, 0
      %652 = vmatpush.bf16.msra.mxu0 0
      %653 = vmatpush.bf16.msra.mxu0 0
      %654 = vmatpush.bf16.msra.mxu0 0
      %655 = vmatpush.bf16.msra.mxu0 0
      %656 = vmatpush.bf16.msra.mxu0 0
      %657 = vmatpush.bf16.msra.mxu0 0
      %658 = vmatpush.bf16.msra.mxu0 %v646
      %659 = vmatpush.bf16.msra.mxu0 %v645
      %660 = vmatmul.bf16.gmra.mxu0 %v650
      %v661 = vpop.f32.mrf.mxu0
      %v662 = vadd.f32 0.0, %v661
      %v663 = vpop.f32.mrf.mxu0
      %664 = vdwg.mxu0
      %v665 = vadd.f32 %v616, %v662
      %v666 = vld [vmem:[%s317] sm:$0xc]
      %s667 = scalar_lea.vmem %s4, 128
      %v668 = vld [vmem:[%s667] sm:$0xf]
      %v669 = vld [vmem:[%s667 + $0x4] sm:$0xf]
      %v670 = vld [vmem:[%s667 + $0x8] sm:$0xf]
      %v671 = vld [vmem:[%s667 + $0xc] sm:$0xf]
      %v673 = vunpack.c.l.b16 %v666
      %v674 = vpack.c.b16 %v578, %v673
      %v675 = vrot.slane %v674, 2
      %v680 = vunpack.c.l.b16 %v668
      %v681 = vunpack.c.l.b16 %v669
      %v682 = vunpack.c.l.b16 %v670
      %v683 = vunpack.c.l.b16 %v671
      %v684 = vpack.c.b16 %v681, %v680
      %v685 = vpack.c.b16 %v683, %v682
      %v689 = vsel %vm363, %v675, 0
      %691 = vmatpush.bf16.msra.mxu0 0
      %692 = vmatpush.bf16.msra.mxu0 0
      %693 = vmatpush.bf16.msra.mxu0 0
      %694 = vmatpush.bf16.msra.mxu0 0
      %695 = vmatpush.bf16.msra.mxu0 0
      %696 = vmatpush.bf16.msra.mxu0 0
      %697 = vmatpush.bf16.msra.mxu0 %v685
      %698 = vmatpush.bf16.msra.mxu0 %v684
      %699 = vmatmul.bf16.gmra.mxu0 %v689
      %v700 = vpop.f32.mrf.mxu0
      %v701 = vadd.f32 0.0, %v700
      %v702 = vpop.f32.mrf.mxu0
      %703 = vdwg.mxu0
      %v704 = vadd.f32 %v665, %v701
      %v706 = vperm.slane %v338, 0
      %v708 = vmul.f32 %v704, %v706
      %v710 = vperm.slane %v339, 0
      %v712 = vadd.f32 %v708, %v710
      %v713 = vmax.f32 %v712, 0.0
      %v714 = vpack.c.bf16 %v713, %v713
      %vm715 = vcmask 518144
      %716 = vst.msk [vmem:[%s336] sm:$0x7] %vm715, %v714
      %p717 = scmp.lt.s32.totalorder %s18, 1
      %s718 = scalar_select %p717, %s18, 1
      %s719 = smul.addr %s718, 4
      %s720 = scalar_lea.vmem %s7, %s719
      // Predicated region
      $region49: #{res_submodule_forward.8} parent=47 // pred_check
        %p721 = pneg %p203
      $region50: #{res_submodule_forward.8} parent=47 // pred_check_branch
        %723 = sbr.rel (%p721) target = $region52
      $region51: #{res_submodule_forward.8} parent=47 // pred_region
        _
      $region52: #{res_submodule_forward.8} parent=47 // pred_fallthru
        _
    $region48: #{res_submodule_forward.8} parent=5 // pred_fallthru
      _
    %p724 = scmp.le.s32.totalorder 2, %s13
    // Predicated region
    $region53: #{res_submodule_forward.8} parent=5 // pred_check
      %p725 = pneg %p724
    $region54: #{res_submodule_forward.8} parent=5 // pred_check_branch
      %727 = sbr.rel (%p725) target = $region56
    $region55: #{res_submodule_forward.8} parent=5 // pred_region
      %s728 = ssub.s32 %s13, 2
      // Predicated region
      $region57: #{res_submodule_forward.8} parent=55 // pred_check
        %p729 = pneg %p209
      $region58: #{res_submodule_forward.8} parent=55 // pred_check_branch
        %731 = sbr.rel (%p729) target = $region60
      $region59: #{res_submodule_forward.8} parent=55 // pred_region
        %p732 = scmp.lt.s32.totalorder %s19, 1
        %s733 = scalar_select %p732, %s19, 1
        %s734 = smul.addr %s733, 4
        %s735 = scalar_lea.vmem %s7, %s734
      $region60: #{res_submodule_forward.8} parent=55 // pred_fallthru
        _
    $region56: #{res_submodule_forward.8} parent=5 // pred_fallthru
      _
  $region6: #{res_submodule_forward.8} parent=0 // loop_footer
    %s17 = sadd.s32 1, %s13
  $region7: #{res_submodule_forward.8} parent=0 // loop_footer_branch
    %12 = sbr.rel target = $region3
  $region8: #{res_submodule_forward.8} parent=0 // loop_exit
    _

// kernel: res_submodule_forward.9
$region0: #{res_submodule_forward.9}
  #allocation0 [shape = 'u32[]', space=smem, size = 0x4, offset = 0x4, fixed_abs, tag = 'smem constant byte address 0x4 - core index']
  #allocation1 [shape = 'u32[72,128]{1,0:T(1,128)}', space=vmem, size = 0x9000, scoped, tag = 'internal scratch']
  %s0 = inlined_call_operand.vmem [shape: bf16[2,18,64], index: 0, kind: input, shape index: {}]
  %s1 = inlined_call_operand.vmem [shape: bf16[9,64,64], index: 1, kind: input, shape index: {}]
  %s2 = inlined_call_operand.vmem [shape: f32[1,64], index: 2, kind: input, shape index: {}]
  %s3 = inlined_call_operand.vmem [shape: f32[1,64], index: 3, kind: input, shape index: {}]
  %s4 = inlined_call_operand.vmem [shape: bf16[2,8,64], index: 4, kind: output, shape index: {}]
  %s5 = sld [smem:[#allocation0]]
  $region49: #{res_submodule_forward.9} parent=0
    _
  %s7 = ssub.s32 1, %s5
  %s8 = scalar_select 0, %s7, %s5
  loop: start=0, step=1, limit=4
  $region2: #{res_submodule_forward.9} parent=0 // loop_pre_header
    _
  $region3: #{res_submodule_forward.9} parent=0 // loop_header
    %s10 = sphi 0, %s14
    %p11 = scmp.ge.s32.totalorder %s10, 4
    %s20 = sphi 0, %s22
    %s23 = sphi 0, %s20
    %s24 = sphi 0, %s23
    %s40 = sphi 0, %s24
    %s44 = sphi 0, %s44
    %s46 = sphi 0, %s44
    %s47 = sphi 0, %s46
    %s61 = sphi 0, %s47
    %s65 = sphi 0, %s65
    %s67 = sphi 0, %s65
    %s68 = sphi 0, %s67
    %s82 = sphi 0, %s68
    %s86 = sphi 0, %s86
    %s88 = sphi 0, %s86
    %s89 = sphi 0, %s88
    %s103 = sphi 0, %s89
    %s109 = sphi 0, %s111
    %s112 = sphi 0, %s109
    %s113 = sphi 0, %s112
    %s129 = sphi 0, %s113
  $region4: #{res_submodule_forward.9} parent=0 // loop_header_branch
    %13 = sbr.rel (%p11) target = $region8
  $region5: #{res_submodule_forward.9} parent=0 // loop_body
    %s15 = ssub.s32 %s10, 1
    %s16 = ssub.s32 %s10, 2
    %s17 = sadd.s32 %s10, 1
    %s18 = ssub.s32 %s10, %s17
    %p19 = scmp.eq.s32.totalorder %s18, 0
    %s21 = sadd.s32 %s20, 1
    %s22 = scalar_select %p19, %s20, %s21
    %p25 = pneg %p19
    %p26 = scmp.eq.s32.totalorder %s10, 1
    %p27 = por %p25, %p26
    %p28 = scmp.ne.s32.totalorder %s20, %s23
    %p29 = scmp.eq.s32.totalorder %s10, 0
    %p30 = por %p28, %p29
    %p31 = scmp.ne.s32.totalorder %s20, %s23
    %p32 = scmp.eq.s32.totalorder %s15, 1
    %p33 = por %p31, %p32
    %p34 = scmp.ne.s32.totalorder %s23, %s24
    %p35 = scmp.eq.s32.totalorder %s15, 0
    %p36 = por %p34, %p35
    %p37 = scmp.ne.s32.totalorder %s23, %s24
    %p38 = scmp.eq.s32.totalorder %s16, 1
    %p39 = por %p37, %p38
    %p41 = scmp.ne.s32.totalorder %s24, %s40
    %p42 = scmp.eq.s32.totalorder %s16, 0
    %p43 = por %p41, %p42
    %s45 = sadd.s32 %s44, 1
    %p48 = scmp.eq.s32.totalorder %s10, 1
    %p49 = scmp.ne.s32.totalorder %s44, %s46
    %p50 = scmp.eq.s32.totalorder %s10, 0
    %p51 = por %p49, %p50
    %p52 = scmp.ne.s32.totalorder %s44, %s46
    %p53 = scmp.eq.s32.totalorder %s15, 1
    %p54 = por %p52, %p53
    %p55 = scmp.ne.s32.totalorder %s46, %s47
    %p56 = scmp.eq.s32.totalorder %s15, 0
    %p57 = por %p55, %p56
    %p58 = scmp.ne.s32.totalorder %s46, %s47
    %p59 = scmp.eq.s32.totalorder %s16, 1
    %p60 = por %p58, %p59
    %p62 = scmp.ne.s32.totalorder %s47, %s61
    %p63 = scmp.eq.s32.totalorder %s16, 0
    %p64 = por %p62, %p63
    %s66 = sadd.s32 %s65, 1
    %p69 = scmp.eq.s32.totalorder %s10, 1
    %p70 = scmp.ne.s32.totalorder %s65, %s67
    %p71 = scmp.eq.s32.totalorder %s10, 0
    %p72 = por %p70, %p71
    %p73 = scmp.ne.s32.totalorder %s65, %s67
    %p74 = scmp.eq.s32.totalorder %s15, 1
    %p75 = por %p73, %p74
    %p76 = scmp.ne.s32.totalorder %s67, %s68
    %p77 = scmp.eq.s32.totalorder %s15, 0
    %p78 = por %p76, %p77
    %p79 = scmp.ne.s32.totalorder %s67, %s68
    %p80 = scmp.eq.s32.totalorder %s16, 1
    %p81 = por %p79, %p80
    %p83 = scmp.ne.s32.totalorder %s68, %s82
    %p84 = scmp.eq.s32.totalorder %s16, 0
    %p85 = por %p83, %p84
    %s87 = sadd.s32 %s86, 1
    %p90 = scmp.eq.s32.totalorder %s10, 1
    %p91 = scmp.ne.s32.totalorder %s86, %s88
    %p92 = scmp.eq.s32.totalorder %s10, 0
    %p93 = por %p91, %p92
    %p94 = scmp.ne.s32.totalorder %s86, %s88
    %p95 = scmp.eq.s32.totalorder %s15, 1
    %p96 = por %p94, %p95
    %p97 = scmp.ne.s32.totalorder %s88, %s89
    %p98 = scmp.eq.s32.totalorder %s15, 0
    %p99 = por %p97, %p98
    %p100 = scmp.ne.s32.totalorder %s88, %s89
    %p101 = scmp.eq.s32.totalorder %s16, 1
    %p102 = por %p100, %p101
    %p104 = scmp.ne.s32.totalorder %s89, %s103
    %p105 = scmp.eq.s32.totalorder %s16, 0
    %p106 = por %p104, %p105
    %s107 = ssub.s32 %s10, %s17
    %p108 = scmp.eq.s32.totalorder %s107, 0
    %s110 = sadd.s32 %s109, 1
    %s111 = scalar_select %p108, %s109, %s110
    %p114 = pneg %p108
    %p115 = scmp.eq.s32.totalorder %s10, 1
    %p116 = por %p114, %p115
    %p117 = scmp.ne.s32.totalorder %s109, %s112
    %p118 = scmp.eq.s32.totalorder %s10, 0
    %p119 = por %p117, %p118
    %p120 = scmp.ne.s32.totalorder %s109, %s112
    %p121 = scmp.eq.s32.totalorder %s15, 1
    %p122 = por %p120, %p121
    %p123 = scmp.ne.s32.totalorder %s112, %s113
    %p124 = scmp.eq.s32.totalorder %s15, 0
    %p125 = por %p123, %p124
    %p126 = scmp.ne.s32.totalorder %s112, %s113
    %p127 = scmp.eq.s32.totalorder %s16, 1
    %p128 = por %p126, %p127
    %p130 = scmp.ne.s32.totalorder %s113, %s129
    %p131 = scmp.eq.s32.totalorder %s16, 0
    %p132 = por %p130, %p131
    %p133 = scmp.le.s32.totalorder 1, %s10
    %p134 = scmp.lt.s32.totalorder %s10, 3
    %p135 = pnand %p133, %p134
    %p136 = pneg %p135
    // Predicated region
    $region9: #{res_submodule_forward.9} parent=5 // pred_check
      _
    $region10: #{res_submodule_forward.9} parent=5 // pred_check_branch
      %138 = sbr.rel (%p135) target = $region12
    $region11: #{res_submodule_forward.9} parent=5 // pred_region
      %s139 = ssub.s32 %s10, 1
      // Predicated region
      $region13: #{res_submodule_forward.9} parent=11 // pred_check
        %p140 = pneg %p57
      $region14: #{res_submodule_forward.9} parent=11 // pred_check_branch
        %142 = sbr.rel (%p140) target = $region16
      $region15: #{res_submodule_forward.9} parent=11 // pred_region
        _
      $region16: #{res_submodule_forward.9} parent=11 // pred_fallthru
        _
      // Predicated region
      $region17: #{res_submodule_forward.9} parent=11 // pred_check
        %p143 = pneg %p78
      $region18: #{res_submodule_forward.9} parent=11 // pred_check_branch
        %145 = sbr.rel (%p143) target = $region20
      $region19: #{res_submodule_forward.9} parent=11 // pred_region
        _
      $region20: #{res_submodule_forward.9} parent=11 // pred_fallthru
        _
      // Predicated region
      $region21: #{res_submodule_forward.9} parent=11 // pred_check
        %p146 = pneg %p99
      $region22: #{res_submodule_forward.9} parent=11 // pred_check_branch
        %148 = sbr.rel (%p146) target = $region24
      $region23: #{res_submodule_forward.9} parent=11 // pred_region
        _
      $region24: #{res_submodule_forward.9} parent=11 // pred_fallthru
        _
    $region12: #{res_submodule_forward.9} parent=5 // pred_fallthru
      _
    %p149 = scmp.lt.s32.totalorder %s10, 2
    // Predicated region
    $region25: #{res_submodule_forward.9} parent=5 // pred_check
      %p150 = pneg %p149
    $region26: #{res_submodule_forward.9} parent=5 // pred_check_branch
      %152 = sbr.rel (%p150) target = $region28
    $region27: #{res_submodule_forward.9} parent=5 // pred_region
      // Predicated region
      $region29: #{res_submodule_forward.9} parent=27 // pred_check
        %p153 = pneg %p30
      $region30: #{res_submodule_forward.9} parent=27 // pred_check_branch
        %155 = sbr.rel (%p153) target = $region32
      $region31: #{res_submodule_forward.9} parent=27 // pred_region
        %p156 = scmp.lt.s32.totalorder %s10, 1
        %s157 = scalar_select %p156, %s10, 1
        %s158 = smul.addr %s157, 3
        %s159 = smul.addr %s158, 4
        %s160 = scalar_lea.vmem %s0, %s159
      $region32: #{res_submodule_forward.9} parent=27 // pred_fallthru
        _
    $region28: #{res_submodule_forward.9} parent=5 // pred_fallthru
      _
    %p161 = scmp.le.s32.totalorder 1, %s10
    %p162 = scmp.lt.s32.totalorder %s10, 3
    %p163 = pnand %p161, %p162
    %p164 = pneg %p163
    // Predicated region
    $region33: #{res_submodule_forward.9} parent=5 // pred_check
      _
    $region34: #{res_submodule_forward.9} parent=5 // pred_check_branch
      %166 = sbr.rel (%p163) target = $region36
    $region35: #{res_submodule_forward.9} parent=5 // pred_region
      %s167 = ssub.s32 %s10, 1
      %p168 = scmp.lt.s32.totalorder %s15, 1
      %s169 = scalar_select %p168, %s15, 1
      %s170 = smul.addr %s169, 3
      %s171 = smul.addr %s170, 4
      %s172 = scalar_lea.vmem %s0, %s171
      %p173 = pneg %p36
      %p174 = pneg %p33
      %p175 = pneg %p57
      %p176 = pneg %p54
      %p177 = pneg %p78
      %p178 = pneg %p75
      %p179 = pneg %p99
      %p180 = pneg %p96
      %p181 = pneg %p125
      %p182 = pneg %p122
      %p183 = scmp.lt.s32.totalorder %s15, 1
      %s184 = scalar_select %p183, %s15, 1
      %s185 = smul.addr %s184, 4
      %s186 = scalar_lea.vmem %s4, %s185
      %p187 = scmp.lt.s32.totalorder %s15, 1
      %s188 = scalar_select %p187, %s15, 1
      %s189 = smul.addr %s188, 3
      %s190 = smul.addr %s189, 4
      %s191 = scalar_lea.vmem %s0, %s190
      %p192 = scmp.lt.s32.totalorder %s15, 1
      %s193 = scalar_select %p192, %s15, 1
      %s194 = smul.addr %s193, 4
      %s195 = scalar_lea.vmem %s4, %s194
      %v197 = vld [vmem:[%s2] sm:$0x1]
      %v198 = vld [vmem:[%s3] sm:$0x1]
      %v199 = vld [vmem:[%s191] sm:$0xf]
      %v200 = vld [vmem:[%s1] sm:$0xf]
      %v201 = vld [vmem:[%s1 + $0x4] sm:$0xf]
      %v202 = vld [vmem:[%s1 + $0x8] sm:$0xf]
      %v203 = vld [vmem:[%s1 + $0xc] sm:$0xf]
      %v204 = vld [vmem:[%s1 + $0x10] sm:$0xf]
      %v205 = vld [vmem:[%s1 + $0x14] sm:$0xf]
      %v206 = vld [vmem:[%s1 + $0x18] sm:$0xf]
      %v207 = vld [vmem:[%s1 + $0x1c] sm:$0xf]
      %v208 = vld [vmem:[%s191 + $0x4] sm:$0x1]
      %s209 = scalar_lea.vmem %s1, 32
      %v210 = vld [vmem:[%s209] sm:$0xf]
      %v211 = vld [vmem:[%s209 + $0x4] sm:$0xf]
      %v212 = vld [vmem:[%s209 + $0x8] sm:$0xf]
      %v213 = vld [vmem:[%s209 + $0xc] sm:$0xf]
      %v214 = vld [vmem:[%s209 + $0x10] sm:$0xf]
      %v215 = vld [vmem:[%s209 + $0x14] sm:$0xf]
      %v216 = vld [vmem:[%s209 + $0x18] sm:$0xf]
      %v217 = vld [vmem:[%s209 + $0x1c] sm:$0xf]
      %v220 = vunpack.c.l.b16 %v199
      %v221 = vunpack.c.l.b16 %v208
      %v222 = vpack.c.b16 %v221, %v220
      %v224 = vshrl.u32 %v222, 16
      %v226 = vshll.u32 %v222, 16
      %v228 = vrot.slane %v226, 1
      %v229 = vor.u32 %v224, %v228
      %v238 = vunpack.c.l.b16 %v210
      %v239 = vunpack.c.l.b16 %v211
      %v240 = vunpack.c.l.b16 %v212
      %v241 = vunpack.c.l.b16 %v213
      %v242 = vunpack.c.l.b16 %v214
      %v243 = vunpack.c.l.b16 %v215
      %v244 = vunpack.c.l.b16 %v216
      %v245 = vunpack.c.l.b16 %v217
      %v246 = vpack.c.b16 %v239, %v238
      %v247 = vpack.c.b16 %v241, %v240
      %v248 = vpack.c.b16 %v243, %v242
      %v249 = vpack.c.b16 %v245, %v244
      %vm254 = vcmask 523264
      %v256 = vsel %vm254, %v229, 0
      %258 = vmatpush.bf16.msra.mxu0 0
      %259 = vmatpush.bf16.msra.mxu0 0
      %260 = vmatpush.bf16.msra.mxu0 0
      %261 = vmatpush.bf16.msra.mxu0 0
      %262 = vmatpush.bf16.msra.mxu0 %v249
      %263 = vmatpush.bf16.msra.mxu0 %v248
      %264 = vmatpush.bf16.msra.mxu0 %v247
      %265 = vmatpush.bf16.msra.mxu0 %v246
      %266 = vmatmul.bf16.gmra.mxu0 %v256
      %v267 = vpop.f32.mrf.mxu0
      %v268 = vadd.f32 0.0, %v267
      %v269 = vpop.f32.mrf.mxu0
      %270 = vdwg.mxu0
      %v279 = vunpack.c.l.b16 %v200
      %v280 = vunpack.c.l.b16 %v201
      %v281 = vunpack.c.l.b16 %v202
      %v282 = vunpack.c.l.b16 %v203
      %v283 = vunpack.c.l.b16 %v204
      %v284 = vunpack.c.l.b16 %v205
      %v285 = vunpack.c.l.b16 %v206
      %v286 = vunpack.c.l.b16 %v207
      %v287 = vpack.c.b16 %v280, %v279
      %v288 = vpack.c.b16 %v282, %v281
      %v289 = vpack.c.b16 %v284, %v283
      %v290 = vpack.c.b16 %v286, %v285
      %v296 = vsel %vm254, %v199, 0
      %298 = vmatpush.bf16.msra.mxu0 0
      %299 = vmatpush.bf16.msra.mxu0 0
      %300 = vmatpush.bf16.msra.mxu0 0
      %301 = vmatpush.bf16.msra.mxu0 0
      %302 = vmatpush.bf16.msra.mxu0 %v290
      %303 = vmatpush.bf16.msra.mxu0 %v289
      %304 = vmatpush.bf16.msra.mxu0 %v288
      %305 = vmatpush.bf16.msra.mxu0 %v287
      %306 = vmatmul.bf16.gmra.mxu0 %v296
      %v307 = vpop.f32.mrf.mxu0
      %v308 = vadd.f32 %v268, %v307
      %v309 = vpop.f32.mrf.mxu0
      %310 = vdwg.mxu0
      %v311 = vld [vmem:[%s191] sm:$0xe]
      %s312 = scalar_lea.vmem %s1, 64
      %v313 = vld [vmem:[%s312] sm:$0xf]
      %v314 = vld [vmem:[%s312 + $0x4] sm:$0xf]
      %v315 = vld [vmem:[%s312 + $0x8] sm:$0xf]
      %v316 = vld [vmem:[%s312 + $0xc] sm:$0xf]
      %v317 = vld [vmem:[%s312 + $0x10] sm:$0xf]
      %v318 = vld [vmem:[%s312 + $0x14] sm:$0xf]
      %v319 = vld [vmem:[%s312 + $0x18] sm:$0xf]
      %v320 = vld [vmem:[%s312 + $0x1c] sm:$0xf]
      %v322 = vunpack.c.l.b16 %v311
      %v323 = vpack.c.b16 %v221, %v322
      %v324 = vrot.slane %v323, 1
      %v333 = vunpack.c.l.b16 %v313
      %v334 = vunpack.c.l.b16 %v314
      %v335 = vunpack.c.l.b16 %v315
      %v336 = vunpack.c.l.b16 %v316
      %v337 = vunpack.c.l.b16 %v317
      %v338 = vunpack.c.l.b16 %v318
      %v339 = vunpack.c.l.b16 %v319
      %v340 = vunpack.c.l.b16 %v320
      %v341 = vpack.c.b16 %v334, %v333
      %v342 = vpack.c.b16 %v336, %v335
      %v343 = vpack.c.b16 %v338, %v337
      %v344 = vpack.c.b16 %v340, %v339
      %v350 = vsel %vm254, %v324, 0
      %352 = vmatpush.bf16.msra.mxu0 0
      %353 = vmatpush.bf16.msra.mxu0 0
      %354 = vmatpush.bf16.msra.mxu0 0
      %355 = vmatpush.bf16.msra.mxu0 0
      %356 = vmatpush.bf16.msra.mxu0 %v344
      %357 = vmatpush.bf16.msra.mxu0 %v343
      %358 = vmatpush.bf16.msra.mxu0 %v342
      %359 = vmatpush.bf16.msra.mxu0 %v341
      %360 = vmatmul.bf16.gmra.mxu0 %v350
      %v361 = vpop.f32.mrf.mxu0
      %v362 = vadd.f32 0.0, %v361
      %v363 = vpop.f32.mrf.mxu0
      %364 = vdwg.mxu0
      %v365 = vadd.f32 %v308, %v362
      %v366 = vld [vmem:[%s191] sm:$0xc]
      %v367 = vld [vmem:[%s191 + $0x4] sm:$0x3]
      %s368 = scalar_lea.vmem %s1, 96
      %v369 = vld [vmem:[%s368] sm:$0xf]
      %v370 = vld [vmem:[%s368 + $0x4] sm:$0xf]
      %v371 = vld [vmem:[%s368 + $0x8] sm:$0xf]
      %v372 = vld [vmem:[%s368 + $0xc] sm:$0xf]
      %v373 = vld [vmem:[%s368 + $0x10] sm:$0xf]
      %v374 = vld [vmem:[%s368 + $0x14] sm:$0xf]
      %v375 = vld [vmem:[%s368 + $0x18] sm:$0xf]
      %v376 = vld [vmem:[%s368 + $0x1c] sm:$0xf]
      %v379 = vunpack.c.l.b16 %v366
      %v380 = vunpack.c.l.b16 %v367
      %v381 = vpack.c.b16 %v380, %v379
      %v382 = vrot.slane %v381, 2
      %v391 = vunpack.c.l.b16 %v369
      %v392 = vunpack.c.l.b16 %v370
      %v393 = vunpack.c.l.b16 %v371
      %v394 = vunpack.c.l.b16 %v372
      %v395 = vunpack.c.l.b16 %v373
      %v396 = vunpack.c.l.b16 %v374
      %v397 = vunpack.c.l.b16 %v375
      %v398 = vunpack.c.l.b16 %v376
      %v399 = vpack.c.b16 %v392, %v391
      %v400 = vpack.c.b16 %v394, %v393
      %v401 = vpack.c.b16 %v396, %v395
      %v402 = vpack.c.b16 %v398, %v397
      %v408 = vsel %vm254, %v382, 0
      %410 = vmatpush.bf16.msra.mxu0 0
      %411 = vmatpush.bf16.msra.mxu0 0
      %412 = vmatpush.bf16.msra.mxu0 0
      %413 = vmatpush.bf16.msra.mxu0 0
      %414 = vmatpush.bf16.msra.mxu0 %v402
      %415 = vmatpush.bf16.msra.mxu0 %v401
      %416 = vmatpush.bf16.msra.mxu0 %v400
      %417 = vmatpush.bf16.msra.mxu0 %v399
      %418 = vmatmul.bf16.gmra.mxu0 %v408
      %v419 = vpop.f32.mrf.mxu0
      %v420 = vadd.f32 0.0, %v419
      %v421 = vpop.f32.mrf.mxu0
      %422 = vdwg.mxu0
      %v423 = vadd.f32 %v365, %v420
      %v424 = vld [vmem:[%s191 + $0x4] sm:$0x7]
      %s425 = scalar_lea.vmem %s1, 128
      %v426 = vld [vmem:[%s425] sm:$0xf]
      %v427 = vld [vmem:[%s425 + $0x4] sm:$0xf]
      %v428 = vld [vmem:[%s425 + $0x8] sm:$0xf]
      %v429 = vld [vmem:[%s425 + $0xc] sm:$0xf]
      %v430 = vld [vmem:[%s425 + $0x10] sm:$0xf]
      %v431 = vld [vmem:[%s425 + $0x14] sm:$0xf]
      %v432 = vld [vmem:[%s425 + $0x18] sm:$0xf]
      %v433 = vld [vmem:[%s425 + $0x1c] sm:$0xf]
      %v435 = vunpack.c.l.b16 %v424
      %v436 = vpack.c.b16 %v435, %v379
      %v438 = vshrl.u32 %v436, 16
      %v440 = vrot.slane %v438, 2
      %v441 = vshll.u32 %v436, 16
      %v443 = vrot.slane %v441, 3
      %v444 = vor.u32 %v440, %v443
      %v453 = vunpack.c.l.b16 %v426
      %v454 = vunpack.c.l.b16 %v427
      %v455 = vunpack.c.l.b16 %v428
      %v456 = vunpack.c.l.b16 %v429
      %v457 = vunpack.c.l.b16 %v430
      %v458 = vunpack.c.l.b16 %v431
      %v459 = vunpack.c.l.b16 %v432
      %v460 = vunpack.c.l.b16 %v433
      %v461 = vpack.c.b16 %v454, %v453
      %v462 = vpack.c.b16 %v456, %v455
      %v463 = vpack.c.b16 %v458, %v457
      %v464 = vpack.c.b16 %v460, %v459
      %v470 = vsel %vm254, %v444, 0
      %472 = vmatpush.bf16.msra.mxu0 0
      %473 = vmatpush.bf16.msra.mxu0 0
      %474 = vmatpush.bf16.msra.mxu0 0
      %475 = vmatpush.bf16.msra.mxu0 0
      %476 = vmatpush.bf16.msra.mxu0 %v464
      %477 = vmatpush.bf16.msra.mxu0 %v463
      %478 = vmatpush.bf16.msra.mxu0 %v462
      %479 = vmatpush.bf16.msra.mxu0 %v461
      %480 = vmatmul.bf16.gmra.mxu0 %v470
      %v481 = vpop.f32.mrf.mxu0
      %v482 = vadd.f32 0.0, %v481
      %v483 = vpop.f32.mrf.mxu0
      %484 = vdwg.mxu0
      %v485 = vadd.f32 %v423, %v482
      %v486 = vld [vmem:[%s191] sm:$0x8]
      %s487 = scalar_lea.vmem %s1, 160
      %v488 = vld [vmem:[%s487] sm:$0xf]
      %v489 = vld [vmem:[%s487 + $0x4] sm:$0xf]
      %v490 = vld [vmem:[%s487 + $0x8] sm:$0xf]
      %v491 = vld [vmem:[%s487 + $0xc] sm:$0xf]
      %v492 = vld [vmem:[%s487 + $0x10] sm:$0xf]
      %v493 = vld [vmem:[%s487 + $0x14] sm:$0xf]
      %v494 = vld [vmem:[%s487 + $0x18] sm:$0xf]
      %v495 = vld [vmem:[%s487 + $0x1c] sm:$0xf]
      %v497 = vunpack.c.l.b16 %v486
      %v498 = vpack.c.b16 %v435, %v497
      %v499 = vrot.slane %v498, 3
      %v508 = vunpack.c.l.b16 %v488
      %v509 = vunpack.c.l.b16 %v489
      %v510 = vunpack.c.l.b16 %v490
      %v511 = vunpack.c.l.b16 %v491
      %v512 = vunpack.c.l.b16 %v492
      %v513 = vunpack.c.l.b16 %v493
      %v514 = vunpack.c.l.b16 %v494
      %v515 = vunpack.c.l.b16 %v495
      %v516 = vpack.c.b16 %v509, %v508
      %v517 = vpack.c.b16 %v511, %v510
      %v518 = vpack.c.b16 %v513, %v512
      %v519 = vpack.c.b16 %v515, %v514
      %v525 = vsel %vm254, %v499, 0
      %527 = vmatpush.bf16.msra.mxu0 0
      %528 = vmatpush.bf16.msra.mxu0 0
      %529 = vmatpush.bf16.msra.mxu0 0
      %530 = vmatpush.bf16.msra.mxu0 0
      %531 = vmatpush.bf16.msra.mxu0 %v519
      %532 = vmatpush.bf16.msra.mxu0 %v518
      %533 = vmatpush.bf16.msra.mxu0 %v517
      %534 = vmatpush.bf16.msra.mxu0 %v516
      %535 = vmatmul.bf16.gmra.mxu0 %v525
      %v536 = vpop.f32.mrf.mxu0
      %v537 = vadd.f32 0.0, %v536
      %v538 = vpop.f32.mrf.mxu0
      %539 = vdwg.mxu0
      %v540 = vadd.f32 %v485, %v537
      %v541 = vld [vmem:[%s191 + $0x4] sm:$0xf]
      %s542 = scalar_lea.vmem %s1, 192
      %v543 = vld [vmem:[%s542] sm:$0xf]
      %v544 = vld [vmem:[%s542 + $0x4] sm:$0xf]
      %v545 = vld [vmem:[%s542 + $0x8] sm:$0xf]
      %v546 = vld [vmem:[%s542 + $0xc] sm:$0xf]
      %v547 = vld [vmem:[%s542 + $0x10] sm:$0xf]
      %v548 = vld [vmem:[%s542 + $0x14] sm:$0xf]
      %v549 = vld [vmem:[%s542 + $0x18] sm:$0xf]
      %v550 = vld [vmem:[%s542 + $0x1c] sm:$0xf]
      %v559 = vunpack.c.l.b16 %v543
      %v560 = vunpack.c.l.b16 %v544
      %v561 = vunpack.c.l.b16 %v545
      %v562 = vunpack.c.l.b16 %v546
      %v563 = vunpack.c.l.b16 %v547
      %v564 = vunpack.c.l.b16 %v548
      %v565 = vunpack.c.l.b16 %v549
      %v566 = vunpack.c.l.b16 %v550
      %v567 = vpack.c.b16 %v560, %v559
      %v568 = vpack.c.b16 %v562, %v561
      %v569 = vpack.c.b16 %v564, %v563
      %v570 = vpack.c.b16 %v566, %v565
      %v576 = vsel %vm254, %v541, 0
      %578 = vmatpush.bf16.msra.mxu0 0
      %579 = vmatpush.bf16.msra.mxu0 0
      %580 = vmatpush.bf16.msra.mxu0 0
      %581 = vmatpush.bf16.msra.mxu0 0
      %582 = vmatpush.bf16.msra.mxu0 %v570
      %583 = vmatpush.bf16.msra.mxu0 %v569
      %584 = vmatpush.bf16.msra.mxu0 %v568
      %585 = vmatpush.bf16.msra.mxu0 %v567
      %586 = vmatmul.bf16.gmra.mxu0 %v576
      %v587 = vpop.f32.mrf.mxu0
      %v588 = vadd.f32 0.0, %v587
      %v589 = vpop.f32.mrf.mxu0
      %590 = vdwg.mxu0
      %v591 = vadd.f32 %v540, %v588
      %v592 = vld [vmem:[%s191 + $0x4] sm:$0xf]
      %v593 = vld [vmem:[%s191 + $0x8] sm:$0x1]
      %s594 = scalar_lea.vmem %s1, 224
      %v595 = vld [vmem:[%s594] sm:$0xf]
      %v596 = vld [vmem:[%s594 + $0x4] sm:$0xf]
      %v597 = vld [vmem:[%s594 + $0x8] sm:$0xf]
      %v598 = vld [vmem:[%s594 + $0xc] sm:$0xf]
      %v599 = vld [vmem:[%s594 + $0x10] sm:$0xf]
      %v600 = vld [vmem:[%s594 + $0x14] sm:$0xf]
      %v601 = vld [vmem:[%s594 + $0x18] sm:$0xf]
      %v602 = vld [vmem:[%s594 + $0x1c] sm:$0xf]
      %v605 = vunpack.c.l.b16 %v592
      %v606 = vunpack.c.l.b16 %v593
      %v607 = vpack.c.b16 %v606, %v605
      %v609 = vshrl.u32 %v607, 16
      %v611 = vshll.u32 %v607, 16
      %v613 = vrot.slane %v611, 1
      %v614 = vor.u32 %v609, %v613
      %v623 = vunpack.c.l.b16 %v595
      %v624 = vunpack.c.l.b16 %v596
      %v625 = vunpack.c.l.b16 %v597
      %v626 = vunpack.c.l.b16 %v598
      %v627 = vunpack.c.l.b16 %v599
      %v628 = vunpack.c.l.b16 %v600
      %v629 = vunpack.c.l.b16 %v601
      %v630 = vunpack.c.l.b16 %v602
      %v631 = vpack.c.b16 %v624, %v623
      %v632 = vpack.c.b16 %v626, %v625
      %v633 = vpack.c.b16 %v628, %v627
      %v634 = vpack.c.b16 %v630, %v629
      %v640 = vsel %vm254, %v614, 0
      %642 = vmatpush.bf16.msra.mxu0 0
      %643 = vmatpush.bf16.msra.mxu0 0
      %644 = vmatpush.bf16.msra.mxu0 0
      %645 = vmatpush.bf16.msra.mxu0 0
      %646 = vmatpush.bf16.msra.mxu0 %v634
      %647 = vmatpush.bf16.msra.mxu0 %v633
      %648 = vmatpush.bf16.msra.mxu0 %v632
      %649 = vmatpush.bf16.msra.mxu0 %v631
      %650 = vmatmul.bf16.gmra.mxu0 %v640
      %v651 = vpop.f32.mrf.mxu0
      %v652 = vadd.f32 0.0, %v651
      %v653 = vpop.f32.mrf.mxu0
      %654 = vdwg.mxu0
      %v655 = vadd.f32 %v591, %v652
      %v656 = vld [vmem:[%s191 + $0x4] sm:$0xe]
      %s657 = scalar_lea.vmem %s1, 256
      %v658 = vld [vmem:[%s657] sm:$0xf]
      %v659 = vld [vmem:[%s657 + $0x4] sm:$0xf]
      %v660 = vld [vmem:[%s657 + $0x8] sm:$0xf]
      %v661 = vld [vmem:[%s657 + $0xc] sm:$0xf]
      %v662 = vld [vmem:[%s657 + $0x10] sm:$0xf]
      %v663 = vld [vmem:[%s657 + $0x14] sm:$0xf]
      %v664 = vld [vmem:[%s657 + $0x18] sm:$0xf]
      %v665 = vld [vmem:[%s657 + $0x1c] sm:$0xf]
      %v667 = vunpack.c.l.b16 %v656
      %v668 = vpack.c.b16 %v606, %v667
      %v669 = vrot.slane %v668, 1
      %v678 = vunpack.c.l.b16 %v658
      %v679 = vunpack.c.l.b16 %v659
      %v680 = vunpack.c.l.b16 %v660
      %v681 = vunpack.c.l.b16 %v661
      %v682 = vunpack.c.l.b16 %v662
      %v683 = vunpack.c.l.b16 %v663
      %v684 = vunpack.c.l.b16 %v664
      %v685 = vunpack.c.l.b16 %v665
      %v686 = vpack.c.b16 %v679, %v678
      %v687 = vpack.c.b16 %v681, %v680
      %v688 = vpack.c.b16 %v683, %v682
      %v689 = vpack.c.b16 %v685, %v684
      %v695 = vsel %vm254, %v669, 0
      %697 = vmatpush.bf16.msra.mxu0 0
      %698 = vmatpush.bf16.msra.mxu0 0
      %699 = vmatpush.bf16.msra.mxu0 0
      %700 = vmatpush.bf16.msra.mxu0 0
      %701 = vmatpush.bf16.msra.mxu0 %v689
      %702 = vmatpush.bf16.msra.mxu0 %v688
      %703 = vmatpush.bf16.msra.mxu0 %v687
      %704 = vmatpush.bf16.msra.mxu0 %v686
      %705 = vmatmul.bf16.gmra.mxu0 %v695
      %v706 = vpop.f32.mrf.mxu0
      %v707 = vadd.f32 0.0, %v706
      %v708 = vpop.f32.mrf.mxu0
      %709 = vdwg.mxu0
      %v710 = vadd.f32 %v655, %v707
      %v712 = vperm.slane %v197, 0
      %v714 = vmul.f32 %v710, %v712
      %v716 = vperm.slane %v198, 0
      %v718 = vadd.f32 %v714, %v716
      %v719 = vmax.f32 %v718, 0.0
      %v720 = vpack.c.bf16 %v719, %v719
      %vm721 = vcmask 519168
      %722 = vst.msk [vmem:[%s195] sm:$0xf] %vm721, %v720
      %p723 = scmp.lt.s32.totalorder %s15, 1
      %s724 = scalar_select %p723, %s15, 1
      %s725 = smul.addr %s724, 4
      %s726 = scalar_lea.vmem %s4, %s725
      // Predicated region
      $region37: #{res_submodule_forward.9} parent=35 // pred_check
        %p727 = pneg %p122
      $region38: #{res_submodule_forward.9} parent=35 // pred_check_branch
        %729 = sbr.rel (%p727) target = $region40
      $region39: #{res_submodule_forward.9} parent=35 // pred_region
        _
      $region40: #{res_submodule_forward.9} parent=35 // pred_fallthru
        _
    $region36: #{res_submodule_forward.9} parent=5 // pred_fallthru
      _
    %p730 = scmp.le.s32.totalorder 2, %s10
    // Predicated region
    $region41: #{res_submodule_forward.9} parent=5 // pred_check
      %p731 = pneg %p730
    $region42: #{res_submodule_forward.9} parent=5 // pred_check_branch
      %733 = sbr.rel (%p731) target = $region44
    $region43: #{res_submodule_forward.9} parent=5 // pred_region
      %s734 = ssub.s32 %s10, 2
      // Predicated region
      $region45: #{res_submodule_forward.9} parent=43 // pred_check
        %p735 = pneg %p128
      $region46: #{res_submodule_forward.9} parent=43 // pred_check_branch
        %737 = sbr.rel (%p735) target = $region48
      $region47: #{res_submodule_forward.9} parent=43 // pred_region
        %p738 = scmp.lt.s32.totalorder %s16, 1
        %s739 = scalar_select %p738, %s16, 1
        %s740 = smul.addr %s739, 4
        %s741 = scalar_lea.vmem %s4, %s740
      $region48: #{res_submodule_forward.9} parent=43 // pred_fallthru
        _
    $region44: #{res_submodule_forward.9} parent=5 // pred_fallthru
      _
  $region6: #{res_submodule_forward.9} parent=0 // loop_footer
    %s14 = sadd.s32 1, %s10
  $region7: #{res_submodule_forward.9} parent=0 // loop_footer_branch
    %9 = sbr.rel target = $region3
  $region8: #{res_submodule_forward.9} parent=0 // loop_exit
    _

// kernel: res_submodule_forward.10
$region0: #{res_submodule_forward.10}
  #allocation0 [shape = 'u32[]', space=smem, size = 0x4, offset = 0x4, fixed_abs, tag = 'smem constant byte address 0x4 - core index']
  #allocation1 [shape = 'u32[72,128]{1,0:T(1,128)}', space=vmem, size = 0x9000, scoped, tag = 'internal scratch']
  %s0 = inlined_call_operand.vmem [shape: bf16[2,10,64], index: 0, kind: input, shape index: {}]
  %s1 = inlined_call_operand.vmem [shape: bf16[9,64,32], index: 1, kind: input, shape index: {}]
  %s2 = inlined_call_operand.vmem [shape: f32[1,32], index: 2, kind: input, shape index: {}]
  %s3 = inlined_call_operand.vmem [shape: f32[1,32], index: 3, kind: input, shape index: {}]
  %s4 = inlined_call_operand.vmem [shape: bf16[2,4,6,32], index: 4, kind: input, shape index: {}]
  %s5 = inlined_call_operand.vmem [shape: bf16[32,32], index: 5, kind: input, shape index: {}]
  %s6 = inlined_call_operand.vmem [shape: bf16[2,6,128], index: 6, kind: output, shape index: {}]
  %s7 = sld [smem:[#allocation0]]
  $region57: #{res_submodule_forward.10} parent=0
    _
  %s9 = ssub.s32 1, %s7
  %s10 = scalar_select 0, %s9, %s7
  loop: start=0, step=1, limit=4
  $region2: #{res_submodule_forward.10} parent=0 // loop_pre_header
    _
  $region3: #{res_submodule_forward.10} parent=0 // loop_header
    %s12 = sphi 0, %s16
    %p13 = scmp.ge.s32.totalorder %s12, 4
    %s22 = sphi 0, %s24
    %s25 = sphi 0, %s22
    %s26 = sphi 0, %s25
    %s42 = sphi 0, %s26
    %s46 = sphi 0, %s46
    %s48 = sphi 0, %s46
    %s49 = sphi 0, %s48
    %s63 = sphi 0, %s49
    %s67 = sphi 0, %s67
    %s69 = sphi 0, %s67
    %s70 = sphi 0, %s69
    %s84 = sphi 0, %s70
    %s88 = sphi 0, %s88
    %s90 = sphi 0, %s88
    %s91 = sphi 0, %s90
    %s105 = sphi 0, %s91
    %s111 = sphi 0, %s113
    %s114 = sphi 0, %s111
    %s115 = sphi 0, %s114
    %s131 = sphi 0, %s115
    %s135 = sphi 0, %s135
    %s137 = sphi 0, %s135
    %s138 = sphi 0, %s137
    %s152 = sphi 0, %s138
    %s158 = sphi 0, %s160
    %s161 = sphi 0, %s158
    %s162 = sphi 0, %s161
    %s178 = sphi 0, %s162
  $region4: #{res_submodule_forward.10} parent=0 // loop_header_branch
    %15 = sbr.rel (%p13) target = $region8
  $region5: #{res_submodule_forward.10} parent=0 // loop_body
    %s17 = ssub.s32 %s12, 1
    %s18 = ssub.s32 %s12, 2
    %s19 = sadd.s32 %s12, 1
    %s20 = ssub.s32 %s12, %s19
    %p21 = scmp.eq.s32.totalorder %s20, 0
    %s23 = sadd.s32 %s22, 1
    %s24 = scalar_select %p21, %s22, %s23
    %p27 = pneg %p21
    %p28 = scmp.eq.s32.totalorder %s12, 1
    %p29 = por %p27, %p28
    %p30 = scmp.ne.s32.totalorder %s22, %s25
    %p31 = scmp.eq.s32.totalorder %s12, 0
    %p32 = por %p30, %p31
    %p33 = scmp.ne.s32.totalorder %s22, %s25
    %p34 = scmp.eq.s32.totalorder %s17, 1
    %p35 = por %p33, %p34
    %p36 = scmp.ne.s32.totalorder %s25, %s26
    %p37 = scmp.eq.s32.totalorder %s17, 0
    %p38 = por %p36, %p37
    %p39 = scmp.ne.s32.totalorder %s25, %s26
    %p40 = scmp.eq.s32.totalorder %s18, 1
    %p41 = por %p39, %p40
    %p43 = scmp.ne.s32.totalorder %s26, %s42
    %p44 = scmp.eq.s32.totalorder %s18, 0
    %p45 = por %p43, %p44
    %s47 = sadd.s32 %s46, 1
    %p50 = scmp.eq.s32.totalorder %s12, 1
    %p51 = scmp.ne.s32.totalorder %s46, %s48
    %p52 = scmp.eq.s32.totalorder %s12, 0
    %p53 = por %p51, %p52
    %p54 = scmp.ne.s32.totalorder %s46, %s48
    %p55 = scmp.eq.s32.totalorder %s17, 1
    %p56 = por %p54, %p55
    %p57 = scmp.ne.s32.totalorder %s48, %s49
    %p58 = scmp.eq.s32.totalorder %s17, 0
    %p59 = por %p57, %p58
    %p60 = scmp.ne.s32.totalorder %s48, %s49
    %p61 = scmp.eq.s32.totalorder %s18, 1
    %p62 = por %p60, %p61
    %p64 = scmp.ne.s32.totalorder %s49, %s63
    %p65 = scmp.eq.s32.totalorder %s18, 0
    %p66 = por %p64, %p65
    %s68 = sadd.s32 %s67, 1
    %p71 = scmp.eq.s32.totalorder %s12, 1
    %p72 = scmp.ne.s32.totalorder %s67, %s69
    %p73 = scmp.eq.s32.totalorder %s12, 0
    %p74 = por %p72, %p73
    %p75 = scmp.ne.s32.totalorder %s67, %s69
    %p76 = scmp.eq.s32.totalorder %s17, 1
    %p77 = por %p75, %p76
    %p78 = scmp.ne.s32.totalorder %s69, %s70
    %p79 = scmp.eq.s32.totalorder %s17, 0
    %p80 = por %p78, %p79
    %p81 = scmp.ne.s32.totalorder %s69, %s70
    %p82 = scmp.eq.s32.totalorder %s18, 1
    %p83 = por %p81, %p82
    %p85 = scmp.ne.s32.totalorder %s70, %s84
    %p86 = scmp.eq.s32.totalorder %s18, 0
    %p87 = por %p85, %p86
    %s89 = sadd.s32 %s88, 1
    %p92 = scmp.eq.s32.totalorder %s12, 1
    %p93 = scmp.ne.s32.totalorder %s88, %s90
    %p94 = scmp.eq.s32.totalorder %s12, 0
    %p95 = por %p93, %p94
    %p96 = scmp.ne.s32.totalorder %s88, %s90
    %p97 = scmp.eq.s32.totalorder %s17, 1
    %p98 = por %p96, %p97
    %p99 = scmp.ne.s32.totalorder %s90, %s91
    %p100 = scmp.eq.s32.totalorder %s17, 0
    %p101 = por %p99, %p100
    %p102 = scmp.ne.s32.totalorder %s90, %s91
    %p103 = scmp.eq.s32.totalorder %s18, 1
    %p104 = por %p102, %p103
    %p106 = scmp.ne.s32.totalorder %s91, %s105
    %p107 = scmp.eq.s32.totalorder %s18, 0
    %p108 = por %p106, %p107
    %s109 = ssub.s32 %s12, %s19
    %p110 = scmp.eq.s32.totalorder %s109, 0
    %s112 = sadd.s32 %s111, 1
    %s113 = scalar_select %p110, %s111, %s112
    %p116 = pneg %p110
    %p117 = scmp.eq.s32.totalorder %s12, 1
    %p118 = por %p116, %p117
    %p119 = scmp.ne.s32.totalorder %s111, %s114
    %p120 = scmp.eq.s32.totalorder %s12, 0
    %p121 = por %p119, %p120
    %p122 = scmp.ne.s32.totalorder %s111, %s114
    %p123 = scmp.eq.s32.totalorder %s17, 1
    %p124 = por %p122, %p123
    %p125 = scmp.ne.s32.totalorder %s114, %s115
    %p126 = scmp.eq.s32.totalorder %s17, 0
    %p127 = por %p125, %p126
    %p128 = scmp.ne.s32.totalorder %s114, %s115
    %p129 = scmp.eq.s32.totalorder %s18, 1
    %p130 = por %p128, %p129
    %p132 = scmp.ne.s32.totalorder %s115, %s131
    %p133 = scmp.eq.s32.totalorder %s18, 0
    %p134 = por %p132, %p133
    %s136 = sadd.s32 %s135, 1
    %p139 = scmp.eq.s32.totalorder %s12, 1
    %p140 = scmp.ne.s32.totalorder %s135, %s137
    %p141 = scmp.eq.s32.totalorder %s12, 0
    %p142 = por %p140, %p141
    %p143 = scmp.ne.s32.totalorder %s135, %s137
    %p144 = scmp.eq.s32.totalorder %s17, 1
    %p145 = por %p143, %p144
    %p146 = scmp.ne.s32.totalorder %s137, %s138
    %p147 = scmp.eq.s32.totalorder %s17, 0
    %p148 = por %p146, %p147
    %p149 = scmp.ne.s32.totalorder %s137, %s138
    %p150 = scmp.eq.s32.totalorder %s18, 1
    %p151 = por %p149, %p150
    %p153 = scmp.ne.s32.totalorder %s138, %s152
    %p154 = scmp.eq.s32.totalorder %s18, 0
    %p155 = por %p153, %p154
    %s156 = ssub.s32 %s12, %s19
    %p157 = scmp.eq.s32.totalorder %s156, 0
    %s159 = sadd.s32 %s158, 1
    %s160 = scalar_select %p157, %s158, %s159
    %p163 = pneg %p157
    %p164 = scmp.eq.s32.totalorder %s12, 1
    %p165 = por %p163, %p164
    %p166 = scmp.ne.s32.totalorder %s158, %s161
    %p167 = scmp.eq.s32.totalorder %s12, 0
    %p168 = por %p166, %p167
    %p169 = scmp.ne.s32.totalorder %s158, %s161
    %p170 = scmp.eq.s32.totalorder %s17, 1
    %p171 = por %p169, %p170
    %p172 = scmp.ne.s32.totalorder %s161, %s162
    %p173 = scmp.eq.s32.totalorder %s17, 0
    %p174 = por %p172, %p173
    %p175 = scmp.ne.s32.totalorder %s161, %s162
    %p176 = scmp.eq.s32.totalorder %s18, 1
    %p177 = por %p175, %p176
    %p179 = scmp.ne.s32.totalorder %s162, %s178
    %p180 = scmp.eq.s32.totalorder %s18, 0
    %p181 = por %p179, %p180
    %p182 = scmp.le.s32.totalorder 1, %s12
    %p183 = scmp.lt.s32.totalorder %s12, 3
    %p184 = pnand %p182, %p183
    %p185 = pneg %p184
    // Predicated region
    $region9: #{res_submodule_forward.10} parent=5 // pred_check
      _
    $region10: #{res_submodule_forward.10} parent=5 // pred_check_branch
      %187 = sbr.rel (%p184) target = $region12
    $region11: #{res_submodule_forward.10} parent=5 // pred_region
      %s188 = ssub.s32 %s12, 1
      // Predicated region
      $region13: #{res_submodule_forward.10} parent=11 // pred_check
        %p189 = pneg %p59
      $region14: #{res_submodule_forward.10} parent=11 // pred_check_branch
        %191 = sbr.rel (%p189) target = $region16
      $region15: #{res_submodule_forward.10} parent=11 // pred_region
        _
      $region16: #{res_submodule_forward.10} parent=11 // pred_fallthru
        _
      // Predicated region
      $region17: #{res_submodule_forward.10} parent=11 // pred_check
        %p192 = pneg %p80
      $region18: #{res_submodule_forward.10} parent=11 // pred_check_branch
        %194 = sbr.rel (%p192) target = $region20
      $region19: #{res_submodule_forward.10} parent=11 // pred_region
        _
      $region20: #{res_submodule_forward.10} parent=11 // pred_fallthru
        _
      // Predicated region
      $region21: #{res_submodule_forward.10} parent=11 // pred_check
        %p195 = pneg %p101
      $region22: #{res_submodule_forward.10} parent=11 // pred_check_branch
        %197 = sbr.rel (%p195) target = $region24
      $region23: #{res_submodule_forward.10} parent=11 // pred_region
        _
      $region24: #{res_submodule_forward.10} parent=11 // pred_fallthru
        _
      // Predicated region
      $region25: #{res_submodule_forward.10} parent=11 // pred_check
        %p198 = pneg %p148
      $region26: #{res_submodule_forward.10} parent=11 // pred_check_branch
        %200 = sbr.rel (%p198) target = $region28
      $region27: #{res_submodule_forward.10} parent=11 // pred_region
        _
      $region28: #{res_submodule_forward.10} parent=11 // pred_fallthru
        _
    $region12: #{res_submodule_forward.10} parent=5 // pred_fallthru
      _
    %p201 = scmp.lt.s32.totalorder %s12, 2
    // Predicated region
    $region29: #{res_submodule_forward.10} parent=5 // pred_check
      %p202 = pneg %p201
    $region30: #{res_submodule_forward.10} parent=5 // pred_check_branch
      %204 = sbr.rel (%p202) target = $region32
    $region31: #{res_submodule_forward.10} parent=5 // pred_region
      // Predicated region
      $region33: #{res_submodule_forward.10} parent=31 // pred_check
        %p205 = pneg %p32
      $region34: #{res_submodule_forward.10} parent=31 // pred_check_branch
        %207 = sbr.rel (%p205) target = $region36
      $region35: #{res_submodule_forward.10} parent=31 // pred_region
        %p208 = scmp.lt.s32.totalorder %s12, 1
        %s209 = scalar_select %p208, %s12, 1
        %s210 = smul.addr %s209, 2
        %s211 = smul.addr %s210, 4
        %s212 = scalar_lea.vmem %s0, %s211
      $region36: #{res_submodule_forward.10} parent=31 // pred_fallthru
        _
      // Predicated region
      $region37: #{res_submodule_forward.10} parent=31 // pred_check
        %p213 = pneg %p121
      $region38: #{res_submodule_forward.10} parent=31 // pred_check_branch
        %215 = sbr.rel (%p213) target = $region40
      $region39: #{res_submodule_forward.10} parent=31 // pred_region
        %p216 = scmp.lt.s32.totalorder %s12, 1
        %s217 = scalar_select %p216, %s12, 1
        %s218 = smul.addr %s217, 4
        %s219 = smul.addr %s218, 4
        %s220 = scalar_lea.vmem %s4, %s219
      $region40: #{res_submodule_forward.10} parent=31 // pred_fallthru
        _
    $region32: #{res_submodule_forward.10} parent=5 // pred_fallthru
      _
    %p221 = scmp.le.s32.totalorder 1, %s12
    %p222 = scmp.lt.s32.totalorder %s12, 3
    %p223 = pnand %p221, %p222
    %p224 = pneg %p223
    // Predicated region
    $region41: #{res_submodule_forward.10} parent=5 // pred_check
      _
    $region42: #{res_submodule_forward.10} parent=5 // pred_check_branch
      %226 = sbr.rel (%p223) target = $region44
    $region43: #{res_submodule_forward.10} parent=5 // pred_region
      %s227 = ssub.s32 %s12, 1
      %p228 = scmp.lt.s32.totalorder %s17, 1
      %s229 = scalar_select %p228, %s17, 1
      %s230 = smul.addr %s229, 2
      %s231 = smul.addr %s230, 4
      %s232 = scalar_lea.vmem %s0, %s231
      %p233 = pneg %p38
      %p234 = pneg %p35
      %p235 = pneg %p59
      %p236 = pneg %p56
      %p237 = pneg %p80
      %p238 = pneg %p77
      %p239 = pneg %p101
      %p240 = pneg %p98
      %p241 = scmp.lt.s32.totalorder %s17, 1
      %s242 = scalar_select %p241, %s17, 1
      %s243 = smul.addr %s242, 4
      %s244 = smul.addr %s243, 4
      %s245 = scalar_lea.vmem %s4, %s244
      %p246 = pneg %p127
      %p247 = pneg %p124
      %p248 = pneg %p148
      %p249 = pneg %p145
      %p250 = pneg %p174
      %p251 = pneg %p171
      %p252 = scmp.lt.s32.totalorder %s17, 1
      %s253 = scalar_select %p252, %s17, 1
      %s254 = smul.addr %s253, 4
      %s255 = scalar_lea.vmem %s6, %s254
      %p256 = scmp.lt.s32.totalorder %s17, 1
      %s257 = scalar_select %p256, %s17, 1
      %s258 = smul.addr %s257, 2
      %s259 = smul.addr %s258, 4
      %s260 = scalar_lea.vmem %s0, %s259
      %p261 = scmp.lt.s32.totalorder %s17, 1
      %s262 = scalar_select %p261, %s17, 1
      %s263 = smul.addr %s262, 4
      %s264 = smul.addr %s263, 4
      %s265 = scalar_lea.vmem %s4, %s264
      %p266 = scmp.lt.s32.totalorder %s17, 1
      %s267 = scalar_select %p266, %s17, 1
      %s268 = smul.addr %s267, 4
      %s269 = scalar_lea.vmem %s6, %s268
      %v271 = vld [vmem:[%s2] sm:$0x1]
      %v272 = vld [vmem:[%s3] sm:$0x1]
      %v273 = vld [vmem:[%s260] sm:$0x7]
      %s274 = scalar_lea.vmem %s1, 128
      %v275 = vld [vmem:[%s274] sm:$0xf]
      %v276 = vld [vmem:[%s274 + $0x4] sm:$0xf]
      %v277 = vld [vmem:[%s274 + $0x8] sm:$0xf]
      %v278 = vld [vmem:[%s274 + $0xc] sm:$0xf]
      %v279 = vld [vmem:[%s274 + $0x10] sm:$0xf]
      %v280 = vld [vmem:[%s274 + $0x14] sm:$0xf]
      %v281 = vld [vmem:[%s274 + $0x18] sm:$0xf]
      %v282 = vld [vmem:[%s274 + $0x1c] sm:$0xf]
      %v291 = vunpack.c.l.b16 %v275
      %v292 = vunpack.c.l.b16 %v276
      %v293 = vunpack.c.l.b16 %v277
      %v294 = vunpack.c.l.b16 %v278
      %v295 = vunpack.c.l.b16 %v279
      %v296 = vunpack.c.l.b16 %v280
      %v297 = vunpack.c.l.b16 %v281
      %v298 = vunpack.c.l.b16 %v282
      %v299 = vpack.c.b16 %v292, %v291
      %v300 = vpack.c.b16 %v294, %v293
      %v301 = vpack.c.b16 %v296, %v295
      %v302 = vpack.c.b16 %v298, %v297
      %vm307 = vcmask 523264
      %v309 = vsel %vm307, %v273, 0
      %311 = vmatpush.bf16.msra.mxu0 0
      %312 = vmatpush.bf16.msra.mxu0 0
      %313 = vmatpush.bf16.msra.mxu0 0
      %314 = vmatpush.bf16.msra.mxu0 0
      %315 = vmatpush.bf16.msra.mxu0 %v302
      %316 = vmatpush.bf16.msra.mxu0 %v301
      %317 = vmatpush.bf16.msra.mxu0 %v300
      %318 = vmatpush.bf16.msra.mxu0 %v299
      %319 = vmatmul.bf16.gmra.mxu0 %v309
      %v320 = vpop.f32.mrf.mxu0
      %v321 = vadd.f32 0.0, %v320
      %v322 = vpop.f32.mrf.mxu0
      %323 = vdwg.mxu0
      %v325 = vperm.slane %v271, 0
      %v327 = vmul.f32 %v321, %v325
      %v329 = vperm.slane %v272, 0
      %v331 = vadd.f32 %v327, %v329
      %v332 = vld [vmem:[%s265] sm:$0x7]
      %v333 = vld [vmem:[%s5] sm:$0xf]
      %v334 = vld [vmem:[%s5 + $0x4] sm:$0xf]
      %v335 = vld [vmem:[%s5 + $0x8] sm:$0xf]
      %v336 = vld [vmem:[%s5 + $0xc] sm:$0xf]
      %v341 = vunpack.c.l.b16 %v333
      %v342 = vunpack.c.l.b16 %v334
      %v343 = vunpack.c.l.b16 %v335
      %v344 = vunpack.c.l.b16 %v336
      %v345 = vpack.c.b16 %v342, %v341
      %v346 = vpack.c.b16 %v344, %v343
      %vm349 = vcmask 261120
      %v351 = vsel %vm349, %v332, 0
      %353 = vmatpush.bf16.msra.mxu0 0
      %354 = vmatpush.bf16.msra.mxu0 0
      %355 = vmatpush.bf16.msra.mxu0 0
      %356 = vmatpush.bf16.msra.mxu0 0
      %357 = vmatpush.bf16.msra.mxu0 0
      %358 = vmatpush.bf16.msra.mxu0 0
      %359 = vmatpush.bf16.msra.mxu0 %v346
      %360 = vmatpush.bf16.msra.mxu0 %v345
      %361 = vmatmul.bf16.gmra.mxu0 %v351
      %v362 = vpop.f32.mrf.mxu0
      %v363 = vadd.f32 0.0, %v362
      %v364 = vpop.f32.mrf.mxu0
      %365 = vdwg.mxu0
      %v366 = vadd.f32 %v331, %v363
      %v367 = vmax.f32 %v366, 0.0
      %v368 = vpack.c.bf16 %v367, %v367
      %vm369 = vcmask 256000
      %370 = vst.msk [vmem:[%s269] sm:$0x7] %vm369, %v368
      %v371 = vld [vmem:[%s260] sm:$0x7]
      %s372 = scalar_lea.vmem %s1, 160
      %v373 = vld [vmem:[%s372] sm:$0xf]
      %v374 = vld [vmem:[%s372 + $0x4] sm:$0xf]
      %v375 = vld [vmem:[%s372 + $0x8] sm:$0xf]
      %v376 = vld [vmem:[%s372 + $0xc] sm:$0xf]
      %v377 = vld [vmem:[%s372 + $0x10] sm:$0xf]
      %v378 = vld [vmem:[%s372 + $0x14] sm:$0xf]
      %v379 = vld [vmem:[%s372 + $0x18] sm:$0xf]
      %v380 = vld [vmem:[%s372 + $0x1c] sm:$0xf]
      %v381 = vld [vmem:[%s260] sm:$0xf]
      %s382 = scalar_lea.vmem %s1, 96
      %v383 = vld [vmem:[%s382] sm:$0xf]
      %v384 = vld [vmem:[%s382 + $0x4] sm:$0xf]
      %v385 = vld [vmem:[%s382 + $0x8] sm:$0xf]
      %v386 = vld [vmem:[%s382 + $0xc] sm:$0xf]
      %v387 = vld [vmem:[%s382 + $0x10] sm:$0xf]
      %v388 = vld [vmem:[%s382 + $0x14] sm:$0xf]
      %v389 = vld [vmem:[%s382 + $0x18] sm:$0xf]
      %v390 = vld [vmem:[%s382 + $0x1c] sm:$0xf]
      %v392 = vunpack.c.l.b16 %v381
      %v393 = vpack.c.b16 %v392, %v392
      %v395 = vshrl.u32 %v393, 16
      %v397 = vshll.u32 %v393, 16
      %v399 = vrot.slane %v397, 1
      %v400 = vor.u32 %v395, %v399
      %v409 = vunpack.c.l.b16 %v383
      %v410 = vunpack.c.l.b16 %v384
      %v411 = vunpack.c.l.b16 %v385
      %v412 = vunpack.c.l.b16 %v386
      %v413 = vunpack.c.l.b16 %v387
      %v414 = vunpack.c.l.b16 %v388
      %v415 = vunpack.c.l.b16 %v389
      %v416 = vunpack.c.l.b16 %v390
      %v417 = vpack.c.b16 %v410, %v409
      %v418 = vpack.c.b16 %v412, %v411
      %v419 = vpack.c.b16 %v414, %v413
      %v420 = vpack.c.b16 %v416, %v415
      %v426 = vsel %vm307, %v400, 0
      %428 = vmatpush.bf16.msra.mxu0 0
      %429 = vmatpush.bf16.msra.mxu0 0
      %430 = vmatpush.bf16.msra.mxu0 0
      %431 = vmatpush.bf16.msra.mxu0 0
      %432 = vmatpush.bf16.msra.mxu0 %v420
      %433 = vmatpush.bf16.msra.mxu0 %v419
      %434 = vmatpush.bf16.msra.mxu0 %v418
      %435 = vmatpush.bf16.msra.mxu0 %v417
      %436 = vmatmul.bf16.gmra.mxu0 %v426
      %v437 = vpop.f32.mrf.mxu0
      %v438 = vadd.f32 0.0, %v437
      %v439 = vpop.f32.mrf.mxu0
      %440 = vdwg.mxu0
      %v449 = vunpack.c.l.b16 %v373
      %v450 = vunpack.c.l.b16 %v374
      %v451 = vunpack.c.l.b16 %v375
      %v452 = vunpack.c.l.b16 %v376
      %v453 = vunpack.c.l.b16 %v377
      %v454 = vunpack.c.l.b16 %v378
      %v455 = vunpack.c.l.b16 %v379
      %v456 = vunpack.c.l.b16 %v380
      %v457 = vpack.c.b16 %v450, %v449
      %v458 = vpack.c.b16 %v452, %v451
      %v459 = vpack.c.b16 %v454, %v453
      %v460 = vpack.c.b16 %v456, %v455
      %v466 = vsel %vm307, %v371, 0
      %468 = vmatpush.bf16.msra.mxu0 0
      %469 = vmatpush.bf16.msra.mxu0 0
      %470 = vmatpush.bf16.msra.mxu0 0
      %471 = vmatpush.bf16.msra.mxu0 0
      %472 = vmatpush.bf16.msra.mxu0 %v460
      %473 = vmatpush.bf16.msra.mxu0 %v459
      %474 = vmatpush.bf16.msra.mxu0 %v458
      %475 = vmatpush.bf16.msra.mxu0 %v457
      %476 = vmatmul.bf16.gmra.mxu0 %v466
      %v477 = vpop.f32.mrf.mxu0
      %v478 = vadd.f32 %v438, %v477
      %v479 = vpop.f32.mrf.mxu0
      %480 = vdwg.mxu0
      %v481 = vmul.f32 %v478, %v325
      %v482 = vadd.f32 %v481, %v329
      %s483 = scalar_lea.vmem %s265, 4
      %v484 = vld [vmem:[%s483] sm:$0x7]
      %v485 = vld [vmem:[%s5] sm:$0xf]
      %v486 = vld [vmem:[%s5 + $0x4] sm:$0xf]
      %v487 = vld [vmem:[%s5 + $0x8] sm:$0xf]
      %v488 = vld [vmem:[%s5 + $0xc] sm:$0xf]
      %v493 = vunpack.c.l.b16 %v485
      %v494 = vunpack.c.l.b16 %v486
      %v495 = vunpack.c.l.b16 %v487
      %v496 = vunpack.c.l.b16 %v488
      %v497 = vpack.c.b16 %v494, %v493
      %v498 = vpack.c.b16 %v496, %v495
      %v502 = vsel %vm349, %v484, 0
      %504 = vmatpush.bf16.msra.mxu0 0
      %505 = vmatpush.bf16.msra.mxu0 0
      %506 = vmatpush.bf16.msra.mxu0 0
      %507 = vmatpush.bf16.msra.mxu0 0
      %508 = vmatpush.bf16.msra.mxu0 0
      %509 = vmatpush.bf16.msra.mxu0 0
      %510 = vmatpush.bf16.msra.mxu0 %v498
      %511 = vmatpush.bf16.msra.mxu0 %v497
      %512 = vmatmul.bf16.gmra.mxu0 %v502
      %v513 = vpop.f32.mrf.mxu0
      %v514 = vadd.f32 0.0, %v513
      %v515 = vpop.f32.mrf.mxu0
      %516 = vdwg.mxu0
      %v517 = vadd.f32 %v482, %v514
      %v518 = vmax.f32 %v517, 0.0
      %v519 = vpack.c.bf16 %v518, %v518
      %521 = vrot.lane.b32.xlu0 %v519, 32
      %v522 = vpop.permute.xlu0 %521
      %vm524 = vcmask 518400
      %525 = vst.msk [vmem:[%s269] sm:$0x7] %vm524, %v522
      %v526 = vld [vmem:[%s260] sm:$0x7]
      %s527 = scalar_lea.vmem %s1, 224
      %v528 = vld [vmem:[%s527] sm:$0xf]
      %v529 = vld [vmem:[%s527 + $0x4] sm:$0xf]
      %v530 = vld [vmem:[%s527 + $0x8] sm:$0xf]
      %v531 = vld [vmem:[%s527 + $0xc] sm:$0xf]
      %v532 = vld [vmem:[%s527 + $0x10] sm:$0xf]
      %v533 = vld [vmem:[%s527 + $0x14] sm:$0xf]
      %v534 = vld [vmem:[%s527 + $0x18] sm:$0xf]
      %v535 = vld [vmem:[%s527 + $0x1c] sm:$0xf]
      %v536 = vld [vmem:[%s260] sm:$0xe]
      %v537 = vld [vmem:[%s260 + $0x4] sm:$0x1]
      %s538 = scalar_lea.vmem %s1, 32
      %v539 = vld [vmem:[%s538] sm:$0xf]
      %v540 = vld [vmem:[%s538 + $0x4] sm:$0xf]
      %v541 = vld [vmem:[%s538 + $0x8] sm:$0xf]
      %v542 = vld [vmem:[%s538 + $0xc] sm:$0xf]
      %v543 = vld [vmem:[%s538 + $0x10] sm:$0xf]
      %v544 = vld [vmem:[%s538 + $0x14] sm:$0xf]
      %v545 = vld [vmem:[%s538 + $0x18] sm:$0xf]
      %v546 = vld [vmem:[%s538 + $0x1c] sm:$0xf]
      %v549 = vunpack.c.l.b16 %v536
      %v550 = vunpack.c.l.b16 %v537
      %v551 = vpack.c.b16 %v550, %v549
      %v553 = vshrl.u32 %v551, 16
      %v555 = vrot.slane %v553, 1
      %v556 = vshll.u32 %v551, 16
      %v558 = vrot.slane %v556, 2
      %v559 = vor.u32 %v555, %v558
      %v568 = vunpack.c.l.b16 %v539
      %v569 = vunpack.c.l.b16 %v540
      %v570 = vunpack.c.l.b16 %v541
      %v571 = vunpack.c.l.b16 %v542
      %v572 = vunpack.c.l.b16 %v543
      %v573 = vunpack.c.l.b16 %v544
      %v574 = vunpack.c.l.b16 %v545
      %v575 = vunpack.c.l.b16 %v546
      %v576 = vpack.c.b16 %v569, %v568
      %v577 = vpack.c.b16 %v571, %v570
      %v578 = vpack.c.b16 %v573, %v572
      %v579 = vpack.c.b16 %v575, %v574
      %v585 = vsel %vm307, %v559, 0
      %587 = vmatpush.bf16.msra.mxu0 0
      %588 = vmatpush.bf16.msra.mxu0 0
      %589 = vmatpush.bf16.msra.mxu0 0
      %590 = vmatpush.bf16.msra.mxu0 0
      %591 = vmatpush.bf16.msra.mxu0 %v579
      %592 = vmatpush.bf16.msra.mxu0 %v578
      %593 = vmatpush.bf16.msra.mxu0 %v577
      %594 = vmatpush.bf16.msra.mxu0 %v576
      %595 = vmatmul.bf16.gmra.mxu0 %v585
      %v596 = vpop.f32.mrf.mxu0
      %v597 = vadd.f32 0.0, %v596
      %v598 = vpop.f32.mrf.mxu0
      %599 = vdwg.mxu0
      %v608 = vunpack.c.l.b16 %v528
      %v609 = vunpack.c.l.b16 %v529
      %v610 = vunpack.c.l.b16 %v530
      %v611 = vunpack.c.l.b16 %v531
      %v612 = vunpack.c.l.b16 %v532
      %v613 = vunpack.c.l.b16 %v533
      %v614 = vunpack.c.l.b16 %v534
      %v615 = vunpack.c.l.b16 %v535
      %v616 = vpack.c.b16 %v609, %v608
      %v617 = vpack.c.b16 %v611, %v610
      %v618 = vpack.c.b16 %v613, %v612
      %v619 = vpack.c.b16 %v615, %v614
      %v625 = vsel %vm307, %v526, 0
      %627 = vmatpush.bf16.msra.mxu0 0
      %628 = vmatpush.bf16.msra.mxu0 0
      %629 = vmatpush.bf16.msra.mxu0 0
      %630 = vmatpush.bf16.msra.mxu0 0
      %631 = vmatpush.bf16.msra.mxu0 %v619
      %632 = vmatpush.bf16.msra.mxu0 %v618
      %633 = vmatpush.bf16.msra.mxu0 %v617
      %634 = vmatpush.bf16.msra.mxu0 %v616
      %635 = vmatmul.bf16.gmra.mxu0 %v625
      %v636 = vpop.f32.mrf.mxu0
      %v637 = vadd.f32 %v597, %v636
      %v638 = vpop.f32.mrf.mxu0
      %639 = vdwg.mxu0
      %v640 = vmul.f32 %v637, %v325
      %v641 = vadd.f32 %v640, %v329
      %s642 = scalar_lea.vmem %s265, 8
      %v643 = vld [vmem:[%s642] sm:$0x7]
      %v644 = vld [vmem:[%s5] sm:$0xf]
      %v645 = vld [vmem:[%s5 + $0x4] sm:$0xf]
      %v646 = vld [vmem:[%s5 + $0x8] sm:$0xf]
      %v647 = vld [vmem:[%s5 + $0xc] sm:$0xf]
      %v652 = vunpack.c.l.b16 %v644
      %v653 = vunpack.c.l.b16 %v645
      %v654 = vunpack.c.l.b16 %v646
      %v655 = vunpack.c.l.b16 %v647
      %v656 = vpack.c.b16 %v653, %v652
      %v657 = vpack.c.b16 %v655, %v654
      %v661 = vsel %vm349, %v643, 0
      %663 = vmatpush.bf16.msra.mxu0 0
      %664 = vmatpush.bf16.msra.mxu0 0
      %665 = vmatpush.bf16.msra.mxu0 0
      %666 = vmatpush.bf16.msra.mxu0 0
      %667 = vmatpush.bf16.msra.mxu0 0
      %668 = vmatpush.bf16.msra.mxu0 0
      %669 = vmatpush.bf16.msra.mxu0 %v657
      %670 = vmatpush.bf16.msra.mxu0 %v656
      %671 = vmatmul.bf16.gmra.mxu0 %v661
      %v672 = vpop.f32.mrf.mxu0
      %v673 = vadd.f32 0.0, %v672
      %v674 = vpop.f32.mrf.mxu0
      %675 = vdwg.mxu0
      %v676 = vadd.f32 %v641, %v673
      %v677 = vmax.f32 %v676, 0.0
      %v678 = vpack.c.bf16 %v677, %v677
      %680 = vrot.lane.b32.xlu0 %v678, 64
      %v681 = vpop.permute.xlu0 %680
      %vm683 = vcmask 780800
      %684 = vst.msk [vmem:[%s269] sm:$0x7] %vm683, %v681
      %v685 = vld [vmem:[%s260] sm:$0x7]
      %s686 = scalar_lea.vmem %s1, 256
      %v687 = vld [vmem:[%s686] sm:$0xf]
      %v688 = vld [vmem:[%s686 + $0x4] sm:$0xf]
      %v689 = vld [vmem:[%s686 + $0x8] sm:$0xf]
      %v690 = vld [vmem:[%s686 + $0xc] sm:$0xf]
      %v691 = vld [vmem:[%s686 + $0x10] sm:$0xf]
      %v692 = vld [vmem:[%s686 + $0x14] sm:$0xf]
      %v693 = vld [vmem:[%s686 + $0x18] sm:$0xf]
      %v694 = vld [vmem:[%s686 + $0x1c] sm:$0xf]
      %v695 = vld [vmem:[%s260] sm:$0xf]
      %s696 = scalar_lea.vmem %s1, 192
      %v697 = vld [vmem:[%s696] sm:$0xf]
      %v698 = vld [vmem:[%s696 + $0x4] sm:$0xf]
      %v699 = vld [vmem:[%s696 + $0x8] sm:$0xf]
      %v700 = vld [vmem:[%s696 + $0xc] sm:$0xf]
      %v701 = vld [vmem:[%s696 + $0x10] sm:$0xf]
      %v702 = vld [vmem:[%s696 + $0x14] sm:$0xf]
      %v703 = vld [vmem:[%s696 + $0x18] sm:$0xf]
      %v704 = vld [vmem:[%s696 + $0x1c] sm:$0xf]
      %v706 = vunpack.c.l.b16 %v695
      %v707 = vpack.c.b16 %v706, %v706
      %v709 = vshrl.u32 %v707, 16
      %v711 = vshll.u32 %v707, 16
      %v713 = vrot.slane %v711, 1
      %v714 = vor.u32 %v709, %v713
      %v723 = vunpack.c.l.b16 %v697
      %v724 = vunpack.c.l.b16 %v698
      %v725 = vunpack.c.l.b16 %v699
      %v726 = vunpack.c.l.b16 %v700
      %v727 = vunpack.c.l.b16 %v701
      %v728 = vunpack.c.l.b16 %v702
      %v729 = vunpack.c.l.b16 %v703
      %v730 = vunpack.c.l.b16 %v704
      %v731 = vpack.c.b16 %v724, %v723
      %v732 = vpack.c.b16 %v726, %v725
      %v733 = vpack.c.b16 %v728, %v727
      %v734 = vpack.c.b16 %v730, %v729
      %v740 = vsel %vm307, %v714, 0
      %742 = vmatpush.bf16.msra.mxu0 0
      %743 = vmatpush.bf16.msra.mxu0 0
      %744 = vmatpush.bf16.msra.mxu0 0
      %745 = vmatpush.bf16.msra.mxu0 0
      %746 = vmatpush.bf16.msra.mxu0 %v734
      %747 = vmatpush.bf16.msra.mxu0 %v733
      %748 = vmatpush.bf16.msra.mxu0 %v732
      %749 = vmatpush.bf16.msra.mxu0 %v731
      %750 = vmatmul.bf16.gmra.mxu0 %v740
      %v751 = vpop.f32.mrf.mxu0
      %v752 = vadd.f32 0.0, %v751
      %v753 = vpop.f32.mrf.mxu0
      %754 = vdwg.mxu0
      %v763 = vunpack.c.l.b16 %v687
      %v764 = vunpack.c.l.b16 %v688
      %v765 = vunpack.c.l.b16 %v689
      %v766 = vunpack.c.l.b16 %v690
      %v767 = vunpack.c.l.b16 %v691
      %v768 = vunpack.c.l.b16 %v692
      %v769 = vunpack.c.l.b16 %v693
      %v770 = vunpack.c.l.b16 %v694
      %v771 = vpack.c.b16 %v764, %v763
      %v772 = vpack.c.b16 %v766, %v765
      %v773 = vpack.c.b16 %v768, %v767
      %v774 = vpack.c.b16 %v770, %v769
      %v780 = vsel %vm307, %v685, 0
      %782 = vmatpush.bf16.msra.mxu0 0
      %783 = vmatpush.bf16.msra.mxu0 0
      %784 = vmatpush.bf16.msra.mxu0 0
      %785 = vmatpush.bf16.msra.mxu0 0
      %786 = vmatpush.bf16.msra.mxu0 %v774
      %787 = vmatpush.bf16.msra.mxu0 %v773
      %788 = vmatpush.bf16.msra.mxu0 %v772
      %789 = vmatpush.bf16.msra.mxu0 %v771
      %790 = vmatmul.bf16.gmra.mxu0 %v780
      %v791 = vpop.f32.mrf.mxu0
      %v792 = vadd.f32 %v752, %v791
      %v793 = vpop.f32.mrf.mxu0
      %794 = vdwg.mxu0
      %v795 = vld [vmem:[%s260] sm:$0xe]
      %v796 = vld [vmem:[%s260 + $0x4] sm:$0x1]
      %s797 = scalar_lea.vmem %s1, 64
      %v798 = vld [vmem:[%s797] sm:$0xf]
      %v799 = vld [vmem:[%s797 + $0x4] sm:$0xf]
      %v800 = vld [vmem:[%s797 + $0x8] sm:$0xf]
      %v801 = vld [vmem:[%s797 + $0xc] sm:$0xf]
      %v802 = vld [vmem:[%s797 + $0x10] sm:$0xf]
      %v803 = vld [vmem:[%s797 + $0x14] sm:$0xf]
      %v804 = vld [vmem:[%s797 + $0x18] sm:$0xf]
      %v805 = vld [vmem:[%s797 + $0x1c] sm:$0xf]
      %v808 = vunpack.c.l.b16 %v795
      %v809 = vunpack.c.l.b16 %v796
      %v810 = vpack.c.b16 %v809, %v808
      %v812 = vshrl.u32 %v810, 16
      %v814 = vrot.slane %v812, 1
      %v815 = vshll.u32 %v810, 16
      %v817 = vrot.slane %v815, 2
      %v818 = vor.u32 %v814, %v817
      %v827 = vunpack.c.l.b16 %v798
      %v828 = vunpack.c.l.b16 %v799
      %v829 = vunpack.c.l.b16 %v800
      %v830 = vunpack.c.l.b16 %v801
      %v831 = vunpack.c.l.b16 %v802
      %v832 = vunpack.c.l.b16 %v803
      %v833 = vunpack.c.l.b16 %v804
      %v834 = vunpack.c.l.b16 %v805
      %v835 = vpack.c.b16 %v828, %v827
      %v836 = vpack.c.b16 %v830, %v829
      %v837 = vpack.c.b16 %v832, %v831
      %v838 = vpack.c.b16 %v834, %v833
      %v844 = vsel %vm307, %v818, 0
      %846 = vmatpush.bf16.msra.mxu0 0
      %847 = vmatpush.bf16.msra.mxu0 0
      %848 = vmatpush.bf16.msra.mxu0 0
      %849 = vmatpush.bf16.msra.mxu0 0
      %850 = vmatpush.bf16.msra.mxu0 %v838
      %851 = vmatpush.bf16.msra.mxu0 %v837
      %852 = vmatpush.bf16.msra.mxu0 %v836
      %853 = vmatpush.bf16.msra.mxu0 %v835
      %854 = vmatmul.bf16.gmra.mxu0 %v844
      %v855 = vpop.f32.mrf.mxu0
      %v856 = vadd.f32 0.0, %v855
      %v857 = vpop.f32.mrf.mxu0
      %858 = vdwg.mxu0
      %v859 = vadd.f32 %v792, %v856
      %v860 = vld [vmem:[%s260] sm:$0xc]
      %v861 = vld [vmem:[%s1] sm:$0xf]
      %v862 = vld [vmem:[%s1 + $0x4] sm:$0xf]
      %v863 = vld [vmem:[%s1 + $0x8] sm:$0xf]
      %v864 = vld [vmem:[%s1 + $0xc] sm:$0xf]
      %v865 = vld [vmem:[%s1 + $0x10] sm:$0xf]
      %v866 = vld [vmem:[%s1 + $0x14] sm:$0xf]
      %v867 = vld [vmem:[%s1 + $0x18] sm:$0xf]
      %v868 = vld [vmem:[%s1 + $0x1c] sm:$0xf]
      %v870 = vunpack.c.l.b16 %v860
      %v871 = vpack.c.b16 %v809, %v870
      %v872 = vrot.slane %v871, 2
      %v881 = vunpack.c.l.b16 %v861
      %v882 = vunpack.c.l.b16 %v862
      %v883 = vunpack.c.l.b16 %v863
      %v884 = vunpack.c.l.b16 %v864
      %v885 = vunpack.c.l.b16 %v865
      %v886 = vunpack.c.l.b16 %v866
      %v887 = vunpack.c.l.b16 %v867
      %v888 = vunpack.c.l.b16 %v868
      %v889 = vpack.c.b16 %v882, %v881
      %v890 = vpack.c.b16 %v884, %v883
      %v891 = vpack.c.b16 %v886, %v885
      %v892 = vpack.c.b16 %v888, %v887
      %v898 = vsel %vm307, %v872, 0
      %900 = vmatpush.bf16.msra.mxu0 0
      %901 = vmatpush.bf16.msra.mxu0 0
      %902 = vmatpush.bf16.msra.mxu0 0
      %903 = vmatpush.bf16.msra.mxu0 0
      %904 = vmatpush.bf16.msra.mxu0 %v892
      %905 = vmatpush.bf16.msra.mxu0 %v891
      %906 = vmatpush.bf16.msra.mxu0 %v890
      %907 = vmatpush.bf16.msra.mxu0 %v889
      %908 = vmatmul.bf16.gmra.mxu0 %v898
      %v909 = vpop.f32.mrf.mxu0
      %v910 = vadd.f32 0.0, %v909
      %v911 = vpop.f32.mrf.mxu0
      %912 = vdwg.mxu0
      %v913 = vadd.f32 %v859, %v910
      %v914 = vmul.f32 %v913, %v325
      %v915 = vadd.f32 %v914, %v329
      %s916 = scalar_lea.vmem %s265, 12
      %v917 = vld [vmem:[%s916] sm:$0x7]
      %v918 = vld [vmem:[%s5] sm:$0xf]
      %v919 = vld [vmem:[%s5 + $0x4] sm:$0xf]
      %v920 = vld [vmem:[%s5 + $0x8] sm:$0xf]
      %v921 = vld [vmem:[%s5 + $0xc] sm:$0xf]
      %v926 = vunpack.c.l.b16 %v918
      %v927 = vunpack.c.l.b16 %v919
      %v928 = vunpack.c.l.b16 %v920
      %v929 = vunpack.c.l.b16 %v921
      %v930 = vpack.c.b16 %v927, %v926
      %v931 = vpack.c.b16 %v929, %v928
      %v935 = vsel %vm349, %v917, 0
      %937 = vmatpush.bf16.msra.mxu0 0
      %938 = vmatpush.bf16.msra.mxu0 0
      %939 = vmatpush.bf16.msra.mxu0 0
      %940 = vmatpush.bf16.msra.mxu0 0
      %941 = vmatpush.bf16.msra.mxu0 0
      %942 = vmatpush.bf16.msra.mxu0 0
      %943 = vmatpush.bf16.msra.mxu0 %v931
      %944 = vmatpush.bf16.msra.mxu0 %v930
      %945 = vmatmul.bf16.gmra.mxu0 %v935
      %v946 = vpop.f32.mrf.mxu0
      %v947 = vadd.f32 0.0, %v946
      %v948 = vpop.f32.mrf.mxu0
      %949 = vdwg.mxu0
      %v950 = vadd.f32 %v915, %v947
      %v951 = vmax.f32 %v950, 0.0
      %v952 = vpack.c.bf16 %v951, %v951
      %954 = vrot.lane.b32.xlu0 %v952, 96
      %v955 = vpop.permute.xlu0 %954
      %vm957 = vcmask 1043200
      %958 = vst.msk [vmem:[%s269] sm:$0x7] %vm957, %v955
      %p959 = scmp.lt.s32.totalorder %s17, 1
      %s960 = scalar_select %p959, %s17, 1
      %s961 = smul.addr %s960, 4
      %s962 = scalar_lea.vmem %s6, %s961
      // Predicated region
      $region45: #{res_submodule_forward.10} parent=43 // pred_check
        %p963 = pneg %p171
      $region46: #{res_submodule_forward.10} parent=43 // pred_check_branch
        %965 = sbr.rel (%p963) target = $region48
      $region47: #{res_submodule_forward.10} parent=43 // pred_region
        _
      $region48: #{res_submodule_forward.10} parent=43 // pred_fallthru
        _
    $region44: #{res_submodule_forward.10} parent=5 // pred_fallthru
      _
    %p966 = scmp.le.s32.totalorder 2, %s12
    // Predicated region
    $region49: #{res_submodule_forward.10} parent=5 // pred_check
      %p967 = pneg %p966
    $region50: #{res_submodule_forward.10} parent=5 // pred_check_branch
      %969 = sbr.rel (%p967) target = $region52
    $region51: #{res_submodule_forward.10} parent=5 // pred_region
      %s970 = ssub.s32 %s12, 2
      // Predicated region
      $region53: #{res_submodule_forward.10} parent=51 // pred_check
        %p971 = pneg %p177
      $region54: #{res_submodule_forward.10} parent=51 // pred_check_branch
        %973 = sbr.rel (%p971) target = $region56
      $region55: #{res_submodule_forward.10} parent=51 // pred_region
        %p974 = scmp.lt.s32.totalorder %s18, 1
        %s975 = scalar_select %p974, %s18, 1
        %s976 = smul.addr %s975, 4
        %s977 = scalar_lea.vmem %s6, %s976
      $region56: #{res_submodule_forward.10} parent=51 // pred_fallthru
        _
    $region52: #{res_submodule_forward.10} parent=5 // pred_fallthru
      _
  $region6: #{res_submodule_forward.10} parent=0 // loop_footer
    %s16 = sadd.s32 1, %s12
  $region7: #{res_submodule_forward.10} parent=0 // loop_footer_branch
    %11 = sbr.rel target = $region3
  $region8: #{res_submodule_forward.10} parent=0 // loop_exit
    _

// kernel: res_submodule_forward.11
$region0: #{res_submodule_forward.11}
  #allocation0 [shape = 'u32[]', space=smem, size = 0x4, offset = 0x4, fixed_abs, tag = 'smem constant byte address 0x4 - core index']
  #allocation1 [shape = 'u32[72,128]{1,0:T(1,128)}', space=vmem, size = 0x9000, scoped, tag = 'internal scratch']
  #allocation2 [shape = 'f32[1,1]{1,0:T(1,128)S(1)}', space=vmem, size = 0x200, scoped, tag = 'scoped memory for res_submodule_forward.11']
  %s0 = inlined_call_operand.vmem [shape: bf16[2,26,32], index: 0, kind: input, shape index: {}]
  %s1 = inlined_call_operand.vmem [shape: bf16[9,32,16], index: 1, kind: input, shape index: {}]
  %s2 = inlined_call_operand.vmem [shape: f32[1,16], index: 2, kind: input, shape index: {}]
  %s3 = inlined_call_operand.vmem [shape: f32[1,16], index: 3, kind: input, shape index: {}]
  %s4 = inlined_call_operand.vmem [shape: bf16[2,4,20,16], index: 4, kind: input, shape index: {}]
  %s5 = inlined_call_operand.vmem [shape: bf16[16,16], index: 5, kind: input, shape index: {}]
  %s6 = inlined_call_operand.vmem [shape: f32[1,16], index: 6, kind: input, shape index: {}]
  %s7 = inlined_call_operand.<no memory space> [shape: f32[1,1], index: 7, kind: input, shape index: {}]
  %s8 = inlined_call_operand.vmem [shape: f32[2,20,4], index: 8, kind: output, shape index: {}]
  %s9 = sld [smem:[#allocation0]]
  $region65: #{res_submodule_forward.11} parent=0
    _
  %s11 = ssub.s32 1, %s9
  %s12 = scalar_select 0, %s11, %s9
  %v13 = vstv %s7
  %14 = vst [vmem:[#allocation2] sm:$0x1] %v13
  loop: start=0, step=1, limit=4
  $region2: #{res_submodule_forward.11} parent=0 // loop_pre_header
    _
  $region3: #{res_submodule_forward.11} parent=0 // loop_header
    %s16 = sphi 0, %s20
    %p17 = scmp.ge.s32.totalorder %s16, 4
    %s26 = sphi 0, %s28
    %s29 = sphi 0, %s26
    %s30 = sphi 0, %s29
    %s46 = sphi 0, %s30
    %s50 = sphi 0, %s50
    %s52 = sphi 0, %s50
    %s53 = sphi 0, %s52
    %s67 = sphi 0, %s53
    %s71 = sphi 0, %s71
    %s73 = sphi 0, %s71
    %s74 = sphi 0, %s73
    %s88 = sphi 0, %s74
    %s92 = sphi 0, %s92
    %s94 = sphi 0, %s92
    %s95 = sphi 0, %s94
    %s109 = sphi 0, %s95
    %s115 = sphi 0, %s117
    %s118 = sphi 0, %s115
    %s119 = sphi 0, %s118
    %s135 = sphi 0, %s119
    %s139 = sphi 0, %s139
    %s141 = sphi 0, %s139
    %s142 = sphi 0, %s141
    %s156 = sphi 0, %s142
    %s160 = sphi 0, %s160
    %s162 = sphi 0, %s160
    %s163 = sphi 0, %s162
    %s177 = sphi 0, %s163
    %s181 = sphi 0, %s181
    %s183 = sphi 0, %s181
    %s184 = sphi 0, %s183
    %s198 = sphi 0, %s184
    %s204 = sphi 0, %s206
    %s207 = sphi 0, %s204
    %s208 = sphi 0, %s207
    %s224 = sphi 0, %s208
  $region4: #{res_submodule_forward.11} parent=0 // loop_header_branch
    %19 = sbr.rel (%p17) target = $region8
  $region5: #{res_submodule_forward.11} parent=0 // loop_body
    %s21 = ssub.s32 %s16, 1
    %s22 = ssub.s32 %s16, 2
    %s23 = sadd.s32 %s16, 1
    %s24 = ssub.s32 %s16, %s23
    %p25 = scmp.eq.s32.totalorder %s24, 0
    %s27 = sadd.s32 %s26, 1
    %s28 = scalar_select %p25, %s26, %s27
    %p31 = pneg %p25
    %p32 = scmp.eq.s32.totalorder %s16, 1
    %p33 = por %p31, %p32
    %p34 = scmp.ne.s32.totalorder %s26, %s29
    %p35 = scmp.eq.s32.totalorder %s16, 0
    %p36 = por %p34, %p35
    %p37 = scmp.ne.s32.totalorder %s26, %s29
    %p38 = scmp.eq.s32.totalorder %s21, 1
    %p39 = por %p37, %p38
    %p40 = scmp.ne.s32.totalorder %s29, %s30
    %p41 = scmp.eq.s32.totalorder %s21, 0
    %p42 = por %p40, %p41
    %p43 = scmp.ne.s32.totalorder %s29, %s30
    %p44 = scmp.eq.s32.totalorder %s22, 1
    %p45 = por %p43, %p44
    %p47 = scmp.ne.s32.totalorder %s30, %s46
    %p48 = scmp.eq.s32.totalorder %s22, 0
    %p49 = por %p47, %p48
    %s51 = sadd.s32 %s50, 1
    %p54 = scmp.eq.s32.totalorder %s16, 1
    %p55 = scmp.ne.s32.totalorder %s50, %s52
    %p56 = scmp.eq.s32.totalorder %s16, 0
    %p57 = por %p55, %p56
    %p58 = scmp.ne.s32.totalorder %s50, %s52
    %p59 = scmp.eq.s32.totalorder %s21, 1
    %p60 = por %p58, %p59
    %p61 = scmp.ne.s32.totalorder %s52, %s53
    %p62 = scmp.eq.s32.totalorder %s21, 0
    %p63 = por %p61, %p62
    %p64 = scmp.ne.s32.totalorder %s52, %s53
    %p65 = scmp.eq.s32.totalorder %s22, 1
    %p66 = por %p64, %p65
    %p68 = scmp.ne.s32.totalorder %s53, %s67
    %p69 = scmp.eq.s32.totalorder %s22, 0
    %p70 = por %p68, %p69
    %s72 = sadd.s32 %s71, 1
    %p75 = scmp.eq.s32.totalorder %s16, 1
    %p76 = scmp.ne.s32.totalorder %s71, %s73
    %p77 = scmp.eq.s32.totalorder %s16, 0
    %p78 = por %p76, %p77
    %p79 = scmp.ne.s32.totalorder %s71, %s73
    %p80 = scmp.eq.s32.totalorder %s21, 1
    %p81 = por %p79, %p80
    %p82 = scmp.ne.s32.totalorder %s73, %s74
    %p83 = scmp.eq.s32.totalorder %s21, 0
    %p84 = por %p82, %p83
    %p85 = scmp.ne.s32.totalorder %s73, %s74
    %p86 = scmp.eq.s32.totalorder %s22, 1
    %p87 = por %p85, %p86
    %p89 = scmp.ne.s32.totalorder %s74, %s88
    %p90 = scmp.eq.s32.totalorder %s22, 0
    %p91 = por %p89, %p90
    %s93 = sadd.s32 %s92, 1
    %p96 = scmp.eq.s32.totalorder %s16, 1
    %p97 = scmp.ne.s32.totalorder %s92, %s94
    %p98 = scmp.eq.s32.totalorder %s16, 0
    %p99 = por %p97, %p98
    %p100 = scmp.ne.s32.totalorder %s92, %s94
    %p101 = scmp.eq.s32.totalorder %s21, 1
    %p102 = por %p100, %p101
    %p103 = scmp.ne.s32.totalorder %s94, %s95
    %p104 = scmp.eq.s32.totalorder %s21, 0
    %p105 = por %p103, %p104
    %p106 = scmp.ne.s32.totalorder %s94, %s95
    %p107 = scmp.eq.s32.totalorder %s22, 1
    %p108 = por %p106, %p107
    %p110 = scmp.ne.s32.totalorder %s95, %s109
    %p111 = scmp.eq.s32.totalorder %s22, 0
    %p112 = por %p110, %p111
    %s113 = ssub.s32 %s16, %s23
    %p114 = scmp.eq.s32.totalorder %s113, 0
    %s116 = sadd.s32 %s115, 1
    %s117 = scalar_select %p114, %s115, %s116
    %p120 = pneg %p114
    %p121 = scmp.eq.s32.totalorder %s16, 1
    %p122 = por %p120, %p121
    %p123 = scmp.ne.s32.totalorder %s115, %s118
    %p124 = scmp.eq.s32.totalorder %s16, 0
    %p125 = por %p123, %p124
    %p126 = scmp.ne.s32.totalorder %s115, %s118
    %p127 = scmp.eq.s32.totalorder %s21, 1
    %p128 = por %p126, %p127
    %p129 = scmp.ne.s32.totalorder %s118, %s119
    %p130 = scmp.eq.s32.totalorder %s21, 0
    %p131 = por %p129, %p130
    %p132 = scmp.ne.s32.totalorder %s118, %s119
    %p133 = scmp.eq.s32.totalorder %s22, 1
    %p134 = por %p132, %p133
    %p136 = scmp.ne.s32.totalorder %s119, %s135
    %p137 = scmp.eq.s32.totalorder %s22, 0
    %p138 = por %p136, %p137
    %s140 = sadd.s32 %s139, 1
    %p143 = scmp.eq.s32.totalorder %s16, 1
    %p144 = scmp.ne.s32.totalorder %s139, %s141
    %p145 = scmp.eq.s32.totalorder %s16, 0
    %p146 = por %p144, %p145
    %p147 = scmp.ne.s32.totalorder %s139, %s141
    %p148 = scmp.eq.s32.totalorder %s21, 1
    %p149 = por %p147, %p148
    %p150 = scmp.ne.s32.totalorder %s141, %s142
    %p151 = scmp.eq.s32.totalorder %s21, 0
    %p152 = por %p150, %p151
    %p153 = scmp.ne.s32.totalorder %s141, %s142
    %p154 = scmp.eq.s32.totalorder %s22, 1
    %p155 = por %p153, %p154
    %p157 = scmp.ne.s32.totalorder %s142, %s156
    %p158 = scmp.eq.s32.totalorder %s22, 0
    %p159 = por %p157, %p158
    %s161 = sadd.s32 %s160, 1
    %p164 = scmp.eq.s32.totalorder %s16, 1
    %p165 = scmp.ne.s32.totalorder %s160, %s162
    %p166 = scmp.eq.s32.totalorder %s16, 0
    %p167 = por %p165, %p166
    %p168 = scmp.ne.s32.totalorder %s160, %s162
    %p169 = scmp.eq.s32.totalorder %s21, 1
    %p170 = por %p168, %p169
    %p171 = scmp.ne.s32.totalorder %s162, %s163
    %p172 = scmp.eq.s32.totalorder %s21, 0
    %p173 = por %p171, %p172
    %p174 = scmp.ne.s32.totalorder %s162, %s163
    %p175 = scmp.eq.s32.totalorder %s22, 1
    %p176 = por %p174, %p175
    %p178 = scmp.ne.s32.totalorder %s163, %s177
    %p179 = scmp.eq.s32.totalorder %s22, 0
    %p180 = por %p178, %p179
    %s182 = sadd.s32 %s181, 1
    %p185 = scmp.eq.s32.totalorder %s16, 1
    %p186 = scmp.ne.s32.totalorder %s181, %s183
    %p187 = scmp.eq.s32.totalorder %s16, 0
    %p188 = por %p186, %p187
    %p189 = scmp.ne.s32.totalorder %s181, %s183
    %p190 = scmp.eq.s32.totalorder %s21, 1
    %p191 = por %p189, %p190
    %p192 = scmp.ne.s32.totalorder %s183, %s184
    %p193 = scmp.eq.s32.totalorder %s21, 0
    %p194 = por %p192, %p193
    %p195 = scmp.ne.s32.totalorder %s183, %s184
    %p196 = scmp.eq.s32.totalorder %s22, 1
    %p197 = por %p195, %p196
    %p199 = scmp.ne.s32.totalorder %s184, %s198
    %p200 = scmp.eq.s32.totalorder %s22, 0
    %p201 = por %p199, %p200
    %s202 = ssub.s32 %s16, %s23
    %p203 = scmp.eq.s32.totalorder %s202, 0
    %s205 = sadd.s32 %s204, 1
    %s206 = scalar_select %p203, %s204, %s205
    %p209 = pneg %p203
    %p210 = scmp.eq.s32.totalorder %s16, 1
    %p211 = por %p209, %p210
    %p212 = scmp.ne.s32.totalorder %s204, %s207
    %p213 = scmp.eq.s32.totalorder %s16, 0
    %p214 = por %p212, %p213
    %p215 = scmp.ne.s32.totalorder %s204, %s207
    %p216 = scmp.eq.s32.totalorder %s21, 1
    %p217 = por %p215, %p216
    %p218 = scmp.ne.s32.totalorder %s207, %s208
    %p219 = scmp.eq.s32.totalorder %s21, 0
    %p220 = por %p218, %p219
    %p221 = scmp.ne.s32.totalorder %s207, %s208
    %p222 = scmp.eq.s32.totalorder %s22, 1
    %p223 = por %p221, %p222
    %p225 = scmp.ne.s32.totalorder %s208, %s224
    %p226 = scmp.eq.s32.totalorder %s22, 0
    %p227 = por %p225, %p226
    %p228 = scmp.le.s32.totalorder 1, %s16
    %p229 = scmp.lt.s32.totalorder %s16, 3
    %p230 = pnand %p228, %p229
    %p231 = pneg %p230
    // Predicated region
    $region9: #{res_submodule_forward.11} parent=5 // pred_check
      _
    $region10: #{res_submodule_forward.11} parent=5 // pred_check_branch
      %233 = sbr.rel (%p230) target = $region12
    $region11: #{res_submodule_forward.11} parent=5 // pred_region
      %s234 = ssub.s32 %s16, 1
      // Predicated region
      $region13: #{res_submodule_forward.11} parent=11 // pred_check
        %p235 = pneg %p63
      $region14: #{res_submodule_forward.11} parent=11 // pred_check_branch
        %237 = sbr.rel (%p235) target = $region16
      $region15: #{res_submodule_forward.11} parent=11 // pred_region
        _
      $region16: #{res_submodule_forward.11} parent=11 // pred_fallthru
        _
      // Predicated region
      $region17: #{res_submodule_forward.11} parent=11 // pred_check
        %p238 = pneg %p84
      $region18: #{res_submodule_forward.11} parent=11 // pred_check_branch
        %240 = sbr.rel (%p238) target = $region20
      $region19: #{res_submodule_forward.11} parent=11 // pred_region
        _
      $region20: #{res_submodule_forward.11} parent=11 // pred_fallthru
        _
      // Predicated region
      $region21: #{res_submodule_forward.11} parent=11 // pred_check
        %p241 = pneg %p105
      $region22: #{res_submodule_forward.11} parent=11 // pred_check_branch
        %243 = sbr.rel (%p241) target = $region24
      $region23: #{res_submodule_forward.11} parent=11 // pred_region
        _
      $region24: #{res_submodule_forward.11} parent=11 // pred_fallthru
        _
      // Predicated region
      $region25: #{res_submodule_forward.11} parent=11 // pred_check
        %p244 = pneg %p152
      $region26: #{res_submodule_forward.11} parent=11 // pred_check_branch
        %246 = sbr.rel (%p244) target = $region28
      $region27: #{res_submodule_forward.11} parent=11 // pred_region
        _
      $region28: #{res_submodule_forward.11} parent=11 // pred_fallthru
        _
      // Predicated region
      $region29: #{res_submodule_forward.11} parent=11 // pred_check
        %p247 = pneg %p173
      $region30: #{res_submodule_forward.11} parent=11 // pred_check_branch
        %249 = sbr.rel (%p247) target = $region32
      $region31: #{res_submodule_forward.11} parent=11 // pred_region
        _
      $region32: #{res_submodule_forward.11} parent=11 // pred_fallthru
        _
      // Predicated region
      $region33: #{res_submodule_forward.11} parent=11 // pred_check
        %p250 = pneg %p194
      $region34: #{res_submodule_forward.11} parent=11 // pred_check_branch
        %252 = sbr.rel (%p250) target = $region36
      $region35: #{res_submodule_forward.11} parent=11 // pred_region
        _
      $region36: #{res_submodule_forward.11} parent=11 // pred_fallthru
        _
    $region12: #{res_submodule_forward.11} parent=5 // pred_fallthru
      _
    %p253 = scmp.lt.s32.totalorder %s16, 2
    // Predicated region
    $region37: #{res_submodule_forward.11} parent=5 // pred_check
      %p254 = pneg %p253
    $region38: #{res_submodule_forward.11} parent=5 // pred_check_branch
      %256 = sbr.rel (%p254) target = $region40
    $region39: #{res_submodule_forward.11} parent=5 // pred_region
      // Predicated region
      $region41: #{res_submodule_forward.11} parent=39 // pred_check
        %p257 = pneg %p36
      $region42: #{res_submodule_forward.11} parent=39 // pred_check_branch
        %259 = sbr.rel (%p257) target = $region44
      $region43: #{res_submodule_forward.11} parent=39 // pred_region
        %p260 = scmp.lt.s32.totalorder %s16, 1
        %s261 = scalar_select %p260, %s16, 1
        %s262 = smul.addr %s261, 4
        %s263 = smul.addr %s262, 4
        %s264 = scalar_lea.vmem %s0, %s263
      $region44: #{res_submodule_forward.11} parent=39 // pred_fallthru
        _
      // Predicated region
      $region45: #{res_submodule_forward.11} parent=39 // pred_check
        %p265 = pneg %p125
      $region46: #{res_submodule_forward.11} parent=39 // pred_check_branch
        %267 = sbr.rel (%p265) target = $region48
      $region47: #{res_submodule_forward.11} parent=39 // pred_region
        %p268 = scmp.lt.s32.totalorder %s16, 1
        %s269 = scalar_select %p268, %s16, 1
        %s270 = smul.addr %s269, 12
        %s271 = smul.addr %s270, 4
        %s272 = scalar_lea.vmem %s4, %s271
      $region48: #{res_submodule_forward.11} parent=39 // pred_fallthru
        _
    $region40: #{res_submodule_forward.11} parent=5 // pred_fallthru
      _
    %p273 = scmp.le.s32.totalorder 1, %s16
    %p274 = scmp.lt.s32.totalorder %s16, 3
    %p275 = pnand %p273, %p274
    %p276 = pneg %p275
    // Predicated region
    $region49: #{res_submodule_forward.11} parent=5 // pred_check
      _
    $region50: #{res_submodule_forward.11} parent=5 // pred_check_branch
      %278 = sbr.rel (%p275) target = $region52
    $region51: #{res_submodule_forward.11} parent=5 // pred_region
      %s279 = ssub.s32 %s16, 1
      %p280 = scmp.lt.s32.totalorder %s21, 1
      %s281 = scalar_select %p280, %s21, 1
      %s282 = smul.addr %s281, 4
      %s283 = smul.addr %s282, 4
      %s284 = scalar_lea.vmem %s0, %s283
      %p285 = pneg %p42
      %p286 = pneg %p39
      %p287 = pneg %p63
      %p288 = pneg %p60
      %p289 = pneg %p84
      %p290 = pneg %p81
      %p291 = pneg %p105
      %p292 = pneg %p102
      %p293 = scmp.lt.s32.totalorder %s21, 1
      %s294 = scalar_select %p293, %s21, 1
      %s295 = smul.addr %s294, 12
      %s296 = smul.addr %s295, 4
      %s297 = scalar_lea.vmem %s4, %s296
      %p298 = pneg %p131
      %p299 = pneg %p128
      %p300 = pneg %p152
      %p301 = pneg %p149
      %p302 = pneg %p173
      %p303 = pneg %p170
      %p304 = pneg %p194
      %p305 = pneg %p191
      %p306 = pneg %p220
      %p307 = pneg %p217
      %p308 = scmp.lt.s32.totalorder %s21, 1
      %s309 = scalar_select %p308, %s21, 1
      %s310 = smul.addr %s309, 3
      %s311 = smul.addr %s310, 8
      %s312 = scalar_lea.vmem %s8, %s311
      %p313 = scmp.lt.s32.totalorder %s21, 1
      %s314 = scalar_select %p313, %s21, 1
      %s315 = smul.addr %s314, 4
      %s316 = smul.addr %s315, 4
      %s317 = scalar_lea.vmem %s0, %s316
      %p318 = scmp.lt.s32.totalorder %s21, 1
      %s319 = scalar_select %p318, %s21, 1
      %s320 = smul.addr %s319, 12
      %s321 = smul.addr %s320, 4
      %s322 = scalar_lea.vmem %s4, %s321
      %p323 = scmp.lt.s32.totalorder %s21, 1
      %s324 = scalar_select %p323, %s21, 1
      %s325 = smul.addr %s324, 3
      %s326 = smul.addr %s325, 8
      %s327 = scalar_lea.vmem %s8, %s326
      %v329 = vld [vmem:[%s2] sm:$0x1]
      %v330 = vld [vmem:[%s3] sm:$0x1]
      %v331 = vld [vmem:[%s317] sm:$0xf]
      %v332 = vld [vmem:[%s317 + $0x4] sm:$0xf]
      %v333 = vld [vmem:[%s317 + $0x8] sm:$0x3]
      %s334 = scalar_lea.vmem %s1, 64
      %v335 = vld [vmem:[%s334] sm:$0xf]
      %v336 = vld [vmem:[%s334 + $0x4] sm:$0xf]
      %v337 = vld [vmem:[%s334 + $0x8] sm:$0xf]
      %v338 = vld [vmem:[%s334 + $0xc] sm:$0xf]
      %v342 = vunpack.c.l.b16 %v331
      %v343 = vunpack.c.l.b16 %v332
      %v344 = vunpack.c.l.b16 %v333
      %v345 = vpack.c.b16 %v343, %v342
      %v346 = vpack.c.b16 %v344, %v344
      %v351 = vunpack.c.l.b16 %v335
      %v352 = vunpack.c.l.b16 %v336
      %v353 = vunpack.c.l.b16 %v337
      %v354 = vunpack.c.l.b16 %v338
      %v355 = vpack.c.b16 %v352, %v351
      %v356 = vpack.c.b16 %v354, %v353
      %vm359 = vcmask 261120
      %v361 = vsel %vm359, %v345, 0
      %v364 = vsel %vm359, %v346, 0
      %366 = vmatpush.bf16.msra.mxu0 0
      %367 = vmatpush.bf16.msra.mxu0 0
      %368 = vmatpush.bf16.msra.mxu0 0
      %369 = vmatpush.bf16.msra.mxu0 0
      %370 = vmatpush.bf16.msra.mxu0 0
      %371 = vmatpush.bf16.msra.mxu0 0
      %372 = vmatpush.bf16.msra.mxu0 %v356
      %373 = vmatpush.bf16.msra.mxu0 %v355
      %374 = vmatmul.bf16.gmra.mxu0 %v361
      %v375 = vpop.f32.mrf.mxu0
      %v376 = vadd.f32 0.0, %v375
      %v377 = vpop.f32.mrf.mxu0
      %v378 = vadd.f32 0.0, %v377
      %379 = vmatmul.bf16.gmra.mxu0 %v364
      %v380 = vpop.f32.mrf.mxu0
      %v381 = vadd.f32 0.0, %v380
      %v382 = vpop.f32.mrf.mxu0
      %383 = vdwg.mxu0
      %v385 = vperm.slane %v329, 0
      %v387 = vmul.f32 %v376, %v385
      %v388 = vmul.f32 %v378, %v385
      %v389 = vmul.f32 %v381, %v385
      %v391 = vperm.slane %v330, 0
      %v393 = vadd.f32 %v387, %v391
      %v394 = vadd.f32 %v388, %v391
      %v395 = vadd.f32 %v389, %v391
      %v396 = vld [vmem:[%s322] sm:$0xf]
      %v397 = vld [vmem:[%s322 + $0x4] sm:$0xf]
      %v398 = vld [vmem:[%s322 + $0x8] sm:$0x3]
      %v399 = vld [vmem:[%s5] sm:$0xf]
      %v400 = vld [vmem:[%s5 + $0x4] sm:$0xf]
      %v404 = vunpack.c.l.b16 %v396
      %v405 = vunpack.c.l.b16 %v397
      %v406 = vunpack.c.l.b16 %v398
      %v407 = vpack.c.b16 %v405, %v404
      %v408 = vpack.c.b16 %v406, %v406
      %v411 = vunpack.c.l.b16 %v399
      %v412 = vunpack.c.l.b16 %v400
      %v413 = vpack.c.b16 %v412, %v411
      %vm415 = vcmask 130048
      %v417 = vsel %vm415, %v407, 0
      %v420 = vsel %vm415, %v408, 0
      %422 = vmatpush.bf16.msra.mxu0 0
      %423 = vmatpush.bf16.msra.mxu0 0
      %424 = vmatpush.bf16.msra.mxu0 0
      %425 = vmatpush.bf16.msra.mxu0 0
      %426 = vmatpush.bf16.msra.mxu0 0
      %427 = vmatpush.bf16.msra.mxu0 0
      %428 = vmatpush.bf16.msra.mxu0 0
      %429 = vmatpush.bf16.msra.mxu0 %v413
      %430 = vmatmul.bf16.gmra.mxu0 %v417
      %v431 = vpop.f32.mrf.mxu0
      %v432 = vadd.f32 0.0, %v431
      %v433 = vpop.f32.mrf.mxu0
      %v434 = vadd.f32 0.0, %v433
      %435 = vmatmul.bf16.gmra.mxu0 %v420
      %v436 = vpop.f32.mrf.mxu0
      %v437 = vadd.f32 0.0, %v436
      %v438 = vpop.f32.mrf.mxu0
      %439 = vdwg.mxu0
      %v440 = vadd.f32 %v393, %v432
      %v441 = vadd.f32 %v394, %v434
      %v442 = vadd.f32 %v395, %v437
      %v443 = vmax.f32 %v440, 0.0
      %v444 = vmax.f32 %v441, 0.0
      %v445 = vmax.f32 %v442, 0.0
      %v446 = vld [vmem:[%s6] sm:$0x1]
      %v448 = vperm.slane %v446, 0
      %v450 = vmul.f32 %v443, %v448
      %v451 = vmul.f32 %v444, %v448
      %v452 = vmul.f32 %v445, %v448
      %v453 = vsel %vm415, %v450, 0.0
      %454 = vadd.xlane.f32.xlu0 %v453
      %v455 = vpop.xlane.xlu0 %454
      %v456 = vsel %vm415, %v451, 0.0
      %457 = vadd.xlane.f32.xlu0 %v456
      %v458 = vpop.xlane.xlu0 %457
      %vm459 = vcmask 125952
      %v460 = vsel %vm459, %v452, 0.0
      %461 = vadd.xlane.f32.xlu0 %v460
      %v462 = vpop.xlane.xlu0 %461
      %v463 = vld [vmem:[#allocation2] sm:$0x1]
      %v465 = vperm.slane %v463, 0
      %v467 = vadd.f32 %v455, %v465
      %v468 = vadd.f32 %v458, %v465
      %v469 = vadd.f32 %v462, %v465
      %vm470 = vcmask 7168
      %471 = vst.msk [vmem:[%s327] sm:$0xff] %vm470, %v467
      %472 = vst.msk [vmem:[%s327 + $0x8] sm:$0xff] %vm470, %v468
      %vm473 = vcmask 3072
      %474 = vst.msk [vmem:[%s327 + $0x10] sm:$0xf] %vm473, %v469
      %v475 = vld [vmem:[%s317] sm:$0xf]
      %v476 = vld [vmem:[%s317 + $0x4] sm:$0xf]
      %v477 = vld [vmem:[%s317 + $0x8] sm:$0x3]
      %s478 = scalar_lea.vmem %s1, 80
      %v479 = vld [vmem:[%s478] sm:$0xf]
      %v480 = vld [vmem:[%s478 + $0x4] sm:$0xf]
      %v481 = vld [vmem:[%s478 + $0x8] sm:$0xf]
      %v482 = vld [vmem:[%s478 + $0xc] sm:$0xf]
      %v483 = vld [vmem:[%s317 + $0x8] sm:$0x7]
      %s484 = scalar_lea.vmem %s1, 48
      %v485 = vld [vmem:[%s484] sm:$0xf]
      %v486 = vld [vmem:[%s484 + $0x4] sm:$0xf]
      %v487 = vld [vmem:[%s484 + $0x8] sm:$0xf]
      %v488 = vld [vmem:[%s484 + $0xc] sm:$0xf]
      %v492 = vunpack.c.l.b16 %v475
      %v493 = vunpack.c.l.b16 %v476
      %v494 = vunpack.c.l.b16 %v483
      %v495 = vpack.c.b16 %v493, %v492
      %v496 = vpack.c.b16 %v494, %v494
      %vm497 = vsmask.f32 7424
      %v499 = vshrl.u32 %v495, 16
      %v501 = vshll.u32 %v495, 16
      %v503 = vrot.slane %v501, 1
      %v504 = vor.u32 %v499, %v503
      %v506 = vshll.u32 %v496, 16
      %v508 = vrot.slane %v506, 1
      %v509 = vsel %vm497, %v504, %v508
      %v510 = vshrl.u32 %v496, 16
      %v512 = vor.u32 %v510, %v508
      %v517 = vunpack.c.l.b16 %v485
      %v518 = vunpack.c.l.b16 %v486
      %v519 = vunpack.c.l.b16 %v487
      %v520 = vunpack.c.l.b16 %v488
      %v521 = vpack.c.b16 %v518, %v517
      %v522 = vpack.c.b16 %v520, %v519
      %v526 = vsel %vm359, %v509, 0
      %v529 = vsel %vm359, %v512, 0
      %531 = vmatpush.bf16.msra.mxu0 0
      %532 = vmatpush.bf16.msra.mxu0 0
      %533 = vmatpush.bf16.msra.mxu0 0
      %534 = vmatpush.bf16.msra.mxu0 0
      %535 = vmatpush.bf16.msra.mxu0 0
      %536 = vmatpush.bf16.msra.mxu0 0
      %537 = vmatpush.bf16.msra.mxu0 %v522
      %538 = vmatpush.bf16.msra.mxu0 %v521
      %539 = vmatmul.bf16.gmra.mxu0 %v526
      %v540 = vpop.f32.mrf.mxu0
      %v541 = vadd.f32 0.0, %v540
      %v542 = vpop.f32.mrf.mxu0
      %v543 = vadd.f32 0.0, %v542
      %544 = vmatmul.bf16.gmra.mxu0 %v529
      %v545 = vpop.f32.mrf.mxu0
      %v546 = vadd.f32 0.0, %v545
      %v547 = vpop.f32.mrf.mxu0
      %548 = vdwg.mxu0
      %v550 = vunpack.c.l.b16 %v477
      %v551 = vpack.c.b16 %v550, %v550
      %v556 = vunpack.c.l.b16 %v479
      %v557 = vunpack.c.l.b16 %v480
      %v558 = vunpack.c.l.b16 %v481
      %v559 = vunpack.c.l.b16 %v482
      %v560 = vpack.c.b16 %v557, %v556
      %v561 = vpack.c.b16 %v559, %v558
      %v564 = vsel %vm359, %v495, 0
      %v567 = vsel %vm359, %v551, 0
      %569 = vmatpush.bf16.msra.mxu0 0
      %570 = vmatpush.bf16.msra.mxu0 0
      %571 = vmatpush.bf16.msra.mxu0 0
      %572 = vmatpush.bf16.msra.mxu0 0
      %573 = vmatpush.bf16.msra.mxu0 0
      %574 = vmatpush.bf16.msra.mxu0 0
      %575 = vmatpush.bf16.msra.mxu0 %v561
      %576 = vmatpush.bf16.msra.mxu0 %v560
      %577 = vmatmul.bf16.gmra.mxu0 %v564
      %v578 = vpop.f32.mrf.mxu0
      %v579 = vadd.f32 %v541, %v578
      %v580 = vpop.f32.mrf.mxu0
      %v581 = vadd.f32 %v543, %v580
      %582 = vmatmul.bf16.gmra.mxu0 %v567
      %v583 = vpop.f32.mrf.mxu0
      %v584 = vadd.f32 %v546, %v583
      %v585 = vpop.f32.mrf.mxu0
      %586 = vdwg.mxu0
      %v587 = vmul.f32 %v579, %v385
      %v588 = vmul.f32 %v581, %v385
      %v589 = vmul.f32 %v584, %v385
      %v590 = vadd.f32 %v587, %v391
      %v591 = vadd.f32 %v588, %v391
      %v592 = vadd.f32 %v589, %v391
      %s593 = scalar_lea.vmem %s322, 12
      %v594 = vld [vmem:[%s593] sm:$0xf]
      %v595 = vld [vmem:[%s593 + $0x4] sm:$0xf]
      %v596 = vld [vmem:[%s593 + $0x8] sm:$0x3]
      %v597 = vld [vmem:[%s5] sm:$0xf]
      %v598 = vld [vmem:[%s5 + $0x4] sm:$0xf]
      %v602 = vunpack.c.l.b16 %v594
      %v603 = vunpack.c.l.b16 %v595
      %v604 = vunpack.c.l.b16 %v596
      %v605 = vpack.c.b16 %v603, %v602
      %v606 = vpack.c.b16 %v604, %v604
      %v609 = vunpack.c.l.b16 %v597
      %v610 = vunpack.c.l.b16 %v598
      %v611 = vpack.c.b16 %v610, %v609
      %v614 = vsel %vm415, %v605, 0
      %v617 = vsel %vm415, %v606, 0
      %619 = vmatpush.bf16.msra.mxu0 0
      %620 = vmatpush.bf16.msra.mxu0 0
      %621 = vmatpush.bf16.msra.mxu0 0
      %622 = vmatpush.bf16.msra.mxu0 0
      %623 = vmatpush.bf16.msra.mxu0 0
      %624 = vmatpush.bf16.msra.mxu0 0
      %625 = vmatpush.bf16.msra.mxu0 0
      %626 = vmatpush.bf16.msra.mxu0 %v611
      %627 = vmatmul.bf16.gmra.mxu0 %v614
      %v628 = vpop.f32.mrf.mxu0
      %v629 = vadd.f32 0.0, %v628
      %v630 = vpop.f32.mrf.mxu0
      %v631 = vadd.f32 0.0, %v630
      %632 = vmatmul.bf16.gmra.mxu0 %v617
      %v633 = vpop.f32.mrf.mxu0
      %v634 = vadd.f32 0.0, %v633
      %v635 = vpop.f32.mrf.mxu0
      %636 = vdwg.mxu0
      %v637 = vadd.f32 %v590, %v629
      %v638 = vadd.f32 %v591, %v631
      %v639 = vadd.f32 %v592, %v634
      %v640 = vmax.f32 %v637, 0.0
      %v641 = vmax.f32 %v638, 0.0
      %v642 = vmax.f32 %v639, 0.0
      %v643 = vld [vmem:[%s6] sm:$0x1]
      %v645 = vperm.slane %v643, 0
      %v647 = vmul.f32 %v640, %v645
      %v648 = vmul.f32 %v641, %v645
      %v649 = vmul.f32 %v642, %v645
      %v650 = vsel %vm415, %v647, 0.0
      %651 = vadd.xlane.f32.xlu0 %v650
      %v652 = vpop.xlane.xlu0 %651
      %v653 = vsel %vm415, %v648, 0.0
      %654 = vadd.xlane.f32.xlu0 %v653
      %v655 = vpop.xlane.xlu0 %654
      %v656 = vsel %vm459, %v649, 0.0
      %657 = vadd.xlane.f32.xlu0 %v656
      %v658 = vpop.xlane.xlu0 %657
      %v659 = vld [vmem:[#allocation2] sm:$0x1]
      %v661 = vperm.slane %v659, 0
      %v663 = vadd.f32 %v652, %v661
      %v664 = vadd.f32 %v655, %v661
      %v665 = vadd.f32 %v658, %v661
      %669 = vrot.lane.b32.xlu0 %v663, 1
      %v670 = vpop.permute.xlu0 %669
      %671 = vrot.lane.b32.xlu0 %v664, 1
      %v672 = vpop.permute.xlu0 %671
      %673 = vrot.lane.b32.xlu0 %v665, 1
      %v674 = vpop.permute.xlu0 %673
      %vm678 = vcmask 15368
      %679 = vst.msk [vmem:[%s327] sm:$0xff] %vm678, %v670
      %680 = vst.msk [vmem:[%s327 + $0x8] sm:$0xff] %vm678, %v672
      %vm681 = vcmask 11272
      %682 = vst.msk [vmem:[%s327 + $0x10] sm:$0xf] %vm681, %v674
      %v683 = vld [vmem:[%s317] sm:$0xf]
      %v684 = vld [vmem:[%s317 + $0x4] sm:$0xf]
      %v685 = vld [vmem:[%s317 + $0x8] sm:$0x3]
      %s686 = scalar_lea.vmem %s1, 112
      %v687 = vld [vmem:[%s686] sm:$0xf]
      %v688 = vld [vmem:[%s686 + $0x4] sm:$0xf]
      %v689 = vld [vmem:[%s686 + $0x8] sm:$0xf]
      %v690 = vld [vmem:[%s686 + $0xc] sm:$0xf]
      %v691 = vld [vmem:[%s317] sm:$0xc]
      %v692 = vld [vmem:[%s317 + $0x8] sm:$0xf]
      %v693 = vld [vmem:[%s317 + $0xc] sm:$0x1]
      %s694 = scalar_lea.vmem %s1, 16
      %v695 = vld [vmem:[%s694] sm:$0xf]
      %v696 = vld [vmem:[%s694 + $0x4] sm:$0xf]
      %v697 = vld [vmem:[%s694 + $0x8] sm:$0xf]
      %v698 = vld [vmem:[%s694 + $0xc] sm:$0xf]
      %v703 = vunpack.c.l.b16 %v691
      %v704 = vunpack.c.l.b16 %v684
      %v705 = vunpack.c.l.b16 %v692
      %v706 = vunpack.c.l.b16 %v693
      %v707 = vpack.c.b16 %v704, %v703
      %v708 = vpack.c.b16 %v706, %v705
      %vm709 = vsmask.f32 5376
      %v711 = vshrl.u32 %v707, 16
      %v713 = vrot.slane %v711, 2
      %v714 = vshll.u32 %v707, 16
      %v716 = vrot.slane %v714, 3
      %v717 = vor.u32 %v713, %v716
      %v719 = vshrl.u32 %v708, 16
      %v721 = vrot.slane %v719, 2
      %v722 = vshll.u32 %v708, 16
      %v724 = vrot.slane %v722, 3
      %v725 = vor.u32 %v721, %v724
      %v726 = vsel %vm709, %v717, %v725
      %v731 = vunpack.c.l.b16 %v695
      %v732 = vunpack.c.l.b16 %v696
      %v733 = vunpack.c.l.b16 %v697
      %v734 = vunpack.c.l.b16 %v698
      %v735 = vpack.c.b16 %v732, %v731
      %v736 = vpack.c.b16 %v734, %v733
      %v740 = vsel %vm359, %v726, 0
      %v743 = vsel %vm359, %v725, 0
      %745 = vmatpush.bf16.msra.mxu0 0
      %746 = vmatpush.bf16.msra.mxu0 0
      %747 = vmatpush.bf16.msra.mxu0 0
      %748 = vmatpush.bf16.msra.mxu0 0
      %749 = vmatpush.bf16.msra.mxu0 0
      %750 = vmatpush.bf16.msra.mxu0 0
      %751 = vmatpush.bf16.msra.mxu0 %v736
      %752 = vmatpush.bf16.msra.mxu0 %v735
      %753 = vmatmul.bf16.gmra.mxu0 %v740
      %v754 = vpop.f32.mrf.mxu0
      %v755 = vadd.f32 0.0, %v754
      %v756 = vpop.f32.mrf.mxu0
      %v757 = vadd.f32 0.0, %v756
      %758 = vmatmul.bf16.gmra.mxu0 %v743
      %v759 = vpop.f32.mrf.mxu0
      %v760 = vadd.f32 0.0, %v759
      %v761 = vpop.f32.mrf.mxu0
      %762 = vdwg.mxu0
      %v765 = vunpack.c.l.b16 %v683
      %v766 = vunpack.c.l.b16 %v685
      %v767 = vpack.c.b16 %v704, %v765
      %v768 = vpack.c.b16 %v766, %v766
      %v773 = vunpack.c.l.b16 %v687
      %v774 = vunpack.c.l.b16 %v688
      %v775 = vunpack.c.l.b16 %v689
      %v776 = vunpack.c.l.b16 %v690
      %v777 = vpack.c.b16 %v774, %v773
      %v778 = vpack.c.b16 %v776, %v775
      %v782 = vsel %vm359, %v767, 0
      %v785 = vsel %vm359, %v768, 0
      %787 = vmatpush.bf16.msra.mxu0 0
      %788 = vmatpush.bf16.msra.mxu0 0
      %789 = vmatpush.bf16.msra.mxu0 0
      %790 = vmatpush.bf16.msra.mxu0 0
      %791 = vmatpush.bf16.msra.mxu0 0
      %792 = vmatpush.bf16.msra.mxu0 0
      %793 = vmatpush.bf16.msra.mxu0 %v778
      %794 = vmatpush.bf16.msra.mxu0 %v777
      %795 = vmatmul.bf16.gmra.mxu0 %v782
      %v796 = vpop.f32.mrf.mxu0
      %v797 = vadd.f32 %v755, %v796
      %v798 = vpop.f32.mrf.mxu0
      %v799 = vadd.f32 %v757, %v798
      %800 = vmatmul.bf16.gmra.mxu0 %v785
      %v801 = vpop.f32.mrf.mxu0
      %v802 = vadd.f32 %v760, %v801
      %v803 = vpop.f32.mrf.mxu0
      %804 = vdwg.mxu0
      %v805 = vmul.f32 %v797, %v385
      %v806 = vmul.f32 %v799, %v385
      %v807 = vmul.f32 %v802, %v385
      %v808 = vadd.f32 %v805, %v391
      %v809 = vadd.f32 %v806, %v391
      %v810 = vadd.f32 %v807, %v391
      %s811 = scalar_lea.vmem %s322, 24
      %v812 = vld [vmem:[%s811] sm:$0xf]
      %v813 = vld [vmem:[%s811 + $0x4] sm:$0xf]
      %v814 = vld [vmem:[%s811 + $0x8] sm:$0x3]
      %v815 = vld [vmem:[%s5] sm:$0xf]
      %v816 = vld [vmem:[%s5 + $0x4] sm:$0xf]
      %v820 = vunpack.c.l.b16 %v812
      %v821 = vunpack.c.l.b16 %v813
      %v822 = vunpack.c.l.b16 %v814
      %v823 = vpack.c.b16 %v821, %v820
      %v824 = vpack.c.b16 %v822, %v822
      %v827 = vunpack.c.l.b16 %v815
      %v828 = vunpack.c.l.b16 %v816
      %v829 = vpack.c.b16 %v828, %v827
      %v832 = vsel %vm415, %v823, 0
      %v835 = vsel %vm415, %v824, 0
      %837 = vmatpush.bf16.msra.mxu0 0
      %838 = vmatpush.bf16.msra.mxu0 0
      %839 = vmatpush.bf16.msra.mxu0 0
      %840 = vmatpush.bf16.msra.mxu0 0
      %841 = vmatpush.bf16.msra.mxu0 0
      %842 = vmatpush.bf16.msra.mxu0 0
      %843 = vmatpush.bf16.msra.mxu0 0
      %844 = vmatpush.bf16.msra.mxu0 %v829
      %845 = vmatmul.bf16.gmra.mxu0 %v832
      %v846 = vpop.f32.mrf.mxu0
      %v847 = vadd.f32 0.0, %v846
      %v848 = vpop.f32.mrf.mxu0
      %v849 = vadd.f32 0.0, %v848
      %850 = vmatmul.bf16.gmra.mxu0 %v835
      %v851 = vpop.f32.mrf.mxu0
      %v852 = vadd.f32 0.0, %v851
      %v853 = vpop.f32.mrf.mxu0
      %854 = vdwg.mxu0
      %v855 = vadd.f32 %v808, %v847
      %v856 = vadd.f32 %v809, %v849
      %v857 = vadd.f32 %v810, %v852
      %v858 = vmax.f32 %v855, 0.0
      %v859 = vmax.f32 %v856, 0.0
      %v860 = vmax.f32 %v857, 0.0
      %v861 = vld [vmem:[%s6] sm:$0x1]
      %v863 = vperm.slane %v861, 0
      %v865 = vmul.f32 %v858, %v863
      %v866 = vmul.f32 %v859, %v863
      %v867 = vmul.f32 %v860, %v863
      %v868 = vsel %vm415, %v865, 0.0
      %869 = vadd.xlane.f32.xlu0 %v868
      %v870 = vpop.xlane.xlu0 %869
      %v871 = vsel %vm415, %v866, 0.0
      %872 = vadd.xlane.f32.xlu0 %v871
      %v873 = vpop.xlane.xlu0 %872
      %v874 = vsel %vm459, %v867, 0.0
      %875 = vadd.xlane.f32.xlu0 %v874
      %v876 = vpop.xlane.xlu0 %875
      %v877 = vld [vmem:[#allocation2] sm:$0x1]
      %v879 = vperm.slane %v877, 0
      %v881 = vadd.f32 %v870, %v879
      %v882 = vadd.f32 %v873, %v879
      %v883 = vadd.f32 %v876, %v879
      %887 = vrot.lane.b32.xlu0 %v881, 2
      %v888 = vpop.permute.xlu0 %887
      %889 = vrot.lane.b32.xlu0 %v882, 2
      %v890 = vpop.permute.xlu0 %889
      %891 = vrot.lane.b32.xlu0 %v883, 2
      %v892 = vpop.permute.xlu0 %891
      %vm896 = vcmask 23568
      %897 = vst.msk [vmem:[%s327] sm:$0xff] %vm896, %v888
      %898 = vst.msk [vmem:[%s327 + $0x8] sm:$0xff] %vm896, %v890
      %vm899 = vcmask 19472
      %900 = vst.msk [vmem:[%s327 + $0x10] sm:$0xf] %vm899, %v892
      %v901 = vld [vmem:[%s317] sm:$0xf]
      %v902 = vld [vmem:[%s317 + $0x4] sm:$0xf]
      %v903 = vld [vmem:[%s317 + $0x8] sm:$0x3]
      %s904 = scalar_lea.vmem %s1, 128
      %v905 = vld [vmem:[%s904] sm:$0xf]
      %v906 = vld [vmem:[%s904 + $0x4] sm:$0xf]
      %v907 = vld [vmem:[%s904 + $0x8] sm:$0xf]
      %v908 = vld [vmem:[%s904 + $0xc] sm:$0xf]
      %v909 = vld [vmem:[%s317 + $0x8] sm:$0x7]
      %s910 = scalar_lea.vmem %s1, 96
      %v911 = vld [vmem:[%s910] sm:$0xf]
      %v912 = vld [vmem:[%s910 + $0x4] sm:$0xf]
      %v913 = vld [vmem:[%s910 + $0x8] sm:$0xf]
      %v914 = vld [vmem:[%s910 + $0xc] sm:$0xf]
      %v918 = vunpack.c.l.b16 %v901
      %v919 = vunpack.c.l.b16 %v902
      %v920 = vunpack.c.l.b16 %v909
      %v921 = vpack.c.b16 %v919, %v918
      %v922 = vpack.c.b16 %v920, %v920
      %v924 = vshrl.u32 %v921, 16
      %v926 = vshll.u32 %v921, 16
      %v928 = vrot.slane %v926, 1
      %v929 = vor.u32 %v924, %v928
      %v931 = vshll.u32 %v922, 16
      %v933 = vrot.slane %v931, 1
      %v934 = vsel %vm497, %v929, %v933
      %v935 = vshrl.u32 %v922, 16
      %v937 = vor.u32 %v935, %v933
      %v942 = vunpack.c.l.b16 %v911
      %v943 = vunpack.c.l.b16 %v912
      %v944 = vunpack.c.l.b16 %v913
      %v945 = vunpack.c.l.b16 %v914
      %v946 = vpack.c.b16 %v943, %v942
      %v947 = vpack.c.b16 %v945, %v944
      %v951 = vsel %vm359, %v934, 0
      %v954 = vsel %vm359, %v937, 0
      %956 = vmatpush.bf16.msra.mxu0 0
      %957 = vmatpush.bf16.msra.mxu0 0
      %958 = vmatpush.bf16.msra.mxu0 0
      %959 = vmatpush.bf16.msra.mxu0 0
      %960 = vmatpush.bf16.msra.mxu0 0
      %961 = vmatpush.bf16.msra.mxu0 0
      %962 = vmatpush.bf16.msra.mxu0 %v947
      %963 = vmatpush.bf16.msra.mxu0 %v946
      %964 = vmatmul.bf16.gmra.mxu0 %v951
      %v965 = vpop.f32.mrf.mxu0
      %v966 = vadd.f32 0.0, %v965
      %v967 = vpop.f32.mrf.mxu0
      %v968 = vadd.f32 0.0, %v967
      %969 = vmatmul.bf16.gmra.mxu0 %v954
      %v970 = vpop.f32.mrf.mxu0
      %v971 = vadd.f32 0.0, %v970
      %v972 = vpop.f32.mrf.mxu0
      %973 = vdwg.mxu0
      %v975 = vunpack.c.l.b16 %v903
      %v976 = vpack.c.b16 %v975, %v975
      %v981 = vunpack.c.l.b16 %v905
      %v982 = vunpack.c.l.b16 %v906
      %v983 = vunpack.c.l.b16 %v907
      %v984 = vunpack.c.l.b16 %v908
      %v985 = vpack.c.b16 %v982, %v981
      %v986 = vpack.c.b16 %v984, %v983
      %v989 = vsel %vm359, %v921, 0
      %v992 = vsel %vm359, %v976, 0
      %994 = vmatpush.bf16.msra.mxu0 0
      %995 = vmatpush.bf16.msra.mxu0 0
      %996 = vmatpush.bf16.msra.mxu0 0
      %997 = vmatpush.bf16.msra.mxu0 0
      %998 = vmatpush.bf16.msra.mxu0 0
      %999 = vmatpush.bf16.msra.mxu0 0
      %1000 = vmatpush.bf16.msra.mxu0 %v986
      %1001 = vmatpush.bf16.msra.mxu0 %v985
      %1002 = vmatmul.bf16.gmra.mxu0 %v989
      %v1003 = vpop.f32.mrf.mxu0
      %v1004 = vadd.f32 %v966, %v1003
      %v1005 = vpop.f32.mrf.mxu0
      %v1006 = vadd.f32 %v968, %v1005
      %1007 = vmatmul.bf16.gmra.mxu0 %v992
      %v1008 = vpop.f32.mrf.mxu0
      %v1009 = vadd.f32 %v971, %v1008
      %v1010 = vpop.f32.mrf.mxu0
      %1011 = vdwg.mxu0
      %v1012 = vld [vmem:[%s317] sm:$0xc]
      %v1013 = vld [vmem:[%s317 + $0x4] sm:$0xf]
      %v1014 = vld [vmem:[%s317 + $0x8] sm:$0xf]
      %v1015 = vld [vmem:[%s317 + $0xc] sm:$0x1]
      %s1016 = scalar_lea.vmem %s1, 32
      %v1017 = vld [vmem:[%s1016] sm:$0xf]
      %v1018 = vld [vmem:[%s1016 + $0x4] sm:$0xf]
      %v1019 = vld [vmem:[%s1016 + $0x8] sm:$0xf]
      %v1020 = vld [vmem:[%s1016 + $0xc] sm:$0xf]
      %v1025 = vunpack.c.l.b16 %v1012
      %v1026 = vunpack.c.l.b16 %v1013
      %v1027 = vunpack.c.l.b16 %v1014
      %v1028 = vunpack.c.l.b16 %v1015
      %v1029 = vpack.c.b16 %v1026, %v1025
      %v1030 = vpack.c.b16 %v1028, %v1027
      %v1032 = vshrl.u32 %v1029, 16
      %v1034 = vrot.slane %v1032, 2
      %v1035 = vshll.u32 %v1029, 16
      %v1037 = vrot.slane %v1035, 3
      %v1038 = vor.u32 %v1034, %v1037
      %v1040 = vshrl.u32 %v1030, 16
      %v1042 = vrot.slane %v1040, 2
      %v1043 = vshll.u32 %v1030, 16
      %v1045 = vrot.slane %v1043, 3
      %v1046 = vor.u32 %v1042, %v1045
      %v1047 = vsel %vm709, %v1038, %v1046
      %v1052 = vunpack.c.l.b16 %v1017
      %v1053 = vunpack.c.l.b16 %v1018
      %v1054 = vunpack.c.l.b16 %v1019
      %v1055 = vunpack.c.l.b16 %v1020
      %v1056 = vpack.c.b16 %v1053, %v1052
      %v1057 = vpack.c.b16 %v1055, %v1054
      %v1061 = vsel %vm359, %v1047, 0
      %v1064 = vsel %vm359, %v1046, 0
      %1066 = vmatpush.bf16.msra.mxu0 0
      %1067 = vmatpush.bf16.msra.mxu0 0
      %1068 = vmatpush.bf16.msra.mxu0 0
      %1069 = vmatpush.bf16.msra.mxu0 0
      %1070 = vmatpush.bf16.msra.mxu0 0
      %1071 = vmatpush.bf16.msra.mxu0 0
      %1072 = vmatpush.bf16.msra.mxu0 %v1057
      %1073 = vmatpush.bf16.msra.mxu0 %v1056
      %1074 = vmatmul.bf16.gmra.mxu0 %v1061
      %v1075 = vpop.f32.mrf.mxu0
      %v1076 = vadd.f32 0.0, %v1075
      %v1077 = vpop.f32.mrf.mxu0
      %v1078 = vadd.f32 0.0, %v1077
      %1079 = vmatmul.bf16.gmra.mxu0 %v1064
      %v1080 = vpop.f32.mrf.mxu0
      %v1081 = vadd.f32 0.0, %v1080
      %v1082 = vpop.f32.mrf.mxu0
      %1083 = vdwg.mxu0
      %v1084 = vadd.f32 %v1004, %v1076
      %v1085 = vadd.f32 %v1006, %v1078
      %v1086 = vadd.f32 %v1009, %v1081
      %v1087 = vld [vmem:[%s317] sm:$0x8]
      %v1088 = vld [vmem:[%s1] sm:$0xf]
      %v1089 = vld [vmem:[%s1 + $0x4] sm:$0xf]
      %v1090 = vld [vmem:[%s1 + $0x8] sm:$0xf]
      %v1091 = vld [vmem:[%s1 + $0xc] sm:$0xf]
      %v1093 = vunpack.c.l.b16 %v1087
      %v1094 = vpack.c.b16 %v1026, %v1093
      %vm1095 = vcmask 1044480
      %v1096 = vrot.slane %v1094, 3
      %v1097 = vrot.slane %v1030, 3
      %v1098 = vsel %vm1095, %v1096, %v1097
      %v1103 = vunpack.c.l.b16 %v1088
      %v1104 = vunpack.c.l.b16 %v1089
      %v1105 = vunpack.c.l.b16 %v1090
      %v1106 = vunpack.c.l.b16 %v1091
      %v1107 = vpack.c.b16 %v1104, %v1103
      %v1108 = vpack.c.b16 %v1106, %v1105
      %v1112 = vsel %vm359, %v1098, 0
      %v1115 = vsel %vm359, %v1097, 0
      %1117 = vmatpush.bf16.msra.mxu0 0
      %1118 = vmatpush.bf16.msra.mxu0 0
      %1119 = vmatpush.bf16.msra.mxu0 0
      %1120 = vmatpush.bf16.msra.mxu0 0
      %1121 = vmatpush.bf16.msra.mxu0 0
      %1122 = vmatpush.bf16.msra.mxu0 0
      %1123 = vmatpush.bf16.msra.mxu0 %v1108
      %1124 = vmatpush.bf16.msra.mxu0 %v1107
      %1125 = vmatmul.bf16.gmra.mxu0 %v1112
      %v1126 = vpop.f32.mrf.mxu0
      %v1127 = vadd.f32 0.0, %v1126
      %v1128 = vpop.f32.mrf.mxu0
      %v1129 = vadd.f32 0.0, %v1128
      %1130 = vmatmul.bf16.gmra.mxu0 %v1115
      %v1131 = vpop.f32.mrf.mxu0
      %v1132 = vadd.f32 0.0, %v1131
      %v1133 = vpop.f32.mrf.mxu0
      %1134 = vdwg.mxu0
      %v1135 = vadd.f32 %v1084, %v1127
      %v1136 = vadd.f32 %v1085, %v1129
      %v1137 = vadd.f32 %v1086, %v1132
      %v1138 = vmul.f32 %v1135, %v385
      %v1139 = vmul.f32 %v1136, %v385
      %v1140 = vmul.f32 %v1137, %v385
      %v1141 = vadd.f32 %v1138, %v391
      %v1142 = vadd.f32 %v1139, %v391
      %v1143 = vadd.f32 %v1140, %v391
      %s1144 = scalar_lea.vmem %s322, 36
      %v1145 = vld [vmem:[%s1144] sm:$0xf]
      %v1146 = vld [vmem:[%s1144 + $0x4] sm:$0xf]
      %v1147 = vld [vmem:[%s1144 + $0x8] sm:$0x3]
      %v1148 = vld [vmem:[%s5] sm:$0xf]
      %v1149 = vld [vmem:[%s5 + $0x4] sm:$0xf]
      %v1153 = vunpack.c.l.b16 %v1145
      %v1154 = vunpack.c.l.b16 %v1146
      %v1155 = vunpack.c.l.b16 %v1147
      %v1156 = vpack.c.b16 %v1154, %v1153
      %v1157 = vpack.c.b16 %v1155, %v1155
      %v1160 = vunpack.c.l.b16 %v1148
      %v1161 = vunpack.c.l.b16 %v1149
      %v1162 = vpack.c.b16 %v1161, %v1160
      %v1165 = vsel %vm415, %v1156, 0
      %v1168 = vsel %vm415, %v1157, 0
      %1170 = vmatpush.bf16.msra.mxu0 0
      %1171 = vmatpush.bf16.msra.mxu0 0
      %1172 = vmatpush.bf16.msra.mxu0 0
      %1173 = vmatpush.bf16.msra.mxu0 0
      %1174 = vmatpush.bf16.msra.mxu0 0
      %1175 = vmatpush.bf16.msra.mxu0 0
      %1176 = vmatpush.bf16.msra.mxu0 0
      %1177 = vmatpush.bf16.msra.mxu0 %v1162
      %1178 = vmatmul.bf16.gmra.mxu0 %v1165
      %v1179 = vpop.f32.mrf.mxu0
      %v1180 = vadd.f32 0.0, %v1179
      %v1181 = vpop.f32.mrf.mxu0
      %v1182 = vadd.f32 0.0, %v1181
      %1183 = vmatmul.bf16.gmra.mxu0 %v1168
      %v1184 = vpop.f32.mrf.mxu0
      %v1185 = vadd.f32 0.0, %v1184
      %v1186 = vpop.f32.mrf.mxu0
      %1187 = vdwg.mxu0
      %v1188 = vadd.f32 %v1141, %v1180
      %v1189 = vadd.f32 %v1142, %v1182
      %v1190 = vadd.f32 %v1143, %v1185
      %v1191 = vmax.f32 %v1188, 0.0
      %v1192 = vmax.f32 %v1189, 0.0
      %v1193 = vmax.f32 %v1190, 0.0
      %v1194 = vld [vmem:[%s6] sm:$0x1]
      %v1196 = vperm.slane %v1194, 0
      %v1198 = vmul.f32 %v1191, %v1196
      %v1199 = vmul.f32 %v1192, %v1196
      %v1200 = vmul.f32 %v1193, %v1196
      %v1201 = vsel %vm415, %v1198, 0.0
      %1202 = vadd.xlane.f32.xlu0 %v1201
      %v1203 = vpop.xlane.xlu0 %1202
      %v1204 = vsel %vm415, %v1199, 0.0
      %1205 = vadd.xlane.f32.xlu0 %v1204
      %v1206 = vpop.xlane.xlu0 %1205
      %v1207 = vsel %vm459, %v1200, 0.0
      %1208 = vadd.xlane.f32.xlu0 %v1207
      %v1209 = vpop.xlane.xlu0 %1208
      %v1210 = vld [vmem:[#allocation2] sm:$0x1]
      %v1212 = vperm.slane %v1210, 0
      %v1214 = vadd.f32 %v1203, %v1212
      %v1215 = vadd.f32 %v1206, %v1212
      %v1216 = vadd.f32 %v1209, %v1212
      %1220 = vrot.lane.b32.xlu0 %v1214, 3
      %v1221 = vpop.permute.xlu0 %1220
      %1222 = vrot.lane.b32.xlu0 %v1215, 3
      %v1223 = vpop.permute.xlu0 %1222
      %1224 = vrot.lane.b32.xlu0 %v1216, 3
      %v1225 = vpop.permute.xlu0 %1224
      %vm1229 = vcmask 31768
      %1230 = vst.msk [vmem:[%s327] sm:$0xff] %vm1229, %v1221
      %1231 = vst.msk [vmem:[%s327 + $0x8] sm:$0xff] %vm1229, %v1223
      %vm1232 = vcmask 27672
      %1233 = vst.msk [vmem:[%s327 + $0x10] sm:$0xf] %vm1232, %v1225
      %p1234 = scmp.lt.s32.totalorder %s21, 1
      %s1235 = scalar_select %p1234, %s21, 1
      %s1236 = smul.addr %s1235, 3
      %s1237 = smul.addr %s1236, 8
      %s1238 = scalar_lea.vmem %s8, %s1237
      // Predicated region
      $region53: #{res_submodule_forward.11} parent=51 // pred_check
        %p1239 = pneg %p217
      $region54: #{res_submodule_forward.11} parent=51 // pred_check_branch
        %1241 = sbr.rel (%p1239) target = $region56
      $region55: #{res_submodule_forward.11} parent=51 // pred_region
        _
      $region56: #{res_submodule_forward.11} parent=51 // pred_fallthru
        _
    $region52: #{res_submodule_forward.11} parent=5 // pred_fallthru
      _
    %p1242 = scmp.le.s32.totalorder 2, %s16
    // Predicated region
    $region57: #{res_submodule_forward.11} parent=5 // pred_check
      %p1243 = pneg %p1242
    $region58: #{res_submodule_forward.11} parent=5 // pred_check_branch
      %1245 = sbr.rel (%p1243) target = $region60
    $region59: #{res_submodule_forward.11} parent=5 // pred_region
      %s1246 = ssub.s32 %s16, 2
      // Predicated region
      $region61: #{res_submodule_forward.11} parent=59 // pred_check
        %p1247 = pneg %p223
      $region62: #{res_submodule_forward.11} parent=59 // pred_check_branch
        %1249 = sbr.rel (%p1247) target = $region64
      $region63: #{res_submodule_forward.11} parent=59 // pred_region
        %p1250 = scmp.lt.s32.totalorder %s22, 1
        %s1251 = scalar_select %p1250, %s22, 1
        %s1252 = smul.addr %s1251, 3
        %s1253 = smul.addr %s1252, 8
        %s1254 = scalar_lea.vmem %s8, %s1253
      $region64: #{res_submodule_forward.11} parent=59 // pred_fallthru
        _
    $region60: #{res_submodule_forward.11} parent=5 // pred_fallthru
      _
  $region6: #{res_submodule_forward.11} parent=0 // loop_footer
    %s20 = sadd.s32 1, %s16
  $region7: #{res_submodule_forward.11} parent=0 // loop_footer_branch
    %15 = sbr.rel target = $region3
  $region8: #{res_submodule_forward.11} parent=0 // loop_exit
    _

</llo_original>
